<compile_context>
chip_gen: v7x
topology: tpu7x:2x2x1
jax: 0.10.0
libtpu: 0.0.40
codegen_flags: <defaults>
</compile_context>

<pallas_src>
from functools import partial

import jax
import jax.numpy as jnp
from jax.experimental import pallas as pl
from jax.experimental.pallas import tpu as pltpu

jax.config.update("jax_default_matmul_precision", "highest")

_H_IN = 11
_GRID = _H_IN * _H_IN      # 121 flattened grid positions
_LANES = 128               # one full lane tile (positions 121..127 are junk)
_H1 = 10                   # conv1 output spatial size (valid)
_H2 = 8                    # conv2 output spatial size (valid)
_C1 = 8                    # conv1 out channels
_C2 = 16                   # conv2 out channels
_K2 = 9 * _C1              # conv2 im2col depth (3*3 taps x 8 channels) = 72
_NCLS = 5
_BN_EPS = 1e-5


def _vmem_spec(shape):
    """Full-array BlockSpec for the trivial grid=(1,)."""
    nd = len(shape)
    return pl.BlockSpec(shape, lambda i, _nd=nd: (0,) * _nd)


def _shift_lanes(x, s):
    """out[..., l] = x[..., l + s]  (only used at lanes where l + s < 128)."""
    if s == 0:
        return x
    # np.roll semantics: roll(x, 128 - s) == roll(x, -s)  -> out[l] = x[l + s]
    return pltpu.roll(x, shift=_LANES - s, axis=x.ndim - 1)


# ----------------------------------------------------------------------------
# The single fused kernel
# ----------------------------------------------------------------------------
def _fused_kernel(x_ref, w1_ref, b1_ref, se1a_ref, se1b_ref,
                  w2t_ref, b2_ref, se2a_ref, se2b_ref,
                  gamma_ref, beta_ref, wfc_ref, bfc_ref,
                  m1_ref, m2_ref,
                  o_ref, stk_scr, flat_scr, *, n_batch):
    f32 = jnp.float32
    xg = x_ref[...]                                         # (N, 128) 11x11 grid on lanes

    # ---- Stage A: conv1(1->8, k=2) + bias + ReLU, batched over N ------------
    acc1 = jnp.zeros((n_batch, _C1, _LANES), f32)
    for kh in range(2):
        for kw in range(2):
            t = kh * 2 + kw
            xs = _shift_lanes(xg, kh * _H_IN + kw)          # (N, 128)
            acc1 = acc1 + xs[:, None, :] * w1_ref[t]        # (N,1,128)*(8,1) -> (N,8,128)
    y1 = jnp.maximum(acc1 + b1_ref[...], 0.0)               # (N, 8, 128)

    # ---- SE1: masked avg-pool -> FC(8->4) -> ReLU -> FC(4->8) -> sigmoid ----
    m1 = m1_ref[...]                                        # (1,1,128), 100 valid lanes
    pooled1 = jnp.sum(y1 * m1, axis=2) * (1.0 / float(_H1 * _H1))          # (N, 8)
    h1 = jnp.maximum(
        jnp.dot(pooled1, se1a_ref[...], preferred_element_type=f32), 0.0)   # (N, 4)
    s1 = jax.nn.sigmoid(
        jnp.dot(h1, se1b_ref[...], preferred_element_type=f32))             # (N, 8)
    y1s = y1 * s1[:, :, None]                                               # (N, 8, 128)

    # ---- Stage B: conv2(8->16, k=3) as ONE im2col matmul per sample ---------
    # stk_scr[n, t*8 + c, l] = y1s[n, c, l + kh*11 + kw]   with t = kh*3 + kw
    for kh in range(3):
        for kw in range(3):
            t = kh * 3 + kw
            stk_scr[:, t * _C1:(t + 1) * _C1, :] = _shift_lanes(y1s, kh * _H_IN + kw)
    w2t = w2t_ref[...]                                      # (16, 72)
    zs = []
    for n in range(n_batch):                                # 1 MXU matmul / sample
        zs.append(jnp.dot(w2t, stk_scr[n], preferred_element_type=f32))     # (16, 128)
    z = jnp.stack(zs, axis=0) + b2_ref[...]                 # (N, 16, 128)

    # ---- SE2 (on pre-ReLU conv2 output) + ReLU -------------------------------
    m2 = m2_ref[...]                                        # (1,1,128), 64 valid lanes
    pooled2 = jnp.sum(z * m2, axis=2) * (1.0 / float(_H2 * _H2))            # (N, 16)
    h2 = jnp.maximum(
        jnp.dot(pooled2, se2a_ref[...], preferred_element_type=f32), 0.0)    # (N, 8)
    s2 = jax.nn.sigmoid(
        jnp.dot(h2, se2b_ref[...], preferred_element_type=f32))              # (N, 16)
    a = jnp.maximum(z * s2[:, :, None], 0.0)                                 # (N, 16, 128)

    # ---- BatchNorm2d(16): training-mode batch statistics (masked lanes) -----
    count = float(n_batch * _H2 * _H2)
    mean = jnp.sum(a * m2, axis=(0, 2), keepdims=True) * (1.0 / count)       # (1, 16, 1)
    diff = a - mean
    var = jnp.sum(diff * diff * m2, axis=(0, 2), keepdims=True) * (1.0 / count)
    inv_std = jax.lax.rsqrt(var + _BN_EPS)
    act = jnp.maximum(diff * inv_std * gamma_ref[...] + beta_ref[...], 0.0)  # (N,16,128)

    # ---- Flatten -> Linear(1024->5) on the MXU -> softmax (exact divide) ----
    # Lane-tile-aligned flatten into scratch; fc weights are zero at junk lanes.
    for c in range(_C2):
        flat_scr[:, c * _LANES:(c + 1) * _LANES] = act[:, c, :]
    logits = jnp.dot(flat_scr[...], wfc_ref[...],
                     preferred_element_type=f32) + bfc_ref[...]              # (N, 5)
    mx = jnp.max(logits, axis=1, keepdims=True)
    e = jnp.exp(logits - mx)
    o_ref[...] = e / jnp.sum(e, axis=1, keepdims=True)      # single batched store


# ----------------------------------------------------------------------------
# Host-side parameter packing (one-time re-layout of PyTorch-style weights)
# ----------------------------------------------------------------------------
def pack_params(p):
    f32 = jnp.float32
    # conv1 (8,1,2,2) -> (taps=4, cout=8, 1) with tap index t = kh*2 + kw
    w1 = jnp.transpose(p["conv1_w"][:, 0], (1, 2, 0)).reshape(4, _C1, 1)
    # conv2 (16,8,3,3) -> (cout=16, 72) with column index (kh*3+kw)*8 + cin
    w2t = jnp.transpose(p["conv2_w"], (0, 2, 3, 1)).reshape(_C2, _K2)
    # fc (5, 1024) with 1024 ordered (c, h, w) -> grid-embedded (2048, 5):
    # row index = c*128 + (i*11 + j) for i,j < 8, zero elsewhere.
    wr = p["fc_w"].reshape(_NCLS, _C2, _H2, _H2)
    wgrid = jnp.zeros((_NCLS, _C2, _H_IN, _H_IN), f32).at[:, :, :_H2, :_H2].set(wr)
    wgrid = wgrid.reshape(_NCLS, _C2, _GRID)
    wgrid = jnp.pad(wgrid, ((0, 0), (0, 0), (0, _LANES - _GRID)))     # (5, 16, 128)
    wfc = jnp.transpose(wgrid, (1, 2, 0)).reshape(_C2 * _LANES, _NCLS)
    # valid-lane masks on the padded 11x11 grid
    lane = jnp.arange(_LANES)
    row, col = lane // _H_IN, lane % _H_IN
    m1 = ((row < _H1) & (col < _H1)).astype(f32).reshape(1, 1, _LANES)   # 100 ones
    m2 = ((row < _H2) & (col < _H2)).astype(f32).reshape(1, 1, _LANES)   # 64 ones
    return {
        "w1": w1,
        "b1": p["conv1_b"].reshape(1, _C1, 1),
        "se1a": p["se1_w1"].T,                    # (8, 4)
        "se1b": p["se1_w2"].T,                    # (4, 8)
        "w2t": w2t,                               # (16, 72)
        "b2": p["conv2_b"].reshape(1, _C2, 1),
        "se2a": p["se2_w1"].T,                    # (16, 8)
        "se2b": p["se2_w2"].T,                    # (8, 16)
        "gamma": p["bn_gamma"].reshape(1, _C2, 1),
        "beta": p["bn_beta"].reshape(1, _C2, 1),
        "wfc": wfc,                               # (2048, 5)
        "bfc": p["fc_b"].reshape(1, _NCLS),
        "m1": m1,
        "m2": m2,
    }


# ----------------------------------------------------------------------------
# Forward pass: one pallas_call
# ----------------------------------------------------------------------------
@jax.jit
def se_forward(packed, x_nchw):
    n = x_nchw.shape[0]
    # NCHW (C=1) -> flattened row-major grid on lanes, padded 121 -> 128.
    x_flat = x_nchw.reshape(n, _GRID)
    x_pad = jnp.pad(x_flat, ((0, 0), (0, _LANES - _GRID)))            # (N, 128)

    kernel = partial(_fused_kernel, n_batch=n)
    return pl.pallas_call(
        kernel,
        out_shape=jax.ShapeDtypeStruct((n, _NCLS), jnp.float32),
        grid=(1,),
        in_specs=[
            _vmem_spec((n, _LANES)),               # x grid
            _vmem_spec((4, _C1, 1)),               # conv1 weights (taps, cout, 1)
            _vmem_spec((1, _C1, 1)),               # conv1 bias
            _vmem_spec((_C1, _C1 // 2)),           # SE1 fc1 (8,4)
            _vmem_spec((_C1 // 2, _C1)),           # SE1 fc2 (4,8)
            _vmem_spec((_C2, _K2)),                # conv2 weights (16,72)
            _vmem_spec((1, _C2, 1)),               # conv2 bias
            _vmem_spec((_C2, _C2 // 2)),           # SE2 fc1 (16,8)
            _vmem_spec((_C2 // 2, _C2)),           # SE2 fc2 (8,16)
            _vmem_spec((1, _C2, 1)),               # bn gamma
            _vmem_spec((1, _C2, 1)),               # bn beta
            _vmem_spec((_C2 * _LANES, _NCLS)),     # fc weight (2048,5), zero at junk lanes
            _vmem_spec((1, _NCLS)),                # fc bias
            _vmem_spec((1, 1, _LANES)),            # conv1-valid lane mask
            _vmem_spec((1, 1, _LANES)),            # conv2-valid lane mask
        ],
        out_specs=_vmem_spec((n, _NCLS)),
        scratch_shapes=[
            pltpu.VMEM((n, _K2, _LANES), jnp.float32),    # conv2 im2col stack
            pltpu.VMEM((n, _C2 * _LANES), jnp.float32),   # flattened FC features
        ],
        compiler_params=pltpu.CompilerParams(
            dimension_semantics=("arbitrary",)),
    )(x_pad, packed["w1"], packed["b1"], packed["se1a"], packed["se1b"],
      packed["w2t"], packed["b2"], packed["se2a"], packed["se2b"],
      packed["gamma"], packed["beta"], packed["wfc"], packed["bfc"],
      packed["m1"], packed["m2"])


# ----------------------------------------------------------------------------
# Pure-JAX reference (faithful to the PyTorch forward) for correctness check
# ----------------------------------------------------------------------------
def ref_forward(p, x_nchw):
    prec = jax.lax.Precision.HIGHEST
    n = x_nchw.shape[0]
    y = jax.lax.conv_general_dilated(
        x_nchw, p["conv1_w"], (1, 1), "VALID",
        dimension_numbers=("NCHW", "OIHW", "NCHW"), precision=prec)
    y = jnp.maximum(y + p["conv1_b"][None, :, None, None], 0.0)
    pool = jnp.mean(y, axis=(2, 3))
    h = jnp.maximum(pool @ p["se1_w1"].T, 0.0)
    s = jax.nn.sigmoid(h @ p["se1_w2"].T)
    y = y * s[:, :, None, None]
    y = jax.lax.conv_general_dilated(
        y, p["conv2_w"], (1, 1), "VALID",
        dimension_numbers=("NCHW", "OIHW", "NCHW"), precision=prec)
    y = y + p["conv2_b"][None, :, None, None]
    pool2 = jnp.mean(y, axis=(2, 3))
    h2 = jnp.maximum(pool2 @ p["se2_w1"].T, 0.0)
    s2 = jax.nn.sigmoid(h2 @ p["se2_w2"].T)
    y = jnp.maximum(y * s2[:, :, None, None], 0.0)
    mean = jnp.mean(y, axis=(0, 2, 3), keepdims=True)
    var = jnp.mean((y - mean) ** 2, axis=(0, 2, 3), keepdims=True)
    y = (y - mean) * jax.lax.rsqrt(var + _BN_EPS)
    y = y * p["bn_gamma"][None, :, None, None] + p["bn_beta"][None, :, None, None]
    y = jnp.maximum(y, 0.0)
    logits = y.reshape(n, -1) @ p["fc_w"].T + p["fc_b"][None, :]
    return jax.nn.softmax(logits, axis=1)


# ----------------------------------------------------------------------------
# Deterministic synthetic parameters (PyTorch layouts)
# ----------------------------------------------------------------------------
def init_params(key):
    ks = jax.random.split(key, 10)
    p = {}
    p["conv1_w"] = 0.2 * jax.random.normal(ks[0], (8, 1, 2, 2), jnp.float32)
    p["conv1_b"] = 0.1 * jax.random.normal(ks[1], (8,), jnp.float32)
    p["se1_w1"] = 0.2 * jax.random.normal(ks[2], (4, 8), jnp.float32)    # Linear(8->4)
    p["se1_w2"] = 0.2 * jax.random.normal(ks[3], (8, 4), jnp.float32)    # Linear(4->8)
    p["conv2_w"] = 0.2 * jax.random.normal(ks[4], (16, 8, 3, 3), jnp.float32)
    p["conv2_b"] = 0.1 * jax.random.normal(ks[5], (16,), jnp.float32)
    p["se2_w1"] = 0.2 * jax.random.normal(ks[6], (8, 16), jnp.float32)   # Linear(16->8)
    p["se2_w2"] = 0.2 * jax.random.normal(ks[7], (16, 8), jnp.float32)   # Linear(8->16)
    p["bn_gamma"] = jnp.ones((16,), jnp.float32)      # fresh nn.BatchNorm2d(16)
    p["bn_beta"] = jnp.zeros((16,), jnp.float32)
    p["fc_w"] = 0.05 * jax.random.normal(ks[8], (5, 1024), jnp.float32)  # Linear(1024->5)
    p["fc_b"] = 0.1 * jax.random.normal(ks[9], (5,), jnp.float32)
    return p


if __name__ == "__main__":
    key = jax.random.PRNGKey(0)
    pkey, xkey = jax.random.split(key)
    params = init_params(pkey)
    packed = pack_params(params)

    # Input: NCHW, batch=2, 1 channel, 11x11 (flatten gives 16*8*8 = 1024).
    x = jax.random.normal(xkey, (2, 1, 11, 11), jnp.float32)

    out = jax.block_until_ready(se_forward(packed, x))
    ref = jax.block_until_ready(ref_forward(params, x))

    assert out.shape == (2, _NCLS), out.shape
    assert bool(jnp.all(jnp.isfinite(out)))
    row_sums = jnp.sum(out, axis=1)
    assert bool(jnp.all(jnp.abs(row_sums - 1.0) < 1e-3)), row_sums
    # Structural/packing/roll errors would produce O(0.1+) differences.
    assert bool(jnp.max(jnp.abs(out - ref)) < 2e-3), (out, ref)
    print("KERNEL_OK")
</pallas_src>

<mosaic_0001>
module attributes {stable_mosaic.version = 11 : i64} {
  func.func @_fused_kernel(%arg0: i32, %arg1: memref<2x128xf32, #tpu.memory_space<vmem>>, %arg2: memref<4x8x1xf32, #tpu.memory_space<vmem>>, %arg3: memref<1x8x1xf32, #tpu.memory_space<vmem>>, %arg4: memref<8x4xf32, #tpu.memory_space<vmem>>, %arg5: memref<4x8xf32, #tpu.memory_space<vmem>>, %arg6: memref<16x72xf32, #tpu.memory_space<vmem>>, %arg7: memref<1x16x1xf32, #tpu.memory_space<vmem>>, %arg8: memref<16x8xf32, #tpu.memory_space<vmem>>, %arg9: memref<8x16xf32, #tpu.memory_space<vmem>>, %arg10: memref<1x16x1xf32, #tpu.memory_space<vmem>>, %arg11: memref<1x16x1xf32, #tpu.memory_space<vmem>>, %arg12: memref<2048x5xf32, #tpu.memory_space<vmem>>, %arg13: memref<1x5xf32, #tpu.memory_space<vmem>>, %arg14: memref<1x1x128xf32, #tpu.memory_space<vmem>>, %arg15: memref<1x1x128xf32, #tpu.memory_space<vmem>>, %arg16: memref<2x5xf32, #tpu.memory_space<vmem>>, %arg17: memref<2x72x128xf32, #tpu.memory_space<vmem>>, %arg18: memref<2x2048xf32, #tpu.memory_space<vmem>>) attributes {dimension_semantics = [#tpu.dimension_semantics<arbitrary>], iteration_bounds = array<i64: 1>, scalar_prefetch = 0 : i64, scratch_operands = 2 : i64, tpu.core_type = #tpu.core_type<tc>, window_params = [{pipeline_mode = #tpu.pipeline_mode<synchronous>, transform_indices = @transform_0, window_bounds = array<i64: 2, 128>}, {pipeline_mode = #tpu.pipeline_mode<synchronous>, transform_indices = @transform_1, window_bounds = array<i64: 4, 8, 1>}, {pipeline_mode = #tpu.pipeline_mode<synchronous>, transform_indices = @transform_2, window_bounds = array<i64: 1, 8, 1>}, {pipeline_mode = #tpu.pipeline_mode<synchronous>, transform_indices = @transform_3, window_bounds = array<i64: 8, 4>}, {pipeline_mode = #tpu.pipeline_mode<synchronous>, transform_indices = @transform_4, window_bounds = array<i64: 4, 8>}, {pipeline_mode = #tpu.pipeline_mode<synchronous>, transform_indices = @transform_5, window_bounds = array<i64: 16, 72>}, {pipeline_mode = #tpu.pipeline_mode<synchronous>, transform_indices = @transform_6, window_bounds = array<i64: 1, 16, 1>}, {pipeline_mode = #tpu.pipeline_mode<synchronous>, transform_indices = @transform_7, window_bounds = array<i64: 16, 8>}, {pipeline_mode = #tpu.pipeline_mode<synchronous>, transform_indices = @transform_8, window_bounds = array<i64: 8, 16>}, {pipeline_mode = #tpu.pipeline_mode<synchronous>, transform_indices = @transform_9, window_bounds = array<i64: 1, 16, 1>}, {pipeline_mode = #tpu.pipeline_mode<synchronous>, transform_indices = @transform_10, window_bounds = array<i64: 1, 16, 1>}, {pipeline_mode = #tpu.pipeline_mode<synchronous>, transform_indices = @transform_11, window_bounds = array<i64: 2048, 5>}, {pipeline_mode = #tpu.pipeline_mode<synchronous>, transform_indices = @transform_12, window_bounds = array<i64: 1, 5>}, {pipeline_mode = #tpu.pipeline_mode<synchronous>, transform_indices = @transform_13, window_bounds = array<i64: 1, 1, 128>}, {pipeline_mode = #tpu.pipeline_mode<synchronous>, transform_indices = @transform_14, window_bounds = array<i64: 1, 1, 128>}, {pipeline_mode = #tpu.pipeline_mode<synchronous>, transform_indices = @transform_15, window_bounds = array<i64: 2, 5>}]} {
    %c0 = arith.constant 0 : index
    %c0_0 = arith.constant 0 : index
    %0 = vector.load %arg1[%c0, %c0_0] : memref<2x128xf32, #tpu.memory_space<vmem>>, vector<2x128xf32>
    %cst = arith.constant 0.000000e+00 : f32
    %1 = vector.broadcast %cst : f32 to vector<2x8x128xf32>
    %2 = vector.shape_cast %0 : vector<2x128xf32> to vector<2x1x128xf32>
    %c0_1 = arith.constant 0 : index
    %c0_2 = arith.constant 0 : index
    %c0_3 = arith.constant 0 : index
    %3 = vector.load %arg2[%c0_1, %c0_2, %c0_3] : memref<4x8x1xf32, #tpu.memory_space<vmem>>, vector<1x8x1xf32>
    %4 = vector.shape_cast %3 : vector<1x8x1xf32> to vector<8x1xf32>
    %5 = vector.shape_cast %4 : vector<8x1xf32> to vector<1x8x1xf32>
    %6 = vector.broadcast %2 : vector<2x1x128xf32> to vector<2x8x128xf32>
    %7 = vector.broadcast %5 : vector<1x8x1xf32> to vector<2x8x128xf32>
    %8 = arith.mulf %6, %7 : vector<2x8x128xf32>
    %9 = arith.addf %1, %8 : vector<2x8x128xf32>
    %c127_i32 = arith.constant 127 : i32
    %10 = tpu.dynamic_rotate %0 by %c127_i32 dim 1 : vector<2x128xf32>, i32 -> vector<2x128xf32>
    %11 = vector.shape_cast %10 : vector<2x128xf32> to vector<2x1x128xf32>
    %c1 = arith.constant 1 : index
    %c0_4 = arith.constant 0 : index
    %c0_5 = arith.constant 0 : index
    %12 = vector.load %arg2[%c1, %c0_4, %c0_5] : memref<4x8x1xf32, #tpu.memory_space<vmem>>, vector<1x8x1xf32>
    %13 = vector.shape_cast %12 : vector<1x8x1xf32> to vector<8x1xf32>
    %14 = vector.shape_cast %13 : vector<8x1xf32> to vector<1x8x1xf32>
    %15 = vector.broadcast %11 : vector<2x1x128xf32> to vector<2x8x128xf32>
    %16 = vector.broadcast %14 : vector<1x8x1xf32> to vector<2x8x128xf32>
    %17 = arith.mulf %15, %16 : vector<2x8x128xf32>
    %18 = arith.addf %9, %17 : vector<2x8x128xf32>
    %c117_i32 = arith.constant 117 : i32
    %19 = tpu.dynamic_rotate %0 by %c117_i32 dim 1 : vector<2x128xf32>, i32 -> vector<2x128xf32>
    %20 = vector.shape_cast %19 : vector<2x128xf32> to vector<2x1x128xf32>
    %c2 = arith.constant 2 : index
    %c0_6 = arith.constant 0 : index
    %c0_7 = arith.constant 0 : index
    %21 = vector.load %arg2[%c2, %c0_6, %c0_7] : memref<4x8x1xf32, #tpu.memory_space<vmem>>, vector<1x8x1xf32>
    %22 = vector.shape_cast %21 : vector<1x8x1xf32> to vector<8x1xf32>
    %23 = vector.shape_cast %22 : vector<8x1xf32> to vector<1x8x1xf32>
    %24 = vector.broadcast %20 : vector<2x1x128xf32> to vector<2x8x128xf32>
    %25 = vector.broadcast %23 : vector<1x8x1xf32> to vector<2x8x128xf32>
    %26 = arith.mulf %24, %25 : vector<2x8x128xf32>
    %27 = arith.addf %18, %26 : vector<2x8x128xf32>
    %c116_i32 = arith.constant 116 : i32
    %28 = tpu.dynamic_rotate %0 by %c116_i32 dim 1 : vector<2x128xf32>, i32 -> vector<2x128xf32>
    %29 = vector.shape_cast %28 : vector<2x128xf32> to vector<2x1x128xf32>
    %c3 = arith.constant 3 : index
    %c0_8 = arith.constant 0 : index
    %c0_9 = arith.constant 0 : index
    %30 = vector.load %arg2[%c3, %c0_8, %c0_9] : memref<4x8x1xf32, #tpu.memory_space<vmem>>, vector<1x8x1xf32>
    %31 = vector.shape_cast %30 : vector<1x8x1xf32> to vector<8x1xf32>
    %32 = vector.shape_cast %31 : vector<8x1xf32> to vector<1x8x1xf32>
    %33 = vector.broadcast %29 : vector<2x1x128xf32> to vector<2x8x128xf32>
    %34 = vector.broadcast %32 : vector<1x8x1xf32> to vector<2x8x128xf32>
    %35 = arith.mulf %33, %34 : vector<2x8x128xf32>
    %36 = arith.addf %27, %35 : vector<2x8x128xf32>
    %c0_10 = arith.constant 0 : index
    %c0_11 = arith.constant 0 : index
    %c0_12 = arith.constant 0 : index
    %37 = vector.load %arg3[%c0_10, %c0_11, %c0_12] : memref<1x8x1xf32, #tpu.memory_space<vmem>>, vector<1x8x1xf32>
    %38 = vector.broadcast %37 : vector<1x8x1xf32> to vector<2x8x128xf32>
    %39 = arith.addf %36, %38 : vector<2x8x128xf32>
    %cst_13 = arith.constant 0.000000e+00 : f32
    %40 = vector.broadcast %cst_13 : f32 to vector<2x8x128xf32>
    %41 = arith.maximumf %39, %40 : vector<2x8x128xf32>
    %c0_14 = arith.constant 0 : index
    %c0_15 = arith.constant 0 : index
    %c0_16 = arith.constant 0 : index
    %42 = vector.load %arg14[%c0_14, %c0_15, %c0_16] : memref<1x1x128xf32, #tpu.memory_space<vmem>>, vector<1x1x128xf32>
    %43 = vector.broadcast %42 : vector<1x1x128xf32> to vector<2x8x128xf32>
    %44 = arith.mulf %41, %43 : vector<2x8x128xf32>
    %cst_17 = arith.constant dense<0.000000e+00> : vector<2x8xf32>
    %45 = vector.multi_reduction <add>, %44, %cst_17 [2] : vector<2x8x128xf32> to vector<2x8xf32>
    %cst_18 = arith.constant 0.00999999977 : f32
    %46 = vector.broadcast %cst_18 : f32 to vector<2x8xf32>
    %47 = arith.mulf %45, %46 : vector<2x8xf32>
    %c0_19 = arith.constant 0 : index
    %c0_20 = arith.constant 0 : index
    %48 = vector.load %arg4[%c0_19, %c0_20] : memref<8x4xf32, #tpu.memory_space<vmem>>, vector<8x4xf32>
    %cst_21 = arith.constant dense<0.000000e+00> : vector<2x4xf32>
    %49 = tpu.matmul %47, %48, %cst_21 {dimension_numbers = #tpu.dot_dimension_numbers<[1], [0], [0], [1], [0, 0, 1, 1], [], []>, precision = #tpu.contract_precision<fp32>} : vector<2x8xf32>, vector<8x4xf32>, vector<2x4xf32> -> vector<2x4xf32>
    %cst_22 = arith.constant 0.000000e+00 : f32
    %50 = vector.broadcast %cst_22 : f32 to vector<2x4xf32>
    %51 = arith.maximumf %49, %50 : vector<2x4xf32>
    %c0_23 = arith.constant 0 : index
    %c0_24 = arith.constant 0 : index
    %52 = vector.load %arg5[%c0_23, %c0_24] : memref<4x8xf32, #tpu.memory_space<vmem>>, vector<4x8xf32>
    %cst_25 = arith.constant dense<0.000000e+00> : vector<2x8xf32>
    %53 = tpu.matmul %51, %52, %cst_25 {dimension_numbers = #tpu.dot_dimension_numbers<[1], [0], [0], [1], [0, 0, 1, 1], [], []>, precision = #tpu.contract_precision<fp32>} : vector<2x4xf32>, vector<4x8xf32>, vector<2x8xf32> -> vector<2x8xf32>
    %54 = arith.negf %53 : vector<2x8xf32>
    %55 = math.exp %54 : vector<2x8xf32>
    %cst_26 = arith.constant 1.000000e+00 : f32
    %56 = vector.broadcast %cst_26 : f32 to vector<2x8xf32>
    %57 = arith.addf %56, %55 : vector<2x8xf32>
    %58 = arith.divf %56, %57 : vector<2x8xf32>
    %59 = vector.shape_cast %58 : vector<2x8xf32> to vector<2x8x1xf32>
    %60 = vector.broadcast %59 : vector<2x8x1xf32> to vector<2x8x128xf32>
    %61 = arith.mulf %41, %60 : vector<2x8x128xf32>
    %c0_27 = arith.constant 0 : index
    %c0_28 = arith.constant 0 : index
    %c0_29 = arith.constant 0 : index
    %62 = vector.load %arg17[%c0_27, %c0_28, %c0_29] : memref<2x72x128xf32, #tpu.memory_space<vmem>>, vector<2x8x128xf32>
    tpu.vector_store %arg17[%c0_27, %c0_28, %c0_29], %61 {strides = array<i32>} : memref<2x72x128xf32, #tpu.memory_space<vmem>>, vector<2x8x128xf32>,
    %c127_i32_30 = arith.constant 127 : i32
    %63 = tpu.dynamic_rotate %61 by %c127_i32_30 dim 2 : vector<2x8x128xf32>, i32 -> vector<2x8x128xf32>
    %c0_31 = arith.constant 0 : index
    %c8 = arith.constant 8 : index
    %c0_32 = arith.constant 0 : index
    %64 = vector.load %arg17[%c0_31, %c8, %c0_32] : memref<2x72x128xf32, #tpu.memory_space<vmem>>, vector<2x8x128xf32>
    tpu.vector_store %arg17[%c0_31, %c8, %c0_32], %63 {strides = array<i32>} : memref<2x72x128xf32, #tpu.memory_space<vmem>>, vector<2x8x128xf32>,
    %c126_i32 = arith.constant 126 : i32
    %65 = tpu.dynamic_rotate %61 by %c126_i32 dim 2 : vector<2x8x128xf32>, i32 -> vector<2x8x128xf32>
    %c0_33 = arith.constant 0 : index
    %c16 = arith.constant 16 : index
    %c0_34 = arith.constant 0 : index
    %66 = vector.load %arg17[%c0_33, %c16, %c0_34] : memref<2x72x128xf32, #tpu.memory_space<vmem>>, vector<2x8x128xf32>
    tpu.vector_store %arg17[%c0_33, %c16, %c0_34], %65 {strides = array<i32>} : memref<2x72x128xf32, #tpu.memory_space<vmem>>, vector<2x8x128xf32>,
    %c117_i32_35 = arith.constant 117 : i32
    %67 = tpu.dynamic_rotate %61 by %c117_i32_35 dim 2 : vector<2x8x128xf32>, i32 -> vector<2x8x128xf32>
    %c0_36 = arith.constant 0 : index
    %c24 = arith.constant 24 : index
    %c0_37 = arith.constant 0 : index
    %68 = vector.load %arg17[%c0_36, %c24, %c0_37] : memref<2x72x128xf32, #tpu.memory_space<vmem>>, vector<2x8x128xf32>
    tpu.vector_store %arg17[%c0_36, %c24, %c0_37], %67 {strides = array<i32>} : memref<2x72x128xf32, #tpu.memory_space<vmem>>, vector<2x8x128xf32>,
    %c116_i32_38 = arith.constant 116 : i32
    %69 = tpu.dynamic_rotate %61 by %c116_i32_38 dim 2 : vector<2x8x128xf32>, i32 -> vector<2x8x128xf32>
    %c0_39 = arith.constant 0 : index
    %c32 = arith.constant 32 : index
    %c0_40 = arith.constant 0 : index
    %70 = vector.load %arg17[%c0_39, %c32, %c0_40] : memref<2x72x128xf32, #tpu.memory_space<vmem>>, vector<2x8x128xf32>
    tpu.vector_store %arg17[%c0_39, %c32, %c0_40], %69 {strides = array<i32>} : memref<2x72x128xf32, #tpu.memory_space<vmem>>, vector<2x8x128xf32>,
    %c115_i32 = arith.constant 115 : i32
    %71 = tpu.dynamic_rotate %61 by %c115_i32 dim 2 : vector<2x8x128xf32>, i32 -> vector<2x8x128xf32>
    %c0_41 = arith.constant 0 : index
    %c40 = arith.constant 40 : index
    %c0_42 = arith.constant 0 : index
    %72 = vector.load %arg17[%c0_41, %c40, %c0_42] : memref<2x72x128xf32, #tpu.memory_space<vmem>>, vector<2x8x128xf32>
    tpu.vector_store %arg17[%c0_41, %c40, %c0_42], %71 {strides = array<i32>} : memref<2x72x128xf32, #tpu.memory_space<vmem>>, vector<2x8x128xf32>,
    %c106_i32 = arith.constant 106 : i32
    %73 = tpu.dynamic_rotate %61 by %c106_i32 dim 2 : vector<2x8x128xf32>, i32 -> vector<2x8x128xf32>
    %c0_43 = arith.constant 0 : index
    %c48 = arith.constant 48 : index
    %c0_44 = arith.constant 0 : index
    %74 = vector.load %arg17[%c0_43, %c48, %c0_44] : memref<2x72x128xf32, #tpu.memory_space<vmem>>, vector<2x8x128xf32>
    tpu.vector_store %arg17[%c0_43, %c48, %c0_44], %73 {strides = array<i32>} : memref<2x72x128xf32, #tpu.memory_space<vmem>>, vector<2x8x128xf32>,
    %c105_i32 = arith.constant 105 : i32
    %75 = tpu.dynamic_rotate %61 by %c105_i32 dim 2 : vector<2x8x128xf32>, i32 -> vector<2x8x128xf32>
    %c0_45 = arith.constant 0 : index
    %c56 = arith.constant 56 : index
    %c0_46 = arith.constant 0 : index
    %76 = vector.load %arg17[%c0_45, %c56, %c0_46] : memref<2x72x128xf32, #tpu.memory_space<vmem>>, vector<2x8x128xf32>
    tpu.vector_store %arg17[%c0_45, %c56, %c0_46], %75 {strides = array<i32>} : memref<2x72x128xf32, #tpu.memory_space<vmem>>, vector<2x8x128xf32>,
    %c104_i32 = arith.constant 104 : i32
    %77 = tpu.dynamic_rotate %61 by %c104_i32 dim 2 : vector<2x8x128xf32>, i32 -> vector<2x8x128xf32>
    %c0_47 = arith.constant 0 : index
    %c64 = arith.constant 64 : index
    %c0_48 = arith.constant 0 : index
    %78 = vector.load %arg17[%c0_47, %c64, %c0_48] : memref<2x72x128xf32, #tpu.memory_space<vmem>>, vector<2x8x128xf32>
    tpu.vector_store %arg17[%c0_47, %c64, %c0_48], %77 {strides = array<i32>} : memref<2x72x128xf32, #tpu.memory_space<vmem>>, vector<2x8x128xf32>,
    %c0_49 = arith.constant 0 : index
    %c0_50 = arith.constant 0 : index
    %79 = vector.load %arg6[%c0_49, %c0_50] : memref<16x72xf32, #tpu.memory_space<vmem>>, vector<16x72xf32>
    %c0_51 = arith.constant 0 : index
    %c0_52 = arith.constant 0 : index
    %c0_53 = arith.constant 0 : index
    %80 = vector.load %arg17[%c0_51, %c0_52, %c0_53] : memref<2x72x128xf32, #tpu.memory_space<vmem>>, vector<1x72x128xf32>
    %81 = vector.shape_cast %80 : vector<1x72x128xf32> to vector<72x128xf32>
    %cst_54 = arith.constant dense<0.000000e+00> : vector<16x128xf32>
    %82 = tpu.matmul %79, %81, %cst_54 {dimension_numbers = #tpu.dot_dimension_numbers<[1], [0], [0], [1], [0, 0, 1, 1], [], []>, precision = #tpu.contract_precision<fp32>} : vector<16x72xf32>, vector<72x128xf32>, vector<16x128xf32> -> vector<16x128xf32>
    %c1_55 = arith.constant 1 : index
    %c0_56 = arith.constant 0 : index
    %c0_57 = arith.constant 0 : index
    %83 = vector.load %arg17[%c1_55, %c0_56, %c0_57] : memref<2x72x128xf32, #tpu.memory_space<vmem>>, vector<1x72x128xf32>
    %84 = vector.shape_cast %83 : vector<1x72x128xf32> to vector<72x128xf32>
    %cst_58 = arith.constant dense<0.000000e+00> : vector<16x128xf32>
    %85 = tpu.matmul %79, %84, %cst_58 {dimension_numbers = #tpu.dot_dimension_numbers<[1], [0], [0], [1], [0, 0, 1, 1], [], []>, precision = #tpu.contract_precision<fp32>} : vector<16x72xf32>, vector<72x128xf32>, vector<16x128xf32> -> vector<16x128xf32>
    %86 = vector.shape_cast %82 : vector<16x128xf32> to vector<1x16x128xf32>
    %87 = vector.shape_cast %85 : vector<16x128xf32> to vector<1x16x128xf32>
    %88 = tpu.concatenate %86, %87 in 0 : vector<1x16x128xf32>, vector<1x16x128xf32> -> vector<2x16x128xf32>
    %c0_59 = arith.constant 0 : index
    %c0_60 = arith.constant 0 : index
    %c0_61 = arith.constant 0 : index
    %89 = vector.load %arg7[%c0_59, %c0_60, %c0_61] : memref<1x16x1xf32, #tpu.memory_space<vmem>>, vector<1x16x1xf32>
    %90 = vector.broadcast %89 : vector<1x16x1xf32> to vector<2x16x128xf32>
    %91 = arith.addf %88, %90 : vector<2x16x128xf32>
    %c0_62 = arith.constant 0 : index
    %c0_63 = arith.constant 0 : index
    %c0_64 = arith.constant 0 : index
    %92 = vector.load %arg15[%c0_62, %c0_63, %c0_64] : memref<1x1x128xf32, #tpu.memory_space<vmem>>, vector<1x1x128xf32>
    %93 = vector.broadcast %92 : vector<1x1x128xf32> to vector<2x16x128xf32>
    %94 = arith.mulf %91, %93 : vector<2x16x128xf32>
    %cst_65 = arith.constant dense<0.000000e+00> : vector<2x16xf32>
    %95 = vector.multi_reduction <add>, %94, %cst_65 [2] : vector<2x16x128xf32> to vector<2x16xf32>
    %cst_66 = arith.constant 1.562500e-02 : f32
    %96 = vector.broadcast %cst_66 : f32 to vector<2x16xf32>
    %97 = arith.mulf %95, %96 : vector<2x16xf32>
    %c0_67 = arith.constant 0 : index
    %c0_68 = arith.constant 0 : index
    %98 = vector.load %arg8[%c0_67, %c0_68] : memref<16x8xf32, #tpu.memory_space<vmem>>, vector<16x8xf32>
    %cst_69 = arith.constant dense<0.000000e+00> : vector<2x8xf32>
    %99 = tpu.matmul %97, %98, %cst_69 {dimension_numbers = #tpu.dot_dimension_numbers<[1], [0], [0], [1], [0, 0, 1, 1], [], []>, precision = #tpu.contract_precision<fp32>} : vector<2x16xf32>, vector<16x8xf32>, vector<2x8xf32> -> vector<2x8xf32>
    %cst_70 = arith.constant 0.000000e+00 : f32
    %100 = vector.broadcast %cst_70 : f32 to vector<2x8xf32>
    %101 = arith.maximumf %99, %100 : vector<2x8xf32>
    %c0_71 = arith.constant 0 : index
    %c0_72 = arith.constant 0 : index
    %102 = vector.load %arg9[%c0_71, %c0_72] : memref<8x16xf32, #tpu.memory_space<vmem>>, vector<8x16xf32>
    %cst_73 = arith.constant dense<0.000000e+00> : vector<2x16xf32>
    %103 = tpu.matmul %101, %102, %cst_73 {dimension_numbers = #tpu.dot_dimension_numbers<[1], [0], [0], [1], [0, 0, 1, 1], [], []>, precision = #tpu.contract_precision<fp32>} : vector<2x8xf32>, vector<8x16xf32>, vector<2x16xf32> -> vector<2x16xf32>
    %104 = arith.negf %103 : vector<2x16xf32>
    %105 = math.exp %104 : vector<2x16xf32>
    %cst_74 = arith.constant 1.000000e+00 : f32
    %106 = vector.broadcast %cst_74 : f32 to vector<2x16xf32>
    %107 = arith.addf %106, %105 : vector<2x16xf32>
    %108 = arith.divf %106, %107 : vector<2x16xf32>
    %109 = vector.shape_cast %108 : vector<2x16xf32> to vector<2x16x1xf32>
    %110 = vector.broadcast %109 : vector<2x16x1xf32> to vector<2x16x128xf32>
    %111 = arith.mulf %91, %110 : vector<2x16x128xf32>
    %cst_75 = arith.constant 0.000000e+00 : f32
    %112 = vector.broadcast %cst_75 : f32 to vector<2x16x128xf32>
    %113 = arith.maximumf %111, %112 : vector<2x16x128xf32>
    %114 = vector.broadcast %92 : vector<1x1x128xf32> to vector<2x16x128xf32>
    %115 = arith.mulf %113, %114 : vector<2x16x128xf32>
    %cst_76 = arith.constant dense<0.000000e+00> : vector<16xf32>
    %116 = vector.multi_reduction <add>, %115, %cst_76 [0, 2] : vector<2x16x128xf32> to vector<16xf32>
    %117 = vector.shape_cast %116 : vector<16xf32> to vector<1x16x1xf32>
    %cst_77 = arith.constant 7.812500e-03 : f32
    %118 = vector.broadcast %cst_77 : f32 to vector<1x16x1xf32>
    %119 = arith.mulf %117, %118 : vector<1x16x1xf32>
    %120 = vector.broadcast %119 : vector<1x16x1xf32> to vector<2x16x128xf32>
    %121 = arith.subf %113, %120 : vector<2x16x128xf32>
    %122 = arith.mulf %121, %121 : vector<2x16x128xf32>
    %123 = vector.broadcast %92 : vector<1x1x128xf32> to vector<2x16x128xf32>
    %124 = arith.mulf %122, %123 : vector<2x16x128xf32>
    %cst_78 = arith.constant dense<0.000000e+00> : vector<16xf32>
    %125 = vector.multi_reduction <add>, %124, %cst_78 [0, 2] : vector<2x16x128xf32> to vector<16xf32>
    %126 = vector.shape_cast %125 : vector<16xf32> to vector<1x16x1xf32>
    %cst_79 = arith.constant 7.812500e-03 : f32
    %127 = vector.broadcast %cst_79 : f32 to vector<1x16x1xf32>
    %128 = arith.mulf %126, %127 : vector<1x16x1xf32>
    %cst_80 = arith.constant 9.99999974E-6 : f32
    %129 = vector.broadcast %cst_80 : f32 to vector<1x16x1xf32>
    %130 = arith.addf %128, %129 : vector<1x16x1xf32>
    %131 = math.rsqrt %130 : vector<1x16x1xf32>
    %132 = vector.broadcast %131 : vector<1x16x1xf32> to vector<2x16x128xf32>
    %133 = arith.mulf %121, %132 : vector<2x16x128xf32>
    %c0_81 = arith.constant 0 : index
    %c0_82 = arith.constant 0 : index
    %c0_83 = arith.constant 0 : index
    %134 = vector.load %arg10[%c0_81, %c0_82, %c0_83] : memref<1x16x1xf32, #tpu.memory_space<vmem>>, vector<1x16x1xf32>
    %135 = vector.broadcast %134 : vector<1x16x1xf32> to vector<2x16x128xf32>
    %136 = arith.mulf %133, %135 : vector<2x16x128xf32>
    %c0_84 = arith.constant 0 : index
    %c0_85 = arith.constant 0 : index
    %c0_86 = arith.constant 0 : index
    %137 = vector.load %arg11[%c0_84, %c0_85, %c0_86] : memref<1x16x1xf32, #tpu.memory_space<vmem>>, vector<1x16x1xf32>
    %138 = vector.broadcast %137 : vector<1x16x1xf32> to vector<2x16x128xf32>
    %139 = arith.addf %136, %138 : vector<2x16x128xf32>
    %cst_87 = arith.constant 0.000000e+00 : f32
    %140 = vector.broadcast %cst_87 : f32 to vector<2x16x128xf32>
    %141 = arith.maximumf %139, %140 : vector<2x16x128xf32>
    %142 = vector.extract_strided_slice %141 {offsets = [0, 0, 0], sizes = [2, 1, 128], strides = [1, 1, 1]} : vector<2x16x128xf32> to vector<2x1x128xf32>
    %143 = vector.shape_cast %142 : vector<2x1x128xf32> to vector<2x128xf32>
    %c0_88 = arith.constant 0 : index
    %c0_89 = arith.constant 0 : index
    %144 = vector.load %arg18[%c0_88, %c0_89] : memref<2x2048xf32, #tpu.memory_space<vmem>>, vector<2x128xf32>
    tpu.vector_store %arg18[%c0_88, %c0_89], %143 {strides = array<i32>} : memref<2x2048xf32, #tpu.memory_space<vmem>>, vector<2x128xf32>,
    %145 = vector.extract_strided_slice %141 {offsets = [0, 1, 0], sizes = [2, 1, 128], strides = [1, 1, 1]} : vector<2x16x128xf32> to vector<2x1x128xf32>
    %146 = vector.shape_cast %145 : vector<2x1x128xf32> to vector<2x128xf32>
    %c0_90 = arith.constant 0 : index
    %c128 = arith.constant 128 : index
    %147 = vector.load %arg18[%c0_90, %c128] : memref<2x2048xf32, #tpu.memory_space<vmem>>, vector<2x128xf32>
    tpu.vector_store %arg18[%c0_90, %c128], %146 {strides = array<i32>} : memref<2x2048xf32, #tpu.memory_space<vmem>>, vector<2x128xf32>,
    %148 = vector.extract_strided_slice %141 {offsets = [0, 2, 0], sizes = [2, 1, 128], strides = [1, 1, 1]} : vector<2x16x128xf32> to vector<2x1x128xf32>
    %149 = vector.shape_cast %148 : vector<2x1x128xf32> to vector<2x128xf32>
    %c0_91 = arith.constant 0 : index
    %c256 = arith.constant 256 : index
    %150 = vector.load %arg18[%c0_91, %c256] : memref<2x2048xf32, #tpu.memory_space<vmem>>, vector<2x128xf32>
    tpu.vector_store %arg18[%c0_91, %c256], %149 {strides = array<i32>} : memref<2x2048xf32, #tpu.memory_space<vmem>>, vector<2x128xf32>,
    %151 = vector.extract_strided_slice %141 {offsets = [0, 3, 0], sizes = [2, 1, 128], strides = [1, 1, 1]} : vector<2x16x128xf32> to vector<2x1x128xf32>
    %152 = vector.shape_cast %151 : vector<2x1x128xf32> to vector<2x128xf32>
    %c0_92 = arith.constant 0 : index
    %c384 = arith.constant 384 : index
    %153 = vector.load %arg18[%c0_92, %c384] : memref<2x2048xf32, #tpu.memory_space<vmem>>, vector<2x128xf32>
    tpu.vector_store %arg18[%c0_92, %c384], %152 {strides = array<i32>} : memref<2x2048xf32, #tpu.memory_space<vmem>>, vector<2x128xf32>,
    %154 = vector.extract_strided_slice %141 {offsets = [0, 4, 0], sizes = [2, 1, 128], strides = [1, 1, 1]} : vector<2x16x128xf32> to vector<2x1x128xf32>
    %155 = vector.shape_cast %154 : vector<2x1x128xf32> to vector<2x128xf32>
    %c0_93 = arith.constant 0 : index
    %c512 = arith.constant 512 : index
    %156 = vector.load %arg18[%c0_93, %c512] : memref<2x2048xf32, #tpu.memory_space<vmem>>, vector<2x128xf32>
    tpu.vector_store %arg18[%c0_93, %c512], %155 {strides = array<i32>} : memref<2x2048xf32, #tpu.memory_space<vmem>>, vector<2x128xf32>,
    %157 = vector.extract_strided_slice %141 {offsets = [0, 5, 0], sizes = [2, 1, 128], strides = [1, 1, 1]} : vector<2x16x128xf32> to vector<2x1x128xf32>
    %158 = vector.shape_cast %157 : vector<2x1x128xf32> to vector<2x128xf32>
    %c0_94 = arith.constant 0 : index
    %c640 = arith.constant 640 : index
    %159 = vector.load %arg18[%c0_94, %c640] : memref<2x2048xf32, #tpu.memory_space<vmem>>, vector<2x128xf32>
    tpu.vector_store %arg18[%c0_94, %c640], %158 {strides = array<i32>} : memref<2x2048xf32, #tpu.memory_space<vmem>>, vector<2x128xf32>,
    %160 = vector.extract_strided_slice %141 {offsets = [0, 6, 0], sizes = [2, 1, 128], strides = [1, 1, 1]} : vector<2x16x128xf32> to vector<2x1x128xf32>
    %161 = vector.shape_cast %160 : vector<2x1x128xf32> to vector<2x128xf32>
    %c0_95 = arith.constant 0 : index
    %c768 = arith.constant 768 : index
    %162 = vector.load %arg18[%c0_95, %c768] : memref<2x2048xf32, #tpu.memory_space<vmem>>, vector<2x128xf32>
    tpu.vector_store %arg18[%c0_95, %c768], %161 {strides = array<i32>} : memref<2x2048xf32, #tpu.memory_space<vmem>>, vector<2x128xf32>,
    %163 = vector.extract_strided_slice %141 {offsets = [0, 7, 0], sizes = [2, 1, 128], strides = [1, 1, 1]} : vector<2x16x128xf32> to vector<2x1x128xf32>
    %164 = vector.shape_cast %163 : vector<2x1x128xf32> to vector<2x128xf32>
    %c0_96 = arith.constant 0 : index
    %c896 = arith.constant 896 : index
    %165 = vector.load %arg18[%c0_96, %c896] : memref<2x2048xf32, #tpu.memory_space<vmem>>, vector<2x128xf32>
    tpu.vector_store %arg18[%c0_96, %c896], %164 {strides = array<i32>} : memref<2x2048xf32, #tpu.memory_space<vmem>>, vector<2x128xf32>,
    %166 = vector.extract_strided_slice %141 {offsets = [0, 8, 0], sizes = [2, 1, 128], strides = [1, 1, 1]} : vector<2x16x128xf32> to vector<2x1x128xf32>
    %167 = vector.shape_cast %166 : vector<2x1x128xf32> to vector<2x128xf32>
    %c0_97 = arith.constant 0 : index
    %c1024 = arith.constant 1024 : index
    %168 = vector.load %arg18[%c0_97, %c1024] : memref<2x2048xf32, #tpu.memory_space<vmem>>, vector<2x128xf32>
    tpu.vector_store %arg18[%c0_97, %c1024], %167 {strides = array<i32>} : memref<2x2048xf32, #tpu.memory_space<vmem>>, vector<2x128xf32>,
    %169 = vector.extract_strided_slice %141 {offsets = [0, 9, 0], sizes = [2, 1, 128], strides = [1, 1, 1]} : vector<2x16x128xf32> to vector<2x1x128xf32>
    %170 = vector.shape_cast %169 : vector<2x1x128xf32> to vector<2x128xf32>
    %c0_98 = arith.constant 0 : index
    %c1152 = arith.constant 1152 : index
    %171 = vector.load %arg18[%c0_98, %c1152] : memref<2x2048xf32, #tpu.memory_space<vmem>>, vector<2x128xf32>
    tpu.vector_store %arg18[%c0_98, %c1152], %170 {strides = array<i32>} : memref<2x2048xf32, #tpu.memory_space<vmem>>, vector<2x128xf32>,
    %172 = vector.extract_strided_slice %141 {offsets = [0, 10, 0], sizes = [2, 1, 128], strides = [1, 1, 1]} : vector<2x16x128xf32> to vector<2x1x128xf32>
    %173 = vector.shape_cast %172 : vector<2x1x128xf32> to vector<2x128xf32>
    %c0_99 = arith.constant 0 : index
    %c1280 = arith.constant 1280 : index
    %174 = vector.load %arg18[%c0_99, %c1280] : memref<2x2048xf32, #tpu.memory_space<vmem>>, vector<2x128xf32>
    tpu.vector_store %arg18[%c0_99, %c1280], %173 {strides = array<i32>} : memref<2x2048xf32, #tpu.memory_space<vmem>>, vector<2x128xf32>,
    %175 = vector.extract_strided_slice %141 {offsets = [0, 11, 0], sizes = [2, 1, 128], strides = [1, 1, 1]} : vector<2x16x128xf32> to vector<2x1x128xf32>
    %176 = vector.shape_cast %175 : vector<2x1x128xf32> to vector<2x128xf32>
    %c0_100 = arith.constant 0 : index
    %c1408 = arith.constant 1408 : index
    %177 = vector.load %arg18[%c0_100, %c1408] : memref<2x2048xf32, #tpu.memory_space<vmem>>, vector<2x128xf32>
    tpu.vector_store %arg18[%c0_100, %c1408], %176 {strides = array<i32>} : memref<2x2048xf32, #tpu.memory_space<vmem>>, vector<2x128xf32>,
    %178 = vector.extract_strided_slice %141 {offsets = [0, 12, 0], sizes = [2, 1, 128], strides = [1, 1, 1]} : vector<2x16x128xf32> to vector<2x1x128xf32>
    %179 = vector.shape_cast %178 : vector<2x1x128xf32> to vector<2x128xf32>
    %c0_101 = arith.constant 0 : index
    %c1536 = arith.constant 1536 : index
    %180 = vector.load %arg18[%c0_101, %c1536] : memref<2x2048xf32, #tpu.memory_space<vmem>>, vector<2x128xf32>
    tpu.vector_store %arg18[%c0_101, %c1536], %179 {strides = array<i32>} : memref<2x2048xf32, #tpu.memory_space<vmem>>, vector<2x128xf32>,
    %181 = vector.extract_strided_slice %141 {offsets = [0, 13, 0], sizes = [2, 1, 128], strides = [1, 1, 1]} : vector<2x16x128xf32> to vector<2x1x128xf32>
    %182 = vector.shape_cast %181 : vector<2x1x128xf32> to vector<2x128xf32>
    %c0_102 = arith.constant 0 : index
    %c1664 = arith.constant 1664 : index
    %183 = vector.load %arg18[%c0_102, %c1664] : memref<2x2048xf32, #tpu.memory_space<vmem>>, vector<2x128xf32>
    tpu.vector_store %arg18[%c0_102, %c1664], %182 {strides = array<i32>} : memref<2x2048xf32, #tpu.memory_space<vmem>>, vector<2x128xf32>,
    %184 = vector.extract_strided_slice %141 {offsets = [0, 14, 0], sizes = [2, 1, 128], strides = [1, 1, 1]} : vector<2x16x128xf32> to vector<2x1x128xf32>
    %185 = vector.shape_cast %184 : vector<2x1x128xf32> to vector<2x128xf32>
    %c0_103 = arith.constant 0 : index
    %c1792 = arith.constant 1792 : index
    %186 = vector.load %arg18[%c0_103, %c1792] : memref<2x2048xf32, #tpu.memory_space<vmem>>, vector<2x128xf32>
    tpu.vector_store %arg18[%c0_103, %c1792], %185 {strides = array<i32>} : memref<2x2048xf32, #tpu.memory_space<vmem>>, vector<2x128xf32>,
    %187 = vector.extract_strided_slice %141 {offsets = [0, 15, 0], sizes = [2, 1, 128], strides = [1, 1, 1]} : vector<2x16x128xf32> to vector<2x1x128xf32>
    %188 = vector.shape_cast %187 : vector<2x1x128xf32> to vector<2x128xf32>
    %c0_104 = arith.constant 0 : index
    %c1920 = arith.constant 1920 : index
    %189 = vector.load %arg18[%c0_104, %c1920] : memref<2x2048xf32, #tpu.memory_space<vmem>>, vector<2x128xf32>
    tpu.vector_store %arg18[%c0_104, %c1920], %188 {strides = array<i32>} : memref<2x2048xf32, #tpu.memory_space<vmem>>, vector<2x128xf32>,
    %c0_105 = arith.constant 0 : index
    %c0_106 = arith.constant 0 : index
    %190 = vector.load %arg18[%c0_105, %c0_106] : memref<2x2048xf32, #tpu.memory_space<vmem>>, vector<2x2048xf32>
    %c0_107 = arith.constant 0 : index
    %c0_108 = arith.constant 0 : index
    %191 = vector.load %arg12[%c0_107, %c0_108] : memref<2048x5xf32, #tpu.memory_space<vmem>>, vector<2048x5xf32>
    %cst_109 = arith.constant dense<0.000000e+00> : vector<2x5xf32>
    %192 = tpu.matmul %190, %191, %cst_109 {dimension_numbers = #tpu.dot_dimension_numbers<[1], [0], [0], [1], [0, 0, 1, 1], [], []>, precision = #tpu.contract_precision<fp32>} : vector<2x2048xf32>, vector<2048x5xf32>, vector<2x5xf32> -> vector<2x5xf32>
    %c0_110 = arith.constant 0 : index
    %c0_111 = arith.constant 0 : index
    %193 = vector.load %arg13[%c0_110, %c0_111] : memref<1x5xf32, #tpu.memory_space<vmem>>, vector<1x5xf32>
    %194 = vector.broadcast %193 : vector<1x5xf32> to vector<2x5xf32>
    %195 = arith.addf %192, %194 : vector<2x5xf32>
    %cst_112 = arith.constant dense<0xFF800000> : vector<2xf32>
    %196 = vector.multi_reduction <maximumf>, %195, %cst_112 [1] : vector<2x5xf32> to vector<2xf32>
    %197 = vector.shape_cast %196 : vector<2xf32> to vector<2x1xf32>
    %198 = vector.broadcast %197 : vector<2x1xf32> to vector<2x5xf32>
    %199 = arith.subf %195, %198 : vector<2x5xf32>
    %200 = math.exp %199 : vector<2x5xf32>
    %cst_113 = arith.constant dense<0.000000e+00> : vector<2xf32>
    %201 = vector.multi_reduction <add>, %200, %cst_113 [1] : vector<2x5xf32> to vector<2xf32>
    %202 = vector.shape_cast %201 : vector<2xf32> to vector<2x1xf32>
    %203 = vector.broadcast %202 : vector<2x1xf32> to vector<2x5xf32>
    %204 = arith.divf %200, %203 : vector<2x5xf32>
    %c0_114 = arith.constant 0 : index
    %c0_115 = arith.constant 0 : index
    %205 = vector.load %arg16[%c0_114, %c0_115] : memref<2x5xf32, #tpu.memory_space<vmem>>, vector<2x5xf32>
    tpu.vector_store %arg16[%c0_114, %c0_115], %204 {strides = array<i32>} : memref<2x5xf32, #tpu.memory_space<vmem>>, vector<2x5xf32>,
    return
  }
  func.func @transform_0(%arg0: i32) -> (i32, i32) {
    %c0_i32 = arith.constant 0 : i32
    %c0_i32_0 = arith.constant 0 : i32
    %c0_i32_1 = arith.constant 0 : i32
    return %c0_i32, %c0_i32_0 : i32, i32
  }
  func.func @transform_1(%arg0: i32) -> (i32, i32, i32) {
    %c0_i32 = arith.constant 0 : i32
    %c0_i32_0 = arith.constant 0 : i32
    %c0_i32_1 = arith.constant 0 : i32
    %c0_i32_2 = arith.constant 0 : i32
    return %c0_i32, %c0_i32_0, %c0_i32_1 : i32, i32, i32
  }
  func.func @transform_2(%arg0: i32) -> (i32, i32, i32) {
    %c0_i32 = arith.constant 0 : i32
    %c0_i32_0 = arith.constant 0 : i32
    %c0_i32_1 = arith.constant 0 : i32
    %c0_i32_2 = arith.constant 0 : i32
    return %c0_i32, %c0_i32_0, %c0_i32_1 : i32, i32, i32
  }
  func.func @transform_3(%arg0: i32) -> (i32, i32) {
    %c0_i32 = arith.constant 0 : i32
    %c0_i32_0 = arith.constant 0 : i32
    %c0_i32_1 = arith.constant 0 : i32
    return %c0_i32, %c0_i32_0 : i32, i32
  }
  func.func @transform_4(%arg0: i32) -> (i32, i32) {
    %c0_i32 = arith.constant 0 : i32
    %c0_i32_0 = arith.constant 0 : i32
    %c0_i32_1 = arith.constant 0 : i32
    return %c0_i32, %c0_i32_0 : i32, i32
  }
  func.func @transform_5(%arg0: i32) -> (i32, i32) {
    %c0_i32 = arith.constant 0 : i32
    %c0_i32_0 = arith.constant 0 : i32
    %c0_i32_1 = arith.constant 0 : i32
    return %c0_i32, %c0_i32_0 : i32, i32
  }
  func.func @transform_6(%arg0: i32) -> (i32, i32, i32) {
    %c0_i32 = arith.constant 0 : i32
    %c0_i32_0 = arith.constant 0 : i32
    %c0_i32_1 = arith.constant 0 : i32
    %c0_i32_2 = arith.constant 0 : i32
    return %c0_i32, %c0_i32_0, %c0_i32_1 : i32, i32, i32
  }
  func.func @transform_7(%arg0: i32) -> (i32, i32) {
    %c0_i32 = arith.constant 0 : i32
    %c0_i32_0 = arith.constant 0 : i32
    %c0_i32_1 = arith.constant 0 : i32
    return %c0_i32, %c0_i32_0 : i32, i32
  }
  func.func @transform_8(%arg0: i32) -> (i32, i32) {
    %c0_i32 = arith.constant 0 : i32
    %c0_i32_0 = arith.constant 0 : i32
    %c0_i32_1 = arith.constant 0 : i32
    return %c0_i32, %c0_i32_0 : i32, i32
  }
  func.func @transform_9(%arg0: i32) -> (i32, i32, i32) {
    %c0_i32 = arith.constant 0 : i32
    %c0_i32_0 = arith.constant 0 : i32
    %c0_i32_1 = arith.constant 0 : i32
    %c0_i32_2 = arith.constant 0 : i32
    return %c0_i32, %c0_i32_0, %c0_i32_1 : i32, i32, i32
  }
  func.func @transform_10(%arg0: i32) -> (i32, i32, i32) {
    %c0_i32 = arith.constant 0 : i32
    %c0_i32_0 = arith.constant 0 : i32
    %c0_i32_1 = arith.constant 0 : i32
    %c0_i32_2 = arith.constant 0 : i32
    return %c0_i32, %c0_i32_0, %c0_i32_1 : i32, i32, i32
  }
  func.func @transform_11(%arg0: i32) -> (i32, i32) {
    %c0_i32 = arith.constant 0 : i32
    %c0_i32_0 = arith.constant 0 : i32
    %c0_i32_1 = arith.constant 0 : i32
    return %c0_i32, %c0_i32_0 : i32, i32
  }
  func.func @transform_12(%arg0: i32) -> (i32, i32) {
    %c0_i32 = arith.constant 0 : i32
    %c0_i32_0 = arith.constant 0 : i32
    %c0_i32_1 = arith.constant 0 : i32
    return %c0_i32, %c0_i32_0 : i32, i32
  }
  func.func @transform_13(%arg0: i32) -> (i32, i32, i32) {
    %c0_i32 = arith.constant 0 : i32
    %c0_i32_0 = arith.constant 0 : i32
    %c0_i32_1 = arith.constant 0 : i32
    %c0_i32_2 = arith.constant 0 : i32
    return %c0_i32, %c0_i32_0, %c0_i32_1 : i32, i32, i32
  }
  func.func @transform_14(%arg0: i32) -> (i32, i32, i32) {
    %c0_i32 = arith.constant 0 : i32
    %c0_i32_0 = arith.constant 0 : i32
    %c0_i32_1 = arith.constant 0 : i32
    %c0_i32_2 = arith.constant 0 : i32
    return %c0_i32, %c0_i32_0, %c0_i32_1 : i32, i32, i32
  }
  func.func @transform_15(%arg0: i32) -> (i32, i32) {
    %c0_i32 = arith.constant 0 : i32
    %c0_i32_0 = arith.constant 0 : i32
    %c0_i32_1 = arith.constant 0 : i32
    return %c0_i32, %c0_i32_0 : i32, i32
  }
}

</mosaic_0001>

<llo_original>
// kernel: se_forward.1
$region0: #{se_forward.1}
  #allocation0 [shape = 'u32[]', space=smem, size = 0x4, offset = 0x4, fixed_abs, tag = 'smem constant byte address 0x4 - core index']
  #allocation1 [shape = 'u32[144,128]{1,0:T(1,128)}', space=vmem, size = 0x12000, scoped, tag = 'internal scratch']
  #allocation2 [shape = 'f32[2,72,128]{2,1,0:T(8,128)}', space=vmem, size = 0x12000, scoped, tag = 'scratch operand']
  #allocation3 [shape = 'f32[2,2048]{1,0:T(2,128)}', space=vmem, size = 0x4000, scoped, tag = 'scratch operand']
  %s0 = inlined_call_operand.vmem [shape: f32[2,128], index: 0, kind: input, shape index: {}]
  %s1 = inlined_call_operand.vmem [shape: f32[4,8,1], index: 1, kind: input, shape index: {}]
  %s2 = inlined_call_operand.vmem [shape: f32[1,8,1], index: 2, kind: input, shape index: {}]
  %s3 = inlined_call_operand.vmem [shape: f32[8,4], index: 3, kind: input, shape index: {}]
  %s4 = inlined_call_operand.vmem [shape: f32[4,8], index: 4, kind: input, shape index: {}]
  %s5 = inlined_call_operand.vmem [shape: f32[16,72], index: 5, kind: input, shape index: {}]
  %s6 = inlined_call_operand.vmem [shape: f32[1,16,1], index: 6, kind: input, shape index: {}]
  %s7 = inlined_call_operand.vmem [shape: f32[16,8], index: 7, kind: input, shape index: {}]
  %s8 = inlined_call_operand.vmem [shape: f32[8,16], index: 8, kind: input, shape index: {}]
  %s9 = inlined_call_operand.vmem [shape: f32[1,16,1], index: 9, kind: input, shape index: {}]
  %s10 = inlined_call_operand.vmem [shape: f32[1,16,1], index: 10, kind: input, shape index: {}]
  %s11 = inlined_call_operand.vmem [shape: f32[2048,5], index: 11, kind: input, shape index: {}]
  %s12 = inlined_call_operand.vmem [shape: f32[1,5], index: 12, kind: input, shape index: {}]
  %s13 = inlined_call_operand.vmem [shape: f32[1,1,128], index: 13, kind: input, shape index: {}]
  %s14 = inlined_call_operand.vmem [shape: f32[1,1,128], index: 14, kind: input, shape index: {}]
  %s15 = inlined_call_operand.hbm [shape: f32[2,5], index: 15, kind: output, shape index: {}]
  %s16 = sld [smem:[#allocation0]]
  $region70: #{se_forward.1} parent=0
    _
  %s18 = ssub.s32 1, %s16
  %s19 = scalar_select 0, %s18, %s16
  $region1: #{se_forward.1} parent=0
    #allocation4 [shape = 'u8[1024]{0}', space=vmem, size = 0x400, scoped, tag = 'output window, operand 0, single buffered']
    #allocation5 [shape = 's32[1]{0}', space=sflag, size = 0x4, scoped, tag = 'scoped memory for se_forward.1']
    %20 = vsyncpa [#allocation5], 0
    // Predicated region
    $region2: #{se_forward.1} parent=1 // pred_check
      _
    $region3: #{se_forward.1} parent=1 // pred_check_branch
      %22 = sbr.rel (0) target = $region5
    $region4: #{se_forward.1} parent=1 // pred_region
      _
    $region5: #{se_forward.1} parent=1 // pred_fallthru
      _
    // Predicated region
    $region6: #{se_forward.1} parent=1 // pred_check
      _
    $region7: #{se_forward.1} parent=1 // pred_check_branch
      %24 = sbr.rel (0) target = $region9
    $region8: #{se_forward.1} parent=1 // pred_region
      _
    $region9: #{se_forward.1} parent=1 // pred_fallthru
      _
    // Predicated region
    $region10: #{se_forward.1} parent=1 // pred_check
      _
    $region11: #{se_forward.1} parent=1 // pred_check_branch
      %26 = sbr.rel (0) target = $region13
    $region12: #{se_forward.1} parent=1 // pred_region
      _
    $region13: #{se_forward.1} parent=1 // pred_fallthru
      _
    // Predicated region
    $region14: #{se_forward.1} parent=1 // pred_check
      _
    $region15: #{se_forward.1} parent=1 // pred_check_branch
      %28 = sbr.rel (0) target = $region17
    $region16: #{se_forward.1} parent=1 // pred_region
      _
    $region17: #{se_forward.1} parent=1 // pred_fallthru
      _
    // Predicated region
    $region18: #{se_forward.1} parent=1 // pred_check
      _
    $region19: #{se_forward.1} parent=1 // pred_check_branch
      %30 = sbr.rel (0) target = $region21
    $region20: #{se_forward.1} parent=1 // pred_region
      _
    $region21: #{se_forward.1} parent=1 // pred_fallthru
      _
    // Predicated region
    $region22: #{se_forward.1} parent=1 // pred_check
      _
    $region23: #{se_forward.1} parent=1 // pred_check_branch
      %32 = sbr.rel (0) target = $region25
    $region24: #{se_forward.1} parent=1 // pred_region
      _
    $region25: #{se_forward.1} parent=1 // pred_fallthru
      _
    // Predicated region
    $region26: #{se_forward.1} parent=1 // pred_check
      _
    $region27: #{se_forward.1} parent=1 // pred_check_branch
      %34 = sbr.rel (0) target = $region29
    $region28: #{se_forward.1} parent=1 // pred_region
      _
    $region29: #{se_forward.1} parent=1 // pred_fallthru
      _
    // Predicated region
    $region30: #{se_forward.1} parent=1 // pred_check
      _
    $region31: #{se_forward.1} parent=1 // pred_check_branch
      %36 = sbr.rel (0) target = $region33
    $region32: #{se_forward.1} parent=1 // pred_region
      _
    $region33: #{se_forward.1} parent=1 // pred_fallthru
      _
    // Predicated region
    $region34: #{se_forward.1} parent=1 // pred_check
      _
    $region35: #{se_forward.1} parent=1 // pred_check_branch
      %38 = sbr.rel (0) target = $region37
    $region36: #{se_forward.1} parent=1 // pred_region
      _
    $region37: #{se_forward.1} parent=1 // pred_fallthru
      _
    // Predicated region
    $region38: #{se_forward.1} parent=1 // pred_check
      _
    $region39: #{se_forward.1} parent=1 // pred_check_branch
      %40 = sbr.rel (0) target = $region41
    $region40: #{se_forward.1} parent=1 // pred_region
      _
    $region41: #{se_forward.1} parent=1 // pred_fallthru
      _
    // Predicated region
    $region42: #{se_forward.1} parent=1 // pred_check
      _
    $region43: #{se_forward.1} parent=1 // pred_check_branch
      %42 = sbr.rel (0) target = $region45
    $region44: #{se_forward.1} parent=1 // pred_region
      _
    $region45: #{se_forward.1} parent=1 // pred_fallthru
      _
    // Predicated region
    $region46: #{se_forward.1} parent=1 // pred_check
      _
    $region47: #{se_forward.1} parent=1 // pred_check_branch
      %44 = sbr.rel (0) target = $region49
    $region48: #{se_forward.1} parent=1 // pred_region
      _
    $region49: #{se_forward.1} parent=1 // pred_fallthru
      _
    // Predicated region
    $region50: #{se_forward.1} parent=1 // pred_check
      _
    $region51: #{se_forward.1} parent=1 // pred_check_branch
      %46 = sbr.rel (0) target = $region53
    $region52: #{se_forward.1} parent=1 // pred_region
      _
    $region53: #{se_forward.1} parent=1 // pred_fallthru
      _
    // Predicated region
    $region54: #{se_forward.1} parent=1 // pred_check
      _
    $region55: #{se_forward.1} parent=1 // pred_check_branch
      %48 = sbr.rel (0) target = $region57
    $region56: #{se_forward.1} parent=1 // pred_region
      _
    $region57: #{se_forward.1} parent=1 // pred_fallthru
      _
    // Predicated region
    $region58: #{se_forward.1} parent=1 // pred_check
      _
    $region59: #{se_forward.1} parent=1 // pred_check_branch
      %50 = sbr.rel (0) target = $region61
    $region60: #{se_forward.1} parent=1 // pred_region
      _
    $region61: #{se_forward.1} parent=1 // pred_fallthru
      _
    %v51 = vld [vmem:[%s0] sm:$0x3]
    %v54 = vunpack.c.l.s4 1966171168
    %v55 = vunpack.c.0.s8 %v54
    %v56 = vlaneseq
    %v57 = vshrl.u32 %v56, 7
    %v58 = vsub.s32 %v55, %v57
    %v59 = vrot.slane %v51, %v58
    %v60 = vcombine.high %v59, %v59
    %v62 = vunpack.c.l.s4 1966171168
    %v63 = vunpack.c.0.s8 %v62
    %v64 = vlaneseq
    %v65 = vshrl.u32 %v64, 7
    %v66 = vsub.s32 %v63, %v65
    %v67 = vrot.slane %v59, %v66
    %v69 = vunpack.c.l.s4 1966171168
    %v70 = vunpack.c.0.s8 %v69
    %v71 = vlaneseq
    %v72 = vshrl.u32 %v71, 7
    %v73 = vsub.s32 %v70, %v72
    %v74 = vrot.slane %v60, %v73
    %v75 = vld [vmem:[%s1] sm:$0xff]
    %v76 = vlaneseq
    %v77 = vshrl.u32 %v76, 7
    %v78 = vsub.s32 0, %v77
    %v79 = vrot.slane %v67, %v78
    %v80 = vlaneseq
    %v81 = vshrl.u32 %v80, 7
    %v82 = vsub.s32 0, %v81
    %v83 = vrot.slane %v74, %v82
    %87 = vset.pattern.permute.xlu0 0
    %88 = vperm.xlu0 %87, %v75
    %v89 = vpop.permute.xlu0 %88
    %v91 = vmul.f32 %v79, %v89
    %v92 = vmul.f32 %v83, %v89
    %v93 = vadd.f32 %v91, 0.0
    %v94 = vadd.f32 %v92, 0.0
    %95 = vrot.lane.b32.xlu0 %v51, 127
    %v96 = vpop.permute.xlu0 %95
    %v99 = vunpack.c.l.s4 1966171168
    %v100 = vunpack.c.0.s8 %v99
    %v101 = vlaneseq
    %v102 = vshrl.u32 %v101, 7
    %v103 = vsub.s32 %v100, %v102
    %v104 = vrot.slane %v96, %v103
    %v105 = vcombine.high %v104, %v104
    %v107 = vunpack.c.l.s4 1966171168
    %v108 = vunpack.c.0.s8 %v107
    %v109 = vlaneseq
    %v110 = vshrl.u32 %v109, 7
    %v111 = vsub.s32 %v108, %v110
    %v112 = vrot.slane %v104, %v111
    %v114 = vunpack.c.l.s4 1966171168
    %v115 = vunpack.c.0.s8 %v114
    %v116 = vlaneseq
    %v117 = vshrl.u32 %v116, 7
    %v118 = vsub.s32 %v115, %v117
    %v119 = vrot.slane %v105, %v118
    %s120 = scalar_lea.vmem %s1, 8
    %v121 = vld [vmem:[%s120] sm:$0xff]
    %v122 = vlaneseq
    %v123 = vshrl.u32 %v122, 7
    %v124 = vsub.s32 0, %v123
    %v125 = vrot.slane %v112, %v124
    %v126 = vlaneseq
    %v127 = vshrl.u32 %v126, 7
    %v128 = vsub.s32 0, %v127
    %v129 = vrot.slane %v119, %v128
    %133 = vset.pattern.permute.xlu0 0
    %134 = vperm.xlu0 %133, %v121
    %v135 = vpop.permute.xlu0 %134
    %v137 = vmul.f32 %v125, %v135
    %v138 = vmul.f32 %v129, %v135
    %v139 = vadd.f32 %v93, %v137
    %v140 = vadd.f32 %v94, %v138
    %141 = vrot.lane.b32.xlu0 %v51, 117
    %v142 = vpop.permute.xlu0 %141
    %v145 = vunpack.c.l.s4 1966171168
    %v146 = vunpack.c.0.s8 %v145
    %v147 = vlaneseq
    %v148 = vshrl.u32 %v147, 7
    %v149 = vsub.s32 %v146, %v148
    %v150 = vrot.slane %v142, %v149
    %v151 = vcombine.high %v150, %v150
    %v153 = vunpack.c.l.s4 1966171168
    %v154 = vunpack.c.0.s8 %v153
    %v155 = vlaneseq
    %v156 = vshrl.u32 %v155, 7
    %v157 = vsub.s32 %v154, %v156
    %v158 = vrot.slane %v150, %v157
    %v160 = vunpack.c.l.s4 1966171168
    %v161 = vunpack.c.0.s8 %v160
    %v162 = vlaneseq
    %v163 = vshrl.u32 %v162, 7
    %v164 = vsub.s32 %v161, %v163
    %v165 = vrot.slane %v151, %v164
    %s166 = scalar_lea.vmem %s1, 16
    %v167 = vld [vmem:[%s166] sm:$0xff]
    %v168 = vlaneseq
    %v169 = vshrl.u32 %v168, 7
    %v170 = vsub.s32 0, %v169
    %v171 = vrot.slane %v158, %v170
    %v172 = vlaneseq
    %v173 = vshrl.u32 %v172, 7
    %v174 = vsub.s32 0, %v173
    %v175 = vrot.slane %v165, %v174
    %179 = vset.pattern.permute.xlu0 0
    %180 = vperm.xlu0 %179, %v167
    %v181 = vpop.permute.xlu0 %180
    %v183 = vmul.f32 %v171, %v181
    %v184 = vmul.f32 %v175, %v181
    %v185 = vadd.f32 %v139, %v183
    %v186 = vadd.f32 %v140, %v184
    %187 = vrot.lane.b32.xlu0 %v51, 116
    %v188 = vpop.permute.xlu0 %187
    %v191 = vunpack.c.l.s4 1966171168
    %v192 = vunpack.c.0.s8 %v191
    %v193 = vlaneseq
    %v194 = vshrl.u32 %v193, 7
    %v195 = vsub.s32 %v192, %v194
    %v196 = vrot.slane %v188, %v195
    %v197 = vcombine.high %v196, %v196
    %v199 = vunpack.c.l.s4 1966171168
    %v200 = vunpack.c.0.s8 %v199
    %v201 = vlaneseq
    %v202 = vshrl.u32 %v201, 7
    %v203 = vsub.s32 %v200, %v202
    %v204 = vrot.slane %v196, %v203
    %v206 = vunpack.c.l.s4 1966171168
    %v207 = vunpack.c.0.s8 %v206
    %v208 = vlaneseq
    %v209 = vshrl.u32 %v208, 7
    %v210 = vsub.s32 %v207, %v209
    %v211 = vrot.slane %v197, %v210
    %s212 = scalar_lea.vmem %s1, 24
    %v213 = vld [vmem:[%s212] sm:$0xff]
    %v214 = vlaneseq
    %v215 = vshrl.u32 %v214, 7
    %v216 = vsub.s32 0, %v215
    %v217 = vrot.slane %v204, %v216
    %v218 = vlaneseq
    %v219 = vshrl.u32 %v218, 7
    %v220 = vsub.s32 0, %v219
    %v221 = vrot.slane %v211, %v220
    %225 = vset.pattern.permute.xlu0 0
    %226 = vperm.xlu0 %225, %v213
    %v227 = vpop.permute.xlu0 %226
    %v229 = vmul.f32 %v217, %v227
    %v230 = vmul.f32 %v221, %v227
    %v231 = vadd.f32 %v185, %v229
    %v232 = vadd.f32 %v186, %v230
    %v233 = vld [vmem:[%s2] sm:$0xff]
    %235 = vset.pattern.permute.xlu0 0
    %236 = vperm.xlu0 %235, %v233
    %v237 = vpop.permute.xlu0 %236
    %v239 = vadd.f32 %v231, %v237
    %v240 = vadd.f32 %v232, %v237
    %v241 = vmax.f32 %v239, 0.0
    %v242 = vmax.f32 %v240, 0.0
    %v243 = vld [vmem:[%s13] sm:$0x1]
    %v245 = vlaneseq
    %v246 = vshrl.u32 %v245, 7
    %v247 = vsub.s32 0, %v246
    %v248 = vrot.slane %v243, %v247
    %v250 = vmul.f32 %v241, %v248
    %v251 = vmul.f32 %v242, %v248
    %252 = vadd.xlane.f32.xlu0 %v250
    %v253 = vpop.xlane.xlu0 %252
    %254 = vadd.xlane.f32.xlu0 %v251
    %v255 = vpop.xlane.xlu0 %254
    %v256 = vmul.f32 %v253, 0.01
    %v257 = vmul.f32 %v255, 0.01
    %v258 = vld [vmem:[%s3] sm:$0xff]
    %v261 = vlaneseq
    %v262 = vand.u32 %v261, 127
    %v263 = vlaneseq
    %v264 = vshrl.u32 %v263, 7
    %v265 = vsub.s32 %v262, %v264
    %v266 = vrot.slane %v256, %v265
    %v267 = vlaneseq
    %v268 = vshrl.u32 %v267, 7
    %v269 = vsub.s32 %v262, %v268
    %v270 = vrot.slane %v257, %v269
    %vm271 = vcmask 1041409
    %v272 = vsel %vm271, %v270, %v266
    %vm273 = vcmask 64512
    %v274 = vsel %vm273, %v272, 0
    %276 = vmatprep.subr.mxu0 0.0
    %v277 = vand.u32 %v258, 4294901760
    %278 = vmatpush1.msra.mxu0 %v277
    %279 = vmatprep.subr.mxu0 0.0
    %280 = vmatpush1.msra.mxu0 0.0
    %281 = vmatprep.subr.mxu0 0.0
    %282 = vmatpush1.msra.mxu0 0.0
    %283 = vmatprep.subr.mxu0 0.0
    %284 = vmatpush1.msra.mxu0 0.0
    %285 = vmatprep.subr.mxu0 0.0
    %286 = vmatpush1.msra.mxu0 0.0
    %287 = vmatprep.subr.mxu0 0.0
    %288 = vmatpush1.msra.mxu0 0.0
    %289 = vmatprep.subr.mxu0 0.0
    %290 = vmatpush1.msra.mxu0 0.0
    %291 = vmatprep.subr.mxu0 0.0
    %292 = vmatpush1.msra.mxu0 0.0
    %293 = vmatprep.subr.mxu0 0.0
    %294 = vmatpush1.msra.mxu0 0.0
    %295 = vmatprep.subr.mxu0 0.0
    %296 = vmatpush1.msra.mxu0 0.0
    %297 = vmatprep.subr.mxu0 0.0
    %298 = vmatpush1.msra.mxu0 0.0
    %299 = vmatprep.subr.mxu0 0.0
    %300 = vmatpush1.msra.mxu0 0.0
    %301 = vmatprep.subr.mxu0 0.0
    %302 = vmatpush1.msra.mxu0 0.0
    %303 = vmatprep.subr.mxu0 0.0
    %304 = vmatpush1.msra.mxu0 0.0
    %305 = vmatprep.subr.mxu0 0.0
    %306 = vmatpush1.msra.mxu0 0.0
    %307 = vmatprep.subr.mxu0 0.0
    %308 = vmatpush1.msra.mxu0 0.0
    %309 = vmatprep.subr.mxu0 0.0
    %310 = vmatpush1.msra.mxu0 0.0
    %311 = vmatprep.subr.mxu0 0.0
    %312 = vmatpush1.msra.mxu0 0.0
    %313 = vmatprep.subr.mxu0 0.0
    %314 = vmatpush1.msra.mxu0 0.0
    %315 = vmatprep.subr.mxu0 0.0
    %316 = vmatpush1.msra.mxu0 0.0
    %317 = vmatprep.subr.mxu0 0.0
    %318 = vmatpush1.msra.mxu0 0.0
    %319 = vmatprep.subr.mxu0 0.0
    %320 = vmatpush1.msra.mxu0 0.0
    %321 = vmatprep.subr.mxu0 0.0
    %322 = vmatpush1.msra.mxu0 0.0
    %323 = vmatprep.subr.mxu0 0.0
    %324 = vmatpush1.msra.mxu0 0.0
    %325 = vmatprep.subr.mxu0 0.0
    %326 = vmatpush1.msra.mxu0 0.0
    %327 = vmatprep.subr.mxu0 0.0
    %328 = vmatpush1.msra.mxu0 0.0
    %329 = vmatprep.subr.mxu0 0.0
    %330 = vmatpush1.msra.mxu0 0.0
    %331 = vmatprep.subr.mxu0 0.0
    %332 = vmatpush1.msra.mxu0 0.0
    %333 = vmatprep.subr.mxu0 0.0
    %334 = vmatpush1.msra.mxu0 0.0
    %335 = vmatprep.subr.mxu0 0.0
    %336 = vmatpush1.msra.mxu0 0.0
    %337 = vmatprep.subr.mxu0 0.0
    %338 = vmatpush1.msra.mxu0 0.0
    %339 = vmatprep.subr.mxu0 0.0
    %340 = vmatpush1.msra.mxu0 0.0
    %341 = vmatprep.mubr.f32.mxu0 0.0
    %v342 = vand.u32 %v274, 4294901760
    %v343 = vsub.f32 %v274, %v342
    %v344 = vand.u32 %v343, 4294901760
    %v345 = vsub.f32 %v343, %v344
    %v346 = vand.u32 %v345, 4294901760
    %347 = vmatmul.mubr.f32.gmra.mrb[0].mxu0 %v346
    %v348 = vpop.f32.mrb[0].mxu0
    %v349 = vadd.f32 0.0, %v348
    %v350 = vpop.f32.mrb[0].mxu0
    %351 = vdwg.mxu0
    %352 = vmatprep.subr.mxu0 0.0
    %v353 = vand.u32 %v258, 4294901760
    %v354 = vsub.f32 %v258, %v353
    %v355 = vand.u32 %v354, 4294901760
    %v356 = vsub.f32 %v354, %v355
    %v357 = vand.u32 %v356, 4294901760
    %358 = vmatpush1.msra.mxu0 %v357
    %359 = vmatprep.subr.mxu0 0.0
    %360 = vmatpush1.msra.mxu0 0.0
    %361 = vmatprep.subr.mxu0 0.0
    %362 = vmatpush1.msra.mxu0 0.0
    %363 = vmatprep.subr.mxu0 0.0
    %364 = vmatpush1.msra.mxu0 0.0
    %365 = vmatprep.subr.mxu0 0.0
    %366 = vmatpush1.msra.mxu0 0.0
    %367 = vmatprep.subr.mxu0 0.0
    %368 = vmatpush1.msra.mxu0 0.0
    %369 = vmatprep.subr.mxu0 0.0
    %370 = vmatpush1.msra.mxu0 0.0
    %371 = vmatprep.subr.mxu0 0.0
    %372 = vmatpush1.msra.mxu0 0.0
    %373 = vmatprep.subr.mxu0 0.0
    %374 = vmatpush1.msra.mxu0 0.0
    %375 = vmatprep.subr.mxu0 0.0
    %376 = vmatpush1.msra.mxu0 0.0
    %377 = vmatprep.subr.mxu0 0.0
    %378 = vmatpush1.msra.mxu0 0.0
    %379 = vmatprep.subr.mxu0 0.0
    %380 = vmatpush1.msra.mxu0 0.0
    %381 = vmatprep.subr.mxu0 0.0
    %382 = vmatpush1.msra.mxu0 0.0
    %383 = vmatprep.subr.mxu0 0.0
    %384 = vmatpush1.msra.mxu0 0.0
    %385 = vmatprep.subr.mxu0 0.0
    %386 = vmatpush1.msra.mxu0 0.0
    %387 = vmatprep.subr.mxu0 0.0
    %388 = vmatpush1.msra.mxu0 0.0
    %389 = vmatprep.subr.mxu0 0.0
    %390 = vmatpush1.msra.mxu0 0.0
    %391 = vmatprep.subr.mxu0 0.0
    %392 = vmatpush1.msra.mxu0 0.0
    %393 = vmatprep.subr.mxu0 0.0
    %394 = vmatpush1.msra.mxu0 0.0
    %395 = vmatprep.subr.mxu0 0.0
    %396 = vmatpush1.msra.mxu0 0.0
    %397 = vmatprep.subr.mxu0 0.0
    %398 = vmatpush1.msra.mxu0 0.0
    %399 = vmatprep.subr.mxu0 0.0
    %400 = vmatpush1.msra.mxu0 0.0
    %401 = vmatprep.subr.mxu0 0.0
    %402 = vmatpush1.msra.mxu0 0.0
    %403 = vmatprep.subr.mxu0 0.0
    %404 = vmatpush1.msra.mxu0 0.0
    %405 = vmatprep.subr.mxu0 0.0
    %406 = vmatpush1.msra.mxu0 0.0
    %407 = vmatprep.subr.mxu0 0.0
    %408 = vmatpush1.msra.mxu0 0.0
    %409 = vmatprep.subr.mxu0 0.0
    %410 = vmatpush1.msra.mxu0 0.0
    %411 = vmatprep.subr.mxu0 0.0
    %412 = vmatpush1.msra.mxu0 0.0
    %413 = vmatprep.subr.mxu0 0.0
    %414 = vmatpush1.msra.mxu0 0.0
    %415 = vmatprep.subr.mxu0 0.0
    %416 = vmatpush1.msra.mxu0 0.0
    %417 = vmatprep.subr.mxu0 0.0
    %418 = vmatpush1.msra.mxu0 0.0
    %419 = vmatprep.subr.mxu0 0.0
    %420 = vmatpush1.msra.mxu0 0.0
    %421 = vmatprep.mubr.f32.mxu0 0.0
    %v422 = vand.u32 %v274, 4294901760
    %423 = vmatmul.mubr.f32.gmra.mrb[0].mxu0 %v422
    %v424 = vpop.f32.mrb[0].mxu0
    %v425 = vadd.f32 %v349, %v424
    %v426 = vpop.f32.mrb[0].mxu0
    %427 = vdwg.mxu0
    %428 = vmatprep.subr.mxu0 0.0
    %v429 = vand.u32 %v258, 4294901760
    %v430 = vsub.f32 %v258, %v429
    %431 = vmatpush1.msra.mxu0 %v430
    %432 = vmatprep.subr.mxu0 0.0
    %433 = vmatpush1.msra.mxu0 0.0
    %434 = vmatprep.subr.mxu0 0.0
    %435 = vmatpush1.msra.mxu0 0.0
    %436 = vmatprep.subr.mxu0 0.0
    %437 = vmatpush1.msra.mxu0 0.0
    %438 = vmatprep.subr.mxu0 0.0
    %439 = vmatpush1.msra.mxu0 0.0
    %440 = vmatprep.subr.mxu0 0.0
    %441 = vmatpush1.msra.mxu0 0.0
    %442 = vmatprep.subr.mxu0 0.0
    %443 = vmatpush1.msra.mxu0 0.0
    %444 = vmatprep.subr.mxu0 0.0
    %445 = vmatpush1.msra.mxu0 0.0
    %446 = vmatprep.subr.mxu0 0.0
    %447 = vmatpush1.msra.mxu0 0.0
    %448 = vmatprep.subr.mxu0 0.0
    %449 = vmatpush1.msra.mxu0 0.0
    %450 = vmatprep.subr.mxu0 0.0
    %451 = vmatpush1.msra.mxu0 0.0
    %452 = vmatprep.subr.mxu0 0.0
    %453 = vmatpush1.msra.mxu0 0.0
    %454 = vmatprep.subr.mxu0 0.0
    %455 = vmatpush1.msra.mxu0 0.0
    %456 = vmatprep.subr.mxu0 0.0
    %457 = vmatpush1.msra.mxu0 0.0
    %458 = vmatprep.subr.mxu0 0.0
    %459 = vmatpush1.msra.mxu0 0.0
    %460 = vmatprep.subr.mxu0 0.0
    %461 = vmatpush1.msra.mxu0 0.0
    %462 = vmatprep.subr.mxu0 0.0
    %463 = vmatpush1.msra.mxu0 0.0
    %464 = vmatprep.subr.mxu0 0.0
    %465 = vmatpush1.msra.mxu0 0.0
    %466 = vmatprep.subr.mxu0 0.0
    %467 = vmatpush1.msra.mxu0 0.0
    %468 = vmatprep.subr.mxu0 0.0
    %469 = vmatpush1.msra.mxu0 0.0
    %470 = vmatprep.subr.mxu0 0.0
    %471 = vmatpush1.msra.mxu0 0.0
    %472 = vmatprep.subr.mxu0 0.0
    %473 = vmatpush1.msra.mxu0 0.0
    %474 = vmatprep.subr.mxu0 0.0
    %475 = vmatpush1.msra.mxu0 0.0
    %476 = vmatprep.subr.mxu0 0.0
    %477 = vmatpush1.msra.mxu0 0.0
    %478 = vmatprep.subr.mxu0 0.0
    %479 = vmatpush1.msra.mxu0 0.0
    %480 = vmatprep.subr.mxu0 0.0
    %481 = vmatpush1.msra.mxu0 0.0
    %482 = vmatprep.subr.mxu0 0.0
    %483 = vmatpush1.msra.mxu0 0.0
    %484 = vmatprep.subr.mxu0 0.0
    %485 = vmatpush1.msra.mxu0 0.0
    %486 = vmatprep.subr.mxu0 0.0
    %487 = vmatpush1.msra.mxu0 0.0
    %488 = vmatprep.subr.mxu0 0.0
    %489 = vmatpush1.msra.mxu0 0.0
    %490 = vmatprep.subr.mxu0 0.0
    %491 = vmatpush1.msra.mxu0 0.0
    %492 = vmatprep.subr.mxu0 0.0
    %493 = vmatpush1.msra.mxu0 0.0
    %494 = vmatprep.mubr.f32.mxu0 0.0
    %v495 = vand.u32 %v274, 4294901760
    %v496 = vsub.f32 %v274, %v495
    %497 = vmatmul.mubr.f32.gmra.mrb[0].mxu0 %v496
    %v498 = vpop.f32.mrb[0].mxu0
    %v499 = vadd.f32 %v425, %v498
    %v500 = vpop.f32.mrb[0].mxu0
    %501 = vdwg.mxu0
    %502 = vmatprep.subr.mxu0 0.0
    %v503 = vand.u32 %v258, 4294901760
    %504 = vmatpush1.msra.mxu0 %v503
    %505 = vmatprep.subr.mxu0 0.0
    %506 = vmatpush1.msra.mxu0 0.0
    %507 = vmatprep.subr.mxu0 0.0
    %508 = vmatpush1.msra.mxu0 0.0
    %509 = vmatprep.subr.mxu0 0.0
    %510 = vmatpush1.msra.mxu0 0.0
    %511 = vmatprep.subr.mxu0 0.0
    %512 = vmatpush1.msra.mxu0 0.0
    %513 = vmatprep.subr.mxu0 0.0
    %514 = vmatpush1.msra.mxu0 0.0
    %515 = vmatprep.subr.mxu0 0.0
    %516 = vmatpush1.msra.mxu0 0.0
    %517 = vmatprep.subr.mxu0 0.0
    %518 = vmatpush1.msra.mxu0 0.0
    %519 = vmatprep.subr.mxu0 0.0
    %520 = vmatpush1.msra.mxu0 0.0
    %521 = vmatprep.subr.mxu0 0.0
    %522 = vmatpush1.msra.mxu0 0.0
    %523 = vmatprep.subr.mxu0 0.0
    %524 = vmatpush1.msra.mxu0 0.0
    %525 = vmatprep.subr.mxu0 0.0
    %526 = vmatpush1.msra.mxu0 0.0
    %527 = vmatprep.subr.mxu0 0.0
    %528 = vmatpush1.msra.mxu0 0.0
    %529 = vmatprep.subr.mxu0 0.0
    %530 = vmatpush1.msra.mxu0 0.0
    %531 = vmatprep.subr.mxu0 0.0
    %532 = vmatpush1.msra.mxu0 0.0
    %533 = vmatprep.subr.mxu0 0.0
    %534 = vmatpush1.msra.mxu0 0.0
    %535 = vmatprep.subr.mxu0 0.0
    %536 = vmatpush1.msra.mxu0 0.0
    %537 = vmatprep.subr.mxu0 0.0
    %538 = vmatpush1.msra.mxu0 0.0
    %539 = vmatprep.subr.mxu0 0.0
    %540 = vmatpush1.msra.mxu0 0.0
    %541 = vmatprep.subr.mxu0 0.0
    %542 = vmatpush1.msra.mxu0 0.0
    %543 = vmatprep.subr.mxu0 0.0
    %544 = vmatpush1.msra.mxu0 0.0
    %545 = vmatprep.subr.mxu0 0.0
    %546 = vmatpush1.msra.mxu0 0.0
    %547 = vmatprep.subr.mxu0 0.0
    %548 = vmatpush1.msra.mxu0 0.0
    %549 = vmatprep.subr.mxu0 0.0
    %550 = vmatpush1.msra.mxu0 0.0
    %551 = vmatprep.subr.mxu0 0.0
    %552 = vmatpush1.msra.mxu0 0.0
    %553 = vmatprep.subr.mxu0 0.0
    %554 = vmatpush1.msra.mxu0 0.0
    %555 = vmatprep.subr.mxu0 0.0
    %556 = vmatpush1.msra.mxu0 0.0
    %557 = vmatprep.subr.mxu0 0.0
    %558 = vmatpush1.msra.mxu0 0.0
    %559 = vmatprep.subr.mxu0 0.0
    %560 = vmatpush1.msra.mxu0 0.0
    %561 = vmatprep.subr.mxu0 0.0
    %562 = vmatpush1.msra.mxu0 0.0
    %563 = vmatprep.subr.mxu0 0.0
    %564 = vmatpush1.msra.mxu0 0.0
    %565 = vmatprep.subr.mxu0 0.0
    %566 = vmatpush1.msra.mxu0 0.0
    %567 = vmatprep.mubr.f32.mxu0 0.0
    %v568 = vand.u32 %v274, 4294901760
    %v569 = vsub.f32 %v274, %v568
    %v570 = vand.u32 %v569, 4294901760
    %571 = vmatmul.mubr.f32.gmra.mrb[0].mxu0 %v570
    %v572 = vpop.f32.mrb[0].mxu0
    %v573 = vadd.f32 %v499, %v572
    %v574 = vpop.f32.mrb[0].mxu0
    %575 = vdwg.mxu0
    %576 = vmatprep.subr.mxu0 0.0
    %v577 = vand.u32 %v258, 4294901760
    %v578 = vsub.f32 %v258, %v577
    %v579 = vand.u32 %v578, 4294901760
    %580 = vmatpush1.msra.mxu0 %v579
    %581 = vmatprep.subr.mxu0 0.0
    %582 = vmatpush1.msra.mxu0 0.0
    %583 = vmatprep.subr.mxu0 0.0
    %584 = vmatpush1.msra.mxu0 0.0
    %585 = vmatprep.subr.mxu0 0.0
    %586 = vmatpush1.msra.mxu0 0.0
    %587 = vmatprep.subr.mxu0 0.0
    %588 = vmatpush1.msra.mxu0 0.0
    %589 = vmatprep.subr.mxu0 0.0
    %590 = vmatpush1.msra.mxu0 0.0
    %591 = vmatprep.subr.mxu0 0.0
    %592 = vmatpush1.msra.mxu0 0.0
    %593 = vmatprep.subr.mxu0 0.0
    %594 = vmatpush1.msra.mxu0 0.0
    %595 = vmatprep.subr.mxu0 0.0
    %596 = vmatpush1.msra.mxu0 0.0
    %597 = vmatprep.subr.mxu0 0.0
    %598 = vmatpush1.msra.mxu0 0.0
    %599 = vmatprep.subr.mxu0 0.0
    %600 = vmatpush1.msra.mxu0 0.0
    %601 = vmatprep.subr.mxu0 0.0
    %602 = vmatpush1.msra.mxu0 0.0
    %603 = vmatprep.subr.mxu0 0.0
    %604 = vmatpush1.msra.mxu0 0.0
    %605 = vmatprep.subr.mxu0 0.0
    %606 = vmatpush1.msra.mxu0 0.0
    %607 = vmatprep.subr.mxu0 0.0
    %608 = vmatpush1.msra.mxu0 0.0
    %609 = vmatprep.subr.mxu0 0.0
    %610 = vmatpush1.msra.mxu0 0.0
    %611 = vmatprep.subr.mxu0 0.0
    %612 = vmatpush1.msra.mxu0 0.0
    %613 = vmatprep.subr.mxu0 0.0
    %614 = vmatpush1.msra.mxu0 0.0
    %615 = vmatprep.subr.mxu0 0.0
    %616 = vmatpush1.msra.mxu0 0.0
    %617 = vmatprep.subr.mxu0 0.0
    %618 = vmatpush1.msra.mxu0 0.0
    %619 = vmatprep.subr.mxu0 0.0
    %620 = vmatpush1.msra.mxu0 0.0
    %621 = vmatprep.subr.mxu0 0.0
    %622 = vmatpush1.msra.mxu0 0.0
    %623 = vmatprep.subr.mxu0 0.0
    %624 = vmatpush1.msra.mxu0 0.0
    %625 = vmatprep.subr.mxu0 0.0
    %626 = vmatpush1.msra.mxu0 0.0
    %627 = vmatprep.subr.mxu0 0.0
    %628 = vmatpush1.msra.mxu0 0.0
    %629 = vmatprep.subr.mxu0 0.0
    %630 = vmatpush1.msra.mxu0 0.0
    %631 = vmatprep.subr.mxu0 0.0
    %632 = vmatpush1.msra.mxu0 0.0
    %633 = vmatprep.subr.mxu0 0.0
    %634 = vmatpush1.msra.mxu0 0.0
    %635 = vmatprep.subr.mxu0 0.0
    %636 = vmatpush1.msra.mxu0 0.0
    %637 = vmatprep.subr.mxu0 0.0
    %638 = vmatpush1.msra.mxu0 0.0
    %639 = vmatprep.subr.mxu0 0.0
    %640 = vmatpush1.msra.mxu0 0.0
    %641 = vmatprep.subr.mxu0 0.0
    %642 = vmatpush1.msra.mxu0 0.0
    %643 = vmatprep.mubr.f32.mxu0 0.0
    %v644 = vand.u32 %v274, 4294901760
    %645 = vmatmul.mubr.f32.gmra.mrb[0].mxu0 %v644
    %v646 = vpop.f32.mrb[0].mxu0
    %v647 = vadd.f32 %v573, %v646
    %v648 = vpop.f32.mrb[0].mxu0
    %649 = vdwg.mxu0
    %650 = vmatprep.subr.mxu0 0.0
    %v651 = vand.u32 %v258, 4294901760
    %652 = vmatpush1.msra.mxu0 %v651
    %653 = vmatprep.subr.mxu0 0.0
    %654 = vmatpush1.msra.mxu0 0.0
    %655 = vmatprep.subr.mxu0 0.0
    %656 = vmatpush1.msra.mxu0 0.0
    %657 = vmatprep.subr.mxu0 0.0
    %658 = vmatpush1.msra.mxu0 0.0
    %659 = vmatprep.subr.mxu0 0.0
    %660 = vmatpush1.msra.mxu0 0.0
    %661 = vmatprep.subr.mxu0 0.0
    %662 = vmatpush1.msra.mxu0 0.0
    %663 = vmatprep.subr.mxu0 0.0
    %664 = vmatpush1.msra.mxu0 0.0
    %665 = vmatprep.subr.mxu0 0.0
    %666 = vmatpush1.msra.mxu0 0.0
    %667 = vmatprep.subr.mxu0 0.0
    %668 = vmatpush1.msra.mxu0 0.0
    %669 = vmatprep.subr.mxu0 0.0
    %670 = vmatpush1.msra.mxu0 0.0
    %671 = vmatprep.subr.mxu0 0.0
    %672 = vmatpush1.msra.mxu0 0.0
    %673 = vmatprep.subr.mxu0 0.0
    %674 = vmatpush1.msra.mxu0 0.0
    %675 = vmatprep.subr.mxu0 0.0
    %676 = vmatpush1.msra.mxu0 0.0
    %677 = vmatprep.subr.mxu0 0.0
    %678 = vmatpush1.msra.mxu0 0.0
    %679 = vmatprep.subr.mxu0 0.0
    %680 = vmatpush1.msra.mxu0 0.0
    %681 = vmatprep.subr.mxu0 0.0
    %682 = vmatpush1.msra.mxu0 0.0
    %683 = vmatprep.subr.mxu0 0.0
    %684 = vmatpush1.msra.mxu0 0.0
    %685 = vmatprep.subr.mxu0 0.0
    %686 = vmatpush1.msra.mxu0 0.0
    %687 = vmatprep.subr.mxu0 0.0
    %688 = vmatpush1.msra.mxu0 0.0
    %689 = vmatprep.subr.mxu0 0.0
    %690 = vmatpush1.msra.mxu0 0.0
    %691 = vmatprep.subr.mxu0 0.0
    %692 = vmatpush1.msra.mxu0 0.0
    %693 = vmatprep.subr.mxu0 0.0
    %694 = vmatpush1.msra.mxu0 0.0
    %695 = vmatprep.subr.mxu0 0.0
    %696 = vmatpush1.msra.mxu0 0.0
    %697 = vmatprep.subr.mxu0 0.0
    %698 = vmatpush1.msra.mxu0 0.0
    %699 = vmatprep.subr.mxu0 0.0
    %700 = vmatpush1.msra.mxu0 0.0
    %701 = vmatprep.subr.mxu0 0.0
    %702 = vmatpush1.msra.mxu0 0.0
    %703 = vmatprep.subr.mxu0 0.0
    %704 = vmatpush1.msra.mxu0 0.0
    %705 = vmatprep.subr.mxu0 0.0
    %706 = vmatpush1.msra.mxu0 0.0
    %707 = vmatprep.subr.mxu0 0.0
    %708 = vmatpush1.msra.mxu0 0.0
    %709 = vmatprep.subr.mxu0 0.0
    %710 = vmatpush1.msra.mxu0 0.0
    %711 = vmatprep.subr.mxu0 0.0
    %712 = vmatpush1.msra.mxu0 0.0
    %713 = vmatprep.subr.mxu0 0.0
    %714 = vmatpush1.msra.mxu0 0.0
    %715 = vmatprep.mubr.f32.mxu0 0.0
    %v716 = vand.u32 %v274, 4294901760
    %717 = vmatmul.mubr.f32.gmra.mrb[0].mxu0 %v716
    %v718 = vpop.f32.mrb[0].mxu0
    %v719 = vadd.f32 %v647, %v718
    %v720 = vpop.f32.mrb[0].mxu0
    %721 = vdwg.mxu0
    %v722 = vmax.f32 %v719, 0.0
    %v723 = vld [vmem:[%s4] sm:$0xf]
    %vm724 = vcmask 31744
    %v726 = vsel %vm724, %v722, 0
    %vm728 = vcmask 1043456
    %v730 = vsel %vm728, %v723, 0
    %732 = vmatprep.subr.mxu0 0.0
    %v733 = vand.u32 %v730, 4294901760
    %734 = vmatpush1.msra.mxu0 %v733
    %735 = vmatprep.subr.mxu0 0.0
    %736 = vmatpush1.msra.mxu0 0.0
    %737 = vmatprep.subr.mxu0 0.0
    %738 = vmatpush1.msra.mxu0 0.0
    %739 = vmatprep.subr.mxu0 0.0
    %740 = vmatpush1.msra.mxu0 0.0
    %741 = vmatprep.subr.mxu0 0.0
    %742 = vmatpush1.msra.mxu0 0.0
    %743 = vmatprep.subr.mxu0 0.0
    %744 = vmatpush1.msra.mxu0 0.0
    %745 = vmatprep.subr.mxu0 0.0
    %746 = vmatpush1.msra.mxu0 0.0
    %747 = vmatprep.subr.mxu0 0.0
    %748 = vmatpush1.msra.mxu0 0.0
    %749 = vmatprep.subr.mxu0 0.0
    %750 = vmatpush1.msra.mxu0 0.0
    %751 = vmatprep.subr.mxu0 0.0
    %752 = vmatpush1.msra.mxu0 0.0
    %753 = vmatprep.subr.mxu0 0.0
    %754 = vmatpush1.msra.mxu0 0.0
    %755 = vmatprep.subr.mxu0 0.0
    %756 = vmatpush1.msra.mxu0 0.0
    %757 = vmatprep.subr.mxu0 0.0
    %758 = vmatpush1.msra.mxu0 0.0
    %759 = vmatprep.subr.mxu0 0.0
    %760 = vmatpush1.msra.mxu0 0.0
    %761 = vmatprep.subr.mxu0 0.0
    %762 = vmatpush1.msra.mxu0 0.0
    %763 = vmatprep.subr.mxu0 0.0
    %764 = vmatpush1.msra.mxu0 0.0
    %765 = vmatprep.subr.mxu0 0.0
    %766 = vmatpush1.msra.mxu0 0.0
    %767 = vmatprep.subr.mxu0 0.0
    %768 = vmatpush1.msra.mxu0 0.0
    %769 = vmatprep.subr.mxu0 0.0
    %770 = vmatpush1.msra.mxu0 0.0
    %771 = vmatprep.subr.mxu0 0.0
    %772 = vmatpush1.msra.mxu0 0.0
    %773 = vmatprep.subr.mxu0 0.0
    %774 = vmatpush1.msra.mxu0 0.0
    %775 = vmatprep.subr.mxu0 0.0
    %776 = vmatpush1.msra.mxu0 0.0
    %777 = vmatprep.subr.mxu0 0.0
    %778 = vmatpush1.msra.mxu0 0.0
    %779 = vmatprep.subr.mxu0 0.0
    %780 = vmatpush1.msra.mxu0 0.0
    %781 = vmatprep.subr.mxu0 0.0
    %782 = vmatpush1.msra.mxu0 0.0
    %783 = vmatprep.subr.mxu0 0.0
    %784 = vmatpush1.msra.mxu0 0.0
    %785 = vmatprep.subr.mxu0 0.0
    %786 = vmatpush1.msra.mxu0 0.0
    %787 = vmatprep.subr.mxu0 0.0
    %788 = vmatpush1.msra.mxu0 0.0
    %789 = vmatprep.subr.mxu0 0.0
    %790 = vmatpush1.msra.mxu0 0.0
    %791 = vmatprep.subr.mxu0 0.0
    %792 = vmatpush1.msra.mxu0 0.0
    %793 = vmatprep.subr.mxu0 0.0
    %794 = vmatpush1.msra.mxu0 0.0
    %795 = vmatprep.subr.mxu0 0.0
    %796 = vmatpush1.msra.mxu0 0.0
    %797 = vmatprep.mubr.f32.mxu0 0.0
    %v798 = vand.u32 %v726, 4294901760
    %v799 = vsub.f32 %v726, %v798
    %v800 = vand.u32 %v799, 4294901760
    %v801 = vsub.f32 %v799, %v800
    %v802 = vand.u32 %v801, 4294901760
    %803 = vmatmul.mubr.f32.gmra.mrb[0].mxu0 %v802
    %v804 = vpop.f32.mrb[0].mxu0
    %v805 = vadd.f32 0.0, %v804
    %v806 = vpop.f32.mrb[0].mxu0
    %807 = vdwg.mxu0
    %808 = vmatprep.subr.mxu0 0.0
    %v809 = vand.u32 %v730, 4294901760
    %v810 = vsub.f32 %v730, %v809
    %v811 = vand.u32 %v810, 4294901760
    %v812 = vsub.f32 %v810, %v811
    %v813 = vand.u32 %v812, 4294901760
    %814 = vmatpush1.msra.mxu0 %v813
    %815 = vmatprep.subr.mxu0 0.0
    %816 = vmatpush1.msra.mxu0 0.0
    %817 = vmatprep.subr.mxu0 0.0
    %818 = vmatpush1.msra.mxu0 0.0
    %819 = vmatprep.subr.mxu0 0.0
    %820 = vmatpush1.msra.mxu0 0.0
    %821 = vmatprep.subr.mxu0 0.0
    %822 = vmatpush1.msra.mxu0 0.0
    %823 = vmatprep.subr.mxu0 0.0
    %824 = vmatpush1.msra.mxu0 0.0
    %825 = vmatprep.subr.mxu0 0.0
    %826 = vmatpush1.msra.mxu0 0.0
    %827 = vmatprep.subr.mxu0 0.0
    %828 = vmatpush1.msra.mxu0 0.0
    %829 = vmatprep.subr.mxu0 0.0
    %830 = vmatpush1.msra.mxu0 0.0
    %831 = vmatprep.subr.mxu0 0.0
    %832 = vmatpush1.msra.mxu0 0.0
    %833 = vmatprep.subr.mxu0 0.0
    %834 = vmatpush1.msra.mxu0 0.0
    %835 = vmatprep.subr.mxu0 0.0
    %836 = vmatpush1.msra.mxu0 0.0
    %837 = vmatprep.subr.mxu0 0.0
    %838 = vmatpush1.msra.mxu0 0.0
    %839 = vmatprep.subr.mxu0 0.0
    %840 = vmatpush1.msra.mxu0 0.0
    %841 = vmatprep.subr.mxu0 0.0
    %842 = vmatpush1.msra.mxu0 0.0
    %843 = vmatprep.subr.mxu0 0.0
    %844 = vmatpush1.msra.mxu0 0.0
    %845 = vmatprep.subr.mxu0 0.0
    %846 = vmatpush1.msra.mxu0 0.0
    %847 = vmatprep.subr.mxu0 0.0
    %848 = vmatpush1.msra.mxu0 0.0
    %849 = vmatprep.subr.mxu0 0.0
    %850 = vmatpush1.msra.mxu0 0.0
    %851 = vmatprep.subr.mxu0 0.0
    %852 = vmatpush1.msra.mxu0 0.0
    %853 = vmatprep.subr.mxu0 0.0
    %854 = vmatpush1.msra.mxu0 0.0
    %855 = vmatprep.subr.mxu0 0.0
    %856 = vmatpush1.msra.mxu0 0.0
    %857 = vmatprep.subr.mxu0 0.0
    %858 = vmatpush1.msra.mxu0 0.0
    %859 = vmatprep.subr.mxu0 0.0
    %860 = vmatpush1.msra.mxu0 0.0
    %861 = vmatprep.subr.mxu0 0.0
    %862 = vmatpush1.msra.mxu0 0.0
    %863 = vmatprep.subr.mxu0 0.0
    %864 = vmatpush1.msra.mxu0 0.0
    %865 = vmatprep.subr.mxu0 0.0
    %866 = vmatpush1.msra.mxu0 0.0
    %867 = vmatprep.subr.mxu0 0.0
    %868 = vmatpush1.msra.mxu0 0.0
    %869 = vmatprep.subr.mxu0 0.0
    %870 = vmatpush1.msra.mxu0 0.0
    %871 = vmatprep.subr.mxu0 0.0
    %872 = vmatpush1.msra.mxu0 0.0
    %873 = vmatprep.subr.mxu0 0.0
    %874 = vmatpush1.msra.mxu0 0.0
    %875 = vmatprep.subr.mxu0 0.0
    %876 = vmatpush1.msra.mxu0 0.0
    %877 = vmatprep.mubr.f32.mxu0 0.0
    %v878 = vand.u32 %v726, 4294901760
    %879 = vmatmul.mubr.f32.gmra.mrb[0].mxu0 %v878
    %v880 = vpop.f32.mrb[0].mxu0
    %v881 = vadd.f32 %v805, %v880
    %v882 = vpop.f32.mrb[0].mxu0
    %883 = vdwg.mxu0
    %884 = vmatprep.subr.mxu0 0.0
    %v885 = vand.u32 %v730, 4294901760
    %v886 = vsub.f32 %v730, %v885
    %887 = vmatpush1.msra.mxu0 %v886
    %888 = vmatprep.subr.mxu0 0.0
    %889 = vmatpush1.msra.mxu0 0.0
    %890 = vmatprep.subr.mxu0 0.0
    %891 = vmatpush1.msra.mxu0 0.0
    %892 = vmatprep.subr.mxu0 0.0
    %893 = vmatpush1.msra.mxu0 0.0
    %894 = vmatprep.subr.mxu0 0.0
    %895 = vmatpush1.msra.mxu0 0.0
    %896 = vmatprep.subr.mxu0 0.0
    %897 = vmatpush1.msra.mxu0 0.0
    %898 = vmatprep.subr.mxu0 0.0
    %899 = vmatpush1.msra.mxu0 0.0
    %900 = vmatprep.subr.mxu0 0.0
    %901 = vmatpush1.msra.mxu0 0.0
    %902 = vmatprep.subr.mxu0 0.0
    %903 = vmatpush1.msra.mxu0 0.0
    %904 = vmatprep.subr.mxu0 0.0
    %905 = vmatpush1.msra.mxu0 0.0
    %906 = vmatprep.subr.mxu0 0.0
    %907 = vmatpush1.msra.mxu0 0.0
    %908 = vmatprep.subr.mxu0 0.0
    %909 = vmatpush1.msra.mxu0 0.0
    %910 = vmatprep.subr.mxu0 0.0
    %911 = vmatpush1.msra.mxu0 0.0
    %912 = vmatprep.subr.mxu0 0.0
    %913 = vmatpush1.msra.mxu0 0.0
    %914 = vmatprep.subr.mxu0 0.0
    %915 = vmatpush1.msra.mxu0 0.0
    %916 = vmatprep.subr.mxu0 0.0
    %917 = vmatpush1.msra.mxu0 0.0
    %918 = vmatprep.subr.mxu0 0.0
    %919 = vmatpush1.msra.mxu0 0.0
    %920 = vmatprep.subr.mxu0 0.0
    %921 = vmatpush1.msra.mxu0 0.0
    %922 = vmatprep.subr.mxu0 0.0
    %923 = vmatpush1.msra.mxu0 0.0
    %924 = vmatprep.subr.mxu0 0.0
    %925 = vmatpush1.msra.mxu0 0.0
    %926 = vmatprep.subr.mxu0 0.0
    %927 = vmatpush1.msra.mxu0 0.0
    %928 = vmatprep.subr.mxu0 0.0
    %929 = vmatpush1.msra.mxu0 0.0
    %930 = vmatprep.subr.mxu0 0.0
    %931 = vmatpush1.msra.mxu0 0.0
    %932 = vmatprep.subr.mxu0 0.0
    %933 = vmatpush1.msra.mxu0 0.0
    %934 = vmatprep.subr.mxu0 0.0
    %935 = vmatpush1.msra.mxu0 0.0
    %936 = vmatprep.subr.mxu0 0.0
    %937 = vmatpush1.msra.mxu0 0.0
    %938 = vmatprep.subr.mxu0 0.0
    %939 = vmatpush1.msra.mxu0 0.0
    %940 = vmatprep.subr.mxu0 0.0
    %941 = vmatpush1.msra.mxu0 0.0
    %942 = vmatprep.subr.mxu0 0.0
    %943 = vmatpush1.msra.mxu0 0.0
    %944 = vmatprep.subr.mxu0 0.0
    %945 = vmatpush1.msra.mxu0 0.0
    %946 = vmatprep.subr.mxu0 0.0
    %947 = vmatpush1.msra.mxu0 0.0
    %948 = vmatprep.subr.mxu0 0.0
    %949 = vmatpush1.msra.mxu0 0.0
    %950 = vmatprep.mubr.f32.mxu0 0.0
    %v951 = vand.u32 %v726, 4294901760
    %v952 = vsub.f32 %v726, %v951
    %953 = vmatmul.mubr.f32.gmra.mrb[0].mxu0 %v952
    %v954 = vpop.f32.mrb[0].mxu0
    %v955 = vadd.f32 %v881, %v954
    %v956 = vpop.f32.mrb[0].mxu0
    %957 = vdwg.mxu0
    %958 = vmatprep.subr.mxu0 0.0
    %v959 = vand.u32 %v730, 4294901760
    %960 = vmatpush1.msra.mxu0 %v959
    %961 = vmatprep.subr.mxu0 0.0
    %962 = vmatpush1.msra.mxu0 0.0
    %963 = vmatprep.subr.mxu0 0.0
    %964 = vmatpush1.msra.mxu0 0.0
    %965 = vmatprep.subr.mxu0 0.0
    %966 = vmatpush1.msra.mxu0 0.0
    %967 = vmatprep.subr.mxu0 0.0
    %968 = vmatpush1.msra.mxu0 0.0
    %969 = vmatprep.subr.mxu0 0.0
    %970 = vmatpush1.msra.mxu0 0.0
    %971 = vmatprep.subr.mxu0 0.0
    %972 = vmatpush1.msra.mxu0 0.0
    %973 = vmatprep.subr.mxu0 0.0
    %974 = vmatpush1.msra.mxu0 0.0
    %975 = vmatprep.subr.mxu0 0.0
    %976 = vmatpush1.msra.mxu0 0.0
    %977 = vmatprep.subr.mxu0 0.0
    %978 = vmatpush1.msra.mxu0 0.0
    %979 = vmatprep.subr.mxu0 0.0
    %980 = vmatpush1.msra.mxu0 0.0
    %981 = vmatprep.subr.mxu0 0.0
    %982 = vmatpush1.msra.mxu0 0.0
    %983 = vmatprep.subr.mxu0 0.0
    %984 = vmatpush1.msra.mxu0 0.0
    %985 = vmatprep.subr.mxu0 0.0
    %986 = vmatpush1.msra.mxu0 0.0
    %987 = vmatprep.subr.mxu0 0.0
    %988 = vmatpush1.msra.mxu0 0.0
    %989 = vmatprep.subr.mxu0 0.0
    %990 = vmatpush1.msra.mxu0 0.0
    %991 = vmatprep.subr.mxu0 0.0
    %992 = vmatpush1.msra.mxu0 0.0
    %993 = vmatprep.subr.mxu0 0.0
    %994 = vmatpush1.msra.mxu0 0.0
    %995 = vmatprep.subr.mxu0 0.0
    %996 = vmatpush1.msra.mxu0 0.0
    %997 = vmatprep.subr.mxu0 0.0
    %998 = vmatpush1.msra.mxu0 0.0
    %999 = vmatprep.subr.mxu0 0.0
    %1000 = vmatpush1.msra.mxu0 0.0
    %1001 = vmatprep.subr.mxu0 0.0
    %1002 = vmatpush1.msra.mxu0 0.0
    %1003 = vmatprep.subr.mxu0 0.0
    %1004 = vmatpush1.msra.mxu0 0.0
    %1005 = vmatprep.subr.mxu0 0.0
    %1006 = vmatpush1.msra.mxu0 0.0
    %1007 = vmatprep.subr.mxu0 0.0
    %1008 = vmatpush1.msra.mxu0 0.0
    %1009 = vmatprep.subr.mxu0 0.0
    %1010 = vmatpush1.msra.mxu0 0.0
    %1011 = vmatprep.subr.mxu0 0.0
    %1012 = vmatpush1.msra.mxu0 0.0
    %1013 = vmatprep.subr.mxu0 0.0
    %1014 = vmatpush1.msra.mxu0 0.0
    %1015 = vmatprep.subr.mxu0 0.0
    %1016 = vmatpush1.msra.mxu0 0.0
    %1017 = vmatprep.subr.mxu0 0.0
    %1018 = vmatpush1.msra.mxu0 0.0
    %1019 = vmatprep.subr.mxu0 0.0
    %1020 = vmatpush1.msra.mxu0 0.0
    %1021 = vmatprep.subr.mxu0 0.0
    %1022 = vmatpush1.msra.mxu0 0.0
    %1023 = vmatprep.mubr.f32.mxu0 0.0
    %v1024 = vand.u32 %v726, 4294901760
    %v1025 = vsub.f32 %v726, %v1024
    %v1026 = vand.u32 %v1025, 4294901760
    %1027 = vmatmul.mubr.f32.gmra.mrb[0].mxu0 %v1026
    %v1028 = vpop.f32.mrb[0].mxu0
    %v1029 = vadd.f32 %v955, %v1028
    %v1030 = vpop.f32.mrb[0].mxu0
    %1031 = vdwg.mxu0
    %1032 = vmatprep.subr.mxu0 0.0
    %v1033 = vand.u32 %v730, 4294901760
    %v1034 = vsub.f32 %v730, %v1033
    %v1035 = vand.u32 %v1034, 4294901760
    %1036 = vmatpush1.msra.mxu0 %v1035
    %1037 = vmatprep.subr.mxu0 0.0
    %1038 = vmatpush1.msra.mxu0 0.0
    %1039 = vmatprep.subr.mxu0 0.0
    %1040 = vmatpush1.msra.mxu0 0.0
    %1041 = vmatprep.subr.mxu0 0.0
    %1042 = vmatpush1.msra.mxu0 0.0
    %1043 = vmatprep.subr.mxu0 0.0
    %1044 = vmatpush1.msra.mxu0 0.0
    %1045 = vmatprep.subr.mxu0 0.0
    %1046 = vmatpush1.msra.mxu0 0.0
    %1047 = vmatprep.subr.mxu0 0.0
    %1048 = vmatpush1.msra.mxu0 0.0
    %1049 = vmatprep.subr.mxu0 0.0
    %1050 = vmatpush1.msra.mxu0 0.0
    %1051 = vmatprep.subr.mxu0 0.0
    %1052 = vmatpush1.msra.mxu0 0.0
    %1053 = vmatprep.subr.mxu0 0.0
    %1054 = vmatpush1.msra.mxu0 0.0
    %1055 = vmatprep.subr.mxu0 0.0
    %1056 = vmatpush1.msra.mxu0 0.0
    %1057 = vmatprep.subr.mxu0 0.0
    %1058 = vmatpush1.msra.mxu0 0.0
    %1059 = vmatprep.subr.mxu0 0.0
    %1060 = vmatpush1.msra.mxu0 0.0
    %1061 = vmatprep.subr.mxu0 0.0
    %1062 = vmatpush1.msra.mxu0 0.0
    %1063 = vmatprep.subr.mxu0 0.0
    %1064 = vmatpush1.msra.mxu0 0.0
    %1065 = vmatprep.subr.mxu0 0.0
    %1066 = vmatpush1.msra.mxu0 0.0
    %1067 = vmatprep.subr.mxu0 0.0
    %1068 = vmatpush1.msra.mxu0 0.0
    %1069 = vmatprep.subr.mxu0 0.0
    %1070 = vmatpush1.msra.mxu0 0.0
    %1071 = vmatprep.subr.mxu0 0.0
    %1072 = vmatpush1.msra.mxu0 0.0
    %1073 = vmatprep.subr.mxu0 0.0
    %1074 = vmatpush1.msra.mxu0 0.0
    %1075 = vmatprep.subr.mxu0 0.0
    %1076 = vmatpush1.msra.mxu0 0.0
    %1077 = vmatprep.subr.mxu0 0.0
    %1078 = vmatpush1.msra.mxu0 0.0
    %1079 = vmatprep.subr.mxu0 0.0
    %1080 = vmatpush1.msra.mxu0 0.0
    %1081 = vmatprep.subr.mxu0 0.0
    %1082 = vmatpush1.msra.mxu0 0.0
    %1083 = vmatprep.subr.mxu0 0.0
    %1084 = vmatpush1.msra.mxu0 0.0
    %1085 = vmatprep.subr.mxu0 0.0
    %1086 = vmatpush1.msra.mxu0 0.0
    %1087 = vmatprep.subr.mxu0 0.0
    %1088 = vmatpush1.msra.mxu0 0.0
    %1089 = vmatprep.subr.mxu0 0.0
    %1090 = vmatpush1.msra.mxu0 0.0
    %1091 = vmatprep.subr.mxu0 0.0
    %1092 = vmatpush1.msra.mxu0 0.0
    %1093 = vmatprep.subr.mxu0 0.0
    %1094 = vmatpush1.msra.mxu0 0.0
    %1095 = vmatprep.subr.mxu0 0.0
    %1096 = vmatpush1.msra.mxu0 0.0
    %1097 = vmatprep.subr.mxu0 0.0
    %1098 = vmatpush1.msra.mxu0 0.0
    %1099 = vmatprep.mubr.f32.mxu0 0.0
    %v1100 = vand.u32 %v726, 4294901760
    %1101 = vmatmul.mubr.f32.gmra.mrb[0].mxu0 %v1100
    %v1102 = vpop.f32.mrb[0].mxu0
    %v1103 = vadd.f32 %v1029, %v1102
    %v1104 = vpop.f32.mrb[0].mxu0
    %1105 = vdwg.mxu0
    %1106 = vmatprep.subr.mxu0 0.0
    %v1107 = vand.u32 %v730, 4294901760
    %1108 = vmatpush1.msra.mxu0 %v1107
    %1109 = vmatprep.subr.mxu0 0.0
    %1110 = vmatpush1.msra.mxu0 0.0
    %1111 = vmatprep.subr.mxu0 0.0
    %1112 = vmatpush1.msra.mxu0 0.0
    %1113 = vmatprep.subr.mxu0 0.0
    %1114 = vmatpush1.msra.mxu0 0.0
    %1115 = vmatprep.subr.mxu0 0.0
    %1116 = vmatpush1.msra.mxu0 0.0
    %1117 = vmatprep.subr.mxu0 0.0
    %1118 = vmatpush1.msra.mxu0 0.0
    %1119 = vmatprep.subr.mxu0 0.0
    %1120 = vmatpush1.msra.mxu0 0.0
    %1121 = vmatprep.subr.mxu0 0.0
    %1122 = vmatpush1.msra.mxu0 0.0
    %1123 = vmatprep.subr.mxu0 0.0
    %1124 = vmatpush1.msra.mxu0 0.0
    %1125 = vmatprep.subr.mxu0 0.0
    %1126 = vmatpush1.msra.mxu0 0.0
    %1127 = vmatprep.subr.mxu0 0.0
    %1128 = vmatpush1.msra.mxu0 0.0
    %1129 = vmatprep.subr.mxu0 0.0
    %1130 = vmatpush1.msra.mxu0 0.0
    %1131 = vmatprep.subr.mxu0 0.0
    %1132 = vmatpush1.msra.mxu0 0.0
    %1133 = vmatprep.subr.mxu0 0.0
    %1134 = vmatpush1.msra.mxu0 0.0
    %1135 = vmatprep.subr.mxu0 0.0
    %1136 = vmatpush1.msra.mxu0 0.0
    %1137 = vmatprep.subr.mxu0 0.0
    %1138 = vmatpush1.msra.mxu0 0.0
    %1139 = vmatprep.subr.mxu0 0.0
    %1140 = vmatpush1.msra.mxu0 0.0
    %1141 = vmatprep.subr.mxu0 0.0
    %1142 = vmatpush1.msra.mxu0 0.0
    %1143 = vmatprep.subr.mxu0 0.0
    %1144 = vmatpush1.msra.mxu0 0.0
    %1145 = vmatprep.subr.mxu0 0.0
    %1146 = vmatpush1.msra.mxu0 0.0
    %1147 = vmatprep.subr.mxu0 0.0
    %1148 = vmatpush1.msra.mxu0 0.0
    %1149 = vmatprep.subr.mxu0 0.0
    %1150 = vmatpush1.msra.mxu0 0.0
    %1151 = vmatprep.subr.mxu0 0.0
    %1152 = vmatpush1.msra.mxu0 0.0
    %1153 = vmatprep.subr.mxu0 0.0
    %1154 = vmatpush1.msra.mxu0 0.0
    %1155 = vmatprep.subr.mxu0 0.0
    %1156 = vmatpush1.msra.mxu0 0.0
    %1157 = vmatprep.subr.mxu0 0.0
    %1158 = vmatpush1.msra.mxu0 0.0
    %1159 = vmatprep.subr.mxu0 0.0
    %1160 = vmatpush1.msra.mxu0 0.0
    %1161 = vmatprep.subr.mxu0 0.0
    %1162 = vmatpush1.msra.mxu0 0.0
    %1163 = vmatprep.subr.mxu0 0.0
    %1164 = vmatpush1.msra.mxu0 0.0
    %1165 = vmatprep.subr.mxu0 0.0
    %1166 = vmatpush1.msra.mxu0 0.0
    %1167 = vmatprep.subr.mxu0 0.0
    %1168 = vmatpush1.msra.mxu0 0.0
    %1169 = vmatprep.subr.mxu0 0.0
    %1170 = vmatpush1.msra.mxu0 0.0
    %1171 = vmatprep.mubr.f32.mxu0 0.0
    %v1172 = vand.u32 %v726, 4294901760
    %1173 = vmatmul.mubr.f32.gmra.mrb[0].mxu0 %v1172
    %v1174 = vpop.f32.mrb[0].mxu0
    %v1175 = vadd.f32 %v1103, %v1174
    %v1176 = vpop.f32.mrb[0].mxu0
    %1177 = vdwg.mxu0
    %v1178 = vxor.u32 %v1175, 2147483648
    %v1179 = vmul.f32 %v1178, 1.442695
    %v1180 = vpow.pop %v1179
    %v1181 = vadd.f32 %v1180, 1.0
    %v1182 = vrcp.pop %v1181
    %v1183 = vmul.f32 1.0, %v1182
    %v1184 = vlaneseq
    %v1185 = vshrl.u32 %v1184, 7
    %v1186 = vsub.s32 0, %v1185
    %v1187 = vrot.slane %v1183, %v1186
    %1189 = vbcast.lane.b32.xlu0 %v1187, 256
    %v1190 = vpop.permute.xlu0 %1189
    %v1191 = vlaneseq
    %v1192 = vshrl.u32 %v1191, 7
    %v1193 = vsub.s32 1, %v1192
    %v1194 = vrot.slane %v1183, %v1193
    %1196 = vbcast.lane.b32.xlu0 %v1194, 256
    %v1197 = vpop.permute.xlu0 %1196
    %v1198 = vmul.f32 %v241, %v1190
    %v1199 = vmul.f32 %v242, %v1197
    %1200 = vst [vmem:[#allocation2] sm:$0xff] %v1198
    %1201 = vst [vmem:[#allocation2 + $0x48] sm:$0xff] %v1199
    %1202 = vrot.lane.b32.xlu0 %v1198, 127
    %v1203 = vpop.permute.xlu0 %1202
    %1204 = vrot.lane.b32.xlu0 %v1199, 127
    %v1205 = vpop.permute.xlu0 %1204
    %1206 = vst [vmem:[#allocation2 + $0x8] sm:$0xff] %v1203
    %1207 = vst [vmem:[#allocation2 + $0x50] sm:$0xff] %v1205
    %1208 = vrot.lane.b32.xlu0 %v1198, 126
    %v1209 = vpop.permute.xlu0 %1208
    %1210 = vrot.lane.b32.xlu0 %v1199, 126
    %v1211 = vpop.permute.xlu0 %1210
    %1212 = vst [vmem:[#allocation2 + $0x10] sm:$0xff] %v1209
    %1213 = vst [vmem:[#allocation2 + $0x58] sm:$0xff] %v1211
    %1214 = vrot.lane.b32.xlu0 %v1198, 117
    %v1215 = vpop.permute.xlu0 %1214
    %1216 = vrot.lane.b32.xlu0 %v1199, 117
    %v1217 = vpop.permute.xlu0 %1216
    %1218 = vst [vmem:[#allocation2 + $0x18] sm:$0xff] %v1215
    %1219 = vst [vmem:[#allocation2 + $0x60] sm:$0xff] %v1217
    %1220 = vrot.lane.b32.xlu0 %v1198, 116
    %v1221 = vpop.permute.xlu0 %1220
    %1222 = vrot.lane.b32.xlu0 %v1199, 116
    %v1223 = vpop.permute.xlu0 %1222
    %1224 = vst [vmem:[#allocation2 + $0x20] sm:$0xff] %v1221
    %1225 = vst [vmem:[#allocation2 + $0x68] sm:$0xff] %v1223
    %1226 = vrot.lane.b32.xlu0 %v1198, 115
    %v1227 = vpop.permute.xlu0 %1226
    %1228 = vrot.lane.b32.xlu0 %v1199, 115
    %v1229 = vpop.permute.xlu0 %1228
    %1230 = vst [vmem:[#allocation2 + $0x28] sm:$0xff] %v1227
    %1231 = vst [vmem:[#allocation2 + $0x70] sm:$0xff] %v1229
    %1232 = vrot.lane.b32.xlu0 %v1198, 106
    %v1233 = vpop.permute.xlu0 %1232
    %1234 = vrot.lane.b32.xlu0 %v1199, 106
    %v1235 = vpop.permute.xlu0 %1234
    %1236 = vst [vmem:[#allocation2 + $0x30] sm:$0xff] %v1233
    %1237 = vst [vmem:[#allocation2 + $0x78] sm:$0xff] %v1235
    %1238 = vrot.lane.b32.xlu0 %v1198, 105
    %v1239 = vpop.permute.xlu0 %1238
    %1240 = vrot.lane.b32.xlu0 %v1199, 105
    %v1241 = vpop.permute.xlu0 %1240
    %1242 = vst [vmem:[#allocation2 + $0x38] sm:$0xff] %v1239
    %1243 = vst [vmem:[#allocation2 + $0x80] sm:$0xff] %v1241
    %1244 = vrot.lane.b32.xlu0 %v1198, 104
    %v1245 = vpop.permute.xlu0 %1244
    %1246 = vrot.lane.b32.xlu0 %v1199, 104
    %v1247 = vpop.permute.xlu0 %1246
    %1248 = vst [vmem:[#allocation2 + $0x40] sm:$0xff] %v1245
    %1249 = vst [vmem:[#allocation2 + $0x88] sm:$0xff] %v1247
    %v1250 = vld [vmem:[%s5] sm:$0xff]
    %v1251 = vld [vmem:[%s5 + $0x8] sm:$0xff]
    %v1252 = vld [vmem:[#allocation2] sm:$0xff]
    %v1253 = vld [vmem:[#allocation2 + $0x8] sm:$0xff]
    %v1254 = vld [vmem:[#allocation2 + $0x10] sm:$0xff]
    %v1255 = vld [vmem:[#allocation2 + $0x18] sm:$0xff]
    %v1256 = vld [vmem:[#allocation2 + $0x20] sm:$0xff]
    %v1257 = vld [vmem:[#allocation2 + $0x28] sm:$0xff]
    %v1258 = vld [vmem:[#allocation2 + $0x30] sm:$0xff]
    %v1259 = vld [vmem:[#allocation2 + $0x38] sm:$0xff]
    %v1260 = vld [vmem:[#allocation2 + $0x40] sm:$0xff]
    %vm1261 = vcmask 588800
    %v1263 = vsel %vm1261, %v1250, 0
    %v1266 = vsel %vm1261, %v1251, 0
    %1268 = vmatprep.subr.mxu0 0.0
    %v1269 = vand.u32 %v1252, 4294901760
    %1270 = vmatpush1.msra.mxu0 %v1269
    %1271 = vmatprep.subr.mxu0 0.0
    %v1272 = vand.u32 %v1253, 4294901760
    %1273 = vmatpush1.msra.mxu0 %v1272
    %1274 = vmatprep.subr.mxu0 0.0
    %v1275 = vand.u32 %v1254, 4294901760
    %1276 = vmatpush1.msra.mxu0 %v1275
    %1277 = vmatprep.subr.mxu0 0.0
    %v1278 = vand.u32 %v1255, 4294901760
    %1279 = vmatpush1.msra.mxu0 %v1278
    %1280 = vmatprep.subr.mxu0 0.0
    %v1281 = vand.u32 %v1256, 4294901760
    %1282 = vmatpush1.msra.mxu0 %v1281
    %1283 = vmatprep.subr.mxu0 0.0
    %v1284 = vand.u32 %v1257, 4294901760
    %1285 = vmatpush1.msra.mxu0 %v1284
    %1286 = vmatprep.subr.mxu0 0.0
    %v1287 = vand.u32 %v1258, 4294901760
    %1288 = vmatpush1.msra.mxu0 %v1287
    %1289 = vmatprep.subr.mxu0 0.0
    %v1290 = vand.u32 %v1259, 4294901760
    %1291 = vmatpush1.msra.mxu0 %v1290
    %1292 = vmatprep.subr.mxu0 0.0
    %v1293 = vand.u32 %v1260, 4294901760
    %1294 = vmatpush1.msra.mxu0 %v1293
    %1295 = vmatprep.subr.mxu0 0.0
    %1296 = vmatpush1.msra.mxu0 0.0
    %1297 = vmatprep.subr.mxu0 0.0
    %1298 = vmatpush1.msra.mxu0 0.0
    %1299 = vmatprep.subr.mxu0 0.0
    %1300 = vmatpush1.msra.mxu0 0.0
    %1301 = vmatprep.subr.mxu0 0.0
    %1302 = vmatpush1.msra.mxu0 0.0
    %1303 = vmatprep.subr.mxu0 0.0
    %1304 = vmatpush1.msra.mxu0 0.0
    %1305 = vmatprep.subr.mxu0 0.0
    %1306 = vmatpush1.msra.mxu0 0.0
    %1307 = vmatprep.subr.mxu0 0.0
    %1308 = vmatpush1.msra.mxu0 0.0
    %1309 = vmatprep.subr.mxu0 0.0
    %1310 = vmatpush1.msra.mxu0 0.0
    %1311 = vmatprep.subr.mxu0 0.0
    %1312 = vmatpush1.msra.mxu0 0.0
    %1313 = vmatprep.subr.mxu0 0.0
    %1314 = vmatpush1.msra.mxu0 0.0
    %1315 = vmatprep.subr.mxu0 0.0
    %1316 = vmatpush1.msra.mxu0 0.0
    %1317 = vmatprep.subr.mxu0 0.0
    %1318 = vmatpush1.msra.mxu0 0.0
    %1319 = vmatprep.subr.mxu0 0.0
    %1320 = vmatpush1.msra.mxu0 0.0
    %1321 = vmatprep.subr.mxu0 0.0
    %1322 = vmatpush1.msra.mxu0 0.0
    %1323 = vmatprep.subr.mxu0 0.0
    %1324 = vmatpush1.msra.mxu0 0.0
    %1325 = vmatprep.subr.mxu0 0.0
    %1326 = vmatpush1.msra.mxu0 0.0
    %1327 = vmatprep.subr.mxu0 0.0
    %1328 = vmatpush1.msra.mxu0 0.0
    %1329 = vmatprep.subr.mxu0 0.0
    %1330 = vmatpush1.msra.mxu0 0.0
    %1331 = vmatprep.subr.mxu0 0.0
    %1332 = vmatpush1.msra.mxu0 0.0
    %1333 = vmatprep.subr.mxu0 0.0
    %1334 = vmatpush1.msra.mxu0 0.0
    %1335 = vmatprep.subr.mxu0 0.0
    %1336 = vmatpush1.msra.mxu0 0.0
    %1337 = vmatprep.subr.mxu0 0.0
    %1338 = vmatpush1.msra.mxu0 0.0
    %1339 = vmatprep.subr.mxu0 0.0
    %1340 = vmatpush1.msra.mxu0 0.0
    %1341 = vmatprep.mubr.f32.mxu0 0.0
    %v1342 = vand.u32 %v1263, 4294901760
    %v1343 = vsub.f32 %v1263, %v1342
    %v1344 = vand.u32 %v1343, 4294901760
    %v1345 = vsub.f32 %v1343, %v1344
    %v1346 = vand.u32 %v1345, 4294901760
    %1347 = vmatmul.mubr.f32.gmra.mrb[0].mxu0 %v1346
    %v1348 = vpop.f32.mrb[0].mxu0
    %v1349 = vadd.f32 0.0, %v1348
    %v1350 = vpop.f32.mrb[0].mxu0
    %1351 = vmatprep.mubr.f32.mxu0 0.0
    %v1352 = vand.u32 %v1266, 4294901760
    %v1353 = vsub.f32 %v1266, %v1352
    %v1354 = vand.u32 %v1353, 4294901760
    %v1355 = vsub.f32 %v1353, %v1354
    %v1356 = vand.u32 %v1355, 4294901760
    %1357 = vmatmul.mubr.f32.gmra.mrb[0].mxu0 %v1356
    %v1358 = vpop.f32.mrb[0].mxu0
    %v1359 = vadd.f32 0.0, %v1358
    %v1360 = vpop.f32.mrb[0].mxu0
    %1361 = vdwg.mxu0
    %1362 = vmatprep.subr.mxu0 0.0
    %v1363 = vand.u32 %v1252, 4294901760
    %v1364 = vsub.f32 %v1252, %v1363
    %v1365 = vand.u32 %v1364, 4294901760
    %v1366 = vsub.f32 %v1364, %v1365
    %v1367 = vand.u32 %v1366, 4294901760
    %1368 = vmatpush1.msra.mxu0 %v1367
    %1369 = vmatprep.subr.mxu0 0.0
    %v1370 = vand.u32 %v1253, 4294901760
    %v1371 = vsub.f32 %v1253, %v1370
    %v1372 = vand.u32 %v1371, 4294901760
    %v1373 = vsub.f32 %v1371, %v1372
    %v1374 = vand.u32 %v1373, 4294901760
    %1375 = vmatpush1.msra.mxu0 %v1374
    %1376 = vmatprep.subr.mxu0 0.0
    %v1377 = vand.u32 %v1254, 4294901760
    %v1378 = vsub.f32 %v1254, %v1377
    %v1379 = vand.u32 %v1378, 4294901760
    %v1380 = vsub.f32 %v1378, %v1379
    %v1381 = vand.u32 %v1380, 4294901760
    %1382 = vmatpush1.msra.mxu0 %v1381
    %1383 = vmatprep.subr.mxu0 0.0
    %v1384 = vand.u32 %v1255, 4294901760
    %v1385 = vsub.f32 %v1255, %v1384
    %v1386 = vand.u32 %v1385, 4294901760
    %v1387 = vsub.f32 %v1385, %v1386
    %v1388 = vand.u32 %v1387, 4294901760
    %1389 = vmatpush1.msra.mxu0 %v1388
    %1390 = vmatprep.subr.mxu0 0.0
    %v1391 = vand.u32 %v1256, 4294901760
    %v1392 = vsub.f32 %v1256, %v1391
    %v1393 = vand.u32 %v1392, 4294901760
    %v1394 = vsub.f32 %v1392, %v1393
    %v1395 = vand.u32 %v1394, 4294901760
    %1396 = vmatpush1.msra.mxu0 %v1395
    %1397 = vmatprep.subr.mxu0 0.0
    %v1398 = vand.u32 %v1257, 4294901760
    %v1399 = vsub.f32 %v1257, %v1398
    %v1400 = vand.u32 %v1399, 4294901760
    %v1401 = vsub.f32 %v1399, %v1400
    %v1402 = vand.u32 %v1401, 4294901760
    %1403 = vmatpush1.msra.mxu0 %v1402
    %1404 = vmatprep.subr.mxu0 0.0
    %v1405 = vand.u32 %v1258, 4294901760
    %v1406 = vsub.f32 %v1258, %v1405
    %v1407 = vand.u32 %v1406, 4294901760
    %v1408 = vsub.f32 %v1406, %v1407
    %v1409 = vand.u32 %v1408, 4294901760
    %1410 = vmatpush1.msra.mxu0 %v1409
    %1411 = vmatprep.subr.mxu0 0.0
    %v1412 = vand.u32 %v1259, 4294901760
    %v1413 = vsub.f32 %v1259, %v1412
    %v1414 = vand.u32 %v1413, 4294901760
    %v1415 = vsub.f32 %v1413, %v1414
    %v1416 = vand.u32 %v1415, 4294901760
    %1417 = vmatpush1.msra.mxu0 %v1416
    %1418 = vmatprep.subr.mxu0 0.0
    %v1419 = vand.u32 %v1260, 4294901760
    %v1420 = vsub.f32 %v1260, %v1419
    %v1421 = vand.u32 %v1420, 4294901760
    %v1422 = vsub.f32 %v1420, %v1421
    %v1423 = vand.u32 %v1422, 4294901760
    %1424 = vmatpush1.msra.mxu0 %v1423
    %1425 = vmatprep.subr.mxu0 0.0
    %1426 = vmatpush1.msra.mxu0 0.0
    %1427 = vmatprep.subr.mxu0 0.0
    %1428 = vmatpush1.msra.mxu0 0.0
    %1429 = vmatprep.subr.mxu0 0.0
    %1430 = vmatpush1.msra.mxu0 0.0
    %1431 = vmatprep.subr.mxu0 0.0
    %1432 = vmatpush1.msra.mxu0 0.0
    %1433 = vmatprep.subr.mxu0 0.0
    %1434 = vmatpush1.msra.mxu0 0.0
    %1435 = vmatprep.subr.mxu0 0.0
    %1436 = vmatpush1.msra.mxu0 0.0
    %1437 = vmatprep.subr.mxu0 0.0
    %1438 = vmatpush1.msra.mxu0 0.0
    %1439 = vmatprep.subr.mxu0 0.0
    %1440 = vmatpush1.msra.mxu0 0.0
    %1441 = vmatprep.subr.mxu0 0.0
    %1442 = vmatpush1.msra.mxu0 0.0
    %1443 = vmatprep.subr.mxu0 0.0
    %1444 = vmatpush1.msra.mxu0 0.0
    %1445 = vmatprep.subr.mxu0 0.0
    %1446 = vmatpush1.msra.mxu0 0.0
    %1447 = vmatprep.subr.mxu0 0.0
    %1448 = vmatpush1.msra.mxu0 0.0
    %1449 = vmatprep.subr.mxu0 0.0
    %1450 = vmatpush1.msra.mxu0 0.0
    %1451 = vmatprep.subr.mxu0 0.0
    %1452 = vmatpush1.msra.mxu0 0.0
    %1453 = vmatprep.subr.mxu0 0.0
    %1454 = vmatpush1.msra.mxu0 0.0
    %1455 = vmatprep.subr.mxu0 0.0
    %1456 = vmatpush1.msra.mxu0 0.0
    %1457 = vmatprep.subr.mxu0 0.0
    %1458 = vmatpush1.msra.mxu0 0.0
    %1459 = vmatprep.subr.mxu0 0.0
    %1460 = vmatpush1.msra.mxu0 0.0
    %1461 = vmatprep.subr.mxu0 0.0
    %1462 = vmatpush1.msra.mxu0 0.0
    %1463 = vmatprep.subr.mxu0 0.0
    %1464 = vmatpush1.msra.mxu0 0.0
    %1465 = vmatprep.subr.mxu0 0.0
    %1466 = vmatpush1.msra.mxu0 0.0
    %1467 = vmatprep.subr.mxu0 0.0
    %1468 = vmatpush1.msra.mxu0 0.0
    %1469 = vmatprep.subr.mxu0 0.0
    %1470 = vmatpush1.msra.mxu0 0.0
    %1471 = vmatprep.mubr.f32.mxu0 0.0
    %v1472 = vand.u32 %v1263, 4294901760
    %1473 = vmatmul.mubr.f32.gmra.mrb[0].mxu0 %v1472
    %v1474 = vpop.f32.mrb[0].mxu0
    %v1475 = vadd.f32 %v1349, %v1474
    %v1476 = vpop.f32.mrb[0].mxu0
    %1477 = vmatprep.mubr.f32.mxu0 0.0
    %v1478 = vand.u32 %v1266, 4294901760
    %1479 = vmatmul.mubr.f32.gmra.mrb[0].mxu0 %v1478
    %v1480 = vpop.f32.mrb[0].mxu0
    %v1481 = vadd.f32 %v1359, %v1480
    %v1482 = vpop.f32.mrb[0].mxu0
    %1483 = vdwg.mxu0
    %1484 = vmatprep.subr.mxu0 0.0
    %v1485 = vand.u32 %v1252, 4294901760
    %v1486 = vsub.f32 %v1252, %v1485
    %1487 = vmatpush1.msra.mxu0 %v1486
    %1488 = vmatprep.subr.mxu0 0.0
    %v1489 = vand.u32 %v1253, 4294901760
    %v1490 = vsub.f32 %v1253, %v1489
    %1491 = vmatpush1.msra.mxu0 %v1490
    %1492 = vmatprep.subr.mxu0 0.0
    %v1493 = vand.u32 %v1254, 4294901760
    %v1494 = vsub.f32 %v1254, %v1493
    %1495 = vmatpush1.msra.mxu0 %v1494
    %1496 = vmatprep.subr.mxu0 0.0
    %v1497 = vand.u32 %v1255, 4294901760
    %v1498 = vsub.f32 %v1255, %v1497
    %1499 = vmatpush1.msra.mxu0 %v1498
    %1500 = vmatprep.subr.mxu0 0.0
    %v1501 = vand.u32 %v1256, 4294901760
    %v1502 = vsub.f32 %v1256, %v1501
    %1503 = vmatpush1.msra.mxu0 %v1502
    %1504 = vmatprep.subr.mxu0 0.0
    %v1505 = vand.u32 %v1257, 4294901760
    %v1506 = vsub.f32 %v1257, %v1505
    %1507 = vmatpush1.msra.mxu0 %v1506
    %1508 = vmatprep.subr.mxu0 0.0
    %v1509 = vand.u32 %v1258, 4294901760
    %v1510 = vsub.f32 %v1258, %v1509
    %1511 = vmatpush1.msra.mxu0 %v1510
    %1512 = vmatprep.subr.mxu0 0.0
    %v1513 = vand.u32 %v1259, 4294901760
    %v1514 = vsub.f32 %v1259, %v1513
    %1515 = vmatpush1.msra.mxu0 %v1514
    %1516 = vmatprep.subr.mxu0 0.0
    %v1517 = vand.u32 %v1260, 4294901760
    %v1518 = vsub.f32 %v1260, %v1517
    %1519 = vmatpush1.msra.mxu0 %v1518
    %1520 = vmatprep.subr.mxu0 0.0
    %1521 = vmatpush1.msra.mxu0 0.0
    %1522 = vmatprep.subr.mxu0 0.0
    %1523 = vmatpush1.msra.mxu0 0.0
    %1524 = vmatprep.subr.mxu0 0.0
    %1525 = vmatpush1.msra.mxu0 0.0
    %1526 = vmatprep.subr.mxu0 0.0
    %1527 = vmatpush1.msra.mxu0 0.0
    %1528 = vmatprep.subr.mxu0 0.0
    %1529 = vmatpush1.msra.mxu0 0.0
    %1530 = vmatprep.subr.mxu0 0.0
    %1531 = vmatpush1.msra.mxu0 0.0
    %1532 = vmatprep.subr.mxu0 0.0
    %1533 = vmatpush1.msra.mxu0 0.0
    %1534 = vmatprep.subr.mxu0 0.0
    %1535 = vmatpush1.msra.mxu0 0.0
    %1536 = vmatprep.subr.mxu0 0.0
    %1537 = vmatpush1.msra.mxu0 0.0
    %1538 = vmatprep.subr.mxu0 0.0
    %1539 = vmatpush1.msra.mxu0 0.0
    %1540 = vmatprep.subr.mxu0 0.0
    %1541 = vmatpush1.msra.mxu0 0.0
    %1542 = vmatprep.subr.mxu0 0.0
    %1543 = vmatpush1.msra.mxu0 0.0
    %1544 = vmatprep.subr.mxu0 0.0
    %1545 = vmatpush1.msra.mxu0 0.0
    %1546 = vmatprep.subr.mxu0 0.0
    %1547 = vmatpush1.msra.mxu0 0.0
    %1548 = vmatprep.subr.mxu0 0.0
    %1549 = vmatpush1.msra.mxu0 0.0
    %1550 = vmatprep.subr.mxu0 0.0
    %1551 = vmatpush1.msra.mxu0 0.0
    %1552 = vmatprep.subr.mxu0 0.0
    %1553 = vmatpush1.msra.mxu0 0.0
    %1554 = vmatprep.subr.mxu0 0.0
    %1555 = vmatpush1.msra.mxu0 0.0
    %1556 = vmatprep.subr.mxu0 0.0
    %1557 = vmatpush1.msra.mxu0 0.0
    %1558 = vmatprep.subr.mxu0 0.0
    %1559 = vmatpush1.msra.mxu0 0.0
    %1560 = vmatprep.subr.mxu0 0.0
    %1561 = vmatpush1.msra.mxu0 0.0
    %1562 = vmatprep.subr.mxu0 0.0
    %1563 = vmatpush1.msra.mxu0 0.0
    %1564 = vmatprep.subr.mxu0 0.0
    %1565 = vmatpush1.msra.mxu0 0.0
    %1566 = vmatprep.mubr.f32.mxu0 0.0
    %v1567 = vand.u32 %v1263, 4294901760
    %v1568 = vsub.f32 %v1263, %v1567
    %1569 = vmatmul.mubr.f32.gmra.mrb[0].mxu0 %v1568
    %v1570 = vpop.f32.mrb[0].mxu0
    %v1571 = vadd.f32 %v1475, %v1570
    %v1572 = vpop.f32.mrb[0].mxu0
    %1573 = vmatprep.mubr.f32.mxu0 0.0
    %v1574 = vand.u32 %v1266, 4294901760
    %v1575 = vsub.f32 %v1266, %v1574
    %1576 = vmatmul.mubr.f32.gmra.mrb[0].mxu0 %v1575
    %v1577 = vpop.f32.mrb[0].mxu0
    %v1578 = vadd.f32 %v1481, %v1577
    %v1579 = vpop.f32.mrb[0].mxu0
    %1580 = vdwg.mxu0
    %1581 = vmatprep.subr.mxu0 0.0
    %v1582 = vand.u32 %v1252, 4294901760
    %1583 = vmatpush1.msra.mxu0 %v1582
    %1584 = vmatprep.subr.mxu0 0.0
    %v1585 = vand.u32 %v1253, 4294901760
    %1586 = vmatpush1.msra.mxu0 %v1585
    %1587 = vmatprep.subr.mxu0 0.0
    %v1588 = vand.u32 %v1254, 4294901760
    %1589 = vmatpush1.msra.mxu0 %v1588
    %1590 = vmatprep.subr.mxu0 0.0
    %v1591 = vand.u32 %v1255, 4294901760
    %1592 = vmatpush1.msra.mxu0 %v1591
    %1593 = vmatprep.subr.mxu0 0.0
    %v1594 = vand.u32 %v1256, 4294901760
    %1595 = vmatpush1.msra.mxu0 %v1594
    %1596 = vmatprep.subr.mxu0 0.0
    %v1597 = vand.u32 %v1257, 4294901760
    %1598 = vmatpush1.msra.mxu0 %v1597
    %1599 = vmatprep.subr.mxu0 0.0
    %v1600 = vand.u32 %v1258, 4294901760
    %1601 = vmatpush1.msra.mxu0 %v1600
    %1602 = vmatprep.subr.mxu0 0.0
    %v1603 = vand.u32 %v1259, 4294901760
    %1604 = vmatpush1.msra.mxu0 %v1603
    %1605 = vmatprep.subr.mxu0 0.0
    %v1606 = vand.u32 %v1260, 4294901760
    %1607 = vmatpush1.msra.mxu0 %v1606
    %1608 = vmatprep.subr.mxu0 0.0
    %1609 = vmatpush1.msra.mxu0 0.0
    %1610 = vmatprep.subr.mxu0 0.0
    %1611 = vmatpush1.msra.mxu0 0.0
    %1612 = vmatprep.subr.mxu0 0.0
    %1613 = vmatpush1.msra.mxu0 0.0
    %1614 = vmatprep.subr.mxu0 0.0
    %1615 = vmatpush1.msra.mxu0 0.0
    %1616 = vmatprep.subr.mxu0 0.0
    %1617 = vmatpush1.msra.mxu0 0.0
    %1618 = vmatprep.subr.mxu0 0.0
    %1619 = vmatpush1.msra.mxu0 0.0
    %1620 = vmatprep.subr.mxu0 0.0
    %1621 = vmatpush1.msra.mxu0 0.0
    %1622 = vmatprep.subr.mxu0 0.0
    %1623 = vmatpush1.msra.mxu0 0.0
    %1624 = vmatprep.subr.mxu0 0.0
    %1625 = vmatpush1.msra.mxu0 0.0
    %1626 = vmatprep.subr.mxu0 0.0
    %1627 = vmatpush1.msra.mxu0 0.0
    %1628 = vmatprep.subr.mxu0 0.0
    %1629 = vmatpush1.msra.mxu0 0.0
    %1630 = vmatprep.subr.mxu0 0.0
    %1631 = vmatpush1.msra.mxu0 0.0
    %1632 = vmatprep.subr.mxu0 0.0
    %1633 = vmatpush1.msra.mxu0 0.0
    %1634 = vmatprep.subr.mxu0 0.0
    %1635 = vmatpush1.msra.mxu0 0.0
    %1636 = vmatprep.subr.mxu0 0.0
    %1637 = vmatpush1.msra.mxu0 0.0
    %1638 = vmatprep.subr.mxu0 0.0
    %1639 = vmatpush1.msra.mxu0 0.0
    %1640 = vmatprep.subr.mxu0 0.0
    %1641 = vmatpush1.msra.mxu0 0.0
    %1642 = vmatprep.subr.mxu0 0.0
    %1643 = vmatpush1.msra.mxu0 0.0
    %1644 = vmatprep.subr.mxu0 0.0
    %1645 = vmatpush1.msra.mxu0 0.0
    %1646 = vmatprep.subr.mxu0 0.0
    %1647 = vmatpush1.msra.mxu0 0.0
    %1648 = vmatprep.subr.mxu0 0.0
    %1649 = vmatpush1.msra.mxu0 0.0
    %1650 = vmatprep.subr.mxu0 0.0
    %1651 = vmatpush1.msra.mxu0 0.0
    %1652 = vmatprep.subr.mxu0 0.0
    %1653 = vmatpush1.msra.mxu0 0.0
    %1654 = vmatprep.mubr.f32.mxu0 0.0
    %v1655 = vand.u32 %v1263, 4294901760
    %v1656 = vsub.f32 %v1263, %v1655
    %v1657 = vand.u32 %v1656, 4294901760
    %1658 = vmatmul.mubr.f32.gmra.mrb[0].mxu0 %v1657
    %v1659 = vpop.f32.mrb[0].mxu0
    %v1660 = vadd.f32 %v1571, %v1659
    %v1661 = vpop.f32.mrb[0].mxu0
    %1662 = vmatprep.mubr.f32.mxu0 0.0
    %v1663 = vand.u32 %v1266, 4294901760
    %v1664 = vsub.f32 %v1266, %v1663
    %v1665 = vand.u32 %v1664, 4294901760
    %1666 = vmatmul.mubr.f32.gmra.mrb[0].mxu0 %v1665
    %v1667 = vpop.f32.mrb[0].mxu0
    %v1668 = vadd.f32 %v1578, %v1667
    %v1669 = vpop.f32.mrb[0].mxu0
    %1670 = vdwg.mxu0
    %1671 = vmatprep.subr.mxu0 0.0
    %v1672 = vand.u32 %v1252, 4294901760
    %v1673 = vsub.f32 %v1252, %v1672
    %v1674 = vand.u32 %v1673, 4294901760
    %1675 = vmatpush1.msra.mxu0 %v1674
    %1676 = vmatprep.subr.mxu0 0.0
    %v1677 = vand.u32 %v1253, 4294901760
    %v1678 = vsub.f32 %v1253, %v1677
    %v1679 = vand.u32 %v1678, 4294901760
    %1680 = vmatpush1.msra.mxu0 %v1679
    %1681 = vmatprep.subr.mxu0 0.0
    %v1682 = vand.u32 %v1254, 4294901760
    %v1683 = vsub.f32 %v1254, %v1682
    %v1684 = vand.u32 %v1683, 4294901760
    %1685 = vmatpush1.msra.mxu0 %v1684
    %1686 = vmatprep.subr.mxu0 0.0
    %v1687 = vand.u32 %v1255, 4294901760
    %v1688 = vsub.f32 %v1255, %v1687
    %v1689 = vand.u32 %v1688, 4294901760
    %1690 = vmatpush1.msra.mxu0 %v1689
    %1691 = vmatprep.subr.mxu0 0.0
    %v1692 = vand.u32 %v1256, 4294901760
    %v1693 = vsub.f32 %v1256, %v1692
    %v1694 = vand.u32 %v1693, 4294901760
    %1695 = vmatpush1.msra.mxu0 %v1694
    %1696 = vmatprep.subr.mxu0 0.0
    %v1697 = vand.u32 %v1257, 4294901760
    %v1698 = vsub.f32 %v1257, %v1697
    %v1699 = vand.u32 %v1698, 4294901760
    %1700 = vmatpush1.msra.mxu0 %v1699
    %1701 = vmatprep.subr.mxu0 0.0
    %v1702 = vand.u32 %v1258, 4294901760
    %v1703 = vsub.f32 %v1258, %v1702
    %v1704 = vand.u32 %v1703, 4294901760
    %1705 = vmatpush1.msra.mxu0 %v1704
    %1706 = vmatprep.subr.mxu0 0.0
    %v1707 = vand.u32 %v1259, 4294901760
    %v1708 = vsub.f32 %v1259, %v1707
    %v1709 = vand.u32 %v1708, 4294901760
    %1710 = vmatpush1.msra.mxu0 %v1709
    %1711 = vmatprep.subr.mxu0 0.0
    %v1712 = vand.u32 %v1260, 4294901760
    %v1713 = vsub.f32 %v1260, %v1712
    %v1714 = vand.u32 %v1713, 4294901760
    %1715 = vmatpush1.msra.mxu0 %v1714
    %1716 = vmatprep.subr.mxu0 0.0
    %1717 = vmatpush1.msra.mxu0 0.0
    %1718 = vmatprep.subr.mxu0 0.0
    %1719 = vmatpush1.msra.mxu0 0.0
    %1720 = vmatprep.subr.mxu0 0.0
    %1721 = vmatpush1.msra.mxu0 0.0
    %1722 = vmatprep.subr.mxu0 0.0
    %1723 = vmatpush1.msra.mxu0 0.0
    %1724 = vmatprep.subr.mxu0 0.0
    %1725 = vmatpush1.msra.mxu0 0.0
    %1726 = vmatprep.subr.mxu0 0.0
    %1727 = vmatpush1.msra.mxu0 0.0
    %1728 = vmatprep.subr.mxu0 0.0
    %1729 = vmatpush1.msra.mxu0 0.0
    %1730 = vmatprep.subr.mxu0 0.0
    %1731 = vmatpush1.msra.mxu0 0.0
    %1732 = vmatprep.subr.mxu0 0.0
    %1733 = vmatpush1.msra.mxu0 0.0
    %1734 = vmatprep.subr.mxu0 0.0
    %1735 = vmatpush1.msra.mxu0 0.0
    %1736 = vmatprep.subr.mxu0 0.0
    %1737 = vmatpush1.msra.mxu0 0.0
    %1738 = vmatprep.subr.mxu0 0.0
    %1739 = vmatpush1.msra.mxu0 0.0
    %1740 = vmatprep.subr.mxu0 0.0
    %1741 = vmatpush1.msra.mxu0 0.0
    %1742 = vmatprep.subr.mxu0 0.0
    %1743 = vmatpush1.msra.mxu0 0.0
    %1744 = vmatprep.subr.mxu0 0.0
    %1745 = vmatpush1.msra.mxu0 0.0
    %1746 = vmatprep.subr.mxu0 0.0
    %1747 = vmatpush1.msra.mxu0 0.0
    %1748 = vmatprep.subr.mxu0 0.0
    %1749 = vmatpush1.msra.mxu0 0.0
    %1750 = vmatprep.subr.mxu0 0.0
    %1751 = vmatpush1.msra.mxu0 0.0
    %1752 = vmatprep.subr.mxu0 0.0
    %1753 = vmatpush1.msra.mxu0 0.0
    %1754 = vmatprep.subr.mxu0 0.0
    %1755 = vmatpush1.msra.mxu0 0.0
    %1756 = vmatprep.subr.mxu0 0.0
    %1757 = vmatpush1.msra.mxu0 0.0
    %1758 = vmatprep.subr.mxu0 0.0
    %1759 = vmatpush1.msra.mxu0 0.0
    %1760 = vmatprep.subr.mxu0 0.0
    %1761 = vmatpush1.msra.mxu0 0.0
    %1762 = vmatprep.mubr.f32.mxu0 0.0
    %v1763 = vand.u32 %v1263, 4294901760
    %1764 = vmatmul.mubr.f32.gmra.mrb[0].mxu0 %v1763
    %v1765 = vpop.f32.mrb[0].mxu0
    %v1766 = vadd.f32 %v1660, %v1765
    %v1767 = vpop.f32.mrb[0].mxu0
    %1768 = vmatprep.mubr.f32.mxu0 0.0
    %v1769 = vand.u32 %v1266, 4294901760
    %1770 = vmatmul.mubr.f32.gmra.mrb[0].mxu0 %v1769
    %v1771 = vpop.f32.mrb[0].mxu0
    %v1772 = vadd.f32 %v1668, %v1771
    %v1773 = vpop.f32.mrb[0].mxu0
    %1774 = vdwg.mxu0
    %1775 = vmatprep.subr.mxu0 0.0
    %v1776 = vand.u32 %v1252, 4294901760
    %1777 = vmatpush1.msra.mxu0 %v1776
    %1778 = vmatprep.subr.mxu0 0.0
    %v1779 = vand.u32 %v1253, 4294901760
    %1780 = vmatpush1.msra.mxu0 %v1779
    %1781 = vmatprep.subr.mxu0 0.0
    %v1782 = vand.u32 %v1254, 4294901760
    %1783 = vmatpush1.msra.mxu0 %v1782
    %1784 = vmatprep.subr.mxu0 0.0
    %v1785 = vand.u32 %v1255, 4294901760
    %1786 = vmatpush1.msra.mxu0 %v1785
    %1787 = vmatprep.subr.mxu0 0.0
    %v1788 = vand.u32 %v1256, 4294901760
    %1789 = vmatpush1.msra.mxu0 %v1788
    %1790 = vmatprep.subr.mxu0 0.0
    %v1791 = vand.u32 %v1257, 4294901760
    %1792 = vmatpush1.msra.mxu0 %v1791
    %1793 = vmatprep.subr.mxu0 0.0
    %v1794 = vand.u32 %v1258, 4294901760
    %1795 = vmatpush1.msra.mxu0 %v1794
    %1796 = vmatprep.subr.mxu0 0.0
    %v1797 = vand.u32 %v1259, 4294901760
    %1798 = vmatpush1.msra.mxu0 %v1797
    %1799 = vmatprep.subr.mxu0 0.0
    %v1800 = vand.u32 %v1260, 4294901760
    %1801 = vmatpush1.msra.mxu0 %v1800
    %1802 = vmatprep.subr.mxu0 0.0
    %1803 = vmatpush1.msra.mxu0 0.0
    %1804 = vmatprep.subr.mxu0 0.0
    %1805 = vmatpush1.msra.mxu0 0.0
    %1806 = vmatprep.subr.mxu0 0.0
    %1807 = vmatpush1.msra.mxu0 0.0
    %1808 = vmatprep.subr.mxu0 0.0
    %1809 = vmatpush1.msra.mxu0 0.0
    %1810 = vmatprep.subr.mxu0 0.0
    %1811 = vmatpush1.msra.mxu0 0.0
    %1812 = vmatprep.subr.mxu0 0.0
    %1813 = vmatpush1.msra.mxu0 0.0
    %1814 = vmatprep.subr.mxu0 0.0
    %1815 = vmatpush1.msra.mxu0 0.0
    %1816 = vmatprep.subr.mxu0 0.0
    %1817 = vmatpush1.msra.mxu0 0.0
    %1818 = vmatprep.subr.mxu0 0.0
    %1819 = vmatpush1.msra.mxu0 0.0
    %1820 = vmatprep.subr.mxu0 0.0
    %1821 = vmatpush1.msra.mxu0 0.0
    %1822 = vmatprep.subr.mxu0 0.0
    %1823 = vmatpush1.msra.mxu0 0.0
    %1824 = vmatprep.subr.mxu0 0.0
    %1825 = vmatpush1.msra.mxu0 0.0
    %1826 = vmatprep.subr.mxu0 0.0
    %1827 = vmatpush1.msra.mxu0 0.0
    %1828 = vmatprep.subr.mxu0 0.0
    %1829 = vmatpush1.msra.mxu0 0.0
    %1830 = vmatprep.subr.mxu0 0.0
    %1831 = vmatpush1.msra.mxu0 0.0
    %1832 = vmatprep.subr.mxu0 0.0
    %1833 = vmatpush1.msra.mxu0 0.0
    %1834 = vmatprep.subr.mxu0 0.0
    %1835 = vmatpush1.msra.mxu0 0.0
    %1836 = vmatprep.subr.mxu0 0.0
    %1837 = vmatpush1.msra.mxu0 0.0
    %1838 = vmatprep.subr.mxu0 0.0
    %1839 = vmatpush1.msra.mxu0 0.0
    %1840 = vmatprep.subr.mxu0 0.0
    %1841 = vmatpush1.msra.mxu0 0.0
    %1842 = vmatprep.subr.mxu0 0.0
    %1843 = vmatpush1.msra.mxu0 0.0
    %1844 = vmatprep.subr.mxu0 0.0
    %1845 = vmatpush1.msra.mxu0 0.0
    %1846 = vmatprep.subr.mxu0 0.0
    %1847 = vmatpush1.msra.mxu0 0.0
    %1848 = vmatprep.mubr.f32.mxu0 0.0
    %v1849 = vand.u32 %v1263, 4294901760
    %1850 = vmatmul.mubr.f32.gmra.mrb[0].mxu0 %v1849
    %v1851 = vpop.f32.mrb[0].mxu0
    %v1852 = vadd.f32 %v1766, %v1851
    %v1853 = vpop.f32.mrb[0].mxu0
    %1854 = vmatprep.mubr.f32.mxu0 0.0
    %v1855 = vand.u32 %v1266, 4294901760
    %1856 = vmatmul.mubr.f32.gmra.mrb[0].mxu0 %v1855
    %v1857 = vpop.f32.mrb[0].mxu0
    %v1858 = vadd.f32 %v1772, %v1857
    %v1859 = vpop.f32.mrb[0].mxu0
    %1860 = vdwg.mxu0
    %s1861 = scalar_lea.vmem [#allocation2], 72
    %v1862 = vld [vmem:[%s1861] sm:$0xff]
    %v1863 = vld [vmem:[%s1861 + $0x8] sm:$0xff]
    %v1864 = vld [vmem:[%s1861 + $0x10] sm:$0xff]
    %v1865 = vld [vmem:[%s1861 + $0x18] sm:$0xff]
    %v1866 = vld [vmem:[%s1861 + $0x20] sm:$0xff]
    %v1867 = vld [vmem:[%s1861 + $0x28] sm:$0xff]
    %v1868 = vld [vmem:[%s1861 + $0x30] sm:$0xff]
    %v1869 = vld [vmem:[%s1861 + $0x38] sm:$0xff]
    %v1870 = vld [vmem:[%s1861 + $0x40] sm:$0xff]
    %1871 = vmatprep.subr.mxu0 0.0
    %v1872 = vand.u32 %v1862, 4294901760
    %1873 = vmatpush1.msra.mxu0 %v1872
    %1874 = vmatprep.subr.mxu0 0.0
    %v1875 = vand.u32 %v1863, 4294901760
    %1876 = vmatpush1.msra.mxu0 %v1875
    %1877 = vmatprep.subr.mxu0 0.0
    %v1878 = vand.u32 %v1864, 4294901760
    %1879 = vmatpush1.msra.mxu0 %v1878
    %1880 = vmatprep.subr.mxu0 0.0
    %v1881 = vand.u32 %v1865, 4294901760
    %1882 = vmatpush1.msra.mxu0 %v1881
    %1883 = vmatprep.subr.mxu0 0.0
    %v1884 = vand.u32 %v1866, 4294901760
    %1885 = vmatpush1.msra.mxu0 %v1884
    %1886 = vmatprep.subr.mxu0 0.0
    %v1887 = vand.u32 %v1867, 4294901760
    %1888 = vmatpush1.msra.mxu0 %v1887
    %1889 = vmatprep.subr.mxu0 0.0
    %v1890 = vand.u32 %v1868, 4294901760
    %1891 = vmatpush1.msra.mxu0 %v1890
    %1892 = vmatprep.subr.mxu0 0.0
    %v1893 = vand.u32 %v1869, 4294901760
    %1894 = vmatpush1.msra.mxu0 %v1893
    %1895 = vmatprep.subr.mxu0 0.0
    %v1896 = vand.u32 %v1870, 4294901760
    %1897 = vmatpush1.msra.mxu0 %v1896
    %1898 = vmatprep.subr.mxu0 0.0
    %1899 = vmatpush1.msra.mxu0 0.0
    %1900 = vmatprep.subr.mxu0 0.0
    %1901 = vmatpush1.msra.mxu0 0.0
    %1902 = vmatprep.subr.mxu0 0.0
    %1903 = vmatpush1.msra.mxu0 0.0
    %1904 = vmatprep.subr.mxu0 0.0
    %1905 = vmatpush1.msra.mxu0 0.0
    %1906 = vmatprep.subr.mxu0 0.0
    %1907 = vmatpush1.msra.mxu0 0.0
    %1908 = vmatprep.subr.mxu0 0.0
    %1909 = vmatpush1.msra.mxu0 0.0
    %1910 = vmatprep.subr.mxu0 0.0
    %1911 = vmatpush1.msra.mxu0 0.0
    %1912 = vmatprep.subr.mxu0 0.0
    %1913 = vmatpush1.msra.mxu0 0.0
    %1914 = vmatprep.subr.mxu0 0.0
    %1915 = vmatpush1.msra.mxu0 0.0
    %1916 = vmatprep.subr.mxu0 0.0
    %1917 = vmatpush1.msra.mxu0 0.0
    %1918 = vmatprep.subr.mxu0 0.0
    %1919 = vmatpush1.msra.mxu0 0.0
    %1920 = vmatprep.subr.mxu0 0.0
    %1921 = vmatpush1.msra.mxu0 0.0
    %1922 = vmatprep.subr.mxu0 0.0
    %1923 = vmatpush1.msra.mxu0 0.0
    %1924 = vmatprep.subr.mxu0 0.0
    %1925 = vmatpush1.msra.mxu0 0.0
    %1926 = vmatprep.subr.mxu0 0.0
    %1927 = vmatpush1.msra.mxu0 0.0
    %1928 = vmatprep.subr.mxu0 0.0
    %1929 = vmatpush1.msra.mxu0 0.0
    %1930 = vmatprep.subr.mxu0 0.0
    %1931 = vmatpush1.msra.mxu0 0.0
    %1932 = vmatprep.subr.mxu0 0.0
    %1933 = vmatpush1.msra.mxu0 0.0
    %1934 = vmatprep.subr.mxu0 0.0
    %1935 = vmatpush1.msra.mxu0 0.0
    %1936 = vmatprep.subr.mxu0 0.0
    %1937 = vmatpush1.msra.mxu0 0.0
    %1938 = vmatprep.subr.mxu0 0.0
    %1939 = vmatpush1.msra.mxu0 0.0
    %1940 = vmatprep.subr.mxu0 0.0
    %1941 = vmatpush1.msra.mxu0 0.0
    %1942 = vmatprep.subr.mxu0 0.0
    %1943 = vmatpush1.msra.mxu0 0.0
    %1944 = vmatprep.mubr.f32.mxu0 0.0
    %v1945 = vand.u32 %v1263, 4294901760
    %v1946 = vsub.f32 %v1263, %v1945
    %v1947 = vand.u32 %v1946, 4294901760
    %v1948 = vsub.f32 %v1946, %v1947
    %v1949 = vand.u32 %v1948, 4294901760
    %1950 = vmatmul.mubr.f32.gmra.mrb[0].mxu0 %v1949
    %v1951 = vpop.f32.mrb[0].mxu0
    %v1952 = vadd.f32 0.0, %v1951
    %v1953 = vpop.f32.mrb[0].mxu0
    %1954 = vmatprep.mubr.f32.mxu0 0.0
    %v1955 = vand.u32 %v1266, 4294901760
    %v1956 = vsub.f32 %v1266, %v1955
    %v1957 = vand.u32 %v1956, 4294901760
    %v1958 = vsub.f32 %v1956, %v1957
    %v1959 = vand.u32 %v1958, 4294901760
    %1960 = vmatmul.mubr.f32.gmra.mrb[0].mxu0 %v1959
    %v1961 = vpop.f32.mrb[0].mxu0
    %v1962 = vadd.f32 0.0, %v1961
    %v1963 = vpop.f32.mrb[0].mxu0
    %1964 = vdwg.mxu0
    %1965 = vmatprep.subr.mxu0 0.0
    %v1966 = vand.u32 %v1862, 4294901760
    %v1967 = vsub.f32 %v1862, %v1966
    %v1968 = vand.u32 %v1967, 4294901760
    %v1969 = vsub.f32 %v1967, %v1968
    %v1970 = vand.u32 %v1969, 4294901760
    %1971 = vmatpush1.msra.mxu0 %v1970
    %1972 = vmatprep.subr.mxu0 0.0
    %v1973 = vand.u32 %v1863, 4294901760
    %v1974 = vsub.f32 %v1863, %v1973
    %v1975 = vand.u32 %v1974, 4294901760
    %v1976 = vsub.f32 %v1974, %v1975
    %v1977 = vand.u32 %v1976, 4294901760
    %1978 = vmatpush1.msra.mxu0 %v1977
    %1979 = vmatprep.subr.mxu0 0.0
    %v1980 = vand.u32 %v1864, 4294901760
    %v1981 = vsub.f32 %v1864, %v1980
    %v1982 = vand.u32 %v1981, 4294901760
    %v1983 = vsub.f32 %v1981, %v1982
    %v1984 = vand.u32 %v1983, 4294901760
    %1985 = vmatpush1.msra.mxu0 %v1984
    %1986 = vmatprep.subr.mxu0 0.0
    %v1987 = vand.u32 %v1865, 4294901760
    %v1988 = vsub.f32 %v1865, %v1987
    %v1989 = vand.u32 %v1988, 4294901760
    %v1990 = vsub.f32 %v1988, %v1989
    %v1991 = vand.u32 %v1990, 4294901760
    %1992 = vmatpush1.msra.mxu0 %v1991
    %1993 = vmatprep.subr.mxu0 0.0
    %v1994 = vand.u32 %v1866, 4294901760
    %v1995 = vsub.f32 %v1866, %v1994
    %v1996 = vand.u32 %v1995, 4294901760
    %v1997 = vsub.f32 %v1995, %v1996
    %v1998 = vand.u32 %v1997, 4294901760
    %1999 = vmatpush1.msra.mxu0 %v1998
    %2000 = vmatprep.subr.mxu0 0.0
    %v2001 = vand.u32 %v1867, 4294901760
    %v2002 = vsub.f32 %v1867, %v2001
    %v2003 = vand.u32 %v2002, 4294901760
    %v2004 = vsub.f32 %v2002, %v2003
    %v2005 = vand.u32 %v2004, 4294901760
    %2006 = vmatpush1.msra.mxu0 %v2005
    %2007 = vmatprep.subr.mxu0 0.0
    %v2008 = vand.u32 %v1868, 4294901760
    %v2009 = vsub.f32 %v1868, %v2008
    %v2010 = vand.u32 %v2009, 4294901760
    %v2011 = vsub.f32 %v2009, %v2010
    %v2012 = vand.u32 %v2011, 4294901760
    %2013 = vmatpush1.msra.mxu0 %v2012
    %2014 = vmatprep.subr.mxu0 0.0
    %v2015 = vand.u32 %v1869, 4294901760
    %v2016 = vsub.f32 %v1869, %v2015
    %v2017 = vand.u32 %v2016, 4294901760
    %v2018 = vsub.f32 %v2016, %v2017
    %v2019 = vand.u32 %v2018, 4294901760
    %2020 = vmatpush1.msra.mxu0 %v2019
    %2021 = vmatprep.subr.mxu0 0.0
    %v2022 = vand.u32 %v1870, 4294901760
    %v2023 = vsub.f32 %v1870, %v2022
    %v2024 = vand.u32 %v2023, 4294901760
    %v2025 = vsub.f32 %v2023, %v2024
    %v2026 = vand.u32 %v2025, 4294901760
    %2027 = vmatpush1.msra.mxu0 %v2026
    %2028 = vmatprep.subr.mxu0 0.0
    %2029 = vmatpush1.msra.mxu0 0.0
    %2030 = vmatprep.subr.mxu0 0.0
    %2031 = vmatpush1.msra.mxu0 0.0
    %2032 = vmatprep.subr.mxu0 0.0
    %2033 = vmatpush1.msra.mxu0 0.0
    %2034 = vmatprep.subr.mxu0 0.0
    %2035 = vmatpush1.msra.mxu0 0.0
    %2036 = vmatprep.subr.mxu0 0.0
    %2037 = vmatpush1.msra.mxu0 0.0
    %2038 = vmatprep.subr.mxu0 0.0
    %2039 = vmatpush1.msra.mxu0 0.0
    %2040 = vmatprep.subr.mxu0 0.0
    %2041 = vmatpush1.msra.mxu0 0.0
    %2042 = vmatprep.subr.mxu0 0.0
    %2043 = vmatpush1.msra.mxu0 0.0
    %2044 = vmatprep.subr.mxu0 0.0
    %2045 = vmatpush1.msra.mxu0 0.0
    %2046 = vmatprep.subr.mxu0 0.0
    %2047 = vmatpush1.msra.mxu0 0.0
    %2048 = vmatprep.subr.mxu0 0.0
    %2049 = vmatpush1.msra.mxu0 0.0
    %2050 = vmatprep.subr.mxu0 0.0
    %2051 = vmatpush1.msra.mxu0 0.0
    %2052 = vmatprep.subr.mxu0 0.0
    %2053 = vmatpush1.msra.mxu0 0.0
    %2054 = vmatprep.subr.mxu0 0.0
    %2055 = vmatpush1.msra.mxu0 0.0
    %2056 = vmatprep.subr.mxu0 0.0
    %2057 = vmatpush1.msra.mxu0 0.0
    %2058 = vmatprep.subr.mxu0 0.0
    %2059 = vmatpush1.msra.mxu0 0.0
    %2060 = vmatprep.subr.mxu0 0.0
    %2061 = vmatpush1.msra.mxu0 0.0
    %2062 = vmatprep.subr.mxu0 0.0
    %2063 = vmatpush1.msra.mxu0 0.0
    %2064 = vmatprep.subr.mxu0 0.0
    %2065 = vmatpush1.msra.mxu0 0.0
    %2066 = vmatprep.subr.mxu0 0.0
    %2067 = vmatpush1.msra.mxu0 0.0
    %2068 = vmatprep.subr.mxu0 0.0
    %2069 = vmatpush1.msra.mxu0 0.0
    %2070 = vmatprep.subr.mxu0 0.0
    %2071 = vmatpush1.msra.mxu0 0.0
    %2072 = vmatprep.subr.mxu0 0.0
    %2073 = vmatpush1.msra.mxu0 0.0
    %2074 = vmatprep.mubr.f32.mxu0 0.0
    %v2075 = vand.u32 %v1263, 4294901760
    %2076 = vmatmul.mubr.f32.gmra.mrb[0].mxu0 %v2075
    %v2077 = vpop.f32.mrb[0].mxu0
    %v2078 = vadd.f32 %v1952, %v2077
    %v2079 = vpop.f32.mrb[0].mxu0
    %2080 = vmatprep.mubr.f32.mxu0 0.0
    %v2081 = vand.u32 %v1266, 4294901760
    %2082 = vmatmul.mubr.f32.gmra.mrb[0].mxu0 %v2081
    %v2083 = vpop.f32.mrb[0].mxu0
    %v2084 = vadd.f32 %v1962, %v2083
    %v2085 = vpop.f32.mrb[0].mxu0
    %2086 = vdwg.mxu0
    %2087 = vmatprep.subr.mxu0 0.0
    %v2088 = vand.u32 %v1862, 4294901760
    %v2089 = vsub.f32 %v1862, %v2088
    %2090 = vmatpush1.msra.mxu0 %v2089
    %2091 = vmatprep.subr.mxu0 0.0
    %v2092 = vand.u32 %v1863, 4294901760
    %v2093 = vsub.f32 %v1863, %v2092
    %2094 = vmatpush1.msra.mxu0 %v2093
    %2095 = vmatprep.subr.mxu0 0.0
    %v2096 = vand.u32 %v1864, 4294901760
    %v2097 = vsub.f32 %v1864, %v2096
    %2098 = vmatpush1.msra.mxu0 %v2097
    %2099 = vmatprep.subr.mxu0 0.0
    %v2100 = vand.u32 %v1865, 4294901760
    %v2101 = vsub.f32 %v1865, %v2100
    %2102 = vmatpush1.msra.mxu0 %v2101
    %2103 = vmatprep.subr.mxu0 0.0
    %v2104 = vand.u32 %v1866, 4294901760
    %v2105 = vsub.f32 %v1866, %v2104
    %2106 = vmatpush1.msra.mxu0 %v2105
    %2107 = vmatprep.subr.mxu0 0.0
    %v2108 = vand.u32 %v1867, 4294901760
    %v2109 = vsub.f32 %v1867, %v2108
    %2110 = vmatpush1.msra.mxu0 %v2109
    %2111 = vmatprep.subr.mxu0 0.0
    %v2112 = vand.u32 %v1868, 4294901760
    %v2113 = vsub.f32 %v1868, %v2112
    %2114 = vmatpush1.msra.mxu0 %v2113
    %2115 = vmatprep.subr.mxu0 0.0
    %v2116 = vand.u32 %v1869, 4294901760
    %v2117 = vsub.f32 %v1869, %v2116
    %2118 = vmatpush1.msra.mxu0 %v2117
    %2119 = vmatprep.subr.mxu0 0.0
    %v2120 = vand.u32 %v1870, 4294901760
    %v2121 = vsub.f32 %v1870, %v2120
    %2122 = vmatpush1.msra.mxu0 %v2121
    %2123 = vmatprep.subr.mxu0 0.0
    %2124 = vmatpush1.msra.mxu0 0.0
    %2125 = vmatprep.subr.mxu0 0.0
    %2126 = vmatpush1.msra.mxu0 0.0
    %2127 = vmatprep.subr.mxu0 0.0
    %2128 = vmatpush1.msra.mxu0 0.0
    %2129 = vmatprep.subr.mxu0 0.0
    %2130 = vmatpush1.msra.mxu0 0.0
    %2131 = vmatprep.subr.mxu0 0.0
    %2132 = vmatpush1.msra.mxu0 0.0
    %2133 = vmatprep.subr.mxu0 0.0
    %2134 = vmatpush1.msra.mxu0 0.0
    %2135 = vmatprep.subr.mxu0 0.0
    %2136 = vmatpush1.msra.mxu0 0.0
    %2137 = vmatprep.subr.mxu0 0.0
    %2138 = vmatpush1.msra.mxu0 0.0
    %2139 = vmatprep.subr.mxu0 0.0
    %2140 = vmatpush1.msra.mxu0 0.0
    %2141 = vmatprep.subr.mxu0 0.0
    %2142 = vmatpush1.msra.mxu0 0.0
    %2143 = vmatprep.subr.mxu0 0.0
    %2144 = vmatpush1.msra.mxu0 0.0
    %2145 = vmatprep.subr.mxu0 0.0
    %2146 = vmatpush1.msra.mxu0 0.0
    %2147 = vmatprep.subr.mxu0 0.0
    %2148 = vmatpush1.msra.mxu0 0.0
    %2149 = vmatprep.subr.mxu0 0.0
    %2150 = vmatpush1.msra.mxu0 0.0
    %2151 = vmatprep.subr.mxu0 0.0
    %2152 = vmatpush1.msra.mxu0 0.0
    %2153 = vmatprep.subr.mxu0 0.0
    %2154 = vmatpush1.msra.mxu0 0.0
    %2155 = vmatprep.subr.mxu0 0.0
    %2156 = vmatpush1.msra.mxu0 0.0
    %2157 = vmatprep.subr.mxu0 0.0
    %2158 = vmatpush1.msra.mxu0 0.0
    %2159 = vmatprep.subr.mxu0 0.0
    %2160 = vmatpush1.msra.mxu0 0.0
    %2161 = vmatprep.subr.mxu0 0.0
    %2162 = vmatpush1.msra.mxu0 0.0
    %2163 = vmatprep.subr.mxu0 0.0
    %2164 = vmatpush1.msra.mxu0 0.0
    %2165 = vmatprep.subr.mxu0 0.0
    %2166 = vmatpush1.msra.mxu0 0.0
    %2167 = vmatprep.subr.mxu0 0.0
    %2168 = vmatpush1.msra.mxu0 0.0
    %2169 = vmatprep.mubr.f32.mxu0 0.0
    %v2170 = vand.u32 %v1263, 4294901760
    %v2171 = vsub.f32 %v1263, %v2170
    %2172 = vmatmul.mubr.f32.gmra.mrb[0].mxu0 %v2171
    %v2173 = vpop.f32.mrb[0].mxu0
    %v2174 = vadd.f32 %v2078, %v2173
    %v2175 = vpop.f32.mrb[0].mxu0
    %2176 = vmatprep.mubr.f32.mxu0 0.0
    %v2177 = vand.u32 %v1266, 4294901760
    %v2178 = vsub.f32 %v1266, %v2177
    %2179 = vmatmul.mubr.f32.gmra.mrb[0].mxu0 %v2178
    %v2180 = vpop.f32.mrb[0].mxu0
    %v2181 = vadd.f32 %v2084, %v2180
    %v2182 = vpop.f32.mrb[0].mxu0
    %2183 = vdwg.mxu0
    %2184 = vmatprep.subr.mxu0 0.0
    %v2185 = vand.u32 %v1862, 4294901760
    %2186 = vmatpush1.msra.mxu0 %v2185
    %2187 = vmatprep.subr.mxu0 0.0
    %v2188 = vand.u32 %v1863, 4294901760
    %2189 = vmatpush1.msra.mxu0 %v2188
    %2190 = vmatprep.subr.mxu0 0.0
    %v2191 = vand.u32 %v1864, 4294901760
    %2192 = vmatpush1.msra.mxu0 %v2191
    %2193 = vmatprep.subr.mxu0 0.0
    %v2194 = vand.u32 %v1865, 4294901760
    %2195 = vmatpush1.msra.mxu0 %v2194
    %2196 = vmatprep.subr.mxu0 0.0
    %v2197 = vand.u32 %v1866, 4294901760
    %2198 = vmatpush1.msra.mxu0 %v2197
    %2199 = vmatprep.subr.mxu0 0.0
    %v2200 = vand.u32 %v1867, 4294901760
    %2201 = vmatpush1.msra.mxu0 %v2200
    %2202 = vmatprep.subr.mxu0 0.0
    %v2203 = vand.u32 %v1868, 4294901760
    %2204 = vmatpush1.msra.mxu0 %v2203
    %2205 = vmatprep.subr.mxu0 0.0
    %v2206 = vand.u32 %v1869, 4294901760
    %2207 = vmatpush1.msra.mxu0 %v2206
    %2208 = vmatprep.subr.mxu0 0.0
    %v2209 = vand.u32 %v1870, 4294901760
    %2210 = vmatpush1.msra.mxu0 %v2209
    %2211 = vmatprep.subr.mxu0 0.0
    %2212 = vmatpush1.msra.mxu0 0.0
    %2213 = vmatprep.subr.mxu0 0.0
    %2214 = vmatpush1.msra.mxu0 0.0
    %2215 = vmatprep.subr.mxu0 0.0
    %2216 = vmatpush1.msra.mxu0 0.0
    %2217 = vmatprep.subr.mxu0 0.0
    %2218 = vmatpush1.msra.mxu0 0.0
    %2219 = vmatprep.subr.mxu0 0.0
    %2220 = vmatpush1.msra.mxu0 0.0
    %2221 = vmatprep.subr.mxu0 0.0
    %2222 = vmatpush1.msra.mxu0 0.0
    %2223 = vmatprep.subr.mxu0 0.0
    %2224 = vmatpush1.msra.mxu0 0.0
    %2225 = vmatprep.subr.mxu0 0.0
    %2226 = vmatpush1.msra.mxu0 0.0
    %2227 = vmatprep.subr.mxu0 0.0
    %2228 = vmatpush1.msra.mxu0 0.0
    %2229 = vmatprep.subr.mxu0 0.0
    %2230 = vmatpush1.msra.mxu0 0.0
    %2231 = vmatprep.subr.mxu0 0.0
    %2232 = vmatpush1.msra.mxu0 0.0
    %2233 = vmatprep.subr.mxu0 0.0
    %2234 = vmatpush1.msra.mxu0 0.0
    %2235 = vmatprep.subr.mxu0 0.0
    %2236 = vmatpush1.msra.mxu0 0.0
    %2237 = vmatprep.subr.mxu0 0.0
    %2238 = vmatpush1.msra.mxu0 0.0
    %2239 = vmatprep.subr.mxu0 0.0
    %2240 = vmatpush1.msra.mxu0 0.0
    %2241 = vmatprep.subr.mxu0 0.0
    %2242 = vmatpush1.msra.mxu0 0.0
    %2243 = vmatprep.subr.mxu0 0.0
    %2244 = vmatpush1.msra.mxu0 0.0
    %2245 = vmatprep.subr.mxu0 0.0
    %2246 = vmatpush1.msra.mxu0 0.0
    %2247 = vmatprep.subr.mxu0 0.0
    %2248 = vmatpush1.msra.mxu0 0.0
    %2249 = vmatprep.subr.mxu0 0.0
    %2250 = vmatpush1.msra.mxu0 0.0
    %2251 = vmatprep.subr.mxu0 0.0
    %2252 = vmatpush1.msra.mxu0 0.0
    %2253 = vmatprep.subr.mxu0 0.0
    %2254 = vmatpush1.msra.mxu0 0.0
    %2255 = vmatprep.subr.mxu0 0.0
    %2256 = vmatpush1.msra.mxu0 0.0
    %2257 = vmatprep.mubr.f32.mxu0 0.0
    %v2258 = vand.u32 %v1263, 4294901760
    %v2259 = vsub.f32 %v1263, %v2258
    %v2260 = vand.u32 %v2259, 4294901760
    %2261 = vmatmul.mubr.f32.gmra.mrb[0].mxu0 %v2260
    %v2262 = vpop.f32.mrb[0].mxu0
    %v2263 = vadd.f32 %v2174, %v2262
    %v2264 = vpop.f32.mrb[0].mxu0
    %2265 = vmatprep.mubr.f32.mxu0 0.0
    %v2266 = vand.u32 %v1266, 4294901760
    %v2267 = vsub.f32 %v1266, %v2266
    %v2268 = vand.u32 %v2267, 4294901760
    %2269 = vmatmul.mubr.f32.gmra.mrb[0].mxu0 %v2268
    %v2270 = vpop.f32.mrb[0].mxu0
    %v2271 = vadd.f32 %v2181, %v2270
    %v2272 = vpop.f32.mrb[0].mxu0
    %2273 = vdwg.mxu0
    %2274 = vmatprep.subr.mxu0 0.0
    %v2275 = vand.u32 %v1862, 4294901760
    %v2276 = vsub.f32 %v1862, %v2275
    %v2277 = vand.u32 %v2276, 4294901760
    %2278 = vmatpush1.msra.mxu0 %v2277
    %2279 = vmatprep.subr.mxu0 0.0
    %v2280 = vand.u32 %v1863, 4294901760
    %v2281 = vsub.f32 %v1863, %v2280
    %v2282 = vand.u32 %v2281, 4294901760
    %2283 = vmatpush1.msra.mxu0 %v2282
    %2284 = vmatprep.subr.mxu0 0.0
    %v2285 = vand.u32 %v1864, 4294901760
    %v2286 = vsub.f32 %v1864, %v2285
    %v2287 = vand.u32 %v2286, 4294901760
    %2288 = vmatpush1.msra.mxu0 %v2287
    %2289 = vmatprep.subr.mxu0 0.0
    %v2290 = vand.u32 %v1865, 4294901760
    %v2291 = vsub.f32 %v1865, %v2290
    %v2292 = vand.u32 %v2291, 4294901760
    %2293 = vmatpush1.msra.mxu0 %v2292
    %2294 = vmatprep.subr.mxu0 0.0
    %v2295 = vand.u32 %v1866, 4294901760
    %v2296 = vsub.f32 %v1866, %v2295
    %v2297 = vand.u32 %v2296, 4294901760
    %2298 = vmatpush1.msra.mxu0 %v2297
    %2299 = vmatprep.subr.mxu0 0.0
    %v2300 = vand.u32 %v1867, 4294901760
    %v2301 = vsub.f32 %v1867, %v2300
    %v2302 = vand.u32 %v2301, 4294901760
    %2303 = vmatpush1.msra.mxu0 %v2302
    %2304 = vmatprep.subr.mxu0 0.0
    %v2305 = vand.u32 %v1868, 4294901760
    %v2306 = vsub.f32 %v1868, %v2305
    %v2307 = vand.u32 %v2306, 4294901760
    %2308 = vmatpush1.msra.mxu0 %v2307
    %2309 = vmatprep.subr.mxu0 0.0
    %v2310 = vand.u32 %v1869, 4294901760
    %v2311 = vsub.f32 %v1869, %v2310
    %v2312 = vand.u32 %v2311, 4294901760
    %2313 = vmatpush1.msra.mxu0 %v2312
    %2314 = vmatprep.subr.mxu0 0.0
    %v2315 = vand.u32 %v1870, 4294901760
    %v2316 = vsub.f32 %v1870, %v2315
    %v2317 = vand.u32 %v2316, 4294901760
    %2318 = vmatpush1.msra.mxu0 %v2317
    %2319 = vmatprep.subr.mxu0 0.0
    %2320 = vmatpush1.msra.mxu0 0.0
    %2321 = vmatprep.subr.mxu0 0.0
    %2322 = vmatpush1.msra.mxu0 0.0
    %2323 = vmatprep.subr.mxu0 0.0
    %2324 = vmatpush1.msra.mxu0 0.0
    %2325 = vmatprep.subr.mxu0 0.0
    %2326 = vmatpush1.msra.mxu0 0.0
    %2327 = vmatprep.subr.mxu0 0.0
    %2328 = vmatpush1.msra.mxu0 0.0
    %2329 = vmatprep.subr.mxu0 0.0
    %2330 = vmatpush1.msra.mxu0 0.0
    %2331 = vmatprep.subr.mxu0 0.0
    %2332 = vmatpush1.msra.mxu0 0.0
    %2333 = vmatprep.subr.mxu0 0.0
    %2334 = vmatpush1.msra.mxu0 0.0
    %2335 = vmatprep.subr.mxu0 0.0
    %2336 = vmatpush1.msra.mxu0 0.0
    %2337 = vmatprep.subr.mxu0 0.0
    %2338 = vmatpush1.msra.mxu0 0.0
    %2339 = vmatprep.subr.mxu0 0.0
    %2340 = vmatpush1.msra.mxu0 0.0
    %2341 = vmatprep.subr.mxu0 0.0
    %2342 = vmatpush1.msra.mxu0 0.0
    %2343 = vmatprep.subr.mxu0 0.0
    %2344 = vmatpush1.msra.mxu0 0.0
    %2345 = vmatprep.subr.mxu0 0.0
    %2346 = vmatpush1.msra.mxu0 0.0
    %2347 = vmatprep.subr.mxu0 0.0
    %2348 = vmatpush1.msra.mxu0 0.0
    %2349 = vmatprep.subr.mxu0 0.0
    %2350 = vmatpush1.msra.mxu0 0.0
    %2351 = vmatprep.subr.mxu0 0.0
    %2352 = vmatpush1.msra.mxu0 0.0
    %2353 = vmatprep.subr.mxu0 0.0
    %2354 = vmatpush1.msra.mxu0 0.0
    %2355 = vmatprep.subr.mxu0 0.0
    %2356 = vmatpush1.msra.mxu0 0.0
    %2357 = vmatprep.subr.mxu0 0.0
    %2358 = vmatpush1.msra.mxu0 0.0
    %2359 = vmatprep.subr.mxu0 0.0
    %2360 = vmatpush1.msra.mxu0 0.0
    %2361 = vmatprep.subr.mxu0 0.0
    %2362 = vmatpush1.msra.mxu0 0.0
    %2363 = vmatprep.subr.mxu0 0.0
    %2364 = vmatpush1.msra.mxu0 0.0
    %2365 = vmatprep.mubr.f32.mxu0 0.0
    %v2366 = vand.u32 %v1263, 4294901760
    %2367 = vmatmul.mubr.f32.gmra.mrb[0].mxu0 %v2366
    %v2368 = vpop.f32.mrb[0].mxu0
    %v2369 = vadd.f32 %v2263, %v2368
    %v2370 = vpop.f32.mrb[0].mxu0
    %2371 = vmatprep.mubr.f32.mxu0 0.0
    %v2372 = vand.u32 %v1266, 4294901760
    %2373 = vmatmul.mubr.f32.gmra.mrb[0].mxu0 %v2372
    %v2374 = vpop.f32.mrb[0].mxu0
    %v2375 = vadd.f32 %v2271, %v2374
    %v2376 = vpop.f32.mrb[0].mxu0
    %2377 = vdwg.mxu0
    %2378 = vmatprep.subr.mxu0 0.0
    %v2379 = vand.u32 %v1862, 4294901760
    %2380 = vmatpush1.msra.mxu0 %v2379
    %2381 = vmatprep.subr.mxu0 0.0
    %v2382 = vand.u32 %v1863, 4294901760
    %2383 = vmatpush1.msra.mxu0 %v2382
    %2384 = vmatprep.subr.mxu0 0.0
    %v2385 = vand.u32 %v1864, 4294901760
    %2386 = vmatpush1.msra.mxu0 %v2385
    %2387 = vmatprep.subr.mxu0 0.0
    %v2388 = vand.u32 %v1865, 4294901760
    %2389 = vmatpush1.msra.mxu0 %v2388
    %2390 = vmatprep.subr.mxu0 0.0
    %v2391 = vand.u32 %v1866, 4294901760
    %2392 = vmatpush1.msra.mxu0 %v2391
    %2393 = vmatprep.subr.mxu0 0.0
    %v2394 = vand.u32 %v1867, 4294901760
    %2395 = vmatpush1.msra.mxu0 %v2394
    %2396 = vmatprep.subr.mxu0 0.0
    %v2397 = vand.u32 %v1868, 4294901760
    %2398 = vmatpush1.msra.mxu0 %v2397
    %2399 = vmatprep.subr.mxu0 0.0
    %v2400 = vand.u32 %v1869, 4294901760
    %2401 = vmatpush1.msra.mxu0 %v2400
    %2402 = vmatprep.subr.mxu0 0.0
    %v2403 = vand.u32 %v1870, 4294901760
    %2404 = vmatpush1.msra.mxu0 %v2403
    %2405 = vmatprep.subr.mxu0 0.0
    %2406 = vmatpush1.msra.mxu0 0.0
    %2407 = vmatprep.subr.mxu0 0.0
    %2408 = vmatpush1.msra.mxu0 0.0
    %2409 = vmatprep.subr.mxu0 0.0
    %2410 = vmatpush1.msra.mxu0 0.0
    %2411 = vmatprep.subr.mxu0 0.0
    %2412 = vmatpush1.msra.mxu0 0.0
    %2413 = vmatprep.subr.mxu0 0.0
    %2414 = vmatpush1.msra.mxu0 0.0
    %2415 = vmatprep.subr.mxu0 0.0
    %2416 = vmatpush1.msra.mxu0 0.0
    %2417 = vmatprep.subr.mxu0 0.0
    %2418 = vmatpush1.msra.mxu0 0.0
    %2419 = vmatprep.subr.mxu0 0.0
    %2420 = vmatpush1.msra.mxu0 0.0
    %2421 = vmatprep.subr.mxu0 0.0
    %2422 = vmatpush1.msra.mxu0 0.0
    %2423 = vmatprep.subr.mxu0 0.0
    %2424 = vmatpush1.msra.mxu0 0.0
    %2425 = vmatprep.subr.mxu0 0.0
    %2426 = vmatpush1.msra.mxu0 0.0
    %2427 = vmatprep.subr.mxu0 0.0
    %2428 = vmatpush1.msra.mxu0 0.0
    %2429 = vmatprep.subr.mxu0 0.0
    %2430 = vmatpush1.msra.mxu0 0.0
    %2431 = vmatprep.subr.mxu0 0.0
    %2432 = vmatpush1.msra.mxu0 0.0
    %2433 = vmatprep.subr.mxu0 0.0
    %2434 = vmatpush1.msra.mxu0 0.0
    %2435 = vmatprep.subr.mxu0 0.0
    %2436 = vmatpush1.msra.mxu0 0.0
    %2437 = vmatprep.subr.mxu0 0.0
    %2438 = vmatpush1.msra.mxu0 0.0
    %2439 = vmatprep.subr.mxu0 0.0
    %2440 = vmatpush1.msra.mxu0 0.0
    %2441 = vmatprep.subr.mxu0 0.0
    %2442 = vmatpush1.msra.mxu0 0.0
    %2443 = vmatprep.subr.mxu0 0.0
    %2444 = vmatpush1.msra.mxu0 0.0
    %2445 = vmatprep.subr.mxu0 0.0
    %2446 = vmatpush1.msra.mxu0 0.0
    %2447 = vmatprep.subr.mxu0 0.0
    %2448 = vmatpush1.msra.mxu0 0.0
    %2449 = vmatprep.subr.mxu0 0.0
    %2450 = vmatpush1.msra.mxu0 0.0
    %2451 = vmatprep.mubr.f32.mxu0 0.0
    %v2452 = vand.u32 %v1263, 4294901760
    %2453 = vmatmul.mubr.f32.gmra.mrb[0].mxu0 %v2452
    %v2454 = vpop.f32.mrb[0].mxu0
    %v2455 = vadd.f32 %v2369, %v2454
    %v2456 = vpop.f32.mrb[0].mxu0
    %2457 = vmatprep.mubr.f32.mxu0 0.0
    %v2458 = vand.u32 %v1266, 4294901760
    %2459 = vmatmul.mubr.f32.gmra.mrb[0].mxu0 %v2458
    %v2460 = vpop.f32.mrb[0].mxu0
    %v2461 = vadd.f32 %v2375, %v2460
    %v2462 = vpop.f32.mrb[0].mxu0
    %2463 = vdwg.mxu0
    %v2464 = vld [vmem:[%s6] sm:$0xff]
    %v2465 = vld [vmem:[%s6 + $0x8] sm:$0xff]
    %2467 = vset.pattern.permute.xlu0 0
    %2468 = vperm.xlu0 %2467, %v2464
    %v2469 = vpop.permute.xlu0 %2468
    %2472 = vset.pattern.permute.xlu0 0
    %2473 = vperm.xlu0 %2472, %v2465
    %v2474 = vpop.permute.xlu0 %2473
    %v2476 = vadd.f32 %v1852, %v2469
    %v2477 = vadd.f32 %v1858, %v2474
    %v2478 = vadd.f32 %v2455, %v2469
    %v2479 = vadd.f32 %v2461, %v2474
    %v2480 = vld [vmem:[%s14] sm:$0x1]
    %v2482 = vlaneseq
    %v2483 = vshrl.u32 %v2482, 7
    %v2484 = vsub.s32 0, %v2483
    %v2485 = vrot.slane %v2480, %v2484
    %v2487 = vmul.f32 %v2476, %v2485
    %v2488 = vmul.f32 %v2477, %v2485
    %v2489 = vmul.f32 %v2478, %v2485
    %v2490 = vmul.f32 %v2479, %v2485
    %2491 = vadd.xlane.f32.xlu0 %v2487
    %v2492 = vpop.xlane.xlu0 %2491
    %2493 = vadd.xlane.f32.xlu0 %v2488
    %v2494 = vpop.xlane.xlu0 %2493
    %2495 = vadd.xlane.f32.xlu0 %v2489
    %v2496 = vpop.xlane.xlu0 %2495
    %2497 = vadd.xlane.f32.xlu0 %v2490
    %v2498 = vpop.xlane.xlu0 %2497
    %v2499 = vmul.f32 %v2492, 0.015625
    %v2500 = vmul.f32 %v2494, 0.015625
    %v2501 = vmul.f32 %v2496, 0.015625
    %v2502 = vmul.f32 %v2498, 0.015625
    %v2503 = vld [vmem:[%s7] sm:$0xff]
    %v2504 = vld [vmem:[%s7 + $0x8] sm:$0xff]
    %v2509 = vlaneseq
    %v2510 = vshrl.u32 %v2509, 7
    %v2511 = vsub.s32 %v262, %v2510
    %v2512 = vrot.slane %v2499, %v2511
    %v2513 = vadd.s32 %v262, 4294967288
    %v2514 = vlaneseq
    %v2515 = vshrl.u32 %v2514, 7
    %v2516 = vsub.s32 %v2513, %v2515
    %v2517 = vrot.slane %v2500, %v2516
    %vm2518 = vcmask 130112
    %v2519 = vsel %vm2518, %v2517, %v2512
    %v2520 = vlaneseq
    %v2521 = vshrl.u32 %v2520, 7
    %v2522 = vsub.s32 %v262, %v2521
    %v2523 = vrot.slane %v2501, %v2522
    %v2524 = vlaneseq
    %v2525 = vshrl.u32 %v2524, 7
    %v2526 = vsub.s32 %v2513, %v2525
    %v2527 = vrot.slane %v2502, %v2526
    %v2528 = vsel %vm2518, %v2527, %v2523
    %v2529 = vsel %vm271, %v2528, %v2519
    %vm2530 = vcmask 130048
    %v2531 = vsel %vm2530, %v2529, 0
    %2533 = vmatprep.subr.mxu0 0.0
    %v2534 = vand.u32 %v2503, 4294901760
    %2535 = vmatpush1.msra.mxu0 %v2534
    %2536 = vmatprep.subr.mxu0 0.0
    %v2537 = vand.u32 %v2504, 4294901760
    %2538 = vmatpush1.msra.mxu0 %v2537
    %2539 = vmatprep.subr.mxu0 0.0
    %2540 = vmatpush1.msra.mxu0 0.0
    %2541 = vmatprep.subr.mxu0 0.0
    %2542 = vmatpush1.msra.mxu0 0.0
    %2543 = vmatprep.subr.mxu0 0.0
    %2544 = vmatpush1.msra.mxu0 0.0
    %2545 = vmatprep.subr.mxu0 0.0
    %2546 = vmatpush1.msra.mxu0 0.0
    %2547 = vmatprep.subr.mxu0 0.0
    %2548 = vmatpush1.msra.mxu0 0.0
    %2549 = vmatprep.subr.mxu0 0.0
    %2550 = vmatpush1.msra.mxu0 0.0
    %2551 = vmatprep.subr.mxu0 0.0
    %2552 = vmatpush1.msra.mxu0 0.0
    %2553 = vmatprep.subr.mxu0 0.0
    %2554 = vmatpush1.msra.mxu0 0.0
    %2555 = vmatprep.subr.mxu0 0.0
    %2556 = vmatpush1.msra.mxu0 0.0
    %2557 = vmatprep.subr.mxu0 0.0
    %2558 = vmatpush1.msra.mxu0 0.0
    %2559 = vmatprep.subr.mxu0 0.0
    %2560 = vmatpush1.msra.mxu0 0.0
    %2561 = vmatprep.subr.mxu0 0.0
    %2562 = vmatpush1.msra.mxu0 0.0
    %2563 = vmatprep.subr.mxu0 0.0
    %2564 = vmatpush1.msra.mxu0 0.0
    %2565 = vmatprep.subr.mxu0 0.0
    %2566 = vmatpush1.msra.mxu0 0.0
    %2567 = vmatprep.subr.mxu0 0.0
    %2568 = vmatpush1.msra.mxu0 0.0
    %2569 = vmatprep.subr.mxu0 0.0
    %2570 = vmatpush1.msra.mxu0 0.0
    %2571 = vmatprep.subr.mxu0 0.0
    %2572 = vmatpush1.msra.mxu0 0.0
    %2573 = vmatprep.subr.mxu0 0.0
    %2574 = vmatpush1.msra.mxu0 0.0
    %2575 = vmatprep.subr.mxu0 0.0
    %2576 = vmatpush1.msra.mxu0 0.0
    %2577 = vmatprep.subr.mxu0 0.0
    %2578 = vmatpush1.msra.mxu0 0.0
    %2579 = vmatprep.subr.mxu0 0.0
    %2580 = vmatpush1.msra.mxu0 0.0
    %2581 = vmatprep.subr.mxu0 0.0
    %2582 = vmatpush1.msra.mxu0 0.0
    %2583 = vmatprep.subr.mxu0 0.0
    %2584 = vmatpush1.msra.mxu0 0.0
    %2585 = vmatprep.subr.mxu0 0.0
    %2586 = vmatpush1.msra.mxu0 0.0
    %2587 = vmatprep.subr.mxu0 0.0
    %2588 = vmatpush1.msra.mxu0 0.0
    %2589 = vmatprep.subr.mxu0 0.0
    %2590 = vmatpush1.msra.mxu0 0.0
    %2591 = vmatprep.subr.mxu0 0.0
    %2592 = vmatpush1.msra.mxu0 0.0
    %2593 = vmatprep.subr.mxu0 0.0
    %2594 = vmatpush1.msra.mxu0 0.0
    %2595 = vmatprep.subr.mxu0 0.0
    %2596 = vmatpush1.msra.mxu0 0.0
    %2597 = vmatprep.subr.mxu0 0.0
    %2598 = vmatpush1.msra.mxu0 0.0
    %2599 = vmatprep.mubr.f32.mxu0 0.0
    %v2600 = vand.u32 %v2531, 4294901760
    %v2601 = vsub.f32 %v2531, %v2600
    %v2602 = vand.u32 %v2601, 4294901760
    %v2603 = vsub.f32 %v2601, %v2602
    %v2604 = vand.u32 %v2603, 4294901760
    %2605 = vmatmul.mubr.f32.gmra.mrb[0].mxu0 %v2604
    %v2606 = vpop.f32.mrb[0].mxu0
    %v2607 = vadd.f32 0.0, %v2606
    %v2608 = vpop.f32.mrb[0].mxu0
    %2609 = vdwg.mxu0
    %2610 = vmatprep.subr.mxu0 0.0
    %v2611 = vand.u32 %v2503, 4294901760
    %v2612 = vsub.f32 %v2503, %v2611
    %v2613 = vand.u32 %v2612, 4294901760
    %v2614 = vsub.f32 %v2612, %v2613
    %v2615 = vand.u32 %v2614, 4294901760
    %2616 = vmatpush1.msra.mxu0 %v2615
    %2617 = vmatprep.subr.mxu0 0.0
    %v2618 = vand.u32 %v2504, 4294901760
    %v2619 = vsub.f32 %v2504, %v2618
    %v2620 = vand.u32 %v2619, 4294901760
    %v2621 = vsub.f32 %v2619, %v2620
    %v2622 = vand.u32 %v2621, 4294901760
    %2623 = vmatpush1.msra.mxu0 %v2622
    %2624 = vmatprep.subr.mxu0 0.0
    %2625 = vmatpush1.msra.mxu0 0.0
    %2626 = vmatprep.subr.mxu0 0.0
    %2627 = vmatpush1.msra.mxu0 0.0
    %2628 = vmatprep.subr.mxu0 0.0
    %2629 = vmatpush1.msra.mxu0 0.0
    %2630 = vmatprep.subr.mxu0 0.0
    %2631 = vmatpush1.msra.mxu0 0.0
    %2632 = vmatprep.subr.mxu0 0.0
    %2633 = vmatpush1.msra.mxu0 0.0
    %2634 = vmatprep.subr.mxu0 0.0
    %2635 = vmatpush1.msra.mxu0 0.0
    %2636 = vmatprep.subr.mxu0 0.0
    %2637 = vmatpush1.msra.mxu0 0.0
    %2638 = vmatprep.subr.mxu0 0.0
    %2639 = vmatpush1.msra.mxu0 0.0
    %2640 = vmatprep.subr.mxu0 0.0
    %2641 = vmatpush1.msra.mxu0 0.0
    %2642 = vmatprep.subr.mxu0 0.0
    %2643 = vmatpush1.msra.mxu0 0.0
    %2644 = vmatprep.subr.mxu0 0.0
    %2645 = vmatpush1.msra.mxu0 0.0
    %2646 = vmatprep.subr.mxu0 0.0
    %2647 = vmatpush1.msra.mxu0 0.0
    %2648 = vmatprep.subr.mxu0 0.0
    %2649 = vmatpush1.msra.mxu0 0.0
    %2650 = vmatprep.subr.mxu0 0.0
    %2651 = vmatpush1.msra.mxu0 0.0
    %2652 = vmatprep.subr.mxu0 0.0
    %2653 = vmatpush1.msra.mxu0 0.0
    %2654 = vmatprep.subr.mxu0 0.0
    %2655 = vmatpush1.msra.mxu0 0.0
    %2656 = vmatprep.subr.mxu0 0.0
    %2657 = vmatpush1.msra.mxu0 0.0
    %2658 = vmatprep.subr.mxu0 0.0
    %2659 = vmatpush1.msra.mxu0 0.0
    %2660 = vmatprep.subr.mxu0 0.0
    %2661 = vmatpush1.msra.mxu0 0.0
    %2662 = vmatprep.subr.mxu0 0.0
    %2663 = vmatpush1.msra.mxu0 0.0
    %2664 = vmatprep.subr.mxu0 0.0
    %2665 = vmatpush1.msra.mxu0 0.0
    %2666 = vmatprep.subr.mxu0 0.0
    %2667 = vmatpush1.msra.mxu0 0.0
    %2668 = vmatprep.subr.mxu0 0.0
    %2669 = vmatpush1.msra.mxu0 0.0
    %2670 = vmatprep.subr.mxu0 0.0
    %2671 = vmatpush1.msra.mxu0 0.0
    %2672 = vmatprep.subr.mxu0 0.0
    %2673 = vmatpush1.msra.mxu0 0.0
    %2674 = vmatprep.subr.mxu0 0.0
    %2675 = vmatpush1.msra.mxu0 0.0
    %2676 = vmatprep.subr.mxu0 0.0
    %2677 = vmatpush1.msra.mxu0 0.0
    %2678 = vmatprep.subr.mxu0 0.0
    %2679 = vmatpush1.msra.mxu0 0.0
    %2680 = vmatprep.subr.mxu0 0.0
    %2681 = vmatpush1.msra.mxu0 0.0
    %2682 = vmatprep.subr.mxu0 0.0
    %2683 = vmatpush1.msra.mxu0 0.0
    %2684 = vmatprep.mubr.f32.mxu0 0.0
    %v2685 = vand.u32 %v2531, 4294901760
    %2686 = vmatmul.mubr.f32.gmra.mrb[0].mxu0 %v2685
    %v2687 = vpop.f32.mrb[0].mxu0
    %v2688 = vadd.f32 %v2607, %v2687
    %v2689 = vpop.f32.mrb[0].mxu0
    %2690 = vdwg.mxu0
    %2691 = vmatprep.subr.mxu0 0.0
    %v2692 = vand.u32 %v2503, 4294901760
    %v2693 = vsub.f32 %v2503, %v2692
    %2694 = vmatpush1.msra.mxu0 %v2693
    %2695 = vmatprep.subr.mxu0 0.0
    %v2696 = vand.u32 %v2504, 4294901760
    %v2697 = vsub.f32 %v2504, %v2696
    %2698 = vmatpush1.msra.mxu0 %v2697
    %2699 = vmatprep.subr.mxu0 0.0
    %2700 = vmatpush1.msra.mxu0 0.0
    %2701 = vmatprep.subr.mxu0 0.0
    %2702 = vmatpush1.msra.mxu0 0.0
    %2703 = vmatprep.subr.mxu0 0.0
    %2704 = vmatpush1.msra.mxu0 0.0
    %2705 = vmatprep.subr.mxu0 0.0
    %2706 = vmatpush1.msra.mxu0 0.0
    %2707 = vmatprep.subr.mxu0 0.0
    %2708 = vmatpush1.msra.mxu0 0.0
    %2709 = vmatprep.subr.mxu0 0.0
    %2710 = vmatpush1.msra.mxu0 0.0
    %2711 = vmatprep.subr.mxu0 0.0
    %2712 = vmatpush1.msra.mxu0 0.0
    %2713 = vmatprep.subr.mxu0 0.0
    %2714 = vmatpush1.msra.mxu0 0.0
    %2715 = vmatprep.subr.mxu0 0.0
    %2716 = vmatpush1.msra.mxu0 0.0
    %2717 = vmatprep.subr.mxu0 0.0
    %2718 = vmatpush1.msra.mxu0 0.0
    %2719 = vmatprep.subr.mxu0 0.0
    %2720 = vmatpush1.msra.mxu0 0.0
    %2721 = vmatprep.subr.mxu0 0.0
    %2722 = vmatpush1.msra.mxu0 0.0
    %2723 = vmatprep.subr.mxu0 0.0
    %2724 = vmatpush1.msra.mxu0 0.0
    %2725 = vmatprep.subr.mxu0 0.0
    %2726 = vmatpush1.msra.mxu0 0.0
    %2727 = vmatprep.subr.mxu0 0.0
    %2728 = vmatpush1.msra.mxu0 0.0
    %2729 = vmatprep.subr.mxu0 0.0
    %2730 = vmatpush1.msra.mxu0 0.0
    %2731 = vmatprep.subr.mxu0 0.0
    %2732 = vmatpush1.msra.mxu0 0.0
    %2733 = vmatprep.subr.mxu0 0.0
    %2734 = vmatpush1.msra.mxu0 0.0
    %2735 = vmatprep.subr.mxu0 0.0
    %2736 = vmatpush1.msra.mxu0 0.0
    %2737 = vmatprep.subr.mxu0 0.0
    %2738 = vmatpush1.msra.mxu0 0.0
    %2739 = vmatprep.subr.mxu0 0.0
    %2740 = vmatpush1.msra.mxu0 0.0
    %2741 = vmatprep.subr.mxu0 0.0
    %2742 = vmatpush1.msra.mxu0 0.0
    %2743 = vmatprep.subr.mxu0 0.0
    %2744 = vmatpush1.msra.mxu0 0.0
    %2745 = vmatprep.subr.mxu0 0.0
    %2746 = vmatpush1.msra.mxu0 0.0
    %2747 = vmatprep.subr.mxu0 0.0
    %2748 = vmatpush1.msra.mxu0 0.0
    %2749 = vmatprep.subr.mxu0 0.0
    %2750 = vmatpush1.msra.mxu0 0.0
    %2751 = vmatprep.subr.mxu0 0.0
    %2752 = vmatpush1.msra.mxu0 0.0
    %2753 = vmatprep.subr.mxu0 0.0
    %2754 = vmatpush1.msra.mxu0 0.0
    %2755 = vmatprep.subr.mxu0 0.0
    %2756 = vmatpush1.msra.mxu0 0.0
    %2757 = vmatprep.subr.mxu0 0.0
    %2758 = vmatpush1.msra.mxu0 0.0
    %2759 = vmatprep.mubr.f32.mxu0 0.0
    %v2760 = vand.u32 %v2531, 4294901760
    %v2761 = vsub.f32 %v2531, %v2760
    %2762 = vmatmul.mubr.f32.gmra.mrb[0].mxu0 %v2761
    %v2763 = vpop.f32.mrb[0].mxu0
    %v2764 = vadd.f32 %v2688, %v2763
    %v2765 = vpop.f32.mrb[0].mxu0
    %2766 = vdwg.mxu0
    %2767 = vmatprep.subr.mxu0 0.0
    %v2768 = vand.u32 %v2503, 4294901760
    %2769 = vmatpush1.msra.mxu0 %v2768
    %2770 = vmatprep.subr.mxu0 0.0
    %v2771 = vand.u32 %v2504, 4294901760
    %2772 = vmatpush1.msra.mxu0 %v2771
    %2773 = vmatprep.subr.mxu0 0.0
    %2774 = vmatpush1.msra.mxu0 0.0
    %2775 = vmatprep.subr.mxu0 0.0
    %2776 = vmatpush1.msra.mxu0 0.0
    %2777 = vmatprep.subr.mxu0 0.0
    %2778 = vmatpush1.msra.mxu0 0.0
    %2779 = vmatprep.subr.mxu0 0.0
    %2780 = vmatpush1.msra.mxu0 0.0
    %2781 = vmatprep.subr.mxu0 0.0
    %2782 = vmatpush1.msra.mxu0 0.0
    %2783 = vmatprep.subr.mxu0 0.0
    %2784 = vmatpush1.msra.mxu0 0.0
    %2785 = vmatprep.subr.mxu0 0.0
    %2786 = vmatpush1.msra.mxu0 0.0
    %2787 = vmatprep.subr.mxu0 0.0
    %2788 = vmatpush1.msra.mxu0 0.0
    %2789 = vmatprep.subr.mxu0 0.0
    %2790 = vmatpush1.msra.mxu0 0.0
    %2791 = vmatprep.subr.mxu0 0.0
    %2792 = vmatpush1.msra.mxu0 0.0
    %2793 = vmatprep.subr.mxu0 0.0
    %2794 = vmatpush1.msra.mxu0 0.0
    %2795 = vmatprep.subr.mxu0 0.0
    %2796 = vmatpush1.msra.mxu0 0.0
    %2797 = vmatprep.subr.mxu0 0.0
    %2798 = vmatpush1.msra.mxu0 0.0
    %2799 = vmatprep.subr.mxu0 0.0
    %2800 = vmatpush1.msra.mxu0 0.0
    %2801 = vmatprep.subr.mxu0 0.0
    %2802 = vmatpush1.msra.mxu0 0.0
    %2803 = vmatprep.subr.mxu0 0.0
    %2804 = vmatpush1.msra.mxu0 0.0
    %2805 = vmatprep.subr.mxu0 0.0
    %2806 = vmatpush1.msra.mxu0 0.0
    %2807 = vmatprep.subr.mxu0 0.0
    %2808 = vmatpush1.msra.mxu0 0.0
    %2809 = vmatprep.subr.mxu0 0.0
    %2810 = vmatpush1.msra.mxu0 0.0
    %2811 = vmatprep.subr.mxu0 0.0
    %2812 = vmatpush1.msra.mxu0 0.0
    %2813 = vmatprep.subr.mxu0 0.0
    %2814 = vmatpush1.msra.mxu0 0.0
    %2815 = vmatprep.subr.mxu0 0.0
    %2816 = vmatpush1.msra.mxu0 0.0
    %2817 = vmatprep.subr.mxu0 0.0
    %2818 = vmatpush1.msra.mxu0 0.0
    %2819 = vmatprep.subr.mxu0 0.0
    %2820 = vmatpush1.msra.mxu0 0.0
    %2821 = vmatprep.subr.mxu0 0.0
    %2822 = vmatpush1.msra.mxu0 0.0
    %2823 = vmatprep.subr.mxu0 0.0
    %2824 = vmatpush1.msra.mxu0 0.0
    %2825 = vmatprep.subr.mxu0 0.0
    %2826 = vmatpush1.msra.mxu0 0.0
    %2827 = vmatprep.subr.mxu0 0.0
    %2828 = vmatpush1.msra.mxu0 0.0
    %2829 = vmatprep.subr.mxu0 0.0
    %2830 = vmatpush1.msra.mxu0 0.0
    %2831 = vmatprep.subr.mxu0 0.0
    %2832 = vmatpush1.msra.mxu0 0.0
    %2833 = vmatprep.mubr.f32.mxu0 0.0
    %v2834 = vand.u32 %v2531, 4294901760
    %v2835 = vsub.f32 %v2531, %v2834
    %v2836 = vand.u32 %v2835, 4294901760
    %2837 = vmatmul.mubr.f32.gmra.mrb[0].mxu0 %v2836
    %v2838 = vpop.f32.mrb[0].mxu0
    %v2839 = vadd.f32 %v2764, %v2838
    %v2840 = vpop.f32.mrb[0].mxu0
    %2841 = vdwg.mxu0
    %2842 = vmatprep.subr.mxu0 0.0
    %v2843 = vand.u32 %v2503, 4294901760
    %v2844 = vsub.f32 %v2503, %v2843
    %v2845 = vand.u32 %v2844, 4294901760
    %2846 = vmatpush1.msra.mxu0 %v2845
    %2847 = vmatprep.subr.mxu0 0.0
    %v2848 = vand.u32 %v2504, 4294901760
    %v2849 = vsub.f32 %v2504, %v2848
    %v2850 = vand.u32 %v2849, 4294901760
    %2851 = vmatpush1.msra.mxu0 %v2850
    %2852 = vmatprep.subr.mxu0 0.0
    %2853 = vmatpush1.msra.mxu0 0.0
    %2854 = vmatprep.subr.mxu0 0.0
    %2855 = vmatpush1.msra.mxu0 0.0
    %2856 = vmatprep.subr.mxu0 0.0
    %2857 = vmatpush1.msra.mxu0 0.0
    %2858 = vmatprep.subr.mxu0 0.0
    %2859 = vmatpush1.msra.mxu0 0.0
    %2860 = vmatprep.subr.mxu0 0.0
    %2861 = vmatpush1.msra.mxu0 0.0
    %2862 = vmatprep.subr.mxu0 0.0
    %2863 = vmatpush1.msra.mxu0 0.0
    %2864 = vmatprep.subr.mxu0 0.0
    %2865 = vmatpush1.msra.mxu0 0.0
    %2866 = vmatprep.subr.mxu0 0.0
    %2867 = vmatpush1.msra.mxu0 0.0
    %2868 = vmatprep.subr.mxu0 0.0
    %2869 = vmatpush1.msra.mxu0 0.0
    %2870 = vmatprep.subr.mxu0 0.0
    %2871 = vmatpush1.msra.mxu0 0.0
    %2872 = vmatprep.subr.mxu0 0.0
    %2873 = vmatpush1.msra.mxu0 0.0
    %2874 = vmatprep.subr.mxu0 0.0
    %2875 = vmatpush1.msra.mxu0 0.0
    %2876 = vmatprep.subr.mxu0 0.0
    %2877 = vmatpush1.msra.mxu0 0.0
    %2878 = vmatprep.subr.mxu0 0.0
    %2879 = vmatpush1.msra.mxu0 0.0
    %2880 = vmatprep.subr.mxu0 0.0
    %2881 = vmatpush1.msra.mxu0 0.0
    %2882 = vmatprep.subr.mxu0 0.0
    %2883 = vmatpush1.msra.mxu0 0.0
    %2884 = vmatprep.subr.mxu0 0.0
    %2885 = vmatpush1.msra.mxu0 0.0
    %2886 = vmatprep.subr.mxu0 0.0
    %2887 = vmatpush1.msra.mxu0 0.0
    %2888 = vmatprep.subr.mxu0 0.0
    %2889 = vmatpush1.msra.mxu0 0.0
    %2890 = vmatprep.subr.mxu0 0.0
    %2891 = vmatpush1.msra.mxu0 0.0
    %2892 = vmatprep.subr.mxu0 0.0
    %2893 = vmatpush1.msra.mxu0 0.0
    %2894 = vmatprep.subr.mxu0 0.0
    %2895 = vmatpush1.msra.mxu0 0.0
    %2896 = vmatprep.subr.mxu0 0.0
    %2897 = vmatpush1.msra.mxu0 0.0
    %2898 = vmatprep.subr.mxu0 0.0
    %2899 = vmatpush1.msra.mxu0 0.0
    %2900 = vmatprep.subr.mxu0 0.0
    %2901 = vmatpush1.msra.mxu0 0.0
    %2902 = vmatprep.subr.mxu0 0.0
    %2903 = vmatpush1.msra.mxu0 0.0
    %2904 = vmatprep.subr.mxu0 0.0
    %2905 = vmatpush1.msra.mxu0 0.0
    %2906 = vmatprep.subr.mxu0 0.0
    %2907 = vmatpush1.msra.mxu0 0.0
    %2908 = vmatprep.subr.mxu0 0.0
    %2909 = vmatpush1.msra.mxu0 0.0
    %2910 = vmatprep.subr.mxu0 0.0
    %2911 = vmatpush1.msra.mxu0 0.0
    %2912 = vmatprep.mubr.f32.mxu0 0.0
    %v2913 = vand.u32 %v2531, 4294901760
    %2914 = vmatmul.mubr.f32.gmra.mrb[0].mxu0 %v2913
    %v2915 = vpop.f32.mrb[0].mxu0
    %v2916 = vadd.f32 %v2839, %v2915
    %v2917 = vpop.f32.mrb[0].mxu0
    %2918 = vdwg.mxu0
    %2919 = vmatprep.subr.mxu0 0.0
    %v2920 = vand.u32 %v2503, 4294901760
    %2921 = vmatpush1.msra.mxu0 %v2920
    %2922 = vmatprep.subr.mxu0 0.0
    %v2923 = vand.u32 %v2504, 4294901760
    %2924 = vmatpush1.msra.mxu0 %v2923
    %2925 = vmatprep.subr.mxu0 0.0
    %2926 = vmatpush1.msra.mxu0 0.0
    %2927 = vmatprep.subr.mxu0 0.0
    %2928 = vmatpush1.msra.mxu0 0.0
    %2929 = vmatprep.subr.mxu0 0.0
    %2930 = vmatpush1.msra.mxu0 0.0
    %2931 = vmatprep.subr.mxu0 0.0
    %2932 = vmatpush1.msra.mxu0 0.0
    %2933 = vmatprep.subr.mxu0 0.0
    %2934 = vmatpush1.msra.mxu0 0.0
    %2935 = vmatprep.subr.mxu0 0.0
    %2936 = vmatpush1.msra.mxu0 0.0
    %2937 = vmatprep.subr.mxu0 0.0
    %2938 = vmatpush1.msra.mxu0 0.0
    %2939 = vmatprep.subr.mxu0 0.0
    %2940 = vmatpush1.msra.mxu0 0.0
    %2941 = vmatprep.subr.mxu0 0.0
    %2942 = vmatpush1.msra.mxu0 0.0
    %2943 = vmatprep.subr.mxu0 0.0
    %2944 = vmatpush1.msra.mxu0 0.0
    %2945 = vmatprep.subr.mxu0 0.0
    %2946 = vmatpush1.msra.mxu0 0.0
    %2947 = vmatprep.subr.mxu0 0.0
    %2948 = vmatpush1.msra.mxu0 0.0
    %2949 = vmatprep.subr.mxu0 0.0
    %2950 = vmatpush1.msra.mxu0 0.0
    %2951 = vmatprep.subr.mxu0 0.0
    %2952 = vmatpush1.msra.mxu0 0.0
    %2953 = vmatprep.subr.mxu0 0.0
    %2954 = vmatpush1.msra.mxu0 0.0
    %2955 = vmatprep.subr.mxu0 0.0
    %2956 = vmatpush1.msra.mxu0 0.0
    %2957 = vmatprep.subr.mxu0 0.0
    %2958 = vmatpush1.msra.mxu0 0.0
    %2959 = vmatprep.subr.mxu0 0.0
    %2960 = vmatpush1.msra.mxu0 0.0
    %2961 = vmatprep.subr.mxu0 0.0
    %2962 = vmatpush1.msra.mxu0 0.0
    %2963 = vmatprep.subr.mxu0 0.0
    %2964 = vmatpush1.msra.mxu0 0.0
    %2965 = vmatprep.subr.mxu0 0.0
    %2966 = vmatpush1.msra.mxu0 0.0
    %2967 = vmatprep.subr.mxu0 0.0
    %2968 = vmatpush1.msra.mxu0 0.0
    %2969 = vmatprep.subr.mxu0 0.0
    %2970 = vmatpush1.msra.mxu0 0.0
    %2971 = vmatprep.subr.mxu0 0.0
    %2972 = vmatpush1.msra.mxu0 0.0
    %2973 = vmatprep.subr.mxu0 0.0
    %2974 = vmatpush1.msra.mxu0 0.0
    %2975 = vmatprep.subr.mxu0 0.0
    %2976 = vmatpush1.msra.mxu0 0.0
    %2977 = vmatprep.subr.mxu0 0.0
    %2978 = vmatpush1.msra.mxu0 0.0
    %2979 = vmatprep.subr.mxu0 0.0
    %2980 = vmatpush1.msra.mxu0 0.0
    %2981 = vmatprep.subr.mxu0 0.0
    %2982 = vmatpush1.msra.mxu0 0.0
    %2983 = vmatprep.subr.mxu0 0.0
    %2984 = vmatpush1.msra.mxu0 0.0
    %2985 = vmatprep.mubr.f32.mxu0 0.0
    %v2986 = vand.u32 %v2531, 4294901760
    %2987 = vmatmul.mubr.f32.gmra.mrb[0].mxu0 %v2986
    %v2988 = vpop.f32.mrb[0].mxu0
    %v2989 = vadd.f32 %v2916, %v2988
    %v2990 = vpop.f32.mrb[0].mxu0
    %2991 = vdwg.mxu0
    %v2992 = vmax.f32 %v2989, 0.0
    %v2993 = vld [vmem:[%s8] sm:$0xff]
    %v2995 = vsel %vm273, %v2992, 0
    %2997 = vmatprep.subr.mxu0 0.0
    %v2998 = vand.u32 %v2993, 4294901760
    %2999 = vmatpush1.msra.mxu0 %v2998
    %3000 = vmatprep.subr.mxu0 0.0
    %3001 = vmatpush1.msra.mxu0 0.0
    %3002 = vmatprep.subr.mxu0 0.0
    %3003 = vmatpush1.msra.mxu0 0.0
    %3004 = vmatprep.subr.mxu0 0.0
    %3005 = vmatpush1.msra.mxu0 0.0
    %3006 = vmatprep.subr.mxu0 0.0
    %3007 = vmatpush1.msra.mxu0 0.0
    %3008 = vmatprep.subr.mxu0 0.0
    %3009 = vmatpush1.msra.mxu0 0.0
    %3010 = vmatprep.subr.mxu0 0.0
    %3011 = vmatpush1.msra.mxu0 0.0
    %3012 = vmatprep.subr.mxu0 0.0
    %3013 = vmatpush1.msra.mxu0 0.0
    %3014 = vmatprep.subr.mxu0 0.0
    %3015 = vmatpush1.msra.mxu0 0.0
    %3016 = vmatprep.subr.mxu0 0.0
    %3017 = vmatpush1.msra.mxu0 0.0
    %3018 = vmatprep.subr.mxu0 0.0
    %3019 = vmatpush1.msra.mxu0 0.0
    %3020 = vmatprep.subr.mxu0 0.0
    %3021 = vmatpush1.msra.mxu0 0.0
    %3022 = vmatprep.subr.mxu0 0.0
    %3023 = vmatpush1.msra.mxu0 0.0
    %3024 = vmatprep.subr.mxu0 0.0
    %3025 = vmatpush1.msra.mxu0 0.0
    %3026 = vmatprep.subr.mxu0 0.0
    %3027 = vmatpush1.msra.mxu0 0.0
    %3028 = vmatprep.subr.mxu0 0.0
    %3029 = vmatpush1.msra.mxu0 0.0
    %3030 = vmatprep.subr.mxu0 0.0
    %3031 = vmatpush1.msra.mxu0 0.0
    %3032 = vmatprep.subr.mxu0 0.0
    %3033 = vmatpush1.msra.mxu0 0.0
    %3034 = vmatprep.subr.mxu0 0.0
    %3035 = vmatpush1.msra.mxu0 0.0
    %3036 = vmatprep.subr.mxu0 0.0
    %3037 = vmatpush1.msra.mxu0 0.0
    %3038 = vmatprep.subr.mxu0 0.0
    %3039 = vmatpush1.msra.mxu0 0.0
    %3040 = vmatprep.subr.mxu0 0.0
    %3041 = vmatpush1.msra.mxu0 0.0
    %3042 = vmatprep.subr.mxu0 0.0
    %3043 = vmatpush1.msra.mxu0 0.0
    %3044 = vmatprep.subr.mxu0 0.0
    %3045 = vmatpush1.msra.mxu0 0.0
    %3046 = vmatprep.subr.mxu0 0.0
    %3047 = vmatpush1.msra.mxu0 0.0
    %3048 = vmatprep.subr.mxu0 0.0
    %3049 = vmatpush1.msra.mxu0 0.0
    %3050 = vmatprep.subr.mxu0 0.0
    %3051 = vmatpush1.msra.mxu0 0.0
    %3052 = vmatprep.subr.mxu0 0.0
    %3053 = vmatpush1.msra.mxu0 0.0
    %3054 = vmatprep.subr.mxu0 0.0
    %3055 = vmatpush1.msra.mxu0 0.0
    %3056 = vmatprep.subr.mxu0 0.0
    %3057 = vmatpush1.msra.mxu0 0.0
    %3058 = vmatprep.subr.mxu0 0.0
    %3059 = vmatpush1.msra.mxu0 0.0
    %3060 = vmatprep.subr.mxu0 0.0
    %3061 = vmatpush1.msra.mxu0 0.0
    %3062 = vmatprep.mubr.f32.mxu0 0.0
    %v3063 = vand.u32 %v2995, 4294901760
    %v3064 = vsub.f32 %v2995, %v3063
    %v3065 = vand.u32 %v3064, 4294901760
    %v3066 = vsub.f32 %v3064, %v3065
    %v3067 = vand.u32 %v3066, 4294901760
    %3068 = vmatmul.mubr.f32.gmra.mrb[0].mxu0 %v3067
    %v3069 = vpop.f32.mrb[0].mxu0
    %v3070 = vadd.f32 0.0, %v3069
    %v3071 = vpop.f32.mrb[0].mxu0
    %3072 = vdwg.mxu0
    %3073 = vmatprep.subr.mxu0 0.0
    %v3074 = vand.u32 %v2993, 4294901760
    %v3075 = vsub.f32 %v2993, %v3074
    %v3076 = vand.u32 %v3075, 4294901760
    %v3077 = vsub.f32 %v3075, %v3076
    %v3078 = vand.u32 %v3077, 4294901760
    %3079 = vmatpush1.msra.mxu0 %v3078
    %3080 = vmatprep.subr.mxu0 0.0
    %3081 = vmatpush1.msra.mxu0 0.0
    %3082 = vmatprep.subr.mxu0 0.0
    %3083 = vmatpush1.msra.mxu0 0.0
    %3084 = vmatprep.subr.mxu0 0.0
    %3085 = vmatpush1.msra.mxu0 0.0
    %3086 = vmatprep.subr.mxu0 0.0
    %3087 = vmatpush1.msra.mxu0 0.0
    %3088 = vmatprep.subr.mxu0 0.0
    %3089 = vmatpush1.msra.mxu0 0.0
    %3090 = vmatprep.subr.mxu0 0.0
    %3091 = vmatpush1.msra.mxu0 0.0
    %3092 = vmatprep.subr.mxu0 0.0
    %3093 = vmatpush1.msra.mxu0 0.0
    %3094 = vmatprep.subr.mxu0 0.0
    %3095 = vmatpush1.msra.mxu0 0.0
    %3096 = vmatprep.subr.mxu0 0.0
    %3097 = vmatpush1.msra.mxu0 0.0
    %3098 = vmatprep.subr.mxu0 0.0
    %3099 = vmatpush1.msra.mxu0 0.0
    %3100 = vmatprep.subr.mxu0 0.0
    %3101 = vmatpush1.msra.mxu0 0.0
    %3102 = vmatprep.subr.mxu0 0.0
    %3103 = vmatpush1.msra.mxu0 0.0
    %3104 = vmatprep.subr.mxu0 0.0
    %3105 = vmatpush1.msra.mxu0 0.0
    %3106 = vmatprep.subr.mxu0 0.0
    %3107 = vmatpush1.msra.mxu0 0.0
    %3108 = vmatprep.subr.mxu0 0.0
    %3109 = vmatpush1.msra.mxu0 0.0
    %3110 = vmatprep.subr.mxu0 0.0
    %3111 = vmatpush1.msra.mxu0 0.0
    %3112 = vmatprep.subr.mxu0 0.0
    %3113 = vmatpush1.msra.mxu0 0.0
    %3114 = vmatprep.subr.mxu0 0.0
    %3115 = vmatpush1.msra.mxu0 0.0
    %3116 = vmatprep.subr.mxu0 0.0
    %3117 = vmatpush1.msra.mxu0 0.0
    %3118 = vmatprep.subr.mxu0 0.0
    %3119 = vmatpush1.msra.mxu0 0.0
    %3120 = vmatprep.subr.mxu0 0.0
    %3121 = vmatpush1.msra.mxu0 0.0
    %3122 = vmatprep.subr.mxu0 0.0
    %3123 = vmatpush1.msra.mxu0 0.0
    %3124 = vmatprep.subr.mxu0 0.0
    %3125 = vmatpush1.msra.mxu0 0.0
    %3126 = vmatprep.subr.mxu0 0.0
    %3127 = vmatpush1.msra.mxu0 0.0
    %3128 = vmatprep.subr.mxu0 0.0
    %3129 = vmatpush1.msra.mxu0 0.0
    %3130 = vmatprep.subr.mxu0 0.0
    %3131 = vmatpush1.msra.mxu0 0.0
    %3132 = vmatprep.subr.mxu0 0.0
    %3133 = vmatpush1.msra.mxu0 0.0
    %3134 = vmatprep.subr.mxu0 0.0
    %3135 = vmatpush1.msra.mxu0 0.0
    %3136 = vmatprep.subr.mxu0 0.0
    %3137 = vmatpush1.msra.mxu0 0.0
    %3138 = vmatprep.subr.mxu0 0.0
    %3139 = vmatpush1.msra.mxu0 0.0
    %3140 = vmatprep.subr.mxu0 0.0
    %3141 = vmatpush1.msra.mxu0 0.0
    %3142 = vmatprep.mubr.f32.mxu0 0.0
    %v3143 = vand.u32 %v2995, 4294901760
    %3144 = vmatmul.mubr.f32.gmra.mrb[0].mxu0 %v3143
    %v3145 = vpop.f32.mrb[0].mxu0
    %v3146 = vadd.f32 %v3070, %v3145
    %v3147 = vpop.f32.mrb[0].mxu0
    %3148 = vdwg.mxu0
    %3149 = vmatprep.subr.mxu0 0.0
    %v3150 = vand.u32 %v2993, 4294901760
    %v3151 = vsub.f32 %v2993, %v3150
    %3152 = vmatpush1.msra.mxu0 %v3151
    %3153 = vmatprep.subr.mxu0 0.0
    %3154 = vmatpush1.msra.mxu0 0.0
    %3155 = vmatprep.subr.mxu0 0.0
    %3156 = vmatpush1.msra.mxu0 0.0
    %3157 = vmatprep.subr.mxu0 0.0
    %3158 = vmatpush1.msra.mxu0 0.0
    %3159 = vmatprep.subr.mxu0 0.0
    %3160 = vmatpush1.msra.mxu0 0.0
    %3161 = vmatprep.subr.mxu0 0.0
    %3162 = vmatpush1.msra.mxu0 0.0
    %3163 = vmatprep.subr.mxu0 0.0
    %3164 = vmatpush1.msra.mxu0 0.0
    %3165 = vmatprep.subr.mxu0 0.0
    %3166 = vmatpush1.msra.mxu0 0.0
    %3167 = vmatprep.subr.mxu0 0.0
    %3168 = vmatpush1.msra.mxu0 0.0
    %3169 = vmatprep.subr.mxu0 0.0
    %3170 = vmatpush1.msra.mxu0 0.0
    %3171 = vmatprep.subr.mxu0 0.0
    %3172 = vmatpush1.msra.mxu0 0.0
    %3173 = vmatprep.subr.mxu0 0.0
    %3174 = vmatpush1.msra.mxu0 0.0
    %3175 = vmatprep.subr.mxu0 0.0
    %3176 = vmatpush1.msra.mxu0 0.0
    %3177 = vmatprep.subr.mxu0 0.0
    %3178 = vmatpush1.msra.mxu0 0.0
    %3179 = vmatprep.subr.mxu0 0.0
    %3180 = vmatpush1.msra.mxu0 0.0
    %3181 = vmatprep.subr.mxu0 0.0
    %3182 = vmatpush1.msra.mxu0 0.0
    %3183 = vmatprep.subr.mxu0 0.0
    %3184 = vmatpush1.msra.mxu0 0.0
    %3185 = vmatprep.subr.mxu0 0.0
    %3186 = vmatpush1.msra.mxu0 0.0
    %3187 = vmatprep.subr.mxu0 0.0
    %3188 = vmatpush1.msra.mxu0 0.0
    %3189 = vmatprep.subr.mxu0 0.0
    %3190 = vmatpush1.msra.mxu0 0.0
    %3191 = vmatprep.subr.mxu0 0.0
    %3192 = vmatpush1.msra.mxu0 0.0
    %3193 = vmatprep.subr.mxu0 0.0
    %3194 = vmatpush1.msra.mxu0 0.0
    %3195 = vmatprep.subr.mxu0 0.0
    %3196 = vmatpush1.msra.mxu0 0.0
    %3197 = vmatprep.subr.mxu0 0.0
    %3198 = vmatpush1.msra.mxu0 0.0
    %3199 = vmatprep.subr.mxu0 0.0
    %3200 = vmatpush1.msra.mxu0 0.0
    %3201 = vmatprep.subr.mxu0 0.0
    %3202 = vmatpush1.msra.mxu0 0.0
    %3203 = vmatprep.subr.mxu0 0.0
    %3204 = vmatpush1.msra.mxu0 0.0
    %3205 = vmatprep.subr.mxu0 0.0
    %3206 = vmatpush1.msra.mxu0 0.0
    %3207 = vmatprep.subr.mxu0 0.0
    %3208 = vmatpush1.msra.mxu0 0.0
    %3209 = vmatprep.subr.mxu0 0.0
    %3210 = vmatpush1.msra.mxu0 0.0
    %3211 = vmatprep.subr.mxu0 0.0
    %3212 = vmatpush1.msra.mxu0 0.0
    %3213 = vmatprep.subr.mxu0 0.0
    %3214 = vmatpush1.msra.mxu0 0.0
    %3215 = vmatprep.mubr.f32.mxu0 0.0
    %v3216 = vand.u32 %v2995, 4294901760
    %v3217 = vsub.f32 %v2995, %v3216
    %3218 = vmatmul.mubr.f32.gmra.mrb[0].mxu0 %v3217
    %v3219 = vpop.f32.mrb[0].mxu0
    %v3220 = vadd.f32 %v3146, %v3219
    %v3221 = vpop.f32.mrb[0].mxu0
    %3222 = vdwg.mxu0
    %3223 = vmatprep.subr.mxu0 0.0
    %v3224 = vand.u32 %v2993, 4294901760
    %3225 = vmatpush1.msra.mxu0 %v3224
    %3226 = vmatprep.subr.mxu0 0.0
    %3227 = vmatpush1.msra.mxu0 0.0
    %3228 = vmatprep.subr.mxu0 0.0
    %3229 = vmatpush1.msra.mxu0 0.0
    %3230 = vmatprep.subr.mxu0 0.0
    %3231 = vmatpush1.msra.mxu0 0.0
    %3232 = vmatprep.subr.mxu0 0.0
    %3233 = vmatpush1.msra.mxu0 0.0
    %3234 = vmatprep.subr.mxu0 0.0
    %3235 = vmatpush1.msra.mxu0 0.0
    %3236 = vmatprep.subr.mxu0 0.0
    %3237 = vmatpush1.msra.mxu0 0.0
    %3238 = vmatprep.subr.mxu0 0.0
    %3239 = vmatpush1.msra.mxu0 0.0
    %3240 = vmatprep.subr.mxu0 0.0
    %3241 = vmatpush1.msra.mxu0 0.0
    %3242 = vmatprep.subr.mxu0 0.0
    %3243 = vmatpush1.msra.mxu0 0.0
    %3244 = vmatprep.subr.mxu0 0.0
    %3245 = vmatpush1.msra.mxu0 0.0
    %3246 = vmatprep.subr.mxu0 0.0
    %3247 = vmatpush1.msra.mxu0 0.0
    %3248 = vmatprep.subr.mxu0 0.0
    %3249 = vmatpush1.msra.mxu0 0.0
    %3250 = vmatprep.subr.mxu0 0.0
    %3251 = vmatpush1.msra.mxu0 0.0
    %3252 = vmatprep.subr.mxu0 0.0
    %3253 = vmatpush1.msra.mxu0 0.0
    %3254 = vmatprep.subr.mxu0 0.0
    %3255 = vmatpush1.msra.mxu0 0.0
    %3256 = vmatprep.subr.mxu0 0.0
    %3257 = vmatpush1.msra.mxu0 0.0
    %3258 = vmatprep.subr.mxu0 0.0
    %3259 = vmatpush1.msra.mxu0 0.0
    %3260 = vmatprep.subr.mxu0 0.0
    %3261 = vmatpush1.msra.mxu0 0.0
    %3262 = vmatprep.subr.mxu0 0.0
    %3263 = vmatpush1.msra.mxu0 0.0
    %3264 = vmatprep.subr.mxu0 0.0
    %3265 = vmatpush1.msra.mxu0 0.0
    %3266 = vmatprep.subr.mxu0 0.0
    %3267 = vmatpush1.msra.mxu0 0.0
    %3268 = vmatprep.subr.mxu0 0.0
    %3269 = vmatpush1.msra.mxu0 0.0
    %3270 = vmatprep.subr.mxu0 0.0
    %3271 = vmatpush1.msra.mxu0 0.0
    %3272 = vmatprep.subr.mxu0 0.0
    %3273 = vmatpush1.msra.mxu0 0.0
    %3274 = vmatprep.subr.mxu0 0.0
    %3275 = vmatpush1.msra.mxu0 0.0
    %3276 = vmatprep.subr.mxu0 0.0
    %3277 = vmatpush1.msra.mxu0 0.0
    %3278 = vmatprep.subr.mxu0 0.0
    %3279 = vmatpush1.msra.mxu0 0.0
    %3280 = vmatprep.subr.mxu0 0.0
    %3281 = vmatpush1.msra.mxu0 0.0
    %3282 = vmatprep.subr.mxu0 0.0
    %3283 = vmatpush1.msra.mxu0 0.0
    %3284 = vmatprep.subr.mxu0 0.0
    %3285 = vmatpush1.msra.mxu0 0.0
    %3286 = vmatprep.subr.mxu0 0.0
    %3287 = vmatpush1.msra.mxu0 0.0
    %3288 = vmatprep.mubr.f32.mxu0 0.0
    %v3289 = vand.u32 %v2995, 4294901760
    %v3290 = vsub.f32 %v2995, %v3289
    %v3291 = vand.u32 %v3290, 4294901760
    %3292 = vmatmul.mubr.f32.gmra.mrb[0].mxu0 %v3291
    %v3293 = vpop.f32.mrb[0].mxu0
    %v3294 = vadd.f32 %v3220, %v3293
    %v3295 = vpop.f32.mrb[0].mxu0
    %3296 = vdwg.mxu0
    %3297 = vmatprep.subr.mxu0 0.0
    %v3298 = vand.u32 %v2993, 4294901760
    %v3299 = vsub.f32 %v2993, %v3298
    %v3300 = vand.u32 %v3299, 4294901760
    %3301 = vmatpush1.msra.mxu0 %v3300
    %3302 = vmatprep.subr.mxu0 0.0
    %3303 = vmatpush1.msra.mxu0 0.0
    %3304 = vmatprep.subr.mxu0 0.0
    %3305 = vmatpush1.msra.mxu0 0.0
    %3306 = vmatprep.subr.mxu0 0.0
    %3307 = vmatpush1.msra.mxu0 0.0
    %3308 = vmatprep.subr.mxu0 0.0
    %3309 = vmatpush1.msra.mxu0 0.0
    %3310 = vmatprep.subr.mxu0 0.0
    %3311 = vmatpush1.msra.mxu0 0.0
    %3312 = vmatprep.subr.mxu0 0.0
    %3313 = vmatpush1.msra.mxu0 0.0
    %3314 = vmatprep.subr.mxu0 0.0
    %3315 = vmatpush1.msra.mxu0 0.0
    %3316 = vmatprep.subr.mxu0 0.0
    %3317 = vmatpush1.msra.mxu0 0.0
    %3318 = vmatprep.subr.mxu0 0.0
    %3319 = vmatpush1.msra.mxu0 0.0
    %3320 = vmatprep.subr.mxu0 0.0
    %3321 = vmatpush1.msra.mxu0 0.0
    %3322 = vmatprep.subr.mxu0 0.0
    %3323 = vmatpush1.msra.mxu0 0.0
    %3324 = vmatprep.subr.mxu0 0.0
    %3325 = vmatpush1.msra.mxu0 0.0
    %3326 = vmatprep.subr.mxu0 0.0
    %3327 = vmatpush1.msra.mxu0 0.0
    %3328 = vmatprep.subr.mxu0 0.0
    %3329 = vmatpush1.msra.mxu0 0.0
    %3330 = vmatprep.subr.mxu0 0.0
    %3331 = vmatpush1.msra.mxu0 0.0
    %3332 = vmatprep.subr.mxu0 0.0
    %3333 = vmatpush1.msra.mxu0 0.0
    %3334 = vmatprep.subr.mxu0 0.0
    %3335 = vmatpush1.msra.mxu0 0.0
    %3336 = vmatprep.subr.mxu0 0.0
    %3337 = vmatpush1.msra.mxu0 0.0
    %3338 = vmatprep.subr.mxu0 0.0
    %3339 = vmatpush1.msra.mxu0 0.0
    %3340 = vmatprep.subr.mxu0 0.0
    %3341 = vmatpush1.msra.mxu0 0.0
    %3342 = vmatprep.subr.mxu0 0.0
    %3343 = vmatpush1.msra.mxu0 0.0
    %3344 = vmatprep.subr.mxu0 0.0
    %3345 = vmatpush1.msra.mxu0 0.0
    %3346 = vmatprep.subr.mxu0 0.0
    %3347 = vmatpush1.msra.mxu0 0.0
    %3348 = vmatprep.subr.mxu0 0.0
    %3349 = vmatpush1.msra.mxu0 0.0
    %3350 = vmatprep.subr.mxu0 0.0
    %3351 = vmatpush1.msra.mxu0 0.0
    %3352 = vmatprep.subr.mxu0 0.0
    %3353 = vmatpush1.msra.mxu0 0.0
    %3354 = vmatprep.subr.mxu0 0.0
    %3355 = vmatpush1.msra.mxu0 0.0
    %3356 = vmatprep.subr.mxu0 0.0
    %3357 = vmatpush1.msra.mxu0 0.0
    %3358 = vmatprep.subr.mxu0 0.0
    %3359 = vmatpush1.msra.mxu0 0.0
    %3360 = vmatprep.subr.mxu0 0.0
    %3361 = vmatpush1.msra.mxu0 0.0
    %3362 = vmatprep.subr.mxu0 0.0
    %3363 = vmatpush1.msra.mxu0 0.0
    %3364 = vmatprep.mubr.f32.mxu0 0.0
    %v3365 = vand.u32 %v2995, 4294901760
    %3366 = vmatmul.mubr.f32.gmra.mrb[0].mxu0 %v3365
    %v3367 = vpop.f32.mrb[0].mxu0
    %v3368 = vadd.f32 %v3294, %v3367
    %v3369 = vpop.f32.mrb[0].mxu0
    %3370 = vdwg.mxu0
    %3371 = vmatprep.subr.mxu0 0.0
    %v3372 = vand.u32 %v2993, 4294901760
    %3373 = vmatpush1.msra.mxu0 %v3372
    %3374 = vmatprep.subr.mxu0 0.0
    %3375 = vmatpush1.msra.mxu0 0.0
    %3376 = vmatprep.subr.mxu0 0.0
    %3377 = vmatpush1.msra.mxu0 0.0
    %3378 = vmatprep.subr.mxu0 0.0
    %3379 = vmatpush1.msra.mxu0 0.0
    %3380 = vmatprep.subr.mxu0 0.0
    %3381 = vmatpush1.msra.mxu0 0.0
    %3382 = vmatprep.subr.mxu0 0.0
    %3383 = vmatpush1.msra.mxu0 0.0
    %3384 = vmatprep.subr.mxu0 0.0
    %3385 = vmatpush1.msra.mxu0 0.0
    %3386 = vmatprep.subr.mxu0 0.0
    %3387 = vmatpush1.msra.mxu0 0.0
    %3388 = vmatprep.subr.mxu0 0.0
    %3389 = vmatpush1.msra.mxu0 0.0
    %3390 = vmatprep.subr.mxu0 0.0
    %3391 = vmatpush1.msra.mxu0 0.0
    %3392 = vmatprep.subr.mxu0 0.0
    %3393 = vmatpush1.msra.mxu0 0.0
    %3394 = vmatprep.subr.mxu0 0.0
    %3395 = vmatpush1.msra.mxu0 0.0
    %3396 = vmatprep.subr.mxu0 0.0
    %3397 = vmatpush1.msra.mxu0 0.0
    %3398 = vmatprep.subr.mxu0 0.0
    %3399 = vmatpush1.msra.mxu0 0.0
    %3400 = vmatprep.subr.mxu0 0.0
    %3401 = vmatpush1.msra.mxu0 0.0
    %3402 = vmatprep.subr.mxu0 0.0
    %3403 = vmatpush1.msra.mxu0 0.0
    %3404 = vmatprep.subr.mxu0 0.0
    %3405 = vmatpush1.msra.mxu0 0.0
    %3406 = vmatprep.subr.mxu0 0.0
    %3407 = vmatpush1.msra.mxu0 0.0
    %3408 = vmatprep.subr.mxu0 0.0
    %3409 = vmatpush1.msra.mxu0 0.0
    %3410 = vmatprep.subr.mxu0 0.0
    %3411 = vmatpush1.msra.mxu0 0.0
    %3412 = vmatprep.subr.mxu0 0.0
    %3413 = vmatpush1.msra.mxu0 0.0
    %3414 = vmatprep.subr.mxu0 0.0
    %3415 = vmatpush1.msra.mxu0 0.0
    %3416 = vmatprep.subr.mxu0 0.0
    %3417 = vmatpush1.msra.mxu0 0.0
    %3418 = vmatprep.subr.mxu0 0.0
    %3419 = vmatpush1.msra.mxu0 0.0
    %3420 = vmatprep.subr.mxu0 0.0
    %3421 = vmatpush1.msra.mxu0 0.0
    %3422 = vmatprep.subr.mxu0 0.0
    %3423 = vmatpush1.msra.mxu0 0.0
    %3424 = vmatprep.subr.mxu0 0.0
    %3425 = vmatpush1.msra.mxu0 0.0
    %3426 = vmatprep.subr.mxu0 0.0
    %3427 = vmatpush1.msra.mxu0 0.0
    %3428 = vmatprep.subr.mxu0 0.0
    %3429 = vmatpush1.msra.mxu0 0.0
    %3430 = vmatprep.subr.mxu0 0.0
    %3431 = vmatpush1.msra.mxu0 0.0
    %3432 = vmatprep.subr.mxu0 0.0
    %3433 = vmatpush1.msra.mxu0 0.0
    %3434 = vmatprep.subr.mxu0 0.0
    %3435 = vmatpush1.msra.mxu0 0.0
    %3436 = vmatprep.mubr.f32.mxu0 0.0
    %v3437 = vand.u32 %v2995, 4294901760
    %3438 = vmatmul.mubr.f32.gmra.mrb[0].mxu0 %v3437
    %v3439 = vpop.f32.mrb[0].mxu0
    %v3440 = vadd.f32 %v3368, %v3439
    %v3441 = vpop.f32.mrb[0].mxu0
    %3442 = vdwg.mxu0
    %v3443 = vxor.u32 %v3440, 2147483648
    %v3444 = vmul.f32 %v3443, 1.442695
    %v3445 = vpow.pop %v3444
    %v3446 = vadd.f32 %v3445, 1.0
    %v3447 = vrcp.pop %v3446
    %v3448 = vmul.f32 1.0, %v3447
    %v3449 = vlaneseq
    %v3450 = vshrl.u32 %v3449, 7
    %v3451 = vsub.s32 0, %v3450
    %v3452 = vrot.slane %v3448, %v3451
    %3454 = vbcast.lane.b32.xlu0 %v3452, 256
    %v3455 = vpop.permute.xlu0 %3454
    %s3457 = sor.u32 256, 8
    %3458 = vbcast.lane.b32.xlu0 %v3452, %s3457
    %v3459 = vpop.permute.xlu0 %3458
    %v3460 = vlaneseq
    %v3461 = vshrl.u32 %v3460, 7
    %v3462 = vsub.s32 1, %v3461
    %v3463 = vrot.slane %v3448, %v3462
    %3465 = vbcast.lane.b32.xlu0 %v3463, 256
    %v3466 = vpop.permute.xlu0 %3465
    %s3468 = sor.u32 256, 8
    %3469 = vbcast.lane.b32.xlu0 %v3463, %s3468
    %v3470 = vpop.permute.xlu0 %3469
    %v3471 = vmul.f32 %v2476, %v3455
    %v3472 = vmul.f32 %v2477, %v3459
    %v3473 = vmul.f32 %v2478, %v3466
    %v3474 = vmul.f32 %v2479, %v3470
    %v3475 = vmax.f32 %v3471, 0.0
    %v3476 = vmax.f32 %v3472, 0.0
    %v3477 = vmax.f32 %v3473, 0.0
    %v3478 = vmax.f32 %v3474, 0.0
    %v3479 = vmul.f32 %v3475, %v2485
    %v3480 = vmul.f32 %v3476, %v2485
    %v3481 = vmul.f32 %v3477, %v2485
    %v3482 = vmul.f32 %v3478, %v2485
    %v3483 = vadd.f32 %v3479, %v3481
    %3484 = vadd.xlane.f32.xlu0 %v3483
    %v3485 = vpop.xlane.xlu0 %3484
    %v3486 = vadd.f32 %v3480, %v3482
    %3487 = vadd.xlane.f32.xlu0 %v3486
    %v3488 = vpop.xlane.xlu0 %3487
    %v3489 = vmul.f32 %v3485, 0.0078125
    %v3490 = vmul.f32 %v3488, 0.0078125
    %v3491 = vsub.f32 %v3475, %v3489
    %v3492 = vsub.f32 %v3476, %v3490
    %v3493 = vsub.f32 %v3477, %v3489
    %v3494 = vsub.f32 %v3478, %v3490
    %v3495 = vmul.f32 %v3491, %v3491
    %v3496 = vmul.f32 %v3492, %v3492
    %v3497 = vmul.f32 %v3493, %v3493
    %v3498 = vmul.f32 %v3494, %v3494
    %v3499 = vmul.f32 %v3495, %v2485
    %v3500 = vmul.f32 %v3496, %v2485
    %v3501 = vmul.f32 %v3497, %v2485
    %v3502 = vmul.f32 %v3498, %v2485
    %v3503 = vadd.f32 %v3499, %v3501
    %3504 = vadd.xlane.f32.xlu0 %v3503
    %v3505 = vpop.xlane.xlu0 %3504
    %v3506 = vadd.f32 %v3500, %v3502
    %3507 = vadd.xlane.f32.xlu0 %v3506
    %v3508 = vpop.xlane.xlu0 %3507
    %v3509 = vmul.f32 %v3505, 0.0078125
    %v3510 = vmul.f32 %v3508, 0.0078125
    %v3511 = vadd.f32 %v3509, 1e-05
    %v3512 = vadd.f32 %v3510, 1e-05
    %v3513 = vrsqrt.pop %v3511
    %v3514 = vrsqrt.pop %v3512
    %v3515 = vmul.f32 %v3491, %v3513
    %v3516 = vmul.f32 %v3492, %v3514
    %v3517 = vmul.f32 %v3493, %v3513
    %v3518 = vmul.f32 %v3494, %v3514
    %v3519 = vld [vmem:[%s9] sm:$0xff]
    %v3520 = vld [vmem:[%s9 + $0x8] sm:$0xff]
    %3522 = vset.pattern.permute.xlu0 0
    %3523 = vperm.xlu0 %3522, %v3519
    %v3524 = vpop.permute.xlu0 %3523
    %3527 = vset.pattern.permute.xlu0 0
    %3528 = vperm.xlu0 %3527, %v3520
    %v3529 = vpop.permute.xlu0 %3528
    %v3531 = vmul.f32 %v3515, %v3524
    %v3532 = vmul.f32 %v3516, %v3529
    %v3533 = vmul.f32 %v3517, %v3524
    %v3534 = vmul.f32 %v3518, %v3529
    %v3535 = vld [vmem:[%s10] sm:$0xff]
    %v3536 = vld [vmem:[%s10 + $0x8] sm:$0xff]
    %3538 = vset.pattern.permute.xlu0 0
    %3539 = vperm.xlu0 %3538, %v3535
    %v3540 = vpop.permute.xlu0 %3539
    %3543 = vset.pattern.permute.xlu0 0
    %3544 = vperm.xlu0 %3543, %v3536
    %v3545 = vpop.permute.xlu0 %3544
    %v3547 = vadd.f32 %v3531, %v3540
    %v3548 = vadd.f32 %v3532, %v3545
    %v3549 = vadd.f32 %v3533, %v3540
    %v3550 = vadd.f32 %v3534, %v3545
    %v3551 = vmax.f32 %v3547, 0.0
    %v3552 = vmax.f32 %v3548, 0.0
    %v3553 = vmax.f32 %v3549, 0.0
    %v3554 = vmax.f32 %v3550, 0.0
    %v3558 = vunpack.c.l.s4 1983009808
    %v3559 = vunpack.c.0.s8 %v3558
    %v3560 = vlaneseq
    %v3561 = vshrl.u32 %v3560, 7
    %v3562 = vsub.s32 %v3559, %v3561
    %v3563 = vrot.slane %v3551, %v3562
    %v3565 = vunpack.c.l.s4 1983009808
    %v3566 = vunpack.c.0.s8 %v3565
    %v3567 = vlaneseq
    %v3568 = vshrl.u32 %v3567, 7
    %v3569 = vsub.s32 %v3566, %v3568
    %v3570 = vrot.slane %v3553, %v3569
    %vm3571 = vcmask 1044484
    %v3572 = vsel %vm3571, %v3563, %v3563
    %vm3573 = vcmask 1046534
    %v3574 = vsel %vm3573, %v3563, %v3572
    %v3575 = vrot.slane %v3570, 7
    %v3576 = vsel %vm271, %v3575, %v3574
    %vm3577 = vcmask 1043459
    %v3578 = vsel %vm3577, %v3575, %v3576
    %vm3579 = vcmask 1045509
    %v3580 = vsel %vm3579, %v3575, %v3578
    %vm3581 = vcmask 1047559
    %v3582 = vsel %vm3581, %v3575, %v3580
    %3584 = vst [vmem:[#allocation3] sm:$0x3] %v3582
    %v3585 = vrot.slane %v3563, 1
    %v3586 = vsel %vm3571, %v3585, %v3585
    %v3587 = vsel %vm3573, %v3585, %v3586
    %v3588 = vsel %vm271, %v3570, %v3587
    %v3589 = vsel %vm3577, %v3570, %v3588
    %v3590 = vsel %vm3579, %v3570, %v3589
    %v3591 = vsel %vm3581, %v3570, %v3590
    %3593 = vst [vmem:[#allocation3 + $0x2] sm:$0x3] %v3591
    %v3594 = vcombine.high %v3563, %v3563
    %v3595 = vcombine.high %v3570, %v3570
    %v3596 = vsel %vm3571, %v3594, %v3594
    %v3597 = vsel %vm3573, %v3594, %v3596
    %v3598 = vrot.slane %v3595, 7
    %v3599 = vsel %vm271, %v3598, %v3597
    %v3600 = vsel %vm3577, %v3598, %v3599
    %v3601 = vsel %vm3579, %v3598, %v3600
    %v3602 = vsel %vm3581, %v3598, %v3601
    %3604 = vst [vmem:[#allocation3 + $0x4] sm:$0x3] %v3602
    %v3605 = vrot.slane %v3594, 1
    %v3606 = vsel %vm3571, %v3605, %v3605
    %v3607 = vsel %vm3573, %v3605, %v3606
    %v3608 = vsel %vm271, %v3595, %v3607
    %v3609 = vsel %vm3577, %v3595, %v3608
    %v3610 = vsel %vm3579, %v3595, %v3609
    %v3611 = vsel %vm3581, %v3595, %v3610
    %3613 = vst [vmem:[#allocation3 + $0x6] sm:$0x3] %v3611
    %v3614 = vcombine.high %v3551, %v3551
    %v3616 = vunpack.c.l.s4 1983009808
    %v3617 = vunpack.c.0.s8 %v3616
    %v3618 = vlaneseq
    %v3619 = vshrl.u32 %v3618, 7
    %v3620 = vsub.s32 %v3617, %v3619
    %v3621 = vrot.slane %v3614, %v3620
    %v3622 = vcombine.high %v3553, %v3553
    %v3624 = vunpack.c.l.s4 1983009808
    %v3625 = vunpack.c.0.s8 %v3624
    %v3626 = vlaneseq
    %v3627 = vshrl.u32 %v3626, 7
    %v3628 = vsub.s32 %v3625, %v3627
    %v3629 = vrot.slane %v3622, %v3628
    %v3630 = vsel %vm3571, %v3621, %v3621
    %v3631 = vsel %vm3573, %v3621, %v3630
    %v3632 = vrot.slane %v3629, 7
    %v3633 = vsel %vm271, %v3632, %v3631
    %v3634 = vsel %vm3577, %v3632, %v3633
    %v3635 = vsel %vm3579, %v3632, %v3634
    %v3636 = vsel %vm3581, %v3632, %v3635
    %3638 = vst [vmem:[#allocation3 + $0x8] sm:$0x3] %v3636
    %v3639 = vrot.slane %v3621, 1
    %v3640 = vsel %vm3571, %v3639, %v3639
    %v3641 = vsel %vm3573, %v3639, %v3640
    %v3642 = vsel %vm271, %v3629, %v3641
    %v3643 = vsel %vm3577, %v3629, %v3642
    %v3644 = vsel %vm3579, %v3629, %v3643
    %v3645 = vsel %vm3581, %v3629, %v3644
    %3647 = vst [vmem:[#allocation3 + $0xa] sm:$0x3] %v3645
    %v3648 = vcombine.high %v3621, %v3621
    %v3649 = vcombine.high %v3629, %v3629
    %v3650 = vsel %vm3571, %v3648, %v3648
    %v3651 = vsel %vm3573, %v3648, %v3650
    %v3652 = vrot.slane %v3649, 7
    %v3653 = vsel %vm271, %v3652, %v3651
    %v3654 = vsel %vm3577, %v3652, %v3653
    %v3655 = vsel %vm3579, %v3652, %v3654
    %v3656 = vsel %vm3581, %v3652, %v3655
    %3658 = vst [vmem:[#allocation3 + $0xc] sm:$0x3] %v3656
    %v3659 = vrot.slane %v3648, 1
    %v3660 = vsel %vm3571, %v3659, %v3659
    %v3661 = vsel %vm3573, %v3659, %v3660
    %v3662 = vsel %vm271, %v3649, %v3661
    %v3663 = vsel %vm3577, %v3649, %v3662
    %v3664 = vsel %vm3579, %v3649, %v3663
    %v3665 = vsel %vm3581, %v3649, %v3664
    %3667 = vst [vmem:[#allocation3 + $0xe] sm:$0x3] %v3665
    %v3671 = vunpack.c.l.s4 1983009808
    %v3672 = vunpack.c.0.s8 %v3671
    %v3673 = vlaneseq
    %v3674 = vshrl.u32 %v3673, 7
    %v3675 = vsub.s32 %v3672, %v3674
    %v3676 = vrot.slane %v3552, %v3675
    %v3678 = vunpack.c.l.s4 1983009808
    %v3679 = vunpack.c.0.s8 %v3678
    %v3680 = vlaneseq
    %v3681 = vshrl.u32 %v3680, 7
    %v3682 = vsub.s32 %v3679, %v3681
    %v3683 = vrot.slane %v3554, %v3682
    %v3684 = vsel %vm3571, %v3676, %v3676
    %v3685 = vsel %vm3573, %v3676, %v3684
    %v3686 = vrot.slane %v3683, 7
    %v3687 = vsel %vm271, %v3686, %v3685
    %v3688 = vsel %vm3577, %v3686, %v3687
    %v3689 = vsel %vm3579, %v3686, %v3688
    %v3690 = vsel %vm3581, %v3686, %v3689
    %3692 = vst [vmem:[#allocation3 + $0x10] sm:$0x3] %v3690
    %v3693 = vrot.slane %v3676, 1
    %v3694 = vsel %vm3571, %v3693, %v3693
    %v3695 = vsel %vm3573, %v3693, %v3694
    %v3696 = vsel %vm271, %v3683, %v3695
    %v3697 = vsel %vm3577, %v3683, %v3696
    %v3698 = vsel %vm3579, %v3683, %v3697
    %v3699 = vsel %vm3581, %v3683, %v3698
    %3701 = vst [vmem:[#allocation3 + $0x12] sm:$0x3] %v3699
    %v3702 = vcombine.high %v3676, %v3676
    %v3703 = vcombine.high %v3683, %v3683
    %v3704 = vsel %vm3571, %v3702, %v3702
    %v3705 = vsel %vm3573, %v3702, %v3704
    %v3706 = vrot.slane %v3703, 7
    %v3707 = vsel %vm271, %v3706, %v3705
    %v3708 = vsel %vm3577, %v3706, %v3707
    %v3709 = vsel %vm3579, %v3706, %v3708
    %v3710 = vsel %vm3581, %v3706, %v3709
    %3712 = vst [vmem:[#allocation3 + $0x14] sm:$0x3] %v3710
    %v3713 = vrot.slane %v3702, 1
    %v3714 = vsel %vm3571, %v3713, %v3713
    %v3715 = vsel %vm3573, %v3713, %v3714
    %v3716 = vsel %vm271, %v3703, %v3715
    %v3717 = vsel %vm3577, %v3703, %v3716
    %v3718 = vsel %vm3579, %v3703, %v3717
    %v3719 = vsel %vm3581, %v3703, %v3718
    %3721 = vst [vmem:[#allocation3 + $0x16] sm:$0x3] %v3719
    %v3722 = vcombine.high %v3552, %v3552
    %v3724 = vunpack.c.l.s4 1983009808
    %v3725 = vunpack.c.0.s8 %v3724
    %v3726 = vlaneseq
    %v3727 = vshrl.u32 %v3726, 7
    %v3728 = vsub.s32 %v3725, %v3727
    %v3729 = vrot.slane %v3722, %v3728
    %v3730 = vcombine.high %v3554, %v3554
    %v3732 = vunpack.c.l.s4 1983009808
    %v3733 = vunpack.c.0.s8 %v3732
    %v3734 = vlaneseq
    %v3735 = vshrl.u32 %v3734, 7
    %v3736 = vsub.s32 %v3733, %v3735
    %v3737 = vrot.slane %v3730, %v3736
    %v3738 = vsel %vm3571, %v3729, %v3729
    %v3739 = vsel %vm3573, %v3729, %v3738
    %v3740 = vrot.slane %v3737, 7
    %v3741 = vsel %vm271, %v3740, %v3739
    %v3742 = vsel %vm3577, %v3740, %v3741
    %v3743 = vsel %vm3579, %v3740, %v3742
    %v3744 = vsel %vm3581, %v3740, %v3743
    %3746 = vst [vmem:[#allocation3 + $0x18] sm:$0x3] %v3744
    %v3747 = vrot.slane %v3729, 1
    %v3748 = vsel %vm3571, %v3747, %v3747
    %v3749 = vsel %vm3573, %v3747, %v3748
    %v3750 = vsel %vm271, %v3737, %v3749
    %v3751 = vsel %vm3577, %v3737, %v3750
    %v3752 = vsel %vm3579, %v3737, %v3751
    %v3753 = vsel %vm3581, %v3737, %v3752
    %3755 = vst [vmem:[#allocation3 + $0x1a] sm:$0x3] %v3753
    %v3756 = vcombine.high %v3729, %v3729
    %v3757 = vcombine.high %v3737, %v3737
    %v3758 = vsel %vm3571, %v3756, %v3756
    %v3759 = vsel %vm3573, %v3756, %v3758
    %v3760 = vrot.slane %v3757, 7
    %v3761 = vsel %vm271, %v3760, %v3759
    %v3762 = vsel %vm3577, %v3760, %v3761
    %v3763 = vsel %vm3579, %v3760, %v3762
    %v3764 = vsel %vm3581, %v3760, %v3763
    %3766 = vst [vmem:[#allocation3 + $0x1c] sm:$0x3] %v3764
    %v3767 = vrot.slane %v3756, 1
    %v3768 = vsel %vm3571, %v3767, %v3767
    %v3769 = vsel %vm3573, %v3767, %v3768
    %v3770 = vsel %vm271, %v3757, %v3769
    %v3771 = vsel %vm3577, %v3757, %v3770
    %v3772 = vsel %vm3579, %v3757, %v3771
    %v3773 = vsel %vm3581, %v3757, %v3772
    %3775 = vst [vmem:[#allocation3 + $0x1e] sm:$0x3] %v3773
    %v3776 = vld [vmem:[#allocation3] sm:$0xff]
    %v3777 = vld [vmem:[#allocation3 + $0x8] sm:$0xff]
    %v3778 = vld [vmem:[#allocation3 + $0x10] sm:$0xff]
    %v3779 = vld [vmem:[#allocation3 + $0x18] sm:$0xff]
    %v3780 = vld [vmem:[%s11] sm:$0xff]
    %v3781 = vld [vmem:[%s11 + $0x8] sm:$0xff]
    %v3782 = vld [vmem:[%s11 + $0x10] sm:$0xff]
    %v3783 = vld [vmem:[%s11 + $0x18] sm:$0xff]
    %v3784 = vld [vmem:[%s11 + $0x20] sm:$0xff]
    %v3785 = vld [vmem:[%s11 + $0x28] sm:$0xff]
    %v3786 = vld [vmem:[%s11 + $0x30] sm:$0xff]
    %v3787 = vld [vmem:[%s11 + $0x38] sm:$0xff]
    %v3788 = vld [vmem:[%s11 + $0x40] sm:$0xff]
    %v3789 = vld [vmem:[%s11 + $0x48] sm:$0xff]
    %v3790 = vld [vmem:[%s11 + $0x50] sm:$0xff]
    %v3791 = vld [vmem:[%s11 + $0x58] sm:$0xff]
    %v3792 = vld [vmem:[%s11 + $0x60] sm:$0xff]
    %v3793 = vld [vmem:[%s11 + $0x68] sm:$0xff]
    %v3794 = vld [vmem:[%s11 + $0x70] sm:$0xff]
    %v3795 = vld [vmem:[%s11 + $0x78] sm:$0xff]
    %v3796 = vld [vmem:[%s11 + $0x80] sm:$0xff]
    %v3797 = vld [vmem:[%s11 + $0x88] sm:$0xff]
    %v3798 = vld [vmem:[%s11 + $0x90] sm:$0xff]
    %v3799 = vld [vmem:[%s11 + $0x98] sm:$0xff]
    %v3800 = vld [vmem:[%s11 + $0xa0] sm:$0xff]
    %v3801 = vld [vmem:[%s11 + $0xa8] sm:$0xff]
    %v3802 = vld [vmem:[%s11 + $0xb0] sm:$0xff]
    %v3803 = vld [vmem:[%s11 + $0xb8] sm:$0xff]
    %v3804 = vld [vmem:[%s11 + $0xc0] sm:$0xff]
    %v3805 = vld [vmem:[%s11 + $0xc8] sm:$0xff]
    %v3806 = vld [vmem:[%s11 + $0xd0] sm:$0xff]
    %v3807 = vld [vmem:[%s11 + $0xd8] sm:$0xff]
    %v3808 = vld [vmem:[%s11 + $0xe0] sm:$0xff]
    %v3809 = vld [vmem:[%s11 + $0xe8] sm:$0xff]
    %v3810 = vld [vmem:[%s11 + $0xf0] sm:$0xff]
    %v3811 = vld [vmem:[%s11 + $0xf8] sm:$0xff]
    %v3812 = vld [vmem:[%s11 + $0x100] sm:$0xff]
    %v3813 = vld [vmem:[%s11 + $0x108] sm:$0xff]
    %v3814 = vld [vmem:[%s11 + $0x110] sm:$0xff]
    %v3815 = vld [vmem:[%s11 + $0x118] sm:$0xff]
    %v3816 = vld [vmem:[%s11 + $0x120] sm:$0xff]
    %v3817 = vld [vmem:[%s11 + $0x128] sm:$0xff]
    %v3818 = vld [vmem:[%s11 + $0x130] sm:$0xff]
    %v3819 = vld [vmem:[%s11 + $0x138] sm:$0xff]
    %v3820 = vld [vmem:[%s11 + $0x140] sm:$0xff]
    %v3821 = vld [vmem:[%s11 + $0x148] sm:$0xff]
    %v3822 = vld [vmem:[%s11 + $0x150] sm:$0xff]
    %v3823 = vld [vmem:[%s11 + $0x158] sm:$0xff]
    %v3824 = vld [vmem:[%s11 + $0x160] sm:$0xff]
    %v3825 = vld [vmem:[%s11 + $0x168] sm:$0xff]
    %v3826 = vld [vmem:[%s11 + $0x170] sm:$0xff]
    %v3827 = vld [vmem:[%s11 + $0x178] sm:$0xff]
    %v3828 = vld [vmem:[%s11 + $0x180] sm:$0xff]
    %v3829 = vld [vmem:[%s11 + $0x188] sm:$0xff]
    %v3830 = vld [vmem:[%s11 + $0x190] sm:$0xff]
    %v3831 = vld [vmem:[%s11 + $0x198] sm:$0xff]
    %v3832 = vld [vmem:[%s11 + $0x1a0] sm:$0xff]
    %v3833 = vld [vmem:[%s11 + $0x1a8] sm:$0xff]
    %v3834 = vld [vmem:[%s11 + $0x1b0] sm:$0xff]
    %v3835 = vld [vmem:[%s11 + $0x1b8] sm:$0xff]
    %v3836 = vld [vmem:[%s11 + $0x1c0] sm:$0xff]
    %v3837 = vld [vmem:[%s11 + $0x1c8] sm:$0xff]
    %v3838 = vld [vmem:[%s11 + $0x1d0] sm:$0xff]
    %v3839 = vld [vmem:[%s11 + $0x1d8] sm:$0xff]
    %v3840 = vld [vmem:[%s11 + $0x1e0] sm:$0xff]
    %v3841 = vld [vmem:[%s11 + $0x1e8] sm:$0xff]
    %v3842 = vld [vmem:[%s11 + $0x1f0] sm:$0xff]
    %v3843 = vld [vmem:[%s11 + $0x1f8] sm:$0xff]
    %v3844 = vld [vmem:[%s11 + $0x200] sm:$0xff]
    %v3845 = vld [vmem:[%s11 + $0x208] sm:$0xff]
    %v3846 = vld [vmem:[%s11 + $0x210] sm:$0xff]
    %v3847 = vld [vmem:[%s11 + $0x218] sm:$0xff]
    %v3848 = vld [vmem:[%s11 + $0x220] sm:$0xff]
    %v3849 = vld [vmem:[%s11 + $0x228] sm:$0xff]
    %v3850 = vld [vmem:[%s11 + $0x230] sm:$0xff]
    %v3851 = vld [vmem:[%s11 + $0x238] sm:$0xff]
    %v3852 = vld [vmem:[%s11 + $0x240] sm:$0xff]
    %v3853 = vld [vmem:[%s11 + $0x248] sm:$0xff]
    %v3854 = vld [vmem:[%s11 + $0x250] sm:$0xff]
    %v3855 = vld [vmem:[%s11 + $0x258] sm:$0xff]
    %v3856 = vld [vmem:[%s11 + $0x260] sm:$0xff]
    %v3857 = vld [vmem:[%s11 + $0x268] sm:$0xff]
    %v3858 = vld [vmem:[%s11 + $0x270] sm:$0xff]
    %v3859 = vld [vmem:[%s11 + $0x278] sm:$0xff]
    %v3860 = vld [vmem:[%s11 + $0x280] sm:$0xff]
    %v3861 = vld [vmem:[%s11 + $0x288] sm:$0xff]
    %v3862 = vld [vmem:[%s11 + $0x290] sm:$0xff]
    %v3863 = vld [vmem:[%s11 + $0x298] sm:$0xff]
    %v3864 = vld [vmem:[%s11 + $0x2a0] sm:$0xff]
    %v3865 = vld [vmem:[%s11 + $0x2a8] sm:$0xff]
    %v3866 = vld [vmem:[%s11 + $0x2b0] sm:$0xff]
    %v3867 = vld [vmem:[%s11 + $0x2b8] sm:$0xff]
    %v3868 = vld [vmem:[%s11 + $0x2c0] sm:$0xff]
    %v3869 = vld [vmem:[%s11 + $0x2c8] sm:$0xff]
    %v3870 = vld [vmem:[%s11 + $0x2d0] sm:$0xff]
    %v3871 = vld [vmem:[%s11 + $0x2d8] sm:$0xff]
    %v3872 = vld [vmem:[%s11 + $0x2e0] sm:$0xff]
    %v3873 = vld [vmem:[%s11 + $0x2e8] sm:$0xff]
    %v3874 = vld [vmem:[%s11 + $0x2f0] sm:$0xff]
    %v3875 = vld [vmem:[%s11 + $0x2f8] sm:$0xff]
    %v3876 = vld [vmem:[%s11 + $0x300] sm:$0xff]
    %v3877 = vld [vmem:[%s11 + $0x308] sm:$0xff]
    %v3878 = vld [vmem:[%s11 + $0x310] sm:$0xff]
    %v3879 = vld [vmem:[%s11 + $0x318] sm:$0xff]
    %v3880 = vld [vmem:[%s11 + $0x320] sm:$0xff]
    %v3881 = vld [vmem:[%s11 + $0x328] sm:$0xff]
    %v3882 = vld [vmem:[%s11 + $0x330] sm:$0xff]
    %v3883 = vld [vmem:[%s11 + $0x338] sm:$0xff]
    %v3884 = vld [vmem:[%s11 + $0x340] sm:$0xff]
    %v3885 = vld [vmem:[%s11 + $0x348] sm:$0xff]
    %v3886 = vld [vmem:[%s11 + $0x350] sm:$0xff]
    %v3887 = vld [vmem:[%s11 + $0x358] sm:$0xff]
    %v3888 = vld [vmem:[%s11 + $0x360] sm:$0xff]
    %v3889 = vld [vmem:[%s11 + $0x368] sm:$0xff]
    %v3890 = vld [vmem:[%s11 + $0x370] sm:$0xff]
    %v3891 = vld [vmem:[%s11 + $0x378] sm:$0xff]
    %v3892 = vld [vmem:[%s11 + $0x380] sm:$0xff]
    %v3893 = vld [vmem:[%s11 + $0x388] sm:$0xff]
    %v3894 = vld [vmem:[%s11 + $0x390] sm:$0xff]
    %v3895 = vld [vmem:[%s11 + $0x398] sm:$0xff]
    %v3896 = vld [vmem:[%s11 + $0x3a0] sm:$0xff]
    %v3897 = vld [vmem:[%s11 + $0x3a8] sm:$0xff]
    %v3898 = vld [vmem:[%s11 + $0x3b0] sm:$0xff]
    %v3899 = vld [vmem:[%s11 + $0x3b8] sm:$0xff]
    %v3900 = vld [vmem:[%s11 + $0x3c0] sm:$0xff]
    %v3901 = vld [vmem:[%s11 + $0x3c8] sm:$0xff]
    %v3902 = vld [vmem:[%s11 + $0x3d0] sm:$0xff]
    %v3903 = vld [vmem:[%s11 + $0x3d8] sm:$0xff]
    %v3904 = vld [vmem:[%s11 + $0x3e0] sm:$0xff]
    %v3905 = vld [vmem:[%s11 + $0x3e8] sm:$0xff]
    %v3906 = vld [vmem:[%s11 + $0x3f0] sm:$0xff]
    %v3907 = vld [vmem:[%s11 + $0x3f8] sm:$0xff]
    %v3908 = vld [vmem:[%s11 + $0x400] sm:$0xff]
    %v3909 = vld [vmem:[%s11 + $0x408] sm:$0xff]
    %v3910 = vld [vmem:[%s11 + $0x410] sm:$0xff]
    %v3911 = vld [vmem:[%s11 + $0x418] sm:$0xff]
    %v3912 = vld [vmem:[%s11 + $0x420] sm:$0xff]
    %v3913 = vld [vmem:[%s11 + $0x428] sm:$0xff]
    %v3914 = vld [vmem:[%s11 + $0x430] sm:$0xff]
    %v3915 = vld [vmem:[%s11 + $0x438] sm:$0xff]
    %v3916 = vld [vmem:[%s11 + $0x440] sm:$0xff]
    %v3917 = vld [vmem:[%s11 + $0x448] sm:$0xff]
    %v3918 = vld [vmem:[%s11 + $0x450] sm:$0xff]
    %v3919 = vld [vmem:[%s11 + $0x458] sm:$0xff]
    %v3920 = vld [vmem:[%s11 + $0x460] sm:$0xff]
    %v3921 = vld [vmem:[%s11 + $0x468] sm:$0xff]
    %v3922 = vld [vmem:[%s11 + $0x470] sm:$0xff]
    %v3923 = vld [vmem:[%s11 + $0x478] sm:$0xff]
    %v3924 = vld [vmem:[%s11 + $0x480] sm:$0xff]
    %v3925 = vld [vmem:[%s11 + $0x488] sm:$0xff]
    %v3926 = vld [vmem:[%s11 + $0x490] sm:$0xff]
    %v3927 = vld [vmem:[%s11 + $0x498] sm:$0xff]
    %v3928 = vld [vmem:[%s11 + $0x4a0] sm:$0xff]
    %v3929 = vld [vmem:[%s11 + $0x4a8] sm:$0xff]
    %v3930 = vld [vmem:[%s11 + $0x4b0] sm:$0xff]
    %v3931 = vld [vmem:[%s11 + $0x4b8] sm:$0xff]
    %v3932 = vld [vmem:[%s11 + $0x4c0] sm:$0xff]
    %v3933 = vld [vmem:[%s11 + $0x4c8] sm:$0xff]
    %v3934 = vld [vmem:[%s11 + $0x4d0] sm:$0xff]
    %v3935 = vld [vmem:[%s11 + $0x4d8] sm:$0xff]
    %v3936 = vld [vmem:[%s11 + $0x4e0] sm:$0xff]
    %v3937 = vld [vmem:[%s11 + $0x4e8] sm:$0xff]
    %v3938 = vld [vmem:[%s11 + $0x4f0] sm:$0xff]
    %v3939 = vld [vmem:[%s11 + $0x4f8] sm:$0xff]
    %v3940 = vld [vmem:[%s11 + $0x500] sm:$0xff]
    %v3941 = vld [vmem:[%s11 + $0x508] sm:$0xff]
    %v3942 = vld [vmem:[%s11 + $0x510] sm:$0xff]
    %v3943 = vld [vmem:[%s11 + $0x518] sm:$0xff]
    %v3944 = vld [vmem:[%s11 + $0x520] sm:$0xff]
    %v3945 = vld [vmem:[%s11 + $0x528] sm:$0xff]
    %v3946 = vld [vmem:[%s11 + $0x530] sm:$0xff]
    %v3947 = vld [vmem:[%s11 + $0x538] sm:$0xff]
    %v3948 = vld [vmem:[%s11 + $0x540] sm:$0xff]
    %v3949 = vld [vmem:[%s11 + $0x548] sm:$0xff]
    %v3950 = vld [vmem:[%s11 + $0x550] sm:$0xff]
    %v3951 = vld [vmem:[%s11 + $0x558] sm:$0xff]
    %v3952 = vld [vmem:[%s11 + $0x560] sm:$0xff]
    %v3953 = vld [vmem:[%s11 + $0x568] sm:$0xff]
    %v3954 = vld [vmem:[%s11 + $0x570] sm:$0xff]
    %v3955 = vld [vmem:[%s11 + $0x578] sm:$0xff]
    %v3956 = vld [vmem:[%s11 + $0x580] sm:$0xff]
    %v3957 = vld [vmem:[%s11 + $0x588] sm:$0xff]
    %v3958 = vld [vmem:[%s11 + $0x590] sm:$0xff]
    %v3959 = vld [vmem:[%s11 + $0x598] sm:$0xff]
    %v3960 = vld [vmem:[%s11 + $0x5a0] sm:$0xff]
    %v3961 = vld [vmem:[%s11 + $0x5a8] sm:$0xff]
    %v3962 = vld [vmem:[%s11 + $0x5b0] sm:$0xff]
    %v3963 = vld [vmem:[%s11 + $0x5b8] sm:$0xff]
    %v3964 = vld [vmem:[%s11 + $0x5c0] sm:$0xff]
    %v3965 = vld [vmem:[%s11 + $0x5c8] sm:$0xff]
    %v3966 = vld [vmem:[%s11 + $0x5d0] sm:$0xff]
    %v3967 = vld [vmem:[%s11 + $0x5d8] sm:$0xff]
    %v3968 = vld [vmem:[%s11 + $0x5e0] sm:$0xff]
    %v3969 = vld [vmem:[%s11 + $0x5e8] sm:$0xff]
    %v3970 = vld [vmem:[%s11 + $0x5f0] sm:$0xff]
    %v3971 = vld [vmem:[%s11 + $0x5f8] sm:$0xff]
    %v3972 = vld [vmem:[%s11 + $0x600] sm:$0xff]
    %v3973 = vld [vmem:[%s11 + $0x608] sm:$0xff]
    %v3974 = vld [vmem:[%s11 + $0x610] sm:$0xff]
    %v3975 = vld [vmem:[%s11 + $0x618] sm:$0xff]
    %v3976 = vld [vmem:[%s11 + $0x620] sm:$0xff]
    %v3977 = vld [vmem:[%s11 + $0x628] sm:$0xff]
    %v3978 = vld [vmem:[%s11 + $0x630] sm:$0xff]
    %v3979 = vld [vmem:[%s11 + $0x638] sm:$0xff]
    %v3980 = vld [vmem:[%s11 + $0x640] sm:$0xff]
    %v3981 = vld [vmem:[%s11 + $0x648] sm:$0xff]
    %v3982 = vld [vmem:[%s11 + $0x650] sm:$0xff]
    %v3983 = vld [vmem:[%s11 + $0x658] sm:$0xff]
    %v3984 = vld [vmem:[%s11 + $0x660] sm:$0xff]
    %v3985 = vld [vmem:[%s11 + $0x668] sm:$0xff]
    %v3986 = vld [vmem:[%s11 + $0x670] sm:$0xff]
    %v3987 = vld [vmem:[%s11 + $0x678] sm:$0xff]
    %v3988 = vld [vmem:[%s11 + $0x680] sm:$0xff]
    %v3989 = vld [vmem:[%s11 + $0x688] sm:$0xff]
    %v3990 = vld [vmem:[%s11 + $0x690] sm:$0xff]
    %v3991 = vld [vmem:[%s11 + $0x698] sm:$0xff]
    %v3992 = vld [vmem:[%s11 + $0x6a0] sm:$0xff]
    %v3993 = vld [vmem:[%s11 + $0x6a8] sm:$0xff]
    %v3994 = vld [vmem:[%s11 + $0x6b0] sm:$0xff]
    %v3995 = vld [vmem:[%s11 + $0x6b8] sm:$0xff]
    %v3996 = vld [vmem:[%s11 + $0x6c0] sm:$0xff]
    %v3997 = vld [vmem:[%s11 + $0x6c8] sm:$0xff]
    %v3998 = vld [vmem:[%s11 + $0x6d0] sm:$0xff]
    %v3999 = vld [vmem:[%s11 + $0x6d8] sm:$0xff]
    %v4000 = vld [vmem:[%s11 + $0x6e0] sm:$0xff]
    %v4001 = vld [vmem:[%s11 + $0x6e8] sm:$0xff]
    %v4002 = vld [vmem:[%s11 + $0x6f0] sm:$0xff]
    %v4003 = vld [vmem:[%s11 + $0x6f8] sm:$0xff]
    %v4004 = vld [vmem:[%s11 + $0x700] sm:$0xff]
    %v4005 = vld [vmem:[%s11 + $0x708] sm:$0xff]
    %v4006 = vld [vmem:[%s11 + $0x710] sm:$0xff]
    %v4007 = vld [vmem:[%s11 + $0x718] sm:$0xff]
    %v4008 = vld [vmem:[%s11 + $0x720] sm:$0xff]
    %v4009 = vld [vmem:[%s11 + $0x728] sm:$0xff]
    %v4010 = vld [vmem:[%s11 + $0x730] sm:$0xff]
    %v4011 = vld [vmem:[%s11 + $0x738] sm:$0xff]
    %v4012 = vld [vmem:[%s11 + $0x740] sm:$0xff]
    %v4013 = vld [vmem:[%s11 + $0x748] sm:$0xff]
    %v4014 = vld [vmem:[%s11 + $0x750] sm:$0xff]
    %v4015 = vld [vmem:[%s11 + $0x758] sm:$0xff]
    %v4016 = vld [vmem:[%s11 + $0x760] sm:$0xff]
    %v4017 = vld [vmem:[%s11 + $0x768] sm:$0xff]
    %v4018 = vld [vmem:[%s11 + $0x770] sm:$0xff]
    %v4019 = vld [vmem:[%s11 + $0x778] sm:$0xff]
    %v4020 = vld [vmem:[%s11 + $0x780] sm:$0xff]
    %v4021 = vld [vmem:[%s11 + $0x788] sm:$0xff]
    %v4022 = vld [vmem:[%s11 + $0x790] sm:$0xff]
    %v4023 = vld [vmem:[%s11 + $0x798] sm:$0xff]
    %v4024 = vld [vmem:[%s11 + $0x7a0] sm:$0xff]
    %v4025 = vld [vmem:[%s11 + $0x7a8] sm:$0xff]
    %v4026 = vld [vmem:[%s11 + $0x7b0] sm:$0xff]
    %v4027 = vld [vmem:[%s11 + $0x7b8] sm:$0xff]
    %v4028 = vld [vmem:[%s11 + $0x7c0] sm:$0xff]
    %v4029 = vld [vmem:[%s11 + $0x7c8] sm:$0xff]
    %v4030 = vld [vmem:[%s11 + $0x7d0] sm:$0xff]
    %v4031 = vld [vmem:[%s11 + $0x7d8] sm:$0xff]
    %v4032 = vld [vmem:[%s11 + $0x7e0] sm:$0xff]
    %v4033 = vld [vmem:[%s11 + $0x7e8] sm:$0xff]
    %v4034 = vld [vmem:[%s11 + $0x7f0] sm:$0xff]
    %v4035 = vld [vmem:[%s11 + $0x7f8] sm:$0xff]
    %v4036 = vld [vmem:[%s12] sm:$0x1]
    %v4038 = vlaneseq
    %v4039 = vshrl.u32 %v4038, 7
    %v4040 = vsub.s32 0, %v4039
    %v4041 = vrot.slane %v4036, %v4040
    %v4047 = vcombine.high %v3776, %v3776
    %v4049 = vunpack.c.l.s4 1983009808
    %v4050 = vunpack.c.0.s8 %v4049
    %v4051 = vlaneseq
    %v4052 = vshrl.u32 %v4051, 7
    %v4053 = vsub.s32 %v4050, %v4052
    %v4054 = vrot.slane %v3776, %v4053
    %v4056 = vunpack.c.l.s4 1983009808
    %v4057 = vunpack.c.0.s8 %v4056
    %v4058 = vlaneseq
    %v4059 = vshrl.u32 %v4058, 7
    %v4060 = vsub.s32 %v4057, %v4059
    %v4061 = vrot.slane %v4047, %v4060
    %v4062 = vcombine.high %v4054, %v4054
    %v4063 = vcombine.high %v4061, %v4061
    %v4064 = vcombine.high %v3777, %v3777
    %v4066 = vunpack.c.l.s4 1983009808
    %v4067 = vunpack.c.0.s8 %v4066
    %v4068 = vlaneseq
    %v4069 = vshrl.u32 %v4068, 7
    %v4070 = vsub.s32 %v4067, %v4069
    %v4071 = vrot.slane %v3777, %v4070
    %v4073 = vunpack.c.l.s4 1983009808
    %v4074 = vunpack.c.0.s8 %v4073
    %v4075 = vlaneseq
    %v4076 = vshrl.u32 %v4075, 7
    %v4077 = vsub.s32 %v4074, %v4076
    %v4078 = vrot.slane %v4064, %v4077
    %v4079 = vcombine.high %v4071, %v4071
    %v4080 = vcombine.high %v4078, %v4078
    %v4081 = vcombine.high %v3778, %v3778
    %v4083 = vunpack.c.l.s4 1983009808
    %v4084 = vunpack.c.0.s8 %v4083
    %v4085 = vlaneseq
    %v4086 = vshrl.u32 %v4085, 7
    %v4087 = vsub.s32 %v4084, %v4086
    %v4088 = vrot.slane %v3778, %v4087
    %v4090 = vunpack.c.l.s4 1983009808
    %v4091 = vunpack.c.0.s8 %v4090
    %v4092 = vlaneseq
    %v4093 = vshrl.u32 %v4092, 7
    %v4094 = vsub.s32 %v4091, %v4093
    %v4095 = vrot.slane %v4081, %v4094
    %v4096 = vcombine.high %v4088, %v4088
    %v4097 = vcombine.high %v4095, %v4095
    %v4098 = vcombine.high %v3779, %v3779
    %v4100 = vunpack.c.l.s4 1983009808
    %v4101 = vunpack.c.0.s8 %v4100
    %v4102 = vlaneseq
    %v4103 = vshrl.u32 %v4102, 7
    %v4104 = vsub.s32 %v4101, %v4103
    %v4105 = vrot.slane %v3779, %v4104
    %v4107 = vunpack.c.l.s4 1983009808
    %v4108 = vunpack.c.0.s8 %v4107
    %v4109 = vlaneseq
    %v4110 = vshrl.u32 %v4109, 7
    %v4111 = vsub.s32 %v4108, %v4110
    %v4112 = vrot.slane %v4098, %v4111
    %v4113 = vcombine.high %v4105, %v4105
    %v4114 = vcombine.high %v4112, %v4112
    %4131 = vmatprep.subr.mxu0 0.0
    %v4132 = vand.u32 %v3780, 4294901760
    %4133 = vmatpush1.msra.mxu0 %v4132
    %4134 = vmatprep.subr.mxu0 0.0
    %v4135 = vand.u32 %v3781, 4294901760
    %4136 = vmatpush1.msra.mxu0 %v4135
    %4137 = vmatprep.subr.mxu0 0.0
    %v4138 = vand.u32 %v3782, 4294901760
    %4139 = vmatpush1.msra.mxu0 %v4138
    %4140 = vmatprep.subr.mxu0 0.0
    %v4141 = vand.u32 %v3783, 4294901760
    %4142 = vmatpush1.msra.mxu0 %v4141
    %4143 = vmatprep.subr.mxu0 0.0
    %v4144 = vand.u32 %v3784, 4294901760
    %4145 = vmatpush1.msra.mxu0 %v4144
    %4146 = vmatprep.subr.mxu0 0.0
    %v4147 = vand.u32 %v3785, 4294901760
    %4148 = vmatpush1.msra.mxu0 %v4147
    %4149 = vmatprep.subr.mxu0 0.0
    %v4150 = vand.u32 %v3786, 4294901760
    %4151 = vmatpush1.msra.mxu0 %v4150
    %4152 = vmatprep.subr.mxu0 0.0
    %v4153 = vand.u32 %v3787, 4294901760
    %4154 = vmatpush1.msra.mxu0 %v4153
    %4155 = vmatprep.subr.mxu0 0.0
    %v4156 = vand.u32 %v3788, 4294901760
    %4157 = vmatpush1.msra.mxu0 %v4156
    %4158 = vmatprep.subr.mxu0 0.0
    %v4159 = vand.u32 %v3789, 4294901760
    %4160 = vmatpush1.msra.mxu0 %v4159
    %4161 = vmatprep.subr.mxu0 0.0
    %v4162 = vand.u32 %v3790, 4294901760
    %4163 = vmatpush1.msra.mxu0 %v4162
    %4164 = vmatprep.subr.mxu0 0.0
    %v4165 = vand.u32 %v3791, 4294901760
    %4166 = vmatpush1.msra.mxu0 %v4165
    %4167 = vmatprep.subr.mxu0 0.0
    %v4168 = vand.u32 %v3792, 4294901760
    %4169 = vmatpush1.msra.mxu0 %v4168
    %4170 = vmatprep.subr.mxu0 0.0
    %v4171 = vand.u32 %v3793, 4294901760
    %4172 = vmatpush1.msra.mxu0 %v4171
    %4173 = vmatprep.subr.mxu0 0.0
    %v4174 = vand.u32 %v3794, 4294901760
    %4175 = vmatpush1.msra.mxu0 %v4174
    %4176 = vmatprep.subr.mxu0 0.0
    %v4177 = vand.u32 %v3795, 4294901760
    %4178 = vmatpush1.msra.mxu0 %v4177
    %4179 = vmatprep.subr.mxu0 0.0
    %v4180 = vand.u32 %v3796, 4294901760
    %4181 = vmatpush1.msra.mxu0 %v4180
    %4182 = vmatprep.subr.mxu0 0.0
    %v4183 = vand.u32 %v3797, 4294901760
    %4184 = vmatpush1.msra.mxu0 %v4183
    %4185 = vmatprep.subr.mxu0 0.0
    %v4186 = vand.u32 %v3798, 4294901760
    %4187 = vmatpush1.msra.mxu0 %v4186
    %4188 = vmatprep.subr.mxu0 0.0
    %v4189 = vand.u32 %v3799, 4294901760
    %4190 = vmatpush1.msra.mxu0 %v4189
    %4191 = vmatprep.subr.mxu0 0.0
    %v4192 = vand.u32 %v3800, 4294901760
    %4193 = vmatpush1.msra.mxu0 %v4192
    %4194 = vmatprep.subr.mxu0 0.0
    %v4195 = vand.u32 %v3801, 4294901760
    %4196 = vmatpush1.msra.mxu0 %v4195
    %4197 = vmatprep.subr.mxu0 0.0
    %v4198 = vand.u32 %v3802, 4294901760
    %4199 = vmatpush1.msra.mxu0 %v4198
    %4200 = vmatprep.subr.mxu0 0.0
    %v4201 = vand.u32 %v3803, 4294901760
    %4202 = vmatpush1.msra.mxu0 %v4201
    %4203 = vmatprep.subr.mxu0 0.0
    %v4204 = vand.u32 %v3804, 4294901760
    %4205 = vmatpush1.msra.mxu0 %v4204
    %4206 = vmatprep.subr.mxu0 0.0
    %v4207 = vand.u32 %v3805, 4294901760
    %4208 = vmatpush1.msra.mxu0 %v4207
    %4209 = vmatprep.subr.mxu0 0.0
    %v4210 = vand.u32 %v3806, 4294901760
    %4211 = vmatpush1.msra.mxu0 %v4210
    %4212 = vmatprep.subr.mxu0 0.0
    %v4213 = vand.u32 %v3807, 4294901760
    %4214 = vmatpush1.msra.mxu0 %v4213
    %4215 = vmatprep.subr.mxu0 0.0
    %v4216 = vand.u32 %v3808, 4294901760
    %4217 = vmatpush1.msra.mxu0 %v4216
    %4218 = vmatprep.subr.mxu0 0.0
    %v4219 = vand.u32 %v3809, 4294901760
    %4220 = vmatpush1.msra.mxu0 %v4219
    %4221 = vmatprep.subr.mxu0 0.0
    %v4222 = vand.u32 %v3810, 4294901760
    %4223 = vmatpush1.msra.mxu0 %v4222
    %4224 = vmatprep.subr.mxu0 0.0
    %v4225 = vand.u32 %v3811, 4294901760
    %4226 = vmatpush1.msra.mxu0 %v4225
    %v4227 = vand.u32 %v4062, 4294901760
    %v4228 = vsub.f32 %v4062, %v4227
    %v4229 = vand.u32 %v4228, 4294901760
    %v4230 = vsub.f32 %v4228, %v4229
    %v4231 = vand.u32 %v4230, 4294901760
    %4232 = vmatprep.mubr.f32.mxu0 %v4231
    %v4233 = vand.u32 %v4054, 4294901760
    %v4234 = vsub.f32 %v4054, %v4233
    %v4235 = vand.u32 %v4234, 4294901760
    %v4236 = vsub.f32 %v4234, %v4235
    %v4237 = vand.u32 %v4236, 4294901760
    %4238 = vmatmul.mubr.f32.gmra.mrb[0].mxu0 %v4237
    %v4239 = vpop.f32.mrb[0].mxu0
    %v4240 = vadd.f32 %v4041, %v4239
    %v4241 = vpop.f32.mrb[0].mxu0
    %4242 = vdwg.mxu0
    %4243 = vmatprep.subr.mxu0 0.0
    %v4244 = vand.u32 %v3780, 4294901760
    %v4245 = vsub.f32 %v3780, %v4244
    %v4246 = vand.u32 %v4245, 4294901760
    %v4247 = vsub.f32 %v4245, %v4246
    %v4248 = vand.u32 %v4247, 4294901760
    %4249 = vmatpush1.msra.mxu0 %v4248
    %4250 = vmatprep.subr.mxu0 0.0
    %v4251 = vand.u32 %v3781, 4294901760
    %v4252 = vsub.f32 %v3781, %v4251
    %v4253 = vand.u32 %v4252, 4294901760
    %v4254 = vsub.f32 %v4252, %v4253
    %v4255 = vand.u32 %v4254, 4294901760
    %4256 = vmatpush1.msra.mxu0 %v4255
    %4257 = vmatprep.subr.mxu0 0.0
    %v4258 = vand.u32 %v3782, 4294901760
    %v4259 = vsub.f32 %v3782, %v4258
    %v4260 = vand.u32 %v4259, 4294901760
    %v4261 = vsub.f32 %v4259, %v4260
    %v4262 = vand.u32 %v4261, 4294901760
    %4263 = vmatpush1.msra.mxu0 %v4262
    %4264 = vmatprep.subr.mxu0 0.0
    %v4265 = vand.u32 %v3783, 4294901760
    %v4266 = vsub.f32 %v3783, %v4265
    %v4267 = vand.u32 %v4266, 4294901760
    %v4268 = vsub.f32 %v4266, %v4267
    %v4269 = vand.u32 %v4268, 4294901760
    %4270 = vmatpush1.msra.mxu0 %v4269
    %4271 = vmatprep.subr.mxu0 0.0
    %v4272 = vand.u32 %v3784, 4294901760
    %v4273 = vsub.f32 %v3784, %v4272
    %v4274 = vand.u32 %v4273, 4294901760
    %v4275 = vsub.f32 %v4273, %v4274
    %v4276 = vand.u32 %v4275, 4294901760
    %4277 = vmatpush1.msra.mxu0 %v4276
    %4278 = vmatprep.subr.mxu0 0.0
    %v4279 = vand.u32 %v3785, 4294901760
    %v4280 = vsub.f32 %v3785, %v4279
    %v4281 = vand.u32 %v4280, 4294901760
    %v4282 = vsub.f32 %v4280, %v4281
    %v4283 = vand.u32 %v4282, 4294901760
    %4284 = vmatpush1.msra.mxu0 %v4283
    %4285 = vmatprep.subr.mxu0 0.0
    %v4286 = vand.u32 %v3786, 4294901760
    %v4287 = vsub.f32 %v3786, %v4286
    %v4288 = vand.u32 %v4287, 4294901760
    %v4289 = vsub.f32 %v4287, %v4288
    %v4290 = vand.u32 %v4289, 4294901760
    %4291 = vmatpush1.msra.mxu0 %v4290
    %4292 = vmatprep.subr.mxu0 0.0
    %v4293 = vand.u32 %v3787, 4294901760
    %v4294 = vsub.f32 %v3787, %v4293
    %v4295 = vand.u32 %v4294, 4294901760
    %v4296 = vsub.f32 %v4294, %v4295
    %v4297 = vand.u32 %v4296, 4294901760
    %4298 = vmatpush1.msra.mxu0 %v4297
    %4299 = vmatprep.subr.mxu0 0.0
    %v4300 = vand.u32 %v3788, 4294901760
    %v4301 = vsub.f32 %v3788, %v4300
    %v4302 = vand.u32 %v4301, 4294901760
    %v4303 = vsub.f32 %v4301, %v4302
    %v4304 = vand.u32 %v4303, 4294901760
    %4305 = vmatpush1.msra.mxu0 %v4304
    %4306 = vmatprep.subr.mxu0 0.0
    %v4307 = vand.u32 %v3789, 4294901760
    %v4308 = vsub.f32 %v3789, %v4307
    %v4309 = vand.u32 %v4308, 4294901760
    %v4310 = vsub.f32 %v4308, %v4309
    %v4311 = vand.u32 %v4310, 4294901760
    %4312 = vmatpush1.msra.mxu0 %v4311
    %4313 = vmatprep.subr.mxu0 0.0
    %v4314 = vand.u32 %v3790, 4294901760
    %v4315 = vsub.f32 %v3790, %v4314
    %v4316 = vand.u32 %v4315, 4294901760
    %v4317 = vsub.f32 %v4315, %v4316
    %v4318 = vand.u32 %v4317, 4294901760
    %4319 = vmatpush1.msra.mxu0 %v4318
    %4320 = vmatprep.subr.mxu0 0.0
    %v4321 = vand.u32 %v3791, 4294901760
    %v4322 = vsub.f32 %v3791, %v4321
    %v4323 = vand.u32 %v4322, 4294901760
    %v4324 = vsub.f32 %v4322, %v4323
    %v4325 = vand.u32 %v4324, 4294901760
    %4326 = vmatpush1.msra.mxu0 %v4325
    %4327 = vmatprep.subr.mxu0 0.0
    %v4328 = vand.u32 %v3792, 4294901760
    %v4329 = vsub.f32 %v3792, %v4328
    %v4330 = vand.u32 %v4329, 4294901760
    %v4331 = vsub.f32 %v4329, %v4330
    %v4332 = vand.u32 %v4331, 4294901760
    %4333 = vmatpush1.msra.mxu0 %v4332
    %4334 = vmatprep.subr.mxu0 0.0
    %v4335 = vand.u32 %v3793, 4294901760
    %v4336 = vsub.f32 %v3793, %v4335
    %v4337 = vand.u32 %v4336, 4294901760
    %v4338 = vsub.f32 %v4336, %v4337
    %v4339 = vand.u32 %v4338, 4294901760
    %4340 = vmatpush1.msra.mxu0 %v4339
    %4341 = vmatprep.subr.mxu0 0.0
    %v4342 = vand.u32 %v3794, 4294901760
    %v4343 = vsub.f32 %v3794, %v4342
    %v4344 = vand.u32 %v4343, 4294901760
    %v4345 = vsub.f32 %v4343, %v4344
    %v4346 = vand.u32 %v4345, 4294901760
    %4347 = vmatpush1.msra.mxu0 %v4346
    %4348 = vmatprep.subr.mxu0 0.0
    %v4349 = vand.u32 %v3795, 4294901760
    %v4350 = vsub.f32 %v3795, %v4349
    %v4351 = vand.u32 %v4350, 4294901760
    %v4352 = vsub.f32 %v4350, %v4351
    %v4353 = vand.u32 %v4352, 4294901760
    %4354 = vmatpush1.msra.mxu0 %v4353
    %4355 = vmatprep.subr.mxu0 0.0
    %v4356 = vand.u32 %v3796, 4294901760
    %v4357 = vsub.f32 %v3796, %v4356
    %v4358 = vand.u32 %v4357, 4294901760
    %v4359 = vsub.f32 %v4357, %v4358
    %v4360 = vand.u32 %v4359, 4294901760
    %4361 = vmatpush1.msra.mxu0 %v4360
    %4362 = vmatprep.subr.mxu0 0.0
    %v4363 = vand.u32 %v3797, 4294901760
    %v4364 = vsub.f32 %v3797, %v4363
    %v4365 = vand.u32 %v4364, 4294901760
    %v4366 = vsub.f32 %v4364, %v4365
    %v4367 = vand.u32 %v4366, 4294901760
    %4368 = vmatpush1.msra.mxu0 %v4367
    %4369 = vmatprep.subr.mxu0 0.0
    %v4370 = vand.u32 %v3798, 4294901760
    %v4371 = vsub.f32 %v3798, %v4370
    %v4372 = vand.u32 %v4371, 4294901760
    %v4373 = vsub.f32 %v4371, %v4372
    %v4374 = vand.u32 %v4373, 4294901760
    %4375 = vmatpush1.msra.mxu0 %v4374
    %4376 = vmatprep.subr.mxu0 0.0
    %v4377 = vand.u32 %v3799, 4294901760
    %v4378 = vsub.f32 %v3799, %v4377
    %v4379 = vand.u32 %v4378, 4294901760
    %v4380 = vsub.f32 %v4378, %v4379
    %v4381 = vand.u32 %v4380, 4294901760
    %4382 = vmatpush1.msra.mxu0 %v4381
    %4383 = vmatprep.subr.mxu0 0.0
    %v4384 = vand.u32 %v3800, 4294901760
    %v4385 = vsub.f32 %v3800, %v4384
    %v4386 = vand.u32 %v4385, 4294901760
    %v4387 = vsub.f32 %v4385, %v4386
    %v4388 = vand.u32 %v4387, 4294901760
    %4389 = vmatpush1.msra.mxu0 %v4388
    %4390 = vmatprep.subr.mxu0 0.0
    %v4391 = vand.u32 %v3801, 4294901760
    %v4392 = vsub.f32 %v3801, %v4391
    %v4393 = vand.u32 %v4392, 4294901760
    %v4394 = vsub.f32 %v4392, %v4393
    %v4395 = vand.u32 %v4394, 4294901760
    %4396 = vmatpush1.msra.mxu0 %v4395
    %4397 = vmatprep.subr.mxu0 0.0
    %v4398 = vand.u32 %v3802, 4294901760
    %v4399 = vsub.f32 %v3802, %v4398
    %v4400 = vand.u32 %v4399, 4294901760
    %v4401 = vsub.f32 %v4399, %v4400
    %v4402 = vand.u32 %v4401, 4294901760
    %4403 = vmatpush1.msra.mxu0 %v4402
    %4404 = vmatprep.subr.mxu0 0.0
    %v4405 = vand.u32 %v3803, 4294901760
    %v4406 = vsub.f32 %v3803, %v4405
    %v4407 = vand.u32 %v4406, 4294901760
    %v4408 = vsub.f32 %v4406, %v4407
    %v4409 = vand.u32 %v4408, 4294901760
    %4410 = vmatpush1.msra.mxu0 %v4409
    %4411 = vmatprep.subr.mxu0 0.0
    %v4412 = vand.u32 %v3804, 4294901760
    %v4413 = vsub.f32 %v3804, %v4412
    %v4414 = vand.u32 %v4413, 4294901760
    %v4415 = vsub.f32 %v4413, %v4414
    %v4416 = vand.u32 %v4415, 4294901760
    %4417 = vmatpush1.msra.mxu0 %v4416
    %4418 = vmatprep.subr.mxu0 0.0
    %v4419 = vand.u32 %v3805, 4294901760
    %v4420 = vsub.f32 %v3805, %v4419
    %v4421 = vand.u32 %v4420, 4294901760
    %v4422 = vsub.f32 %v4420, %v4421
    %v4423 = vand.u32 %v4422, 4294901760
    %4424 = vmatpush1.msra.mxu0 %v4423
    %4425 = vmatprep.subr.mxu0 0.0
    %v4426 = vand.u32 %v3806, 4294901760
    %v4427 = vsub.f32 %v3806, %v4426
    %v4428 = vand.u32 %v4427, 4294901760
    %v4429 = vsub.f32 %v4427, %v4428
    %v4430 = vand.u32 %v4429, 4294901760
    %4431 = vmatpush1.msra.mxu0 %v4430
    %4432 = vmatprep.subr.mxu0 0.0
    %v4433 = vand.u32 %v3807, 4294901760
    %v4434 = vsub.f32 %v3807, %v4433
    %v4435 = vand.u32 %v4434, 4294901760
    %v4436 = vsub.f32 %v4434, %v4435
    %v4437 = vand.u32 %v4436, 4294901760
    %4438 = vmatpush1.msra.mxu0 %v4437
    %4439 = vmatprep.subr.mxu0 0.0
    %v4440 = vand.u32 %v3808, 4294901760
    %v4441 = vsub.f32 %v3808, %v4440
    %v4442 = vand.u32 %v4441, 4294901760
    %v4443 = vsub.f32 %v4441, %v4442
    %v4444 = vand.u32 %v4443, 4294901760
    %4445 = vmatpush1.msra.mxu0 %v4444
    %4446 = vmatprep.subr.mxu0 0.0
    %v4447 = vand.u32 %v3809, 4294901760
    %v4448 = vsub.f32 %v3809, %v4447
    %v4449 = vand.u32 %v4448, 4294901760
    %v4450 = vsub.f32 %v4448, %v4449
    %v4451 = vand.u32 %v4450, 4294901760
    %4452 = vmatpush1.msra.mxu0 %v4451
    %4453 = vmatprep.subr.mxu0 0.0
    %v4454 = vand.u32 %v3810, 4294901760
    %v4455 = vsub.f32 %v3810, %v4454
    %v4456 = vand.u32 %v4455, 4294901760
    %v4457 = vsub.f32 %v4455, %v4456
    %v4458 = vand.u32 %v4457, 4294901760
    %4459 = vmatpush1.msra.mxu0 %v4458
    %4460 = vmatprep.subr.mxu0 0.0
    %v4461 = vand.u32 %v3811, 4294901760
    %v4462 = vsub.f32 %v3811, %v4461
    %v4463 = vand.u32 %v4462, 4294901760
    %v4464 = vsub.f32 %v4462, %v4463
    %v4465 = vand.u32 %v4464, 4294901760
    %4466 = vmatpush1.msra.mxu0 %v4465
    %v4467 = vand.u32 %v4062, 4294901760
    %4468 = vmatprep.mubr.f32.mxu0 %v4467
    %v4469 = vand.u32 %v4054, 4294901760
    %4470 = vmatmul.mubr.f32.gmra.mrb[0].mxu0 %v4469
    %v4471 = vpop.f32.mrb[0].mxu0
    %v4472 = vadd.f32 %v4240, %v4471
    %v4473 = vpop.f32.mrb[0].mxu0
    %4474 = vdwg.mxu0
    %4475 = vmatprep.subr.mxu0 0.0
    %v4476 = vand.u32 %v3780, 4294901760
    %v4477 = vsub.f32 %v3780, %v4476
    %4478 = vmatpush1.msra.mxu0 %v4477
    %4479 = vmatprep.subr.mxu0 0.0
    %v4480 = vand.u32 %v3781, 4294901760
    %v4481 = vsub.f32 %v3781, %v4480
    %4482 = vmatpush1.msra.mxu0 %v4481
    %4483 = vmatprep.subr.mxu0 0.0
    %v4484 = vand.u32 %v3782, 4294901760
    %v4485 = vsub.f32 %v3782, %v4484
    %4486 = vmatpush1.msra.mxu0 %v4485
    %4487 = vmatprep.subr.mxu0 0.0
    %v4488 = vand.u32 %v3783, 4294901760
    %v4489 = vsub.f32 %v3783, %v4488
    %4490 = vmatpush1.msra.mxu0 %v4489
    %4491 = vmatprep.subr.mxu0 0.0
    %v4492 = vand.u32 %v3784, 4294901760
    %v4493 = vsub.f32 %v3784, %v4492
    %4494 = vmatpush1.msra.mxu0 %v4493
    %4495 = vmatprep.subr.mxu0 0.0
    %v4496 = vand.u32 %v3785, 4294901760
    %v4497 = vsub.f32 %v3785, %v4496
    %4498 = vmatpush1.msra.mxu0 %v4497
    %4499 = vmatprep.subr.mxu0 0.0
    %v4500 = vand.u32 %v3786, 4294901760
    %v4501 = vsub.f32 %v3786, %v4500
    %4502 = vmatpush1.msra.mxu0 %v4501
    %4503 = vmatprep.subr.mxu0 0.0
    %v4504 = vand.u32 %v3787, 4294901760
    %v4505 = vsub.f32 %v3787, %v4504
    %4506 = vmatpush1.msra.mxu0 %v4505
    %4507 = vmatprep.subr.mxu0 0.0
    %v4508 = vand.u32 %v3788, 4294901760
    %v4509 = vsub.f32 %v3788, %v4508
    %4510 = vmatpush1.msra.mxu0 %v4509
    %4511 = vmatprep.subr.mxu0 0.0
    %v4512 = vand.u32 %v3789, 4294901760
    %v4513 = vsub.f32 %v3789, %v4512
    %4514 = vmatpush1.msra.mxu0 %v4513
    %4515 = vmatprep.subr.mxu0 0.0
    %v4516 = vand.u32 %v3790, 4294901760
    %v4517 = vsub.f32 %v3790, %v4516
    %4518 = vmatpush1.msra.mxu0 %v4517
    %4519 = vmatprep.subr.mxu0 0.0
    %v4520 = vand.u32 %v3791, 4294901760
    %v4521 = vsub.f32 %v3791, %v4520
    %4522 = vmatpush1.msra.mxu0 %v4521
    %4523 = vmatprep.subr.mxu0 0.0
    %v4524 = vand.u32 %v3792, 4294901760
    %v4525 = vsub.f32 %v3792, %v4524
    %4526 = vmatpush1.msra.mxu0 %v4525
    %4527 = vmatprep.subr.mxu0 0.0
    %v4528 = vand.u32 %v3793, 4294901760
    %v4529 = vsub.f32 %v3793, %v4528
    %4530 = vmatpush1.msra.mxu0 %v4529
    %4531 = vmatprep.subr.mxu0 0.0
    %v4532 = vand.u32 %v3794, 4294901760
    %v4533 = vsub.f32 %v3794, %v4532
    %4534 = vmatpush1.msra.mxu0 %v4533
    %4535 = vmatprep.subr.mxu0 0.0
    %v4536 = vand.u32 %v3795, 4294901760
    %v4537 = vsub.f32 %v3795, %v4536
    %4538 = vmatpush1.msra.mxu0 %v4537
    %4539 = vmatprep.subr.mxu0 0.0
    %v4540 = vand.u32 %v3796, 4294901760
    %v4541 = vsub.f32 %v3796, %v4540
    %4542 = vmatpush1.msra.mxu0 %v4541
    %4543 = vmatprep.subr.mxu0 0.0
    %v4544 = vand.u32 %v3797, 4294901760
    %v4545 = vsub.f32 %v3797, %v4544
    %4546 = vmatpush1.msra.mxu0 %v4545
    %4547 = vmatprep.subr.mxu0 0.0
    %v4548 = vand.u32 %v3798, 4294901760
    %v4549 = vsub.f32 %v3798, %v4548
    %4550 = vmatpush1.msra.mxu0 %v4549
    %4551 = vmatprep.subr.mxu0 0.0
    %v4552 = vand.u32 %v3799, 4294901760
    %v4553 = vsub.f32 %v3799, %v4552
    %4554 = vmatpush1.msra.mxu0 %v4553
    %4555 = vmatprep.subr.mxu0 0.0
    %v4556 = vand.u32 %v3800, 4294901760
    %v4557 = vsub.f32 %v3800, %v4556
    %4558 = vmatpush1.msra.mxu0 %v4557
    %4559 = vmatprep.subr.mxu0 0.0
    %v4560 = vand.u32 %v3801, 4294901760
    %v4561 = vsub.f32 %v3801, %v4560
    %4562 = vmatpush1.msra.mxu0 %v4561
    %4563 = vmatprep.subr.mxu0 0.0
    %v4564 = vand.u32 %v3802, 4294901760
    %v4565 = vsub.f32 %v3802, %v4564
    %4566 = vmatpush1.msra.mxu0 %v4565
    %4567 = vmatprep.subr.mxu0 0.0
    %v4568 = vand.u32 %v3803, 4294901760
    %v4569 = vsub.f32 %v3803, %v4568
    %4570 = vmatpush1.msra.mxu0 %v4569
    %4571 = vmatprep.subr.mxu0 0.0
    %v4572 = vand.u32 %v3804, 4294901760
    %v4573 = vsub.f32 %v3804, %v4572
    %4574 = vmatpush1.msra.mxu0 %v4573
    %4575 = vmatprep.subr.mxu0 0.0
    %v4576 = vand.u32 %v3805, 4294901760
    %v4577 = vsub.f32 %v3805, %v4576
    %4578 = vmatpush1.msra.mxu0 %v4577
    %4579 = vmatprep.subr.mxu0 0.0
    %v4580 = vand.u32 %v3806, 4294901760
    %v4581 = vsub.f32 %v3806, %v4580
    %4582 = vmatpush1.msra.mxu0 %v4581
    %4583 = vmatprep.subr.mxu0 0.0
    %v4584 = vand.u32 %v3807, 4294901760
    %v4585 = vsub.f32 %v3807, %v4584
    %4586 = vmatpush1.msra.mxu0 %v4585
    %4587 = vmatprep.subr.mxu0 0.0
    %v4588 = vand.u32 %v3808, 4294901760
    %v4589 = vsub.f32 %v3808, %v4588
    %4590 = vmatpush1.msra.mxu0 %v4589
    %4591 = vmatprep.subr.mxu0 0.0
    %v4592 = vand.u32 %v3809, 4294901760
    %v4593 = vsub.f32 %v3809, %v4592
    %4594 = vmatpush1.msra.mxu0 %v4593
    %4595 = vmatprep.subr.mxu0 0.0
    %v4596 = vand.u32 %v3810, 4294901760
    %v4597 = vsub.f32 %v3810, %v4596
    %4598 = vmatpush1.msra.mxu0 %v4597
    %4599 = vmatprep.subr.mxu0 0.0
    %v4600 = vand.u32 %v3811, 4294901760
    %v4601 = vsub.f32 %v3811, %v4600
    %4602 = vmatpush1.msra.mxu0 %v4601
    %v4603 = vand.u32 %v4062, 4294901760
    %v4604 = vsub.f32 %v4062, %v4603
    %4605 = vmatprep.mubr.f32.mxu0 %v4604
    %v4606 = vand.u32 %v4054, 4294901760
    %v4607 = vsub.f32 %v4054, %v4606
    %4608 = vmatmul.mubr.f32.gmra.mrb[0].mxu0 %v4607
    %v4609 = vpop.f32.mrb[0].mxu0
    %v4610 = vadd.f32 %v4472, %v4609
    %v4611 = vpop.f32.mrb[0].mxu0
    %4612 = vdwg.mxu0
    %4613 = vmatprep.subr.mxu0 0.0
    %v4614 = vand.u32 %v3780, 4294901760
    %4615 = vmatpush1.msra.mxu0 %v4614
    %4616 = vmatprep.subr.mxu0 0.0
    %v4617 = vand.u32 %v3781, 4294901760
    %4618 = vmatpush1.msra.mxu0 %v4617
    %4619 = vmatprep.subr.mxu0 0.0
    %v4620 = vand.u32 %v3782, 4294901760
    %4621 = vmatpush1.msra.mxu0 %v4620
    %4622 = vmatprep.subr.mxu0 0.0
    %v4623 = vand.u32 %v3783, 4294901760
    %4624 = vmatpush1.msra.mxu0 %v4623
    %4625 = vmatprep.subr.mxu0 0.0
    %v4626 = vand.u32 %v3784, 4294901760
    %4627 = vmatpush1.msra.mxu0 %v4626
    %4628 = vmatprep.subr.mxu0 0.0
    %v4629 = vand.u32 %v3785, 4294901760
    %4630 = vmatpush1.msra.mxu0 %v4629
    %4631 = vmatprep.subr.mxu0 0.0
    %v4632 = vand.u32 %v3786, 4294901760
    %4633 = vmatpush1.msra.mxu0 %v4632
    %4634 = vmatprep.subr.mxu0 0.0
    %v4635 = vand.u32 %v3787, 4294901760
    %4636 = vmatpush1.msra.mxu0 %v4635
    %4637 = vmatprep.subr.mxu0 0.0
    %v4638 = vand.u32 %v3788, 4294901760
    %4639 = vmatpush1.msra.mxu0 %v4638
    %4640 = vmatprep.subr.mxu0 0.0
    %v4641 = vand.u32 %v3789, 4294901760
    %4642 = vmatpush1.msra.mxu0 %v4641
    %4643 = vmatprep.subr.mxu0 0.0
    %v4644 = vand.u32 %v3790, 4294901760
    %4645 = vmatpush1.msra.mxu0 %v4644
    %4646 = vmatprep.subr.mxu0 0.0
    %v4647 = vand.u32 %v3791, 4294901760
    %4648 = vmatpush1.msra.mxu0 %v4647
    %4649 = vmatprep.subr.mxu0 0.0
    %v4650 = vand.u32 %v3792, 4294901760
    %4651 = vmatpush1.msra.mxu0 %v4650
    %4652 = vmatprep.subr.mxu0 0.0
    %v4653 = vand.u32 %v3793, 4294901760
    %4654 = vmatpush1.msra.mxu0 %v4653
    %4655 = vmatprep.subr.mxu0 0.0
    %v4656 = vand.u32 %v3794, 4294901760
    %4657 = vmatpush1.msra.mxu0 %v4656
    %4658 = vmatprep.subr.mxu0 0.0
    %v4659 = vand.u32 %v3795, 4294901760
    %4660 = vmatpush1.msra.mxu0 %v4659
    %4661 = vmatprep.subr.mxu0 0.0
    %v4662 = vand.u32 %v3796, 4294901760
    %4663 = vmatpush1.msra.mxu0 %v4662
    %4664 = vmatprep.subr.mxu0 0.0
    %v4665 = vand.u32 %v3797, 4294901760
    %4666 = vmatpush1.msra.mxu0 %v4665
    %4667 = vmatprep.subr.mxu0 0.0
    %v4668 = vand.u32 %v3798, 4294901760
    %4669 = vmatpush1.msra.mxu0 %v4668
    %4670 = vmatprep.subr.mxu0 0.0
    %v4671 = vand.u32 %v3799, 4294901760
    %4672 = vmatpush1.msra.mxu0 %v4671
    %4673 = vmatprep.subr.mxu0 0.0
    %v4674 = vand.u32 %v3800, 4294901760
    %4675 = vmatpush1.msra.mxu0 %v4674
    %4676 = vmatprep.subr.mxu0 0.0
    %v4677 = vand.u32 %v3801, 4294901760
    %4678 = vmatpush1.msra.mxu0 %v4677
    %4679 = vmatprep.subr.mxu0 0.0
    %v4680 = vand.u32 %v3802, 4294901760
    %4681 = vmatpush1.msra.mxu0 %v4680
    %4682 = vmatprep.subr.mxu0 0.0
    %v4683 = vand.u32 %v3803, 4294901760
    %4684 = vmatpush1.msra.mxu0 %v4683
    %4685 = vmatprep.subr.mxu0 0.0
    %v4686 = vand.u32 %v3804, 4294901760
    %4687 = vmatpush1.msra.mxu0 %v4686
    %4688 = vmatprep.subr.mxu0 0.0
    %v4689 = vand.u32 %v3805, 4294901760
    %4690 = vmatpush1.msra.mxu0 %v4689
    %4691 = vmatprep.subr.mxu0 0.0
    %v4692 = vand.u32 %v3806, 4294901760
    %4693 = vmatpush1.msra.mxu0 %v4692
    %4694 = vmatprep.subr.mxu0 0.0
    %v4695 = vand.u32 %v3807, 4294901760
    %4696 = vmatpush1.msra.mxu0 %v4695
    %4697 = vmatprep.subr.mxu0 0.0
    %v4698 = vand.u32 %v3808, 4294901760
    %4699 = vmatpush1.msra.mxu0 %v4698
    %4700 = vmatprep.subr.mxu0 0.0
    %v4701 = vand.u32 %v3809, 4294901760
    %4702 = vmatpush1.msra.mxu0 %v4701
    %4703 = vmatprep.subr.mxu0 0.0
    %v4704 = vand.u32 %v3810, 4294901760
    %4705 = vmatpush1.msra.mxu0 %v4704
    %4706 = vmatprep.subr.mxu0 0.0
    %v4707 = vand.u32 %v3811, 4294901760
    %4708 = vmatpush1.msra.mxu0 %v4707
    %v4709 = vand.u32 %v4062, 4294901760
    %v4710 = vsub.f32 %v4062, %v4709
    %v4711 = vand.u32 %v4710, 4294901760
    %4712 = vmatprep.mubr.f32.mxu0 %v4711
    %v4713 = vand.u32 %v4054, 4294901760
    %v4714 = vsub.f32 %v4054, %v4713
    %v4715 = vand.u32 %v4714, 4294901760
    %4716 = vmatmul.mubr.f32.gmra.mrb[0].mxu0 %v4715
    %v4717 = vpop.f32.mrb[0].mxu0
    %v4718 = vadd.f32 %v4610, %v4717
    %v4719 = vpop.f32.mrb[0].mxu0
    %4720 = vdwg.mxu0
    %4721 = vmatprep.subr.mxu0 0.0
    %v4722 = vand.u32 %v3780, 4294901760
    %v4723 = vsub.f32 %v3780, %v4722
    %v4724 = vand.u32 %v4723, 4294901760
    %4725 = vmatpush1.msra.mxu0 %v4724
    %4726 = vmatprep.subr.mxu0 0.0
    %v4727 = vand.u32 %v3781, 4294901760
    %v4728 = vsub.f32 %v3781, %v4727
    %v4729 = vand.u32 %v4728, 4294901760
    %4730 = vmatpush1.msra.mxu0 %v4729
    %4731 = vmatprep.subr.mxu0 0.0
    %v4732 = vand.u32 %v3782, 4294901760
    %v4733 = vsub.f32 %v3782, %v4732
    %v4734 = vand.u32 %v4733, 4294901760
    %4735 = vmatpush1.msra.mxu0 %v4734
    %4736 = vmatprep.subr.mxu0 0.0
    %v4737 = vand.u32 %v3783, 4294901760
    %v4738 = vsub.f32 %v3783, %v4737
    %v4739 = vand.u32 %v4738, 4294901760
    %4740 = vmatpush1.msra.mxu0 %v4739
    %4741 = vmatprep.subr.mxu0 0.0
    %v4742 = vand.u32 %v3784, 4294901760
    %v4743 = vsub.f32 %v3784, %v4742
    %v4744 = vand.u32 %v4743, 4294901760
    %4745 = vmatpush1.msra.mxu0 %v4744
    %4746 = vmatprep.subr.mxu0 0.0
    %v4747 = vand.u32 %v3785, 4294901760
    %v4748 = vsub.f32 %v3785, %v4747
    %v4749 = vand.u32 %v4748, 4294901760
    %4750 = vmatpush1.msra.mxu0 %v4749
    %4751 = vmatprep.subr.mxu0 0.0
    %v4752 = vand.u32 %v3786, 4294901760
    %v4753 = vsub.f32 %v3786, %v4752
    %v4754 = vand.u32 %v4753, 4294901760
    %4755 = vmatpush1.msra.mxu0 %v4754
    %4756 = vmatprep.subr.mxu0 0.0
    %v4757 = vand.u32 %v3787, 4294901760
    %v4758 = vsub.f32 %v3787, %v4757
    %v4759 = vand.u32 %v4758, 4294901760
    %4760 = vmatpush1.msra.mxu0 %v4759
    %4761 = vmatprep.subr.mxu0 0.0
    %v4762 = vand.u32 %v3788, 4294901760
    %v4763 = vsub.f32 %v3788, %v4762
    %v4764 = vand.u32 %v4763, 4294901760
    %4765 = vmatpush1.msra.mxu0 %v4764
    %4766 = vmatprep.subr.mxu0 0.0
    %v4767 = vand.u32 %v3789, 4294901760
    %v4768 = vsub.f32 %v3789, %v4767
    %v4769 = vand.u32 %v4768, 4294901760
    %4770 = vmatpush1.msra.mxu0 %v4769
    %4771 = vmatprep.subr.mxu0 0.0
    %v4772 = vand.u32 %v3790, 4294901760
    %v4773 = vsub.f32 %v3790, %v4772
    %v4774 = vand.u32 %v4773, 4294901760
    %4775 = vmatpush1.msra.mxu0 %v4774
    %4776 = vmatprep.subr.mxu0 0.0
    %v4777 = vand.u32 %v3791, 4294901760
    %v4778 = vsub.f32 %v3791, %v4777
    %v4779 = vand.u32 %v4778, 4294901760
    %4780 = vmatpush1.msra.mxu0 %v4779
    %4781 = vmatprep.subr.mxu0 0.0
    %v4782 = vand.u32 %v3792, 4294901760
    %v4783 = vsub.f32 %v3792, %v4782
    %v4784 = vand.u32 %v4783, 4294901760
    %4785 = vmatpush1.msra.mxu0 %v4784
    %4786 = vmatprep.subr.mxu0 0.0
    %v4787 = vand.u32 %v3793, 4294901760
    %v4788 = vsub.f32 %v3793, %v4787
    %v4789 = vand.u32 %v4788, 4294901760
    %4790 = vmatpush1.msra.mxu0 %v4789
    %4791 = vmatprep.subr.mxu0 0.0
    %v4792 = vand.u32 %v3794, 4294901760
    %v4793 = vsub.f32 %v3794, %v4792
    %v4794 = vand.u32 %v4793, 4294901760
    %4795 = vmatpush1.msra.mxu0 %v4794
    %4796 = vmatprep.subr.mxu0 0.0
    %v4797 = vand.u32 %v3795, 4294901760
    %v4798 = vsub.f32 %v3795, %v4797
    %v4799 = vand.u32 %v4798, 4294901760
    %4800 = vmatpush1.msra.mxu0 %v4799
    %4801 = vmatprep.subr.mxu0 0.0
    %v4802 = vand.u32 %v3796, 4294901760
    %v4803 = vsub.f32 %v3796, %v4802
    %v4804 = vand.u32 %v4803, 4294901760
    %4805 = vmatpush1.msra.mxu0 %v4804
    %4806 = vmatprep.subr.mxu0 0.0
    %v4807 = vand.u32 %v3797, 4294901760
    %v4808 = vsub.f32 %v3797, %v4807
    %v4809 = vand.u32 %v4808, 4294901760
    %4810 = vmatpush1.msra.mxu0 %v4809
    %4811 = vmatprep.subr.mxu0 0.0
    %v4812 = vand.u32 %v3798, 4294901760
    %v4813 = vsub.f32 %v3798, %v4812
    %v4814 = vand.u32 %v4813, 4294901760
    %4815 = vmatpush1.msra.mxu0 %v4814
    %4816 = vmatprep.subr.mxu0 0.0
    %v4817 = vand.u32 %v3799, 4294901760
    %v4818 = vsub.f32 %v3799, %v4817
    %v4819 = vand.u32 %v4818, 4294901760
    %4820 = vmatpush1.msra.mxu0 %v4819
    %4821 = vmatprep.subr.mxu0 0.0
    %v4822 = vand.u32 %v3800, 4294901760
    %v4823 = vsub.f32 %v3800, %v4822
    %v4824 = vand.u32 %v4823, 4294901760
    %4825 = vmatpush1.msra.mxu0 %v4824
    %4826 = vmatprep.subr.mxu0 0.0
    %v4827 = vand.u32 %v3801, 4294901760
    %v4828 = vsub.f32 %v3801, %v4827
    %v4829 = vand.u32 %v4828, 4294901760
    %4830 = vmatpush1.msra.mxu0 %v4829
    %4831 = vmatprep.subr.mxu0 0.0
    %v4832 = vand.u32 %v3802, 4294901760
    %v4833 = vsub.f32 %v3802, %v4832
    %v4834 = vand.u32 %v4833, 4294901760
    %4835 = vmatpush1.msra.mxu0 %v4834
    %4836 = vmatprep.subr.mxu0 0.0
    %v4837 = vand.u32 %v3803, 4294901760
    %v4838 = vsub.f32 %v3803, %v4837
    %v4839 = vand.u32 %v4838, 4294901760
    %4840 = vmatpush1.msra.mxu0 %v4839
    %4841 = vmatprep.subr.mxu0 0.0
    %v4842 = vand.u32 %v3804, 4294901760
    %v4843 = vsub.f32 %v3804, %v4842
    %v4844 = vand.u32 %v4843, 4294901760
    %4845 = vmatpush1.msra.mxu0 %v4844
    %4846 = vmatprep.subr.mxu0 0.0
    %v4847 = vand.u32 %v3805, 4294901760
    %v4848 = vsub.f32 %v3805, %v4847
    %v4849 = vand.u32 %v4848, 4294901760
    %4850 = vmatpush1.msra.mxu0 %v4849
    %4851 = vmatprep.subr.mxu0 0.0
    %v4852 = vand.u32 %v3806, 4294901760
    %v4853 = vsub.f32 %v3806, %v4852
    %v4854 = vand.u32 %v4853, 4294901760
    %4855 = vmatpush1.msra.mxu0 %v4854
    %4856 = vmatprep.subr.mxu0 0.0
    %v4857 = vand.u32 %v3807, 4294901760
    %v4858 = vsub.f32 %v3807, %v4857
    %v4859 = vand.u32 %v4858, 4294901760
    %4860 = vmatpush1.msra.mxu0 %v4859
    %4861 = vmatprep.subr.mxu0 0.0
    %v4862 = vand.u32 %v3808, 4294901760
    %v4863 = vsub.f32 %v3808, %v4862
    %v4864 = vand.u32 %v4863, 4294901760
    %4865 = vmatpush1.msra.mxu0 %v4864
    %4866 = vmatprep.subr.mxu0 0.0
    %v4867 = vand.u32 %v3809, 4294901760
    %v4868 = vsub.f32 %v3809, %v4867
    %v4869 = vand.u32 %v4868, 4294901760
    %4870 = vmatpush1.msra.mxu0 %v4869
    %4871 = vmatprep.subr.mxu0 0.0
    %v4872 = vand.u32 %v3810, 4294901760
    %v4873 = vsub.f32 %v3810, %v4872
    %v4874 = vand.u32 %v4873, 4294901760
    %4875 = vmatpush1.msra.mxu0 %v4874
    %4876 = vmatprep.subr.mxu0 0.0
    %v4877 = vand.u32 %v3811, 4294901760
    %v4878 = vsub.f32 %v3811, %v4877
    %v4879 = vand.u32 %v4878, 4294901760
    %4880 = vmatpush1.msra.mxu0 %v4879
    %v4881 = vand.u32 %v4062, 4294901760
    %4882 = vmatprep.mubr.f32.mxu0 %v4881
    %v4883 = vand.u32 %v4054, 4294901760
    %4884 = vmatmul.mubr.f32.gmra.mrb[0].mxu0 %v4883
    %v4885 = vpop.f32.mrb[0].mxu0
    %v4886 = vadd.f32 %v4718, %v4885
    %v4887 = vpop.f32.mrb[0].mxu0
    %4888 = vdwg.mxu0
    %4889 = vmatprep.subr.mxu0 0.0
    %v4890 = vand.u32 %v3780, 4294901760
    %4891 = vmatpush1.msra.mxu0 %v4890
    %4892 = vmatprep.subr.mxu0 0.0
    %v4893 = vand.u32 %v3781, 4294901760
    %4894 = vmatpush1.msra.mxu0 %v4893
    %4895 = vmatprep.subr.mxu0 0.0
    %v4896 = vand.u32 %v3782, 4294901760
    %4897 = vmatpush1.msra.mxu0 %v4896
    %4898 = vmatprep.subr.mxu0 0.0
    %v4899 = vand.u32 %v3783, 4294901760
    %4900 = vmatpush1.msra.mxu0 %v4899
    %4901 = vmatprep.subr.mxu0 0.0
    %v4902 = vand.u32 %v3784, 4294901760
    %4903 = vmatpush1.msra.mxu0 %v4902
    %4904 = vmatprep.subr.mxu0 0.0
    %v4905 = vand.u32 %v3785, 4294901760
    %4906 = vmatpush1.msra.mxu0 %v4905
    %4907 = vmatprep.subr.mxu0 0.0
    %v4908 = vand.u32 %v3786, 4294901760
    %4909 = vmatpush1.msra.mxu0 %v4908
    %4910 = vmatprep.subr.mxu0 0.0
    %v4911 = vand.u32 %v3787, 4294901760
    %4912 = vmatpush1.msra.mxu0 %v4911
    %4913 = vmatprep.subr.mxu0 0.0
    %v4914 = vand.u32 %v3788, 4294901760
    %4915 = vmatpush1.msra.mxu0 %v4914
    %4916 = vmatprep.subr.mxu0 0.0
    %v4917 = vand.u32 %v3789, 4294901760
    %4918 = vmatpush1.msra.mxu0 %v4917
    %4919 = vmatprep.subr.mxu0 0.0
    %v4920 = vand.u32 %v3790, 4294901760
    %4921 = vmatpush1.msra.mxu0 %v4920
    %4922 = vmatprep.subr.mxu0 0.0
    %v4923 = vand.u32 %v3791, 4294901760
    %4924 = vmatpush1.msra.mxu0 %v4923
    %4925 = vmatprep.subr.mxu0 0.0
    %v4926 = vand.u32 %v3792, 4294901760
    %4927 = vmatpush1.msra.mxu0 %v4926
    %4928 = vmatprep.subr.mxu0 0.0
    %v4929 = vand.u32 %v3793, 4294901760
    %4930 = vmatpush1.msra.mxu0 %v4929
    %4931 = vmatprep.subr.mxu0 0.0
    %v4932 = vand.u32 %v3794, 4294901760
    %4933 = vmatpush1.msra.mxu0 %v4932
    %4934 = vmatprep.subr.mxu0 0.0
    %v4935 = vand.u32 %v3795, 4294901760
    %4936 = vmatpush1.msra.mxu0 %v4935
    %4937 = vmatprep.subr.mxu0 0.0
    %v4938 = vand.u32 %v3796, 4294901760
    %4939 = vmatpush1.msra.mxu0 %v4938
    %4940 = vmatprep.subr.mxu0 0.0
    %v4941 = vand.u32 %v3797, 4294901760
    %4942 = vmatpush1.msra.mxu0 %v4941
    %4943 = vmatprep.subr.mxu0 0.0
    %v4944 = vand.u32 %v3798, 4294901760
    %4945 = vmatpush1.msra.mxu0 %v4944
    %4946 = vmatprep.subr.mxu0 0.0
    %v4947 = vand.u32 %v3799, 4294901760
    %4948 = vmatpush1.msra.mxu0 %v4947
    %4949 = vmatprep.subr.mxu0 0.0
    %v4950 = vand.u32 %v3800, 4294901760
    %4951 = vmatpush1.msra.mxu0 %v4950
    %4952 = vmatprep.subr.mxu0 0.0
    %v4953 = vand.u32 %v3801, 4294901760
    %4954 = vmatpush1.msra.mxu0 %v4953
    %4955 = vmatprep.subr.mxu0 0.0
    %v4956 = vand.u32 %v3802, 4294901760
    %4957 = vmatpush1.msra.mxu0 %v4956
    %4958 = vmatprep.subr.mxu0 0.0
    %v4959 = vand.u32 %v3803, 4294901760
    %4960 = vmatpush1.msra.mxu0 %v4959
    %4961 = vmatprep.subr.mxu0 0.0
    %v4962 = vand.u32 %v3804, 4294901760
    %4963 = vmatpush1.msra.mxu0 %v4962
    %4964 = vmatprep.subr.mxu0 0.0
    %v4965 = vand.u32 %v3805, 4294901760
    %4966 = vmatpush1.msra.mxu0 %v4965
    %4967 = vmatprep.subr.mxu0 0.0
    %v4968 = vand.u32 %v3806, 4294901760
    %4969 = vmatpush1.msra.mxu0 %v4968
    %4970 = vmatprep.subr.mxu0 0.0
    %v4971 = vand.u32 %v3807, 4294901760
    %4972 = vmatpush1.msra.mxu0 %v4971
    %4973 = vmatprep.subr.mxu0 0.0
    %v4974 = vand.u32 %v3808, 4294901760
    %4975 = vmatpush1.msra.mxu0 %v4974
    %4976 = vmatprep.subr.mxu0 0.0
    %v4977 = vand.u32 %v3809, 4294901760
    %4978 = vmatpush1.msra.mxu0 %v4977
    %4979 = vmatprep.subr.mxu0 0.0
    %v4980 = vand.u32 %v3810, 4294901760
    %4981 = vmatpush1.msra.mxu0 %v4980
    %4982 = vmatprep.subr.mxu0 0.0
    %v4983 = vand.u32 %v3811, 4294901760
    %4984 = vmatpush1.msra.mxu0 %v4983
    %v4985 = vand.u32 %v4062, 4294901760
    %4986 = vmatprep.mubr.f32.mxu0 %v4985
    %v4987 = vand.u32 %v4054, 4294901760
    %4988 = vmatmul.mubr.f32.gmra.mrb[0].mxu0 %v4987
    %v4989 = vpop.f32.mrb[0].mxu0
    %v4990 = vadd.f32 %v4886, %v4989
    %v4991 = vpop.f32.mrb[0].mxu0
    %4992 = vdwg.mxu0
    %4993 = vmatprep.subr.mxu0 0.0
    %v4994 = vand.u32 %v3812, 4294901760
    %4995 = vmatpush1.msra.mxu0 %v4994
    %4996 = vmatprep.subr.mxu0 0.0
    %v4997 = vand.u32 %v3813, 4294901760
    %4998 = vmatpush1.msra.mxu0 %v4997
    %4999 = vmatprep.subr.mxu0 0.0
    %v5000 = vand.u32 %v3814, 4294901760
    %5001 = vmatpush1.msra.mxu0 %v5000
    %5002 = vmatprep.subr.mxu0 0.0
    %v5003 = vand.u32 %v3815, 4294901760
    %5004 = vmatpush1.msra.mxu0 %v5003
    %5005 = vmatprep.subr.mxu0 0.0
    %v5006 = vand.u32 %v3816, 4294901760
    %5007 = vmatpush1.msra.mxu0 %v5006
    %5008 = vmatprep.subr.mxu0 0.0
    %v5009 = vand.u32 %v3817, 4294901760
    %5010 = vmatpush1.msra.mxu0 %v5009
    %5011 = vmatprep.subr.mxu0 0.0
    %v5012 = vand.u32 %v3818, 4294901760
    %5013 = vmatpush1.msra.mxu0 %v5012
    %5014 = vmatprep.subr.mxu0 0.0
    %v5015 = vand.u32 %v3819, 4294901760
    %5016 = vmatpush1.msra.mxu0 %v5015
    %5017 = vmatprep.subr.mxu0 0.0
    %v5018 = vand.u32 %v3820, 4294901760
    %5019 = vmatpush1.msra.mxu0 %v5018
    %5020 = vmatprep.subr.mxu0 0.0
    %v5021 = vand.u32 %v3821, 4294901760
    %5022 = vmatpush1.msra.mxu0 %v5021
    %5023 = vmatprep.subr.mxu0 0.0
    %v5024 = vand.u32 %v3822, 4294901760
    %5025 = vmatpush1.msra.mxu0 %v5024
    %5026 = vmatprep.subr.mxu0 0.0
    %v5027 = vand.u32 %v3823, 4294901760
    %5028 = vmatpush1.msra.mxu0 %v5027
    %5029 = vmatprep.subr.mxu0 0.0
    %v5030 = vand.u32 %v3824, 4294901760
    %5031 = vmatpush1.msra.mxu0 %v5030
    %5032 = vmatprep.subr.mxu0 0.0
    %v5033 = vand.u32 %v3825, 4294901760
    %5034 = vmatpush1.msra.mxu0 %v5033
    %5035 = vmatprep.subr.mxu0 0.0
    %v5036 = vand.u32 %v3826, 4294901760
    %5037 = vmatpush1.msra.mxu0 %v5036
    %5038 = vmatprep.subr.mxu0 0.0
    %v5039 = vand.u32 %v3827, 4294901760
    %5040 = vmatpush1.msra.mxu0 %v5039
    %5041 = vmatprep.subr.mxu0 0.0
    %v5042 = vand.u32 %v3828, 4294901760
    %5043 = vmatpush1.msra.mxu0 %v5042
    %5044 = vmatprep.subr.mxu0 0.0
    %v5045 = vand.u32 %v3829, 4294901760
    %5046 = vmatpush1.msra.mxu0 %v5045
    %5047 = vmatprep.subr.mxu0 0.0
    %v5048 = vand.u32 %v3830, 4294901760
    %5049 = vmatpush1.msra.mxu0 %v5048
    %5050 = vmatprep.subr.mxu0 0.0
    %v5051 = vand.u32 %v3831, 4294901760
    %5052 = vmatpush1.msra.mxu0 %v5051
    %5053 = vmatprep.subr.mxu0 0.0
    %v5054 = vand.u32 %v3832, 4294901760
    %5055 = vmatpush1.msra.mxu0 %v5054
    %5056 = vmatprep.subr.mxu0 0.0
    %v5057 = vand.u32 %v3833, 4294901760
    %5058 = vmatpush1.msra.mxu0 %v5057
    %5059 = vmatprep.subr.mxu0 0.0
    %v5060 = vand.u32 %v3834, 4294901760
    %5061 = vmatpush1.msra.mxu0 %v5060
    %5062 = vmatprep.subr.mxu0 0.0
    %v5063 = vand.u32 %v3835, 4294901760
    %5064 = vmatpush1.msra.mxu0 %v5063
    %5065 = vmatprep.subr.mxu0 0.0
    %v5066 = vand.u32 %v3836, 4294901760
    %5067 = vmatpush1.msra.mxu0 %v5066
    %5068 = vmatprep.subr.mxu0 0.0
    %v5069 = vand.u32 %v3837, 4294901760
    %5070 = vmatpush1.msra.mxu0 %v5069
    %5071 = vmatprep.subr.mxu0 0.0
    %v5072 = vand.u32 %v3838, 4294901760
    %5073 = vmatpush1.msra.mxu0 %v5072
    %5074 = vmatprep.subr.mxu0 0.0
    %v5075 = vand.u32 %v3839, 4294901760
    %5076 = vmatpush1.msra.mxu0 %v5075
    %5077 = vmatprep.subr.mxu0 0.0
    %v5078 = vand.u32 %v3840, 4294901760
    %5079 = vmatpush1.msra.mxu0 %v5078
    %5080 = vmatprep.subr.mxu0 0.0
    %v5081 = vand.u32 %v3841, 4294901760
    %5082 = vmatpush1.msra.mxu0 %v5081
    %5083 = vmatprep.subr.mxu0 0.0
    %v5084 = vand.u32 %v3842, 4294901760
    %5085 = vmatpush1.msra.mxu0 %v5084
    %5086 = vmatprep.subr.mxu0 0.0
    %v5087 = vand.u32 %v3843, 4294901760
    %5088 = vmatpush1.msra.mxu0 %v5087
    %v5089 = vand.u32 %v4063, 4294901760
    %v5090 = vsub.f32 %v4063, %v5089
    %v5091 = vand.u32 %v5090, 4294901760
    %v5092 = vsub.f32 %v5090, %v5091
    %v5093 = vand.u32 %v5092, 4294901760
    %5094 = vmatprep.mubr.f32.mxu0 %v5093
    %v5095 = vand.u32 %v4061, 4294901760
    %v5096 = vsub.f32 %v4061, %v5095
    %v5097 = vand.u32 %v5096, 4294901760
    %v5098 = vsub.f32 %v5096, %v5097
    %v5099 = vand.u32 %v5098, 4294901760
    %5100 = vmatmul.mubr.f32.gmra.mrb[0].mxu0 %v5099
    %v5101 = vpop.f32.mrb[0].mxu0
    %v5102 = vadd.f32 %v4990, %v5101
    %v5103 = vpop.f32.mrb[0].mxu0
    %5104 = vdwg.mxu0
    %5105 = vmatprep.subr.mxu0 0.0
    %v5106 = vand.u32 %v3812, 4294901760
    %v5107 = vsub.f32 %v3812, %v5106
    %v5108 = vand.u32 %v5107, 4294901760
    %v5109 = vsub.f32 %v5107, %v5108
    %v5110 = vand.u32 %v5109, 4294901760
    %5111 = vmatpush1.msra.mxu0 %v5110
    %5112 = vmatprep.subr.mxu0 0.0
    %v5113 = vand.u32 %v3813, 4294901760
    %v5114 = vsub.f32 %v3813, %v5113
    %v5115 = vand.u32 %v5114, 4294901760
    %v5116 = vsub.f32 %v5114, %v5115
    %v5117 = vand.u32 %v5116, 4294901760
    %5118 = vmatpush1.msra.mxu0 %v5117
    %5119 = vmatprep.subr.mxu0 0.0
    %v5120 = vand.u32 %v3814, 4294901760
    %v5121 = vsub.f32 %v3814, %v5120
    %v5122 = vand.u32 %v5121, 4294901760
    %v5123 = vsub.f32 %v5121, %v5122
    %v5124 = vand.u32 %v5123, 4294901760
    %5125 = vmatpush1.msra.mxu0 %v5124
    %5126 = vmatprep.subr.mxu0 0.0
    %v5127 = vand.u32 %v3815, 4294901760
    %v5128 = vsub.f32 %v3815, %v5127
    %v5129 = vand.u32 %v5128, 4294901760
    %v5130 = vsub.f32 %v5128, %v5129
    %v5131 = vand.u32 %v5130, 4294901760
    %5132 = vmatpush1.msra.mxu0 %v5131
    %5133 = vmatprep.subr.mxu0 0.0
    %v5134 = vand.u32 %v3816, 4294901760
    %v5135 = vsub.f32 %v3816, %v5134
    %v5136 = vand.u32 %v5135, 4294901760
    %v5137 = vsub.f32 %v5135, %v5136
    %v5138 = vand.u32 %v5137, 4294901760
    %5139 = vmatpush1.msra.mxu0 %v5138
    %5140 = vmatprep.subr.mxu0 0.0
    %v5141 = vand.u32 %v3817, 4294901760
    %v5142 = vsub.f32 %v3817, %v5141
    %v5143 = vand.u32 %v5142, 4294901760
    %v5144 = vsub.f32 %v5142, %v5143
    %v5145 = vand.u32 %v5144, 4294901760
    %5146 = vmatpush1.msra.mxu0 %v5145
    %5147 = vmatprep.subr.mxu0 0.0
    %v5148 = vand.u32 %v3818, 4294901760
    %v5149 = vsub.f32 %v3818, %v5148
    %v5150 = vand.u32 %v5149, 4294901760
    %v5151 = vsub.f32 %v5149, %v5150
    %v5152 = vand.u32 %v5151, 4294901760
    %5153 = vmatpush1.msra.mxu0 %v5152
    %5154 = vmatprep.subr.mxu0 0.0
    %v5155 = vand.u32 %v3819, 4294901760
    %v5156 = vsub.f32 %v3819, %v5155
    %v5157 = vand.u32 %v5156, 4294901760
    %v5158 = vsub.f32 %v5156, %v5157
    %v5159 = vand.u32 %v5158, 4294901760
    %5160 = vmatpush1.msra.mxu0 %v5159
    %5161 = vmatprep.subr.mxu0 0.0
    %v5162 = vand.u32 %v3820, 4294901760
    %v5163 = vsub.f32 %v3820, %v5162
    %v5164 = vand.u32 %v5163, 4294901760
    %v5165 = vsub.f32 %v5163, %v5164
    %v5166 = vand.u32 %v5165, 4294901760
    %5167 = vmatpush1.msra.mxu0 %v5166
    %5168 = vmatprep.subr.mxu0 0.0
    %v5169 = vand.u32 %v3821, 4294901760
    %v5170 = vsub.f32 %v3821, %v5169
    %v5171 = vand.u32 %v5170, 4294901760
    %v5172 = vsub.f32 %v5170, %v5171
    %v5173 = vand.u32 %v5172, 4294901760
    %5174 = vmatpush1.msra.mxu0 %v5173
    %5175 = vmatprep.subr.mxu0 0.0
    %v5176 = vand.u32 %v3822, 4294901760
    %v5177 = vsub.f32 %v3822, %v5176
    %v5178 = vand.u32 %v5177, 4294901760
    %v5179 = vsub.f32 %v5177, %v5178
    %v5180 = vand.u32 %v5179, 4294901760
    %5181 = vmatpush1.msra.mxu0 %v5180
    %5182 = vmatprep.subr.mxu0 0.0
    %v5183 = vand.u32 %v3823, 4294901760
    %v5184 = vsub.f32 %v3823, %v5183
    %v5185 = vand.u32 %v5184, 4294901760
    %v5186 = vsub.f32 %v5184, %v5185
    %v5187 = vand.u32 %v5186, 4294901760
    %5188 = vmatpush1.msra.mxu0 %v5187
    %5189 = vmatprep.subr.mxu0 0.0
    %v5190 = vand.u32 %v3824, 4294901760
    %v5191 = vsub.f32 %v3824, %v5190
    %v5192 = vand.u32 %v5191, 4294901760
    %v5193 = vsub.f32 %v5191, %v5192
    %v5194 = vand.u32 %v5193, 4294901760
    %5195 = vmatpush1.msra.mxu0 %v5194
    %5196 = vmatprep.subr.mxu0 0.0
    %v5197 = vand.u32 %v3825, 4294901760
    %v5198 = vsub.f32 %v3825, %v5197
    %v5199 = vand.u32 %v5198, 4294901760
    %v5200 = vsub.f32 %v5198, %v5199
    %v5201 = vand.u32 %v5200, 4294901760
    %5202 = vmatpush1.msra.mxu0 %v5201
    %5203 = vmatprep.subr.mxu0 0.0
    %v5204 = vand.u32 %v3826, 4294901760
    %v5205 = vsub.f32 %v3826, %v5204
    %v5206 = vand.u32 %v5205, 4294901760
    %v5207 = vsub.f32 %v5205, %v5206
    %v5208 = vand.u32 %v5207, 4294901760
    %5209 = vmatpush1.msra.mxu0 %v5208
    %5210 = vmatprep.subr.mxu0 0.0
    %v5211 = vand.u32 %v3827, 4294901760
    %v5212 = vsub.f32 %v3827, %v5211
    %v5213 = vand.u32 %v5212, 4294901760
    %v5214 = vsub.f32 %v5212, %v5213
    %v5215 = vand.u32 %v5214, 4294901760
    %5216 = vmatpush1.msra.mxu0 %v5215
    %5217 = vmatprep.subr.mxu0 0.0
    %v5218 = vand.u32 %v3828, 4294901760
    %v5219 = vsub.f32 %v3828, %v5218
    %v5220 = vand.u32 %v5219, 4294901760
    %v5221 = vsub.f32 %v5219, %v5220
    %v5222 = vand.u32 %v5221, 4294901760
    %5223 = vmatpush1.msra.mxu0 %v5222
    %5224 = vmatprep.subr.mxu0 0.0
    %v5225 = vand.u32 %v3829, 4294901760
    %v5226 = vsub.f32 %v3829, %v5225
    %v5227 = vand.u32 %v5226, 4294901760
    %v5228 = vsub.f32 %v5226, %v5227
    %v5229 = vand.u32 %v5228, 4294901760
    %5230 = vmatpush1.msra.mxu0 %v5229
    %5231 = vmatprep.subr.mxu0 0.0
    %v5232 = vand.u32 %v3830, 4294901760
    %v5233 = vsub.f32 %v3830, %v5232
    %v5234 = vand.u32 %v5233, 4294901760
    %v5235 = vsub.f32 %v5233, %v5234
    %v5236 = vand.u32 %v5235, 4294901760
    %5237 = vmatpush1.msra.mxu0 %v5236
    %5238 = vmatprep.subr.mxu0 0.0
    %v5239 = vand.u32 %v3831, 4294901760
    %v5240 = vsub.f32 %v3831, %v5239
    %v5241 = vand.u32 %v5240, 4294901760
    %v5242 = vsub.f32 %v5240, %v5241
    %v5243 = vand.u32 %v5242, 4294901760
    %5244 = vmatpush1.msra.mxu0 %v5243
    %5245 = vmatprep.subr.mxu0 0.0
    %v5246 = vand.u32 %v3832, 4294901760
    %v5247 = vsub.f32 %v3832, %v5246
    %v5248 = vand.u32 %v5247, 4294901760
    %v5249 = vsub.f32 %v5247, %v5248
    %v5250 = vand.u32 %v5249, 4294901760
    %5251 = vmatpush1.msra.mxu0 %v5250
    %5252 = vmatprep.subr.mxu0 0.0
    %v5253 = vand.u32 %v3833, 4294901760
    %v5254 = vsub.f32 %v3833, %v5253
    %v5255 = vand.u32 %v5254, 4294901760
    %v5256 = vsub.f32 %v5254, %v5255
    %v5257 = vand.u32 %v5256, 4294901760
    %5258 = vmatpush1.msra.mxu0 %v5257
    %5259 = vmatprep.subr.mxu0 0.0
    %v5260 = vand.u32 %v3834, 4294901760
    %v5261 = vsub.f32 %v3834, %v5260
    %v5262 = vand.u32 %v5261, 4294901760
    %v5263 = vsub.f32 %v5261, %v5262
    %v5264 = vand.u32 %v5263, 4294901760
    %5265 = vmatpush1.msra.mxu0 %v5264
    %5266 = vmatprep.subr.mxu0 0.0
    %v5267 = vand.u32 %v3835, 4294901760
    %v5268 = vsub.f32 %v3835, %v5267
    %v5269 = vand.u32 %v5268, 4294901760
    %v5270 = vsub.f32 %v5268, %v5269
    %v5271 = vand.u32 %v5270, 4294901760
    %5272 = vmatpush1.msra.mxu0 %v5271
    %5273 = vmatprep.subr.mxu0 0.0
    %v5274 = vand.u32 %v3836, 4294901760
    %v5275 = vsub.f32 %v3836, %v5274
    %v5276 = vand.u32 %v5275, 4294901760
    %v5277 = vsub.f32 %v5275, %v5276
    %v5278 = vand.u32 %v5277, 4294901760
    %5279 = vmatpush1.msra.mxu0 %v5278
    %5280 = vmatprep.subr.mxu0 0.0
    %v5281 = vand.u32 %v3837, 4294901760
    %v5282 = vsub.f32 %v3837, %v5281
    %v5283 = vand.u32 %v5282, 4294901760
    %v5284 = vsub.f32 %v5282, %v5283
    %v5285 = vand.u32 %v5284, 4294901760
    %5286 = vmatpush1.msra.mxu0 %v5285
    %5287 = vmatprep.subr.mxu0 0.0
    %v5288 = vand.u32 %v3838, 4294901760
    %v5289 = vsub.f32 %v3838, %v5288
    %v5290 = vand.u32 %v5289, 4294901760
    %v5291 = vsub.f32 %v5289, %v5290
    %v5292 = vand.u32 %v5291, 4294901760
    %5293 = vmatpush1.msra.mxu0 %v5292
    %5294 = vmatprep.subr.mxu0 0.0
    %v5295 = vand.u32 %v3839, 4294901760
    %v5296 = vsub.f32 %v3839, %v5295
    %v5297 = vand.u32 %v5296, 4294901760
    %v5298 = vsub.f32 %v5296, %v5297
    %v5299 = vand.u32 %v5298, 4294901760
    %5300 = vmatpush1.msra.mxu0 %v5299
    %5301 = vmatprep.subr.mxu0 0.0
    %v5302 = vand.u32 %v3840, 4294901760
    %v5303 = vsub.f32 %v3840, %v5302
    %v5304 = vand.u32 %v5303, 4294901760
    %v5305 = vsub.f32 %v5303, %v5304
    %v5306 = vand.u32 %v5305, 4294901760
    %5307 = vmatpush1.msra.mxu0 %v5306
    %5308 = vmatprep.subr.mxu0 0.0
    %v5309 = vand.u32 %v3841, 4294901760
    %v5310 = vsub.f32 %v3841, %v5309
    %v5311 = vand.u32 %v5310, 4294901760
    %v5312 = vsub.f32 %v5310, %v5311
    %v5313 = vand.u32 %v5312, 4294901760
    %5314 = vmatpush1.msra.mxu0 %v5313
    %5315 = vmatprep.subr.mxu0 0.0
    %v5316 = vand.u32 %v3842, 4294901760
    %v5317 = vsub.f32 %v3842, %v5316
    %v5318 = vand.u32 %v5317, 4294901760
    %v5319 = vsub.f32 %v5317, %v5318
    %v5320 = vand.u32 %v5319, 4294901760
    %5321 = vmatpush1.msra.mxu0 %v5320
    %5322 = vmatprep.subr.mxu0 0.0
    %v5323 = vand.u32 %v3843, 4294901760
    %v5324 = vsub.f32 %v3843, %v5323
    %v5325 = vand.u32 %v5324, 4294901760
    %v5326 = vsub.f32 %v5324, %v5325
    %v5327 = vand.u32 %v5326, 4294901760
    %5328 = vmatpush1.msra.mxu0 %v5327
    %v5329 = vand.u32 %v4063, 4294901760
    %5330 = vmatprep.mubr.f32.mxu0 %v5329
    %v5331 = vand.u32 %v4061, 4294901760
    %5332 = vmatmul.mubr.f32.gmra.mrb[0].mxu0 %v5331
    %v5333 = vpop.f32.mrb[0].mxu0
    %v5334 = vadd.f32 %v5102, %v5333
    %v5335 = vpop.f32.mrb[0].mxu0
    %5336 = vdwg.mxu0
    %5337 = vmatprep.subr.mxu0 0.0
    %v5338 = vand.u32 %v3812, 4294901760
    %v5339 = vsub.f32 %v3812, %v5338
    %5340 = vmatpush1.msra.mxu0 %v5339
    %5341 = vmatprep.subr.mxu0 0.0
    %v5342 = vand.u32 %v3813, 4294901760
    %v5343 = vsub.f32 %v3813, %v5342
    %5344 = vmatpush1.msra.mxu0 %v5343
    %5345 = vmatprep.subr.mxu0 0.0
    %v5346 = vand.u32 %v3814, 4294901760
    %v5347 = vsub.f32 %v3814, %v5346
    %5348 = vmatpush1.msra.mxu0 %v5347
    %5349 = vmatprep.subr.mxu0 0.0
    %v5350 = vand.u32 %v3815, 4294901760
    %v5351 = vsub.f32 %v3815, %v5350
    %5352 = vmatpush1.msra.mxu0 %v5351
    %5353 = vmatprep.subr.mxu0 0.0
    %v5354 = vand.u32 %v3816, 4294901760
    %v5355 = vsub.f32 %v3816, %v5354
    %5356 = vmatpush1.msra.mxu0 %v5355
    %5357 = vmatprep.subr.mxu0 0.0
    %v5358 = vand.u32 %v3817, 4294901760
    %v5359 = vsub.f32 %v3817, %v5358
    %5360 = vmatpush1.msra.mxu0 %v5359
    %5361 = vmatprep.subr.mxu0 0.0
    %v5362 = vand.u32 %v3818, 4294901760
    %v5363 = vsub.f32 %v3818, %v5362
    %5364 = vmatpush1.msra.mxu0 %v5363
    %5365 = vmatprep.subr.mxu0 0.0
    %v5366 = vand.u32 %v3819, 4294901760
    %v5367 = vsub.f32 %v3819, %v5366
    %5368 = vmatpush1.msra.mxu0 %v5367
    %5369 = vmatprep.subr.mxu0 0.0
    %v5370 = vand.u32 %v3820, 4294901760
    %v5371 = vsub.f32 %v3820, %v5370
    %5372 = vmatpush1.msra.mxu0 %v5371
    %5373 = vmatprep.subr.mxu0 0.0
    %v5374 = vand.u32 %v3821, 4294901760
    %v5375 = vsub.f32 %v3821, %v5374
    %5376 = vmatpush1.msra.mxu0 %v5375
    %5377 = vmatprep.subr.mxu0 0.0
    %v5378 = vand.u32 %v3822, 4294901760
    %v5379 = vsub.f32 %v3822, %v5378
    %5380 = vmatpush1.msra.mxu0 %v5379
    %5381 = vmatprep.subr.mxu0 0.0
    %v5382 = vand.u32 %v3823, 4294901760
    %v5383 = vsub.f32 %v3823, %v5382
    %5384 = vmatpush1.msra.mxu0 %v5383
    %5385 = vmatprep.subr.mxu0 0.0
    %v5386 = vand.u32 %v3824, 4294901760
    %v5387 = vsub.f32 %v3824, %v5386
    %5388 = vmatpush1.msra.mxu0 %v5387
    %5389 = vmatprep.subr.mxu0 0.0
    %v5390 = vand.u32 %v3825, 4294901760
    %v5391 = vsub.f32 %v3825, %v5390
    %5392 = vmatpush1.msra.mxu0 %v5391
    %5393 = vmatprep.subr.mxu0 0.0
    %v5394 = vand.u32 %v3826, 4294901760
    %v5395 = vsub.f32 %v3826, %v5394
    %5396 = vmatpush1.msra.mxu0 %v5395
    %5397 = vmatprep.subr.mxu0 0.0
    %v5398 = vand.u32 %v3827, 4294901760
    %v5399 = vsub.f32 %v3827, %v5398
    %5400 = vmatpush1.msra.mxu0 %v5399
    %5401 = vmatprep.subr.mxu0 0.0
    %v5402 = vand.u32 %v3828, 4294901760
    %v5403 = vsub.f32 %v3828, %v5402
    %5404 = vmatpush1.msra.mxu0 %v5403
    %5405 = vmatprep.subr.mxu0 0.0
    %v5406 = vand.u32 %v3829, 4294901760
    %v5407 = vsub.f32 %v3829, %v5406
    %5408 = vmatpush1.msra.mxu0 %v5407
    %5409 = vmatprep.subr.mxu0 0.0
    %v5410 = vand.u32 %v3830, 4294901760
    %v5411 = vsub.f32 %v3830, %v5410
    %5412 = vmatpush1.msra.mxu0 %v5411
    %5413 = vmatprep.subr.mxu0 0.0
    %v5414 = vand.u32 %v3831, 4294901760
    %v5415 = vsub.f32 %v3831, %v5414
    %5416 = vmatpush1.msra.mxu0 %v5415
    %5417 = vmatprep.subr.mxu0 0.0
    %v5418 = vand.u32 %v3832, 4294901760
    %v5419 = vsub.f32 %v3832, %v5418
    %5420 = vmatpush1.msra.mxu0 %v5419
    %5421 = vmatprep.subr.mxu0 0.0
    %v5422 = vand.u32 %v3833, 4294901760
    %v5423 = vsub.f32 %v3833, %v5422
    %5424 = vmatpush1.msra.mxu0 %v5423
    %5425 = vmatprep.subr.mxu0 0.0
    %v5426 = vand.u32 %v3834, 4294901760
    %v5427 = vsub.f32 %v3834, %v5426
    %5428 = vmatpush1.msra.mxu0 %v5427
    %5429 = vmatprep.subr.mxu0 0.0
    %v5430 = vand.u32 %v3835, 4294901760
    %v5431 = vsub.f32 %v3835, %v5430
    %5432 = vmatpush1.msra.mxu0 %v5431
    %5433 = vmatprep.subr.mxu0 0.0
    %v5434 = vand.u32 %v3836, 4294901760
    %v5435 = vsub.f32 %v3836, %v5434
    %5436 = vmatpush1.msra.mxu0 %v5435
    %5437 = vmatprep.subr.mxu0 0.0
    %v5438 = vand.u32 %v3837, 4294901760
    %v5439 = vsub.f32 %v3837, %v5438
    %5440 = vmatpush1.msra.mxu0 %v5439
    %5441 = vmatprep.subr.mxu0 0.0
    %v5442 = vand.u32 %v3838, 4294901760
    %v5443 = vsub.f32 %v3838, %v5442
    %5444 = vmatpush1.msra.mxu0 %v5443
    %5445 = vmatprep.subr.mxu0 0.0
    %v5446 = vand.u32 %v3839, 4294901760
    %v5447 = vsub.f32 %v3839, %v5446
    %5448 = vmatpush1.msra.mxu0 %v5447
    %5449 = vmatprep.subr.mxu0 0.0
    %v5450 = vand.u32 %v3840, 4294901760
    %v5451 = vsub.f32 %v3840, %v5450
    %5452 = vmatpush1.msra.mxu0 %v5451
    %5453 = vmatprep.subr.mxu0 0.0
    %v5454 = vand.u32 %v3841, 4294901760
    %v5455 = vsub.f32 %v3841, %v5454
    %5456 = vmatpush1.msra.mxu0 %v5455
    %5457 = vmatprep.subr.mxu0 0.0
    %v5458 = vand.u32 %v3842, 4294901760
    %v5459 = vsub.f32 %v3842, %v5458
    %5460 = vmatpush1.msra.mxu0 %v5459
    %5461 = vmatprep.subr.mxu0 0.0
    %v5462 = vand.u32 %v3843, 4294901760
    %v5463 = vsub.f32 %v3843, %v5462
    %5464 = vmatpush1.msra.mxu0 %v5463
    %v5465 = vand.u32 %v4063, 4294901760
    %v5466 = vsub.f32 %v4063, %v5465
    %5467 = vmatprep.mubr.f32.mxu0 %v5466
    %v5468 = vand.u32 %v4061, 4294901760
    %v5469 = vsub.f32 %v4061, %v5468
    %5470 = vmatmul.mubr.f32.gmra.mrb[0].mxu0 %v5469
    %v5471 = vpop.f32.mrb[0].mxu0
    %v5472 = vadd.f32 %v5334, %v5471
    %v5473 = vpop.f32.mrb[0].mxu0
    %5474 = vdwg.mxu0
    %5475 = vmatprep.subr.mxu0 0.0
    %v5476 = vand.u32 %v3812, 4294901760
    %5477 = vmatpush1.msra.mxu0 %v5476
    %5478 = vmatprep.subr.mxu0 0.0
    %v5479 = vand.u32 %v3813, 4294901760
    %5480 = vmatpush1.msra.mxu0 %v5479
    %5481 = vmatprep.subr.mxu0 0.0
    %v5482 = vand.u32 %v3814, 4294901760
    %5483 = vmatpush1.msra.mxu0 %v5482
    %5484 = vmatprep.subr.mxu0 0.0
    %v5485 = vand.u32 %v3815, 4294901760
    %5486 = vmatpush1.msra.mxu0 %v5485
    %5487 = vmatprep.subr.mxu0 0.0
    %v5488 = vand.u32 %v3816, 4294901760
    %5489 = vmatpush1.msra.mxu0 %v5488
    %5490 = vmatprep.subr.mxu0 0.0
    %v5491 = vand.u32 %v3817, 4294901760
    %5492 = vmatpush1.msra.mxu0 %v5491
    %5493 = vmatprep.subr.mxu0 0.0
    %v5494 = vand.u32 %v3818, 4294901760
    %5495 = vmatpush1.msra.mxu0 %v5494
    %5496 = vmatprep.subr.mxu0 0.0
    %v5497 = vand.u32 %v3819, 4294901760
    %5498 = vmatpush1.msra.mxu0 %v5497
    %5499 = vmatprep.subr.mxu0 0.0
    %v5500 = vand.u32 %v3820, 4294901760
    %5501 = vmatpush1.msra.mxu0 %v5500
    %5502 = vmatprep.subr.mxu0 0.0
    %v5503 = vand.u32 %v3821, 4294901760
    %5504 = vmatpush1.msra.mxu0 %v5503
    %5505 = vmatprep.subr.mxu0 0.0
    %v5506 = vand.u32 %v3822, 4294901760
    %5507 = vmatpush1.msra.mxu0 %v5506
    %5508 = vmatprep.subr.mxu0 0.0
    %v5509 = vand.u32 %v3823, 4294901760
    %5510 = vmatpush1.msra.mxu0 %v5509
    %5511 = vmatprep.subr.mxu0 0.0
    %v5512 = vand.u32 %v3824, 4294901760
    %5513 = vmatpush1.msra.mxu0 %v5512
    %5514 = vmatprep.subr.mxu0 0.0
    %v5515 = vand.u32 %v3825, 4294901760
    %5516 = vmatpush1.msra.mxu0 %v5515
    %5517 = vmatprep.subr.mxu0 0.0
    %v5518 = vand.u32 %v3826, 4294901760
    %5519 = vmatpush1.msra.mxu0 %v5518
    %5520 = vmatprep.subr.mxu0 0.0
    %v5521 = vand.u32 %v3827, 4294901760
    %5522 = vmatpush1.msra.mxu0 %v5521
    %5523 = vmatprep.subr.mxu0 0.0
    %v5524 = vand.u32 %v3828, 4294901760
    %5525 = vmatpush1.msra.mxu0 %v5524
    %5526 = vmatprep.subr.mxu0 0.0
    %v5527 = vand.u32 %v3829, 4294901760
    %5528 = vmatpush1.msra.mxu0 %v5527
    %5529 = vmatprep.subr.mxu0 0.0
    %v5530 = vand.u32 %v3830, 4294901760
    %5531 = vmatpush1.msra.mxu0 %v5530
    %5532 = vmatprep.subr.mxu0 0.0
    %v5533 = vand.u32 %v3831, 4294901760
    %5534 = vmatpush1.msra.mxu0 %v5533
    %5535 = vmatprep.subr.mxu0 0.0
    %v5536 = vand.u32 %v3832, 4294901760
    %5537 = vmatpush1.msra.mxu0 %v5536
    %5538 = vmatprep.subr.mxu0 0.0
    %v5539 = vand.u32 %v3833, 4294901760
    %5540 = vmatpush1.msra.mxu0 %v5539
    %5541 = vmatprep.subr.mxu0 0.0
    %v5542 = vand.u32 %v3834, 4294901760
    %5543 = vmatpush1.msra.mxu0 %v5542
    %5544 = vmatprep.subr.mxu0 0.0
    %v5545 = vand.u32 %v3835, 4294901760
    %5546 = vmatpush1.msra.mxu0 %v5545
    %5547 = vmatprep.subr.mxu0 0.0
    %v5548 = vand.u32 %v3836, 4294901760
    %5549 = vmatpush1.msra.mxu0 %v5548
    %5550 = vmatprep.subr.mxu0 0.0
    %v5551 = vand.u32 %v3837, 4294901760
    %5552 = vmatpush1.msra.mxu0 %v5551
    %5553 = vmatprep.subr.mxu0 0.0
    %v5554 = vand.u32 %v3838, 4294901760
    %5555 = vmatpush1.msra.mxu0 %v5554
    %5556 = vmatprep.subr.mxu0 0.0
    %v5557 = vand.u32 %v3839, 4294901760
    %5558 = vmatpush1.msra.mxu0 %v5557
    %5559 = vmatprep.subr.mxu0 0.0
    %v5560 = vand.u32 %v3840, 4294901760
    %5561 = vmatpush1.msra.mxu0 %v5560
    %5562 = vmatprep.subr.mxu0 0.0
    %v5563 = vand.u32 %v3841, 4294901760
    %5564 = vmatpush1.msra.mxu0 %v5563
    %5565 = vmatprep.subr.mxu0 0.0
    %v5566 = vand.u32 %v3842, 4294901760
    %5567 = vmatpush1.msra.mxu0 %v5566
    %5568 = vmatprep.subr.mxu0 0.0
    %v5569 = vand.u32 %v3843, 4294901760
    %5570 = vmatpush1.msra.mxu0 %v5569
    %v5571 = vand.u32 %v4063, 4294901760
    %v5572 = vsub.f32 %v4063, %v5571
    %v5573 = vand.u32 %v5572, 4294901760
    %5574 = vmatprep.mubr.f32.mxu0 %v5573
    %v5575 = vand.u32 %v4061, 4294901760
    %v5576 = vsub.f32 %v4061, %v5575
    %v5577 = vand.u32 %v5576, 4294901760
    %5578 = vmatmul.mubr.f32.gmra.mrb[0].mxu0 %v5577
    %v5579 = vpop.f32.mrb[0].mxu0
    %v5580 = vadd.f32 %v5472, %v5579
    %v5581 = vpop.f32.mrb[0].mxu0
    %5582 = vdwg.mxu0
    %5583 = vmatprep.subr.mxu0 0.0
    %v5584 = vand.u32 %v3812, 4294901760
    %v5585 = vsub.f32 %v3812, %v5584
    %v5586 = vand.u32 %v5585, 4294901760
    %5587 = vmatpush1.msra.mxu0 %v5586
    %5588 = vmatprep.subr.mxu0 0.0
    %v5589 = vand.u32 %v3813, 4294901760
    %v5590 = vsub.f32 %v3813, %v5589
    %v5591 = vand.u32 %v5590, 4294901760
    %5592 = vmatpush1.msra.mxu0 %v5591
    %5593 = vmatprep.subr.mxu0 0.0
    %v5594 = vand.u32 %v3814, 4294901760
    %v5595 = vsub.f32 %v3814, %v5594
    %v5596 = vand.u32 %v5595, 4294901760
    %5597 = vmatpush1.msra.mxu0 %v5596
    %5598 = vmatprep.subr.mxu0 0.0
    %v5599 = vand.u32 %v3815, 4294901760
    %v5600 = vsub.f32 %v3815, %v5599
    %v5601 = vand.u32 %v5600, 4294901760
    %5602 = vmatpush1.msra.mxu0 %v5601
    %5603 = vmatprep.subr.mxu0 0.0
    %v5604 = vand.u32 %v3816, 4294901760
    %v5605 = vsub.f32 %v3816, %v5604
    %v5606 = vand.u32 %v5605, 4294901760
    %5607 = vmatpush1.msra.mxu0 %v5606
    %5608 = vmatprep.subr.mxu0 0.0
    %v5609 = vand.u32 %v3817, 4294901760
    %v5610 = vsub.f32 %v3817, %v5609
    %v5611 = vand.u32 %v5610, 4294901760
    %5612 = vmatpush1.msra.mxu0 %v5611
    %5613 = vmatprep.subr.mxu0 0.0
    %v5614 = vand.u32 %v3818, 4294901760
    %v5615 = vsub.f32 %v3818, %v5614
    %v5616 = vand.u32 %v5615, 4294901760
    %5617 = vmatpush1.msra.mxu0 %v5616
    %5618 = vmatprep.subr.mxu0 0.0
    %v5619 = vand.u32 %v3819, 4294901760
    %v5620 = vsub.f32 %v3819, %v5619
    %v5621 = vand.u32 %v5620, 4294901760
    %5622 = vmatpush1.msra.mxu0 %v5621
    %5623 = vmatprep.subr.mxu0 0.0
    %v5624 = vand.u32 %v3820, 4294901760
    %v5625 = vsub.f32 %v3820, %v5624
    %v5626 = vand.u32 %v5625, 4294901760
    %5627 = vmatpush1.msra.mxu0 %v5626
    %5628 = vmatprep.subr.mxu0 0.0
    %v5629 = vand.u32 %v3821, 4294901760
    %v5630 = vsub.f32 %v3821, %v5629
    %v5631 = vand.u32 %v5630, 4294901760
    %5632 = vmatpush1.msra.mxu0 %v5631
    %5633 = vmatprep.subr.mxu0 0.0
    %v5634 = vand.u32 %v3822, 4294901760
    %v5635 = vsub.f32 %v3822, %v5634
    %v5636 = vand.u32 %v5635, 4294901760
    %5637 = vmatpush1.msra.mxu0 %v5636
    %5638 = vmatprep.subr.mxu0 0.0
    %v5639 = vand.u32 %v3823, 4294901760
    %v5640 = vsub.f32 %v3823, %v5639
    %v5641 = vand.u32 %v5640, 4294901760
    %5642 = vmatpush1.msra.mxu0 %v5641
    %5643 = vmatprep.subr.mxu0 0.0
    %v5644 = vand.u32 %v3824, 4294901760
    %v5645 = vsub.f32 %v3824, %v5644
    %v5646 = vand.u32 %v5645, 4294901760
    %5647 = vmatpush1.msra.mxu0 %v5646
    %5648 = vmatprep.subr.mxu0 0.0
    %v5649 = vand.u32 %v3825, 4294901760
    %v5650 = vsub.f32 %v3825, %v5649
    %v5651 = vand.u32 %v5650, 4294901760
    %5652 = vmatpush1.msra.mxu0 %v5651
    %5653 = vmatprep.subr.mxu0 0.0
    %v5654 = vand.u32 %v3826, 4294901760
    %v5655 = vsub.f32 %v3826, %v5654
    %v5656 = vand.u32 %v5655, 4294901760
    %5657 = vmatpush1.msra.mxu0 %v5656
    %5658 = vmatprep.subr.mxu0 0.0
    %v5659 = vand.u32 %v3827, 4294901760
    %v5660 = vsub.f32 %v3827, %v5659
    %v5661 = vand.u32 %v5660, 4294901760
    %5662 = vmatpush1.msra.mxu0 %v5661
    %5663 = vmatprep.subr.mxu0 0.0
    %v5664 = vand.u32 %v3828, 4294901760
    %v5665 = vsub.f32 %v3828, %v5664
    %v5666 = vand.u32 %v5665, 4294901760
    %5667 = vmatpush1.msra.mxu0 %v5666
    %5668 = vmatprep.subr.mxu0 0.0
    %v5669 = vand.u32 %v3829, 4294901760
    %v5670 = vsub.f32 %v3829, %v5669
    %v5671 = vand.u32 %v5670, 4294901760
    %5672 = vmatpush1.msra.mxu0 %v5671
    %5673 = vmatprep.subr.mxu0 0.0
    %v5674 = vand.u32 %v3830, 4294901760
    %v5675 = vsub.f32 %v3830, %v5674
    %v5676 = vand.u32 %v5675, 4294901760
    %5677 = vmatpush1.msra.mxu0 %v5676
    %5678 = vmatprep.subr.mxu0 0.0
    %v5679 = vand.u32 %v3831, 4294901760
    %v5680 = vsub.f32 %v3831, %v5679
    %v5681 = vand.u32 %v5680, 4294901760
    %5682 = vmatpush1.msra.mxu0 %v5681
    %5683 = vmatprep.subr.mxu0 0.0
    %v5684 = vand.u32 %v3832, 4294901760
    %v5685 = vsub.f32 %v3832, %v5684
    %v5686 = vand.u32 %v5685, 4294901760
    %5687 = vmatpush1.msra.mxu0 %v5686
    %5688 = vmatprep.subr.mxu0 0.0
    %v5689 = vand.u32 %v3833, 4294901760
    %v5690 = vsub.f32 %v3833, %v5689
    %v5691 = vand.u32 %v5690, 4294901760
    %5692 = vmatpush1.msra.mxu0 %v5691
    %5693 = vmatprep.subr.mxu0 0.0
    %v5694 = vand.u32 %v3834, 4294901760
    %v5695 = vsub.f32 %v3834, %v5694
    %v5696 = vand.u32 %v5695, 4294901760
    %5697 = vmatpush1.msra.mxu0 %v5696
    %5698 = vmatprep.subr.mxu0 0.0
    %v5699 = vand.u32 %v3835, 4294901760
    %v5700 = vsub.f32 %v3835, %v5699
    %v5701 = vand.u32 %v5700, 4294901760
    %5702 = vmatpush1.msra.mxu0 %v5701
    %5703 = vmatprep.subr.mxu0 0.0
    %v5704 = vand.u32 %v3836, 4294901760
    %v5705 = vsub.f32 %v3836, %v5704
    %v5706 = vand.u32 %v5705, 4294901760
    %5707 = vmatpush1.msra.mxu0 %v5706
    %5708 = vmatprep.subr.mxu0 0.0
    %v5709 = vand.u32 %v3837, 4294901760
    %v5710 = vsub.f32 %v3837, %v5709
    %v5711 = vand.u32 %v5710, 4294901760
    %5712 = vmatpush1.msra.mxu0 %v5711
    %5713 = vmatprep.subr.mxu0 0.0
    %v5714 = vand.u32 %v3838, 4294901760
    %v5715 = vsub.f32 %v3838, %v5714
    %v5716 = vand.u32 %v5715, 4294901760
    %5717 = vmatpush1.msra.mxu0 %v5716
    %5718 = vmatprep.subr.mxu0 0.0
    %v5719 = vand.u32 %v3839, 4294901760
    %v5720 = vsub.f32 %v3839, %v5719
    %v5721 = vand.u32 %v5720, 4294901760
    %5722 = vmatpush1.msra.mxu0 %v5721
    %5723 = vmatprep.subr.mxu0 0.0
    %v5724 = vand.u32 %v3840, 4294901760
    %v5725 = vsub.f32 %v3840, %v5724
    %v5726 = vand.u32 %v5725, 4294901760
    %5727 = vmatpush1.msra.mxu0 %v5726
    %5728 = vmatprep.subr.mxu0 0.0
    %v5729 = vand.u32 %v3841, 4294901760
    %v5730 = vsub.f32 %v3841, %v5729
    %v5731 = vand.u32 %v5730, 4294901760
    %5732 = vmatpush1.msra.mxu0 %v5731
    %5733 = vmatprep.subr.mxu0 0.0
    %v5734 = vand.u32 %v3842, 4294901760
    %v5735 = vsub.f32 %v3842, %v5734
    %v5736 = vand.u32 %v5735, 4294901760
    %5737 = vmatpush1.msra.mxu0 %v5736
    %5738 = vmatprep.subr.mxu0 0.0
    %v5739 = vand.u32 %v3843, 4294901760
    %v5740 = vsub.f32 %v3843, %v5739
    %v5741 = vand.u32 %v5740, 4294901760
    %5742 = vmatpush1.msra.mxu0 %v5741
    %v5743 = vand.u32 %v4063, 4294901760
    %5744 = vmatprep.mubr.f32.mxu0 %v5743
    %v5745 = vand.u32 %v4061, 4294901760
    %5746 = vmatmul.mubr.f32.gmra.mrb[0].mxu0 %v5745
    %v5747 = vpop.f32.mrb[0].mxu0
    %v5748 = vadd.f32 %v5580, %v5747
    %v5749 = vpop.f32.mrb[0].mxu0
    %5750 = vdwg.mxu0
    %5751 = vmatprep.subr.mxu0 0.0
    %v5752 = vand.u32 %v3812, 4294901760
    %5753 = vmatpush1.msra.mxu0 %v5752
    %5754 = vmatprep.subr.mxu0 0.0
    %v5755 = vand.u32 %v3813, 4294901760
    %5756 = vmatpush1.msra.mxu0 %v5755
    %5757 = vmatprep.subr.mxu0 0.0
    %v5758 = vand.u32 %v3814, 4294901760
    %5759 = vmatpush1.msra.mxu0 %v5758
    %5760 = vmatprep.subr.mxu0 0.0
    %v5761 = vand.u32 %v3815, 4294901760
    %5762 = vmatpush1.msra.mxu0 %v5761
    %5763 = vmatprep.subr.mxu0 0.0
    %v5764 = vand.u32 %v3816, 4294901760
    %5765 = vmatpush1.msra.mxu0 %v5764
    %5766 = vmatprep.subr.mxu0 0.0
    %v5767 = vand.u32 %v3817, 4294901760
    %5768 = vmatpush1.msra.mxu0 %v5767
    %5769 = vmatprep.subr.mxu0 0.0
    %v5770 = vand.u32 %v3818, 4294901760
    %5771 = vmatpush1.msra.mxu0 %v5770
    %5772 = vmatprep.subr.mxu0 0.0
    %v5773 = vand.u32 %v3819, 4294901760
    %5774 = vmatpush1.msra.mxu0 %v5773
    %5775 = vmatprep.subr.mxu0 0.0
    %v5776 = vand.u32 %v3820, 4294901760
    %5777 = vmatpush1.msra.mxu0 %v5776
    %5778 = vmatprep.subr.mxu0 0.0
    %v5779 = vand.u32 %v3821, 4294901760
    %5780 = vmatpush1.msra.mxu0 %v5779
    %5781 = vmatprep.subr.mxu0 0.0
    %v5782 = vand.u32 %v3822, 4294901760
    %5783 = vmatpush1.msra.mxu0 %v5782
    %5784 = vmatprep.subr.mxu0 0.0
    %v5785 = vand.u32 %v3823, 4294901760
    %5786 = vmatpush1.msra.mxu0 %v5785
    %5787 = vmatprep.subr.mxu0 0.0
    %v5788 = vand.u32 %v3824, 4294901760
    %5789 = vmatpush1.msra.mxu0 %v5788
    %5790 = vmatprep.subr.mxu0 0.0
    %v5791 = vand.u32 %v3825, 4294901760
    %5792 = vmatpush1.msra.mxu0 %v5791
    %5793 = vmatprep.subr.mxu0 0.0
    %v5794 = vand.u32 %v3826, 4294901760
    %5795 = vmatpush1.msra.mxu0 %v5794
    %5796 = vmatprep.subr.mxu0 0.0
    %v5797 = vand.u32 %v3827, 4294901760
    %5798 = vmatpush1.msra.mxu0 %v5797
    %5799 = vmatprep.subr.mxu0 0.0
    %v5800 = vand.u32 %v3828, 4294901760
    %5801 = vmatpush1.msra.mxu0 %v5800
    %5802 = vmatprep.subr.mxu0 0.0
    %v5803 = vand.u32 %v3829, 4294901760
    %5804 = vmatpush1.msra.mxu0 %v5803
    %5805 = vmatprep.subr.mxu0 0.0
    %v5806 = vand.u32 %v3830, 4294901760
    %5807 = vmatpush1.msra.mxu0 %v5806
    %5808 = vmatprep.subr.mxu0 0.0
    %v5809 = vand.u32 %v3831, 4294901760
    %5810 = vmatpush1.msra.mxu0 %v5809
    %5811 = vmatprep.subr.mxu0 0.0
    %v5812 = vand.u32 %v3832, 4294901760
    %5813 = vmatpush1.msra.mxu0 %v5812
    %5814 = vmatprep.subr.mxu0 0.0
    %v5815 = vand.u32 %v3833, 4294901760
    %5816 = vmatpush1.msra.mxu0 %v5815
    %5817 = vmatprep.subr.mxu0 0.0
    %v5818 = vand.u32 %v3834, 4294901760
    %5819 = vmatpush1.msra.mxu0 %v5818
    %5820 = vmatprep.subr.mxu0 0.0
    %v5821 = vand.u32 %v3835, 4294901760
    %5822 = vmatpush1.msra.mxu0 %v5821
    %5823 = vmatprep.subr.mxu0 0.0
    %v5824 = vand.u32 %v3836, 4294901760
    %5825 = vmatpush1.msra.mxu0 %v5824
    %5826 = vmatprep.subr.mxu0 0.0
    %v5827 = vand.u32 %v3837, 4294901760
    %5828 = vmatpush1.msra.mxu0 %v5827
    %5829 = vmatprep.subr.mxu0 0.0
    %v5830 = vand.u32 %v3838, 4294901760
    %5831 = vmatpush1.msra.mxu0 %v5830
    %5832 = vmatprep.subr.mxu0 0.0
    %v5833 = vand.u32 %v3839, 4294901760
    %5834 = vmatpush1.msra.mxu0 %v5833
    %5835 = vmatprep.subr.mxu0 0.0
    %v5836 = vand.u32 %v3840, 4294901760
    %5837 = vmatpush1.msra.mxu0 %v5836
    %5838 = vmatprep.subr.mxu0 0.0
    %v5839 = vand.u32 %v3841, 4294901760
    %5840 = vmatpush1.msra.mxu0 %v5839
    %5841 = vmatprep.subr.mxu0 0.0
    %v5842 = vand.u32 %v3842, 4294901760
    %5843 = vmatpush1.msra.mxu0 %v5842
    %5844 = vmatprep.subr.mxu0 0.0
    %v5845 = vand.u32 %v3843, 4294901760
    %5846 = vmatpush1.msra.mxu0 %v5845
    %v5847 = vand.u32 %v4063, 4294901760
    %5848 = vmatprep.mubr.f32.mxu0 %v5847
    %v5849 = vand.u32 %v4061, 4294901760
    %5850 = vmatmul.mubr.f32.gmra.mrb[0].mxu0 %v5849
    %v5851 = vpop.f32.mrb[0].mxu0
    %v5852 = vadd.f32 %v5748, %v5851
    %v5853 = vpop.f32.mrb[0].mxu0
    %5854 = vdwg.mxu0
    %5855 = vmatprep.subr.mxu0 0.0
    %v5856 = vand.u32 %v3844, 4294901760
    %5857 = vmatpush1.msra.mxu0 %v5856
    %5858 = vmatprep.subr.mxu0 0.0
    %v5859 = vand.u32 %v3845, 4294901760
    %5860 = vmatpush1.msra.mxu0 %v5859
    %5861 = vmatprep.subr.mxu0 0.0
    %v5862 = vand.u32 %v3846, 4294901760
    %5863 = vmatpush1.msra.mxu0 %v5862
    %5864 = vmatprep.subr.mxu0 0.0
    %v5865 = vand.u32 %v3847, 4294901760
    %5866 = vmatpush1.msra.mxu0 %v5865
    %5867 = vmatprep.subr.mxu0 0.0
    %v5868 = vand.u32 %v3848, 4294901760
    %5869 = vmatpush1.msra.mxu0 %v5868
    %5870 = vmatprep.subr.mxu0 0.0
    %v5871 = vand.u32 %v3849, 4294901760
    %5872 = vmatpush1.msra.mxu0 %v5871
    %5873 = vmatprep.subr.mxu0 0.0
    %v5874 = vand.u32 %v3850, 4294901760
    %5875 = vmatpush1.msra.mxu0 %v5874
    %5876 = vmatprep.subr.mxu0 0.0
    %v5877 = vand.u32 %v3851, 4294901760
    %5878 = vmatpush1.msra.mxu0 %v5877
    %5879 = vmatprep.subr.mxu0 0.0
    %v5880 = vand.u32 %v3852, 4294901760
    %5881 = vmatpush1.msra.mxu0 %v5880
    %5882 = vmatprep.subr.mxu0 0.0
    %v5883 = vand.u32 %v3853, 4294901760
    %5884 = vmatpush1.msra.mxu0 %v5883
    %5885 = vmatprep.subr.mxu0 0.0
    %v5886 = vand.u32 %v3854, 4294901760
    %5887 = vmatpush1.msra.mxu0 %v5886
    %5888 = vmatprep.subr.mxu0 0.0
    %v5889 = vand.u32 %v3855, 4294901760
    %5890 = vmatpush1.msra.mxu0 %v5889
    %5891 = vmatprep.subr.mxu0 0.0
    %v5892 = vand.u32 %v3856, 4294901760
    %5893 = vmatpush1.msra.mxu0 %v5892
    %5894 = vmatprep.subr.mxu0 0.0
    %v5895 = vand.u32 %v3857, 4294901760
    %5896 = vmatpush1.msra.mxu0 %v5895
    %5897 = vmatprep.subr.mxu0 0.0
    %v5898 = vand.u32 %v3858, 4294901760
    %5899 = vmatpush1.msra.mxu0 %v5898
    %5900 = vmatprep.subr.mxu0 0.0
    %v5901 = vand.u32 %v3859, 4294901760
    %5902 = vmatpush1.msra.mxu0 %v5901
    %5903 = vmatprep.subr.mxu0 0.0
    %v5904 = vand.u32 %v3860, 4294901760
    %5905 = vmatpush1.msra.mxu0 %v5904
    %5906 = vmatprep.subr.mxu0 0.0
    %v5907 = vand.u32 %v3861, 4294901760
    %5908 = vmatpush1.msra.mxu0 %v5907
    %5909 = vmatprep.subr.mxu0 0.0
    %v5910 = vand.u32 %v3862, 4294901760
    %5911 = vmatpush1.msra.mxu0 %v5910
    %5912 = vmatprep.subr.mxu0 0.0
    %v5913 = vand.u32 %v3863, 4294901760
    %5914 = vmatpush1.msra.mxu0 %v5913
    %5915 = vmatprep.subr.mxu0 0.0
    %v5916 = vand.u32 %v3864, 4294901760
    %5917 = vmatpush1.msra.mxu0 %v5916
    %5918 = vmatprep.subr.mxu0 0.0
    %v5919 = vand.u32 %v3865, 4294901760
    %5920 = vmatpush1.msra.mxu0 %v5919
    %5921 = vmatprep.subr.mxu0 0.0
    %v5922 = vand.u32 %v3866, 4294901760
    %5923 = vmatpush1.msra.mxu0 %v5922
    %5924 = vmatprep.subr.mxu0 0.0
    %v5925 = vand.u32 %v3867, 4294901760
    %5926 = vmatpush1.msra.mxu0 %v5925
    %5927 = vmatprep.subr.mxu0 0.0
    %v5928 = vand.u32 %v3868, 4294901760
    %5929 = vmatpush1.msra.mxu0 %v5928
    %5930 = vmatprep.subr.mxu0 0.0
    %v5931 = vand.u32 %v3869, 4294901760
    %5932 = vmatpush1.msra.mxu0 %v5931
    %5933 = vmatprep.subr.mxu0 0.0
    %v5934 = vand.u32 %v3870, 4294901760
    %5935 = vmatpush1.msra.mxu0 %v5934
    %5936 = vmatprep.subr.mxu0 0.0
    %v5937 = vand.u32 %v3871, 4294901760
    %5938 = vmatpush1.msra.mxu0 %v5937
    %5939 = vmatprep.subr.mxu0 0.0
    %v5940 = vand.u32 %v3872, 4294901760
    %5941 = vmatpush1.msra.mxu0 %v5940
    %5942 = vmatprep.subr.mxu0 0.0
    %v5943 = vand.u32 %v3873, 4294901760
    %5944 = vmatpush1.msra.mxu0 %v5943
    %5945 = vmatprep.subr.mxu0 0.0
    %v5946 = vand.u32 %v3874, 4294901760
    %5947 = vmatpush1.msra.mxu0 %v5946
    %5948 = vmatprep.subr.mxu0 0.0
    %v5949 = vand.u32 %v3875, 4294901760
    %5950 = vmatpush1.msra.mxu0 %v5949
    %v5951 = vand.u32 %v4079, 4294901760
    %v5952 = vsub.f32 %v4079, %v5951
    %v5953 = vand.u32 %v5952, 4294901760
    %v5954 = vsub.f32 %v5952, %v5953
    %v5955 = vand.u32 %v5954, 4294901760
    %5956 = vmatprep.mubr.f32.mxu0 %v5955
    %v5957 = vand.u32 %v4071, 4294901760
    %v5958 = vsub.f32 %v4071, %v5957
    %v5959 = vand.u32 %v5958, 4294901760
    %v5960 = vsub.f32 %v5958, %v5959
    %v5961 = vand.u32 %v5960, 4294901760
    %5962 = vmatmul.mubr.f32.gmra.mrb[0].mxu0 %v5961
    %v5963 = vpop.f32.mrb[0].mxu0
    %v5964 = vadd.f32 %v5852, %v5963
    %v5965 = vpop.f32.mrb[0].mxu0
    %5966 = vdwg.mxu0
    %5967 = vmatprep.subr.mxu0 0.0
    %v5968 = vand.u32 %v3844, 4294901760
    %v5969 = vsub.f32 %v3844, %v5968
    %v5970 = vand.u32 %v5969, 4294901760
    %v5971 = vsub.f32 %v5969, %v5970
    %v5972 = vand.u32 %v5971, 4294901760
    %5973 = vmatpush1.msra.mxu0 %v5972
    %5974 = vmatprep.subr.mxu0 0.0
    %v5975 = vand.u32 %v3845, 4294901760
    %v5976 = vsub.f32 %v3845, %v5975
    %v5977 = vand.u32 %v5976, 4294901760
    %v5978 = vsub.f32 %v5976, %v5977
    %v5979 = vand.u32 %v5978, 4294901760
    %5980 = vmatpush1.msra.mxu0 %v5979
    %5981 = vmatprep.subr.mxu0 0.0
    %v5982 = vand.u32 %v3846, 4294901760
    %v5983 = vsub.f32 %v3846, %v5982
    %v5984 = vand.u32 %v5983, 4294901760
    %v5985 = vsub.f32 %v5983, %v5984
    %v5986 = vand.u32 %v5985, 4294901760
    %5987 = vmatpush1.msra.mxu0 %v5986
    %5988 = vmatprep.subr.mxu0 0.0
    %v5989 = vand.u32 %v3847, 4294901760
    %v5990 = vsub.f32 %v3847, %v5989
    %v5991 = vand.u32 %v5990, 4294901760
    %v5992 = vsub.f32 %v5990, %v5991
    %v5993 = vand.u32 %v5992, 4294901760
    %5994 = vmatpush1.msra.mxu0 %v5993
    %5995 = vmatprep.subr.mxu0 0.0
    %v5996 = vand.u32 %v3848, 4294901760
    %v5997 = vsub.f32 %v3848, %v5996
    %v5998 = vand.u32 %v5997, 4294901760
    %v5999 = vsub.f32 %v5997, %v5998
    %v6000 = vand.u32 %v5999, 4294901760
    %6001 = vmatpush1.msra.mxu0 %v6000
    %6002 = vmatprep.subr.mxu0 0.0
    %v6003 = vand.u32 %v3849, 4294901760
    %v6004 = vsub.f32 %v3849, %v6003
    %v6005 = vand.u32 %v6004, 4294901760
    %v6006 = vsub.f32 %v6004, %v6005
    %v6007 = vand.u32 %v6006, 4294901760
    %6008 = vmatpush1.msra.mxu0 %v6007
    %6009 = vmatprep.subr.mxu0 0.0
    %v6010 = vand.u32 %v3850, 4294901760
    %v6011 = vsub.f32 %v3850, %v6010
    %v6012 = vand.u32 %v6011, 4294901760
    %v6013 = vsub.f32 %v6011, %v6012
    %v6014 = vand.u32 %v6013, 4294901760
    %6015 = vmatpush1.msra.mxu0 %v6014
    %6016 = vmatprep.subr.mxu0 0.0
    %v6017 = vand.u32 %v3851, 4294901760
    %v6018 = vsub.f32 %v3851, %v6017
    %v6019 = vand.u32 %v6018, 4294901760
    %v6020 = vsub.f32 %v6018, %v6019
    %v6021 = vand.u32 %v6020, 4294901760
    %6022 = vmatpush1.msra.mxu0 %v6021
    %6023 = vmatprep.subr.mxu0 0.0
    %v6024 = vand.u32 %v3852, 4294901760
    %v6025 = vsub.f32 %v3852, %v6024
    %v6026 = vand.u32 %v6025, 4294901760
    %v6027 = vsub.f32 %v6025, %v6026
    %v6028 = vand.u32 %v6027, 4294901760
    %6029 = vmatpush1.msra.mxu0 %v6028
    %6030 = vmatprep.subr.mxu0 0.0
    %v6031 = vand.u32 %v3853, 4294901760
    %v6032 = vsub.f32 %v3853, %v6031
    %v6033 = vand.u32 %v6032, 4294901760
    %v6034 = vsub.f32 %v6032, %v6033
    %v6035 = vand.u32 %v6034, 4294901760
    %6036 = vmatpush1.msra.mxu0 %v6035
    %6037 = vmatprep.subr.mxu0 0.0
    %v6038 = vand.u32 %v3854, 4294901760
    %v6039 = vsub.f32 %v3854, %v6038
    %v6040 = vand.u32 %v6039, 4294901760
    %v6041 = vsub.f32 %v6039, %v6040
    %v6042 = vand.u32 %v6041, 4294901760
    %6043 = vmatpush1.msra.mxu0 %v6042
    %6044 = vmatprep.subr.mxu0 0.0
    %v6045 = vand.u32 %v3855, 4294901760
    %v6046 = vsub.f32 %v3855, %v6045
    %v6047 = vand.u32 %v6046, 4294901760
    %v6048 = vsub.f32 %v6046, %v6047
    %v6049 = vand.u32 %v6048, 4294901760
    %6050 = vmatpush1.msra.mxu0 %v6049
    %6051 = vmatprep.subr.mxu0 0.0
    %v6052 = vand.u32 %v3856, 4294901760
    %v6053 = vsub.f32 %v3856, %v6052
    %v6054 = vand.u32 %v6053, 4294901760
    %v6055 = vsub.f32 %v6053, %v6054
    %v6056 = vand.u32 %v6055, 4294901760
    %6057 = vmatpush1.msra.mxu0 %v6056
    %6058 = vmatprep.subr.mxu0 0.0
    %v6059 = vand.u32 %v3857, 4294901760
    %v6060 = vsub.f32 %v3857, %v6059
    %v6061 = vand.u32 %v6060, 4294901760
    %v6062 = vsub.f32 %v6060, %v6061
    %v6063 = vand.u32 %v6062, 4294901760
    %6064 = vmatpush1.msra.mxu0 %v6063
    %6065 = vmatprep.subr.mxu0 0.0
    %v6066 = vand.u32 %v3858, 4294901760
    %v6067 = vsub.f32 %v3858, %v6066
    %v6068 = vand.u32 %v6067, 4294901760
    %v6069 = vsub.f32 %v6067, %v6068
    %v6070 = vand.u32 %v6069, 4294901760
    %6071 = vmatpush1.msra.mxu0 %v6070
    %6072 = vmatprep.subr.mxu0 0.0
    %v6073 = vand.u32 %v3859, 4294901760
    %v6074 = vsub.f32 %v3859, %v6073
    %v6075 = vand.u32 %v6074, 4294901760
    %v6076 = vsub.f32 %v6074, %v6075
    %v6077 = vand.u32 %v6076, 4294901760
    %6078 = vmatpush1.msra.mxu0 %v6077
    %6079 = vmatprep.subr.mxu0 0.0
    %v6080 = vand.u32 %v3860, 4294901760
    %v6081 = vsub.f32 %v3860, %v6080
    %v6082 = vand.u32 %v6081, 4294901760
    %v6083 = vsub.f32 %v6081, %v6082
    %v6084 = vand.u32 %v6083, 4294901760
    %6085 = vmatpush1.msra.mxu0 %v6084
    %6086 = vmatprep.subr.mxu0 0.0
    %v6087 = vand.u32 %v3861, 4294901760
    %v6088 = vsub.f32 %v3861, %v6087
    %v6089 = vand.u32 %v6088, 4294901760
    %v6090 = vsub.f32 %v6088, %v6089
    %v6091 = vand.u32 %v6090, 4294901760
    %6092 = vmatpush1.msra.mxu0 %v6091
    %6093 = vmatprep.subr.mxu0 0.0
    %v6094 = vand.u32 %v3862, 4294901760
    %v6095 = vsub.f32 %v3862, %v6094
    %v6096 = vand.u32 %v6095, 4294901760
    %v6097 = vsub.f32 %v6095, %v6096
    %v6098 = vand.u32 %v6097, 4294901760
    %6099 = vmatpush1.msra.mxu0 %v6098
    %6100 = vmatprep.subr.mxu0 0.0
    %v6101 = vand.u32 %v3863, 4294901760
    %v6102 = vsub.f32 %v3863, %v6101
    %v6103 = vand.u32 %v6102, 4294901760
    %v6104 = vsub.f32 %v6102, %v6103
    %v6105 = vand.u32 %v6104, 4294901760
    %6106 = vmatpush1.msra.mxu0 %v6105
    %6107 = vmatprep.subr.mxu0 0.0
    %v6108 = vand.u32 %v3864, 4294901760
    %v6109 = vsub.f32 %v3864, %v6108
    %v6110 = vand.u32 %v6109, 4294901760
    %v6111 = vsub.f32 %v6109, %v6110
    %v6112 = vand.u32 %v6111, 4294901760
    %6113 = vmatpush1.msra.mxu0 %v6112
    %6114 = vmatprep.subr.mxu0 0.0
    %v6115 = vand.u32 %v3865, 4294901760
    %v6116 = vsub.f32 %v3865, %v6115
    %v6117 = vand.u32 %v6116, 4294901760
    %v6118 = vsub.f32 %v6116, %v6117
    %v6119 = vand.u32 %v6118, 4294901760
    %6120 = vmatpush1.msra.mxu0 %v6119
    %6121 = vmatprep.subr.mxu0 0.0
    %v6122 = vand.u32 %v3866, 4294901760
    %v6123 = vsub.f32 %v3866, %v6122
    %v6124 = vand.u32 %v6123, 4294901760
    %v6125 = vsub.f32 %v6123, %v6124
    %v6126 = vand.u32 %v6125, 4294901760
    %6127 = vmatpush1.msra.mxu0 %v6126
    %6128 = vmatprep.subr.mxu0 0.0
    %v6129 = vand.u32 %v3867, 4294901760
    %v6130 = vsub.f32 %v3867, %v6129
    %v6131 = vand.u32 %v6130, 4294901760
    %v6132 = vsub.f32 %v6130, %v6131
    %v6133 = vand.u32 %v6132, 4294901760
    %6134 = vmatpush1.msra.mxu0 %v6133
    %6135 = vmatprep.subr.mxu0 0.0
    %v6136 = vand.u32 %v3868, 4294901760
    %v6137 = vsub.f32 %v3868, %v6136
    %v6138 = vand.u32 %v6137, 4294901760
    %v6139 = vsub.f32 %v6137, %v6138
    %v6140 = vand.u32 %v6139, 4294901760
    %6141 = vmatpush1.msra.mxu0 %v6140
    %6142 = vmatprep.subr.mxu0 0.0
    %v6143 = vand.u32 %v3869, 4294901760
    %v6144 = vsub.f32 %v3869, %v6143
    %v6145 = vand.u32 %v6144, 4294901760
    %v6146 = vsub.f32 %v6144, %v6145
    %v6147 = vand.u32 %v6146, 4294901760
    %6148 = vmatpush1.msra.mxu0 %v6147
    %6149 = vmatprep.subr.mxu0 0.0
    %v6150 = vand.u32 %v3870, 4294901760
    %v6151 = vsub.f32 %v3870, %v6150
    %v6152 = vand.u32 %v6151, 4294901760
    %v6153 = vsub.f32 %v6151, %v6152
    %v6154 = vand.u32 %v6153, 4294901760
    %6155 = vmatpush1.msra.mxu0 %v6154
    %6156 = vmatprep.subr.mxu0 0.0
    %v6157 = vand.u32 %v3871, 4294901760
    %v6158 = vsub.f32 %v3871, %v6157
    %v6159 = vand.u32 %v6158, 4294901760
    %v6160 = vsub.f32 %v6158, %v6159
    %v6161 = vand.u32 %v6160, 4294901760
    %6162 = vmatpush1.msra.mxu0 %v6161
    %6163 = vmatprep.subr.mxu0 0.0
    %v6164 = vand.u32 %v3872, 4294901760
    %v6165 = vsub.f32 %v3872, %v6164
    %v6166 = vand.u32 %v6165, 4294901760
    %v6167 = vsub.f32 %v6165, %v6166
    %v6168 = vand.u32 %v6167, 4294901760
    %6169 = vmatpush1.msra.mxu0 %v6168
    %6170 = vmatprep.subr.mxu0 0.0
    %v6171 = vand.u32 %v3873, 4294901760
    %v6172 = vsub.f32 %v3873, %v6171
    %v6173 = vand.u32 %v6172, 4294901760
    %v6174 = vsub.f32 %v6172, %v6173
    %v6175 = vand.u32 %v6174, 4294901760
    %6176 = vmatpush1.msra.mxu0 %v6175
    %6177 = vmatprep.subr.mxu0 0.0
    %v6178 = vand.u32 %v3874, 4294901760
    %v6179 = vsub.f32 %v3874, %v6178
    %v6180 = vand.u32 %v6179, 4294901760
    %v6181 = vsub.f32 %v6179, %v6180
    %v6182 = vand.u32 %v6181, 4294901760
    %6183 = vmatpush1.msra.mxu0 %v6182
    %6184 = vmatprep.subr.mxu0 0.0
    %v6185 = vand.u32 %v3875, 4294901760
    %v6186 = vsub.f32 %v3875, %v6185
    %v6187 = vand.u32 %v6186, 4294901760
    %v6188 = vsub.f32 %v6186, %v6187
    %v6189 = vand.u32 %v6188, 4294901760
    %6190 = vmatpush1.msra.mxu0 %v6189
    %v6191 = vand.u32 %v4079, 4294901760
    %6192 = vmatprep.mubr.f32.mxu0 %v6191
    %v6193 = vand.u32 %v4071, 4294901760
    %6194 = vmatmul.mubr.f32.gmra.mrb[0].mxu0 %v6193
    %v6195 = vpop.f32.mrb[0].mxu0
    %v6196 = vadd.f32 %v5964, %v6195
    %v6197 = vpop.f32.mrb[0].mxu0
    %6198 = vdwg.mxu0
    %6199 = vmatprep.subr.mxu0 0.0
    %v6200 = vand.u32 %v3844, 4294901760
    %v6201 = vsub.f32 %v3844, %v6200
    %6202 = vmatpush1.msra.mxu0 %v6201
    %6203 = vmatprep.subr.mxu0 0.0
    %v6204 = vand.u32 %v3845, 4294901760
    %v6205 = vsub.f32 %v3845, %v6204
    %6206 = vmatpush1.msra.mxu0 %v6205
    %6207 = vmatprep.subr.mxu0 0.0
    %v6208 = vand.u32 %v3846, 4294901760
    %v6209 = vsub.f32 %v3846, %v6208
    %6210 = vmatpush1.msra.mxu0 %v6209
    %6211 = vmatprep.subr.mxu0 0.0
    %v6212 = vand.u32 %v3847, 4294901760
    %v6213 = vsub.f32 %v3847, %v6212
    %6214 = vmatpush1.msra.mxu0 %v6213
    %6215 = vmatprep.subr.mxu0 0.0
    %v6216 = vand.u32 %v3848, 4294901760
    %v6217 = vsub.f32 %v3848, %v6216
    %6218 = vmatpush1.msra.mxu0 %v6217
    %6219 = vmatprep.subr.mxu0 0.0
    %v6220 = vand.u32 %v3849, 4294901760
    %v6221 = vsub.f32 %v3849, %v6220
    %6222 = vmatpush1.msra.mxu0 %v6221
    %6223 = vmatprep.subr.mxu0 0.0
    %v6224 = vand.u32 %v3850, 4294901760
    %v6225 = vsub.f32 %v3850, %v6224
    %6226 = vmatpush1.msra.mxu0 %v6225
    %6227 = vmatprep.subr.mxu0 0.0
    %v6228 = vand.u32 %v3851, 4294901760
    %v6229 = vsub.f32 %v3851, %v6228
    %6230 = vmatpush1.msra.mxu0 %v6229
    %6231 = vmatprep.subr.mxu0 0.0
    %v6232 = vand.u32 %v3852, 4294901760
    %v6233 = vsub.f32 %v3852, %v6232
    %6234 = vmatpush1.msra.mxu0 %v6233
    %6235 = vmatprep.subr.mxu0 0.0
    %v6236 = vand.u32 %v3853, 4294901760
    %v6237 = vsub.f32 %v3853, %v6236
    %6238 = vmatpush1.msra.mxu0 %v6237
    %6239 = vmatprep.subr.mxu0 0.0
    %v6240 = vand.u32 %v3854, 4294901760
    %v6241 = vsub.f32 %v3854, %v6240
    %6242 = vmatpush1.msra.mxu0 %v6241
    %6243 = vmatprep.subr.mxu0 0.0
    %v6244 = vand.u32 %v3855, 4294901760
    %v6245 = vsub.f32 %v3855, %v6244
    %6246 = vmatpush1.msra.mxu0 %v6245
    %6247 = vmatprep.subr.mxu0 0.0
    %v6248 = vand.u32 %v3856, 4294901760
    %v6249 = vsub.f32 %v3856, %v6248
    %6250 = vmatpush1.msra.mxu0 %v6249
    %6251 = vmatprep.subr.mxu0 0.0
    %v6252 = vand.u32 %v3857, 4294901760
    %v6253 = vsub.f32 %v3857, %v6252
    %6254 = vmatpush1.msra.mxu0 %v6253
    %6255 = vmatprep.subr.mxu0 0.0
    %v6256 = vand.u32 %v3858, 4294901760
    %v6257 = vsub.f32 %v3858, %v6256
    %6258 = vmatpush1.msra.mxu0 %v6257
    %6259 = vmatprep.subr.mxu0 0.0
    %v6260 = vand.u32 %v3859, 4294901760
    %v6261 = vsub.f32 %v3859, %v6260
    %6262 = vmatpush1.msra.mxu0 %v6261
    %6263 = vmatprep.subr.mxu0 0.0
    %v6264 = vand.u32 %v3860, 4294901760
    %v6265 = vsub.f32 %v3860, %v6264
    %6266 = vmatpush1.msra.mxu0 %v6265
    %6267 = vmatprep.subr.mxu0 0.0
    %v6268 = vand.u32 %v3861, 4294901760
    %v6269 = vsub.f32 %v3861, %v6268
    %6270 = vmatpush1.msra.mxu0 %v6269
    %6271 = vmatprep.subr.mxu0 0.0
    %v6272 = vand.u32 %v3862, 4294901760
    %v6273 = vsub.f32 %v3862, %v6272
    %6274 = vmatpush1.msra.mxu0 %v6273
    %6275 = vmatprep.subr.mxu0 0.0
    %v6276 = vand.u32 %v3863, 4294901760
    %v6277 = vsub.f32 %v3863, %v6276
    %6278 = vmatpush1.msra.mxu0 %v6277
    %6279 = vmatprep.subr.mxu0 0.0
    %v6280 = vand.u32 %v3864, 4294901760
    %v6281 = vsub.f32 %v3864, %v6280
    %6282 = vmatpush1.msra.mxu0 %v6281
    %6283 = vmatprep.subr.mxu0 0.0
    %v6284 = vand.u32 %v3865, 4294901760
    %v6285 = vsub.f32 %v3865, %v6284
    %6286 = vmatpush1.msra.mxu0 %v6285
    %6287 = vmatprep.subr.mxu0 0.0
    %v6288 = vand.u32 %v3866, 4294901760
    %v6289 = vsub.f32 %v3866, %v6288
    %6290 = vmatpush1.msra.mxu0 %v6289
    %6291 = vmatprep.subr.mxu0 0.0
    %v6292 = vand.u32 %v3867, 4294901760
    %v6293 = vsub.f32 %v3867, %v6292
    %6294 = vmatpush1.msra.mxu0 %v6293
    %6295 = vmatprep.subr.mxu0 0.0
    %v6296 = vand.u32 %v3868, 4294901760
    %v6297 = vsub.f32 %v3868, %v6296
    %6298 = vmatpush1.msra.mxu0 %v6297
    %6299 = vmatprep.subr.mxu0 0.0
    %v6300 = vand.u32 %v3869, 4294901760
    %v6301 = vsub.f32 %v3869, %v6300
    %6302 = vmatpush1.msra.mxu0 %v6301
    %6303 = vmatprep.subr.mxu0 0.0
    %v6304 = vand.u32 %v3870, 4294901760
    %v6305 = vsub.f32 %v3870, %v6304
    %6306 = vmatpush1.msra.mxu0 %v6305
    %6307 = vmatprep.subr.mxu0 0.0
    %v6308 = vand.u32 %v3871, 4294901760
    %v6309 = vsub.f32 %v3871, %v6308
    %6310 = vmatpush1.msra.mxu0 %v6309
    %6311 = vmatprep.subr.mxu0 0.0
    %v6312 = vand.u32 %v3872, 4294901760
    %v6313 = vsub.f32 %v3872, %v6312
    %6314 = vmatpush1.msra.mxu0 %v6313
    %6315 = vmatprep.subr.mxu0 0.0
    %v6316 = vand.u32 %v3873, 4294901760
    %v6317 = vsub.f32 %v3873, %v6316
    %6318 = vmatpush1.msra.mxu0 %v6317
    %6319 = vmatprep.subr.mxu0 0.0
    %v6320 = vand.u32 %v3874, 4294901760
    %v6321 = vsub.f32 %v3874, %v6320
    %6322 = vmatpush1.msra.mxu0 %v6321
    %6323 = vmatprep.subr.mxu0 0.0
    %v6324 = vand.u32 %v3875, 4294901760
    %v6325 = vsub.f32 %v3875, %v6324
    %6326 = vmatpush1.msra.mxu0 %v6325
    %v6327 = vand.u32 %v4079, 4294901760
    %v6328 = vsub.f32 %v4079, %v6327
    %6329 = vmatprep.mubr.f32.mxu0 %v6328
    %v6330 = vand.u32 %v4071, 4294901760
    %v6331 = vsub.f32 %v4071, %v6330
    %6332 = vmatmul.mubr.f32.gmra.mrb[0].mxu0 %v6331
    %v6333 = vpop.f32.mrb[0].mxu0
    %v6334 = vadd.f32 %v6196, %v6333
    %v6335 = vpop.f32.mrb[0].mxu0
    %6336 = vdwg.mxu0
    %6337 = vmatprep.subr.mxu0 0.0
    %v6338 = vand.u32 %v3844, 4294901760
    %6339 = vmatpush1.msra.mxu0 %v6338
    %6340 = vmatprep.subr.mxu0 0.0
    %v6341 = vand.u32 %v3845, 4294901760
    %6342 = vmatpush1.msra.mxu0 %v6341
    %6343 = vmatprep.subr.mxu0 0.0
    %v6344 = vand.u32 %v3846, 4294901760
    %6345 = vmatpush1.msra.mxu0 %v6344
    %6346 = vmatprep.subr.mxu0 0.0
    %v6347 = vand.u32 %v3847, 4294901760
    %6348 = vmatpush1.msra.mxu0 %v6347
    %6349 = vmatprep.subr.mxu0 0.0
    %v6350 = vand.u32 %v3848, 4294901760
    %6351 = vmatpush1.msra.mxu0 %v6350
    %6352 = vmatprep.subr.mxu0 0.0
    %v6353 = vand.u32 %v3849, 4294901760
    %6354 = vmatpush1.msra.mxu0 %v6353
    %6355 = vmatprep.subr.mxu0 0.0
    %v6356 = vand.u32 %v3850, 4294901760
    %6357 = vmatpush1.msra.mxu0 %v6356
    %6358 = vmatprep.subr.mxu0 0.0
    %v6359 = vand.u32 %v3851, 4294901760
    %6360 = vmatpush1.msra.mxu0 %v6359
    %6361 = vmatprep.subr.mxu0 0.0
    %v6362 = vand.u32 %v3852, 4294901760
    %6363 = vmatpush1.msra.mxu0 %v6362
    %6364 = vmatprep.subr.mxu0 0.0
    %v6365 = vand.u32 %v3853, 4294901760
    %6366 = vmatpush1.msra.mxu0 %v6365
    %6367 = vmatprep.subr.mxu0 0.0
    %v6368 = vand.u32 %v3854, 4294901760
    %6369 = vmatpush1.msra.mxu0 %v6368
    %6370 = vmatprep.subr.mxu0 0.0
    %v6371 = vand.u32 %v3855, 4294901760
    %6372 = vmatpush1.msra.mxu0 %v6371
    %6373 = vmatprep.subr.mxu0 0.0
    %v6374 = vand.u32 %v3856, 4294901760
    %6375 = vmatpush1.msra.mxu0 %v6374
    %6376 = vmatprep.subr.mxu0 0.0
    %v6377 = vand.u32 %v3857, 4294901760
    %6378 = vmatpush1.msra.mxu0 %v6377
    %6379 = vmatprep.subr.mxu0 0.0
    %v6380 = vand.u32 %v3858, 4294901760
    %6381 = vmatpush1.msra.mxu0 %v6380
    %6382 = vmatprep.subr.mxu0 0.0
    %v6383 = vand.u32 %v3859, 4294901760
    %6384 = vmatpush1.msra.mxu0 %v6383
    %6385 = vmatprep.subr.mxu0 0.0
    %v6386 = vand.u32 %v3860, 4294901760
    %6387 = vmatpush1.msra.mxu0 %v6386
    %6388 = vmatprep.subr.mxu0 0.0
    %v6389 = vand.u32 %v3861, 4294901760
    %6390 = vmatpush1.msra.mxu0 %v6389
    %6391 = vmatprep.subr.mxu0 0.0
    %v6392 = vand.u32 %v3862, 4294901760
    %6393 = vmatpush1.msra.mxu0 %v6392
    %6394 = vmatprep.subr.mxu0 0.0
    %v6395 = vand.u32 %v3863, 4294901760
    %6396 = vmatpush1.msra.mxu0 %v6395
    %6397 = vmatprep.subr.mxu0 0.0
    %v6398 = vand.u32 %v3864, 4294901760
    %6399 = vmatpush1.msra.mxu0 %v6398
    %6400 = vmatprep.subr.mxu0 0.0
    %v6401 = vand.u32 %v3865, 4294901760
    %6402 = vmatpush1.msra.mxu0 %v6401
    %6403 = vmatprep.subr.mxu0 0.0
    %v6404 = vand.u32 %v3866, 4294901760
    %6405 = vmatpush1.msra.mxu0 %v6404
    %6406 = vmatprep.subr.mxu0 0.0
    %v6407 = vand.u32 %v3867, 4294901760
    %6408 = vmatpush1.msra.mxu0 %v6407
    %6409 = vmatprep.subr.mxu0 0.0
    %v6410 = vand.u32 %v3868, 4294901760
    %6411 = vmatpush1.msra.mxu0 %v6410
    %6412 = vmatprep.subr.mxu0 0.0
    %v6413 = vand.u32 %v3869, 4294901760
    %6414 = vmatpush1.msra.mxu0 %v6413
    %6415 = vmatprep.subr.mxu0 0.0
    %v6416 = vand.u32 %v3870, 4294901760
    %6417 = vmatpush1.msra.mxu0 %v6416
    %6418 = vmatprep.subr.mxu0 0.0
    %v6419 = vand.u32 %v3871, 4294901760
    %6420 = vmatpush1.msra.mxu0 %v6419
    %6421 = vmatprep.subr.mxu0 0.0
    %v6422 = vand.u32 %v3872, 4294901760
    %6423 = vmatpush1.msra.mxu0 %v6422
    %6424 = vmatprep.subr.mxu0 0.0
    %v6425 = vand.u32 %v3873, 4294901760
    %6426 = vmatpush1.msra.mxu0 %v6425
    %6427 = vmatprep.subr.mxu0 0.0
    %v6428 = vand.u32 %v3874, 4294901760
    %6429 = vmatpush1.msra.mxu0 %v6428
    %6430 = vmatprep.subr.mxu0 0.0
    %v6431 = vand.u32 %v3875, 4294901760
    %6432 = vmatpush1.msra.mxu0 %v6431
    %v6433 = vand.u32 %v4079, 4294901760
    %v6434 = vsub.f32 %v4079, %v6433
    %v6435 = vand.u32 %v6434, 4294901760
    %6436 = vmatprep.mubr.f32.mxu0 %v6435
    %v6437 = vand.u32 %v4071, 4294901760
    %v6438 = vsub.f32 %v4071, %v6437
    %v6439 = vand.u32 %v6438, 4294901760
    %6440 = vmatmul.mubr.f32.gmra.mrb[0].mxu0 %v6439
    %v6441 = vpop.f32.mrb[0].mxu0
    %v6442 = vadd.f32 %v6334, %v6441
    %v6443 = vpop.f32.mrb[0].mxu0
    %6444 = vdwg.mxu0
    %6445 = vmatprep.subr.mxu0 0.0
    %v6446 = vand.u32 %v3844, 4294901760
    %v6447 = vsub.f32 %v3844, %v6446
    %v6448 = vand.u32 %v6447, 4294901760
    %6449 = vmatpush1.msra.mxu0 %v6448
    %6450 = vmatprep.subr.mxu0 0.0
    %v6451 = vand.u32 %v3845, 4294901760
    %v6452 = vsub.f32 %v3845, %v6451
    %v6453 = vand.u32 %v6452, 4294901760
    %6454 = vmatpush1.msra.mxu0 %v6453
    %6455 = vmatprep.subr.mxu0 0.0
    %v6456 = vand.u32 %v3846, 4294901760
    %v6457 = vsub.f32 %v3846, %v6456
    %v6458 = vand.u32 %v6457, 4294901760
    %6459 = vmatpush1.msra.mxu0 %v6458
    %6460 = vmatprep.subr.mxu0 0.0
    %v6461 = vand.u32 %v3847, 4294901760
    %v6462 = vsub.f32 %v3847, %v6461
    %v6463 = vand.u32 %v6462, 4294901760
    %6464 = vmatpush1.msra.mxu0 %v6463
    %6465 = vmatprep.subr.mxu0 0.0
    %v6466 = vand.u32 %v3848, 4294901760
    %v6467 = vsub.f32 %v3848, %v6466
    %v6468 = vand.u32 %v6467, 4294901760
    %6469 = vmatpush1.msra.mxu0 %v6468
    %6470 = vmatprep.subr.mxu0 0.0
    %v6471 = vand.u32 %v3849, 4294901760
    %v6472 = vsub.f32 %v3849, %v6471
    %v6473 = vand.u32 %v6472, 4294901760
    %6474 = vmatpush1.msra.mxu0 %v6473
    %6475 = vmatprep.subr.mxu0 0.0
    %v6476 = vand.u32 %v3850, 4294901760
    %v6477 = vsub.f32 %v3850, %v6476
    %v6478 = vand.u32 %v6477, 4294901760
    %6479 = vmatpush1.msra.mxu0 %v6478
    %6480 = vmatprep.subr.mxu0 0.0
    %v6481 = vand.u32 %v3851, 4294901760
    %v6482 = vsub.f32 %v3851, %v6481
    %v6483 = vand.u32 %v6482, 4294901760
    %6484 = vmatpush1.msra.mxu0 %v6483
    %6485 = vmatprep.subr.mxu0 0.0
    %v6486 = vand.u32 %v3852, 4294901760
    %v6487 = vsub.f32 %v3852, %v6486
    %v6488 = vand.u32 %v6487, 4294901760
    %6489 = vmatpush1.msra.mxu0 %v6488
    %6490 = vmatprep.subr.mxu0 0.0
    %v6491 = vand.u32 %v3853, 4294901760
    %v6492 = vsub.f32 %v3853, %v6491
    %v6493 = vand.u32 %v6492, 4294901760
    %6494 = vmatpush1.msra.mxu0 %v6493
    %6495 = vmatprep.subr.mxu0 0.0
    %v6496 = vand.u32 %v3854, 4294901760
    %v6497 = vsub.f32 %v3854, %v6496
    %v6498 = vand.u32 %v6497, 4294901760
    %6499 = vmatpush1.msra.mxu0 %v6498
    %6500 = vmatprep.subr.mxu0 0.0
    %v6501 = vand.u32 %v3855, 4294901760
    %v6502 = vsub.f32 %v3855, %v6501
    %v6503 = vand.u32 %v6502, 4294901760
    %6504 = vmatpush1.msra.mxu0 %v6503
    %6505 = vmatprep.subr.mxu0 0.0
    %v6506 = vand.u32 %v3856, 4294901760
    %v6507 = vsub.f32 %v3856, %v6506
    %v6508 = vand.u32 %v6507, 4294901760
    %6509 = vmatpush1.msra.mxu0 %v6508
    %6510 = vmatprep.subr.mxu0 0.0
    %v6511 = vand.u32 %v3857, 4294901760
    %v6512 = vsub.f32 %v3857, %v6511
    %v6513 = vand.u32 %v6512, 4294901760
    %6514 = vmatpush1.msra.mxu0 %v6513
    %6515 = vmatprep.subr.mxu0 0.0
    %v6516 = vand.u32 %v3858, 4294901760
    %v6517 = vsub.f32 %v3858, %v6516
    %v6518 = vand.u32 %v6517, 4294901760
    %6519 = vmatpush1.msra.mxu0 %v6518
    %6520 = vmatprep.subr.mxu0 0.0
    %v6521 = vand.u32 %v3859, 4294901760
    %v6522 = vsub.f32 %v3859, %v6521
    %v6523 = vand.u32 %v6522, 4294901760
    %6524 = vmatpush1.msra.mxu0 %v6523
    %6525 = vmatprep.subr.mxu0 0.0
    %v6526 = vand.u32 %v3860, 4294901760
    %v6527 = vsub.f32 %v3860, %v6526
    %v6528 = vand.u32 %v6527, 4294901760
    %6529 = vmatpush1.msra.mxu0 %v6528
    %6530 = vmatprep.subr.mxu0 0.0
    %v6531 = vand.u32 %v3861, 4294901760
    %v6532 = vsub.f32 %v3861, %v6531
    %v6533 = vand.u32 %v6532, 4294901760
    %6534 = vmatpush1.msra.mxu0 %v6533
    %6535 = vmatprep.subr.mxu0 0.0
    %v6536 = vand.u32 %v3862, 4294901760
    %v6537 = vsub.f32 %v3862, %v6536
    %v6538 = vand.u32 %v6537, 4294901760
    %6539 = vmatpush1.msra.mxu0 %v6538
    %6540 = vmatprep.subr.mxu0 0.0
    %v6541 = vand.u32 %v3863, 4294901760
    %v6542 = vsub.f32 %v3863, %v6541
    %v6543 = vand.u32 %v6542, 4294901760
    %6544 = vmatpush1.msra.mxu0 %v6543
    %6545 = vmatprep.subr.mxu0 0.0
    %v6546 = vand.u32 %v3864, 4294901760
    %v6547 = vsub.f32 %v3864, %v6546
    %v6548 = vand.u32 %v6547, 4294901760
    %6549 = vmatpush1.msra.mxu0 %v6548
    %6550 = vmatprep.subr.mxu0 0.0
    %v6551 = vand.u32 %v3865, 4294901760
    %v6552 = vsub.f32 %v3865, %v6551
    %v6553 = vand.u32 %v6552, 4294901760
    %6554 = vmatpush1.msra.mxu0 %v6553
    %6555 = vmatprep.subr.mxu0 0.0
    %v6556 = vand.u32 %v3866, 4294901760
    %v6557 = vsub.f32 %v3866, %v6556
    %v6558 = vand.u32 %v6557, 4294901760
    %6559 = vmatpush1.msra.mxu0 %v6558
    %6560 = vmatprep.subr.mxu0 0.0
    %v6561 = vand.u32 %v3867, 4294901760
    %v6562 = vsub.f32 %v3867, %v6561
    %v6563 = vand.u32 %v6562, 4294901760
    %6564 = vmatpush1.msra.mxu0 %v6563
    %6565 = vmatprep.subr.mxu0 0.0
    %v6566 = vand.u32 %v3868, 4294901760
    %v6567 = vsub.f32 %v3868, %v6566
    %v6568 = vand.u32 %v6567, 4294901760
    %6569 = vmatpush1.msra.mxu0 %v6568
    %6570 = vmatprep.subr.mxu0 0.0
    %v6571 = vand.u32 %v3869, 4294901760
    %v6572 = vsub.f32 %v3869, %v6571
    %v6573 = vand.u32 %v6572, 4294901760
    %6574 = vmatpush1.msra.mxu0 %v6573
    %6575 = vmatprep.subr.mxu0 0.0
    %v6576 = vand.u32 %v3870, 4294901760
    %v6577 = vsub.f32 %v3870, %v6576
    %v6578 = vand.u32 %v6577, 4294901760
    %6579 = vmatpush1.msra.mxu0 %v6578
    %6580 = vmatprep.subr.mxu0 0.0
    %v6581 = vand.u32 %v3871, 4294901760
    %v6582 = vsub.f32 %v3871, %v6581
    %v6583 = vand.u32 %v6582, 4294901760
    %6584 = vmatpush1.msra.mxu0 %v6583
    %6585 = vmatprep.subr.mxu0 0.0
    %v6586 = vand.u32 %v3872, 4294901760
    %v6587 = vsub.f32 %v3872, %v6586
    %v6588 = vand.u32 %v6587, 4294901760
    %6589 = vmatpush1.msra.mxu0 %v6588
    %6590 = vmatprep.subr.mxu0 0.0
    %v6591 = vand.u32 %v3873, 4294901760
    %v6592 = vsub.f32 %v3873, %v6591
    %v6593 = vand.u32 %v6592, 4294901760
    %6594 = vmatpush1.msra.mxu0 %v6593
    %6595 = vmatprep.subr.mxu0 0.0
    %v6596 = vand.u32 %v3874, 4294901760
    %v6597 = vsub.f32 %v3874, %v6596
    %v6598 = vand.u32 %v6597, 4294901760
    %6599 = vmatpush1.msra.mxu0 %v6598
    %6600 = vmatprep.subr.mxu0 0.0
    %v6601 = vand.u32 %v3875, 4294901760
    %v6602 = vsub.f32 %v3875, %v6601
    %v6603 = vand.u32 %v6602, 4294901760
    %6604 = vmatpush1.msra.mxu0 %v6603
    %v6605 = vand.u32 %v4079, 4294901760
    %6606 = vmatprep.mubr.f32.mxu0 %v6605
    %v6607 = vand.u32 %v4071, 4294901760
    %6608 = vmatmul.mubr.f32.gmra.mrb[0].mxu0 %v6607
    %v6609 = vpop.f32.mrb[0].mxu0
    %v6610 = vadd.f32 %v6442, %v6609
    %v6611 = vpop.f32.mrb[0].mxu0
    %6612 = vdwg.mxu0
    %6613 = vmatprep.subr.mxu0 0.0
    %v6614 = vand.u32 %v3844, 4294901760
    %6615 = vmatpush1.msra.mxu0 %v6614
    %6616 = vmatprep.subr.mxu0 0.0
    %v6617 = vand.u32 %v3845, 4294901760
    %6618 = vmatpush1.msra.mxu0 %v6617
    %6619 = vmatprep.subr.mxu0 0.0
    %v6620 = vand.u32 %v3846, 4294901760
    %6621 = vmatpush1.msra.mxu0 %v6620
    %6622 = vmatprep.subr.mxu0 0.0
    %v6623 = vand.u32 %v3847, 4294901760
    %6624 = vmatpush1.msra.mxu0 %v6623
    %6625 = vmatprep.subr.mxu0 0.0
    %v6626 = vand.u32 %v3848, 4294901760
    %6627 = vmatpush1.msra.mxu0 %v6626
    %6628 = vmatprep.subr.mxu0 0.0
    %v6629 = vand.u32 %v3849, 4294901760
    %6630 = vmatpush1.msra.mxu0 %v6629
    %6631 = vmatprep.subr.mxu0 0.0
    %v6632 = vand.u32 %v3850, 4294901760
    %6633 = vmatpush1.msra.mxu0 %v6632
    %6634 = vmatprep.subr.mxu0 0.0
    %v6635 = vand.u32 %v3851, 4294901760
    %6636 = vmatpush1.msra.mxu0 %v6635
    %6637 = vmatprep.subr.mxu0 0.0
    %v6638 = vand.u32 %v3852, 4294901760
    %6639 = vmatpush1.msra.mxu0 %v6638
    %6640 = vmatprep.subr.mxu0 0.0
    %v6641 = vand.u32 %v3853, 4294901760
    %6642 = vmatpush1.msra.mxu0 %v6641
    %6643 = vmatprep.subr.mxu0 0.0
    %v6644 = vand.u32 %v3854, 4294901760
    %6645 = vmatpush1.msra.mxu0 %v6644
    %6646 = vmatprep.subr.mxu0 0.0
    %v6647 = vand.u32 %v3855, 4294901760
    %6648 = vmatpush1.msra.mxu0 %v6647
    %6649 = vmatprep.subr.mxu0 0.0
    %v6650 = vand.u32 %v3856, 4294901760
    %6651 = vmatpush1.msra.mxu0 %v6650
    %6652 = vmatprep.subr.mxu0 0.0
    %v6653 = vand.u32 %v3857, 4294901760
    %6654 = vmatpush1.msra.mxu0 %v6653
    %6655 = vmatprep.subr.mxu0 0.0
    %v6656 = vand.u32 %v3858, 4294901760
    %6657 = vmatpush1.msra.mxu0 %v6656
    %6658 = vmatprep.subr.mxu0 0.0
    %v6659 = vand.u32 %v3859, 4294901760
    %6660 = vmatpush1.msra.mxu0 %v6659
    %6661 = vmatprep.subr.mxu0 0.0
    %v6662 = vand.u32 %v3860, 4294901760
    %6663 = vmatpush1.msra.mxu0 %v6662
    %6664 = vmatprep.subr.mxu0 0.0
    %v6665 = vand.u32 %v3861, 4294901760
    %6666 = vmatpush1.msra.mxu0 %v6665
    %6667 = vmatprep.subr.mxu0 0.0
    %v6668 = vand.u32 %v3862, 4294901760
    %6669 = vmatpush1.msra.mxu0 %v6668
    %6670 = vmatprep.subr.mxu0 0.0
    %v6671 = vand.u32 %v3863, 4294901760
    %6672 = vmatpush1.msra.mxu0 %v6671
    %6673 = vmatprep.subr.mxu0 0.0
    %v6674 = vand.u32 %v3864, 4294901760
    %6675 = vmatpush1.msra.mxu0 %v6674
    %6676 = vmatprep.subr.mxu0 0.0
    %v6677 = vand.u32 %v3865, 4294901760
    %6678 = vmatpush1.msra.mxu0 %v6677
    %6679 = vmatprep.subr.mxu0 0.0
    %v6680 = vand.u32 %v3866, 4294901760
    %6681 = vmatpush1.msra.mxu0 %v6680
    %6682 = vmatprep.subr.mxu0 0.0
    %v6683 = vand.u32 %v3867, 4294901760
    %6684 = vmatpush1.msra.mxu0 %v6683
    %6685 = vmatprep.subr.mxu0 0.0
    %v6686 = vand.u32 %v3868, 4294901760
    %6687 = vmatpush1.msra.mxu0 %v6686
    %6688 = vmatprep.subr.mxu0 0.0
    %v6689 = vand.u32 %v3869, 4294901760
    %6690 = vmatpush1.msra.mxu0 %v6689
    %6691 = vmatprep.subr.mxu0 0.0
    %v6692 = vand.u32 %v3870, 4294901760
    %6693 = vmatpush1.msra.mxu0 %v6692
    %6694 = vmatprep.subr.mxu0 0.0
    %v6695 = vand.u32 %v3871, 4294901760
    %6696 = vmatpush1.msra.mxu0 %v6695
    %6697 = vmatprep.subr.mxu0 0.0
    %v6698 = vand.u32 %v3872, 4294901760
    %6699 = vmatpush1.msra.mxu0 %v6698
    %6700 = vmatprep.subr.mxu0 0.0
    %v6701 = vand.u32 %v3873, 4294901760
    %6702 = vmatpush1.msra.mxu0 %v6701
    %6703 = vmatprep.subr.mxu0 0.0
    %v6704 = vand.u32 %v3874, 4294901760
    %6705 = vmatpush1.msra.mxu0 %v6704
    %6706 = vmatprep.subr.mxu0 0.0
    %v6707 = vand.u32 %v3875, 4294901760
    %6708 = vmatpush1.msra.mxu0 %v6707
    %v6709 = vand.u32 %v4079, 4294901760
    %6710 = vmatprep.mubr.f32.mxu0 %v6709
    %v6711 = vand.u32 %v4071, 4294901760
    %6712 = vmatmul.mubr.f32.gmra.mrb[0].mxu0 %v6711
    %v6713 = vpop.f32.mrb[0].mxu0
    %v6714 = vadd.f32 %v6610, %v6713
    %v6715 = vpop.f32.mrb[0].mxu0
    %6716 = vdwg.mxu0
    %6717 = vmatprep.subr.mxu0 0.0
    %v6718 = vand.u32 %v3876, 4294901760
    %6719 = vmatpush1.msra.mxu0 %v6718
    %6720 = vmatprep.subr.mxu0 0.0
    %v6721 = vand.u32 %v3877, 4294901760
    %6722 = vmatpush1.msra.mxu0 %v6721
    %6723 = vmatprep.subr.mxu0 0.0
    %v6724 = vand.u32 %v3878, 4294901760
    %6725 = vmatpush1.msra.mxu0 %v6724
    %6726 = vmatprep.subr.mxu0 0.0
    %v6727 = vand.u32 %v3879, 4294901760
    %6728 = vmatpush1.msra.mxu0 %v6727
    %6729 = vmatprep.subr.mxu0 0.0
    %v6730 = vand.u32 %v3880, 4294901760
    %6731 = vmatpush1.msra.mxu0 %v6730
    %6732 = vmatprep.subr.mxu0 0.0
    %v6733 = vand.u32 %v3881, 4294901760
    %6734 = vmatpush1.msra.mxu0 %v6733
    %6735 = vmatprep.subr.mxu0 0.0
    %v6736 = vand.u32 %v3882, 4294901760
    %6737 = vmatpush1.msra.mxu0 %v6736
    %6738 = vmatprep.subr.mxu0 0.0
    %v6739 = vand.u32 %v3883, 4294901760
    %6740 = vmatpush1.msra.mxu0 %v6739
    %6741 = vmatprep.subr.mxu0 0.0
    %v6742 = vand.u32 %v3884, 4294901760
    %6743 = vmatpush1.msra.mxu0 %v6742
    %6744 = vmatprep.subr.mxu0 0.0
    %v6745 = vand.u32 %v3885, 4294901760
    %6746 = vmatpush1.msra.mxu0 %v6745
    %6747 = vmatprep.subr.mxu0 0.0
    %v6748 = vand.u32 %v3886, 4294901760
    %6749 = vmatpush1.msra.mxu0 %v6748
    %6750 = vmatprep.subr.mxu0 0.0
    %v6751 = vand.u32 %v3887, 4294901760
    %6752 = vmatpush1.msra.mxu0 %v6751
    %6753 = vmatprep.subr.mxu0 0.0
    %v6754 = vand.u32 %v3888, 4294901760
    %6755 = vmatpush1.msra.mxu0 %v6754
    %6756 = vmatprep.subr.mxu0 0.0
    %v6757 = vand.u32 %v3889, 4294901760
    %6758 = vmatpush1.msra.mxu0 %v6757
    %6759 = vmatprep.subr.mxu0 0.0
    %v6760 = vand.u32 %v3890, 4294901760
    %6761 = vmatpush1.msra.mxu0 %v6760
    %6762 = vmatprep.subr.mxu0 0.0
    %v6763 = vand.u32 %v3891, 4294901760
    %6764 = vmatpush1.msra.mxu0 %v6763
    %6765 = vmatprep.subr.mxu0 0.0
    %v6766 = vand.u32 %v3892, 4294901760
    %6767 = vmatpush1.msra.mxu0 %v6766
    %6768 = vmatprep.subr.mxu0 0.0
    %v6769 = vand.u32 %v3893, 4294901760
    %6770 = vmatpush1.msra.mxu0 %v6769
    %6771 = vmatprep.subr.mxu0 0.0
    %v6772 = vand.u32 %v3894, 4294901760
    %6773 = vmatpush1.msra.mxu0 %v6772
    %6774 = vmatprep.subr.mxu0 0.0
    %v6775 = vand.u32 %v3895, 4294901760
    %6776 = vmatpush1.msra.mxu0 %v6775
    %6777 = vmatprep.subr.mxu0 0.0
    %v6778 = vand.u32 %v3896, 4294901760
    %6779 = vmatpush1.msra.mxu0 %v6778
    %6780 = vmatprep.subr.mxu0 0.0
    %v6781 = vand.u32 %v3897, 4294901760
    %6782 = vmatpush1.msra.mxu0 %v6781
    %6783 = vmatprep.subr.mxu0 0.0
    %v6784 = vand.u32 %v3898, 4294901760
    %6785 = vmatpush1.msra.mxu0 %v6784
    %6786 = vmatprep.subr.mxu0 0.0
    %v6787 = vand.u32 %v3899, 4294901760
    %6788 = vmatpush1.msra.mxu0 %v6787
    %6789 = vmatprep.subr.mxu0 0.0
    %v6790 = vand.u32 %v3900, 4294901760
    %6791 = vmatpush1.msra.mxu0 %v6790
    %6792 = vmatprep.subr.mxu0 0.0
    %v6793 = vand.u32 %v3901, 4294901760
    %6794 = vmatpush1.msra.mxu0 %v6793
    %6795 = vmatprep.subr.mxu0 0.0
    %v6796 = vand.u32 %v3902, 4294901760
    %6797 = vmatpush1.msra.mxu0 %v6796
    %6798 = vmatprep.subr.mxu0 0.0
    %v6799 = vand.u32 %v3903, 4294901760
    %6800 = vmatpush1.msra.mxu0 %v6799
    %6801 = vmatprep.subr.mxu0 0.0
    %v6802 = vand.u32 %v3904, 4294901760
    %6803 = vmatpush1.msra.mxu0 %v6802
    %6804 = vmatprep.subr.mxu0 0.0
    %v6805 = vand.u32 %v3905, 4294901760
    %6806 = vmatpush1.msra.mxu0 %v6805
    %6807 = vmatprep.subr.mxu0 0.0
    %v6808 = vand.u32 %v3906, 4294901760
    %6809 = vmatpush1.msra.mxu0 %v6808
    %6810 = vmatprep.subr.mxu0 0.0
    %v6811 = vand.u32 %v3907, 4294901760
    %6812 = vmatpush1.msra.mxu0 %v6811
    %v6813 = vand.u32 %v4080, 4294901760
    %v6814 = vsub.f32 %v4080, %v6813
    %v6815 = vand.u32 %v6814, 4294901760
    %v6816 = vsub.f32 %v6814, %v6815
    %v6817 = vand.u32 %v6816, 4294901760
    %6818 = vmatprep.mubr.f32.mxu0 %v6817
    %v6819 = vand.u32 %v4078, 4294901760
    %v6820 = vsub.f32 %v4078, %v6819
    %v6821 = vand.u32 %v6820, 4294901760
    %v6822 = vsub.f32 %v6820, %v6821
    %v6823 = vand.u32 %v6822, 4294901760
    %6824 = vmatmul.mubr.f32.gmra.mrb[0].mxu0 %v6823
    %v6825 = vpop.f32.mrb[0].mxu0
    %v6826 = vadd.f32 %v6714, %v6825
    %v6827 = vpop.f32.mrb[0].mxu0
    %6828 = vdwg.mxu0
    %6829 = vmatprep.subr.mxu0 0.0
    %v6830 = vand.u32 %v3876, 4294901760
    %v6831 = vsub.f32 %v3876, %v6830
    %v6832 = vand.u32 %v6831, 4294901760
    %v6833 = vsub.f32 %v6831, %v6832
    %v6834 = vand.u32 %v6833, 4294901760
    %6835 = vmatpush1.msra.mxu0 %v6834
    %6836 = vmatprep.subr.mxu0 0.0
    %v6837 = vand.u32 %v3877, 4294901760
    %v6838 = vsub.f32 %v3877, %v6837
    %v6839 = vand.u32 %v6838, 4294901760
    %v6840 = vsub.f32 %v6838, %v6839
    %v6841 = vand.u32 %v6840, 4294901760
    %6842 = vmatpush1.msra.mxu0 %v6841
    %6843 = vmatprep.subr.mxu0 0.0
    %v6844 = vand.u32 %v3878, 4294901760
    %v6845 = vsub.f32 %v3878, %v6844
    %v6846 = vand.u32 %v6845, 4294901760
    %v6847 = vsub.f32 %v6845, %v6846
    %v6848 = vand.u32 %v6847, 4294901760
    %6849 = vmatpush1.msra.mxu0 %v6848
    %6850 = vmatprep.subr.mxu0 0.0
    %v6851 = vand.u32 %v3879, 4294901760
    %v6852 = vsub.f32 %v3879, %v6851
    %v6853 = vand.u32 %v6852, 4294901760
    %v6854 = vsub.f32 %v6852, %v6853
    %v6855 = vand.u32 %v6854, 4294901760
    %6856 = vmatpush1.msra.mxu0 %v6855
    %6857 = vmatprep.subr.mxu0 0.0
    %v6858 = vand.u32 %v3880, 4294901760
    %v6859 = vsub.f32 %v3880, %v6858
    %v6860 = vand.u32 %v6859, 4294901760
    %v6861 = vsub.f32 %v6859, %v6860
    %v6862 = vand.u32 %v6861, 4294901760
    %6863 = vmatpush1.msra.mxu0 %v6862
    %6864 = vmatprep.subr.mxu0 0.0
    %v6865 = vand.u32 %v3881, 4294901760
    %v6866 = vsub.f32 %v3881, %v6865
    %v6867 = vand.u32 %v6866, 4294901760
    %v6868 = vsub.f32 %v6866, %v6867
    %v6869 = vand.u32 %v6868, 4294901760
    %6870 = vmatpush1.msra.mxu0 %v6869
    %6871 = vmatprep.subr.mxu0 0.0
    %v6872 = vand.u32 %v3882, 4294901760
    %v6873 = vsub.f32 %v3882, %v6872
    %v6874 = vand.u32 %v6873, 4294901760
    %v6875 = vsub.f32 %v6873, %v6874
    %v6876 = vand.u32 %v6875, 4294901760
    %6877 = vmatpush1.msra.mxu0 %v6876
    %6878 = vmatprep.subr.mxu0 0.0
    %v6879 = vand.u32 %v3883, 4294901760
    %v6880 = vsub.f32 %v3883, %v6879
    %v6881 = vand.u32 %v6880, 4294901760
    %v6882 = vsub.f32 %v6880, %v6881
    %v6883 = vand.u32 %v6882, 4294901760
    %6884 = vmatpush1.msra.mxu0 %v6883
    %6885 = vmatprep.subr.mxu0 0.0
    %v6886 = vand.u32 %v3884, 4294901760
    %v6887 = vsub.f32 %v3884, %v6886
    %v6888 = vand.u32 %v6887, 4294901760
    %v6889 = vsub.f32 %v6887, %v6888
    %v6890 = vand.u32 %v6889, 4294901760
    %6891 = vmatpush1.msra.mxu0 %v6890
    %6892 = vmatprep.subr.mxu0 0.0
    %v6893 = vand.u32 %v3885, 4294901760
    %v6894 = vsub.f32 %v3885, %v6893
    %v6895 = vand.u32 %v6894, 4294901760
    %v6896 = vsub.f32 %v6894, %v6895
    %v6897 = vand.u32 %v6896, 4294901760
    %6898 = vmatpush1.msra.mxu0 %v6897
    %6899 = vmatprep.subr.mxu0 0.0
    %v6900 = vand.u32 %v3886, 4294901760
    %v6901 = vsub.f32 %v3886, %v6900
    %v6902 = vand.u32 %v6901, 4294901760
    %v6903 = vsub.f32 %v6901, %v6902
    %v6904 = vand.u32 %v6903, 4294901760
    %6905 = vmatpush1.msra.mxu0 %v6904
    %6906 = vmatprep.subr.mxu0 0.0
    %v6907 = vand.u32 %v3887, 4294901760
    %v6908 = vsub.f32 %v3887, %v6907
    %v6909 = vand.u32 %v6908, 4294901760
    %v6910 = vsub.f32 %v6908, %v6909
    %v6911 = vand.u32 %v6910, 4294901760
    %6912 = vmatpush1.msra.mxu0 %v6911
    %6913 = vmatprep.subr.mxu0 0.0
    %v6914 = vand.u32 %v3888, 4294901760
    %v6915 = vsub.f32 %v3888, %v6914
    %v6916 = vand.u32 %v6915, 4294901760
    %v6917 = vsub.f32 %v6915, %v6916
    %v6918 = vand.u32 %v6917, 4294901760
    %6919 = vmatpush1.msra.mxu0 %v6918
    %6920 = vmatprep.subr.mxu0 0.0
    %v6921 = vand.u32 %v3889, 4294901760
    %v6922 = vsub.f32 %v3889, %v6921
    %v6923 = vand.u32 %v6922, 4294901760
    %v6924 = vsub.f32 %v6922, %v6923
    %v6925 = vand.u32 %v6924, 4294901760
    %6926 = vmatpush1.msra.mxu0 %v6925
    %6927 = vmatprep.subr.mxu0 0.0
    %v6928 = vand.u32 %v3890, 4294901760
    %v6929 = vsub.f32 %v3890, %v6928
    %v6930 = vand.u32 %v6929, 4294901760
    %v6931 = vsub.f32 %v6929, %v6930
    %v6932 = vand.u32 %v6931, 4294901760
    %6933 = vmatpush1.msra.mxu0 %v6932
    %6934 = vmatprep.subr.mxu0 0.0
    %v6935 = vand.u32 %v3891, 4294901760
    %v6936 = vsub.f32 %v3891, %v6935
    %v6937 = vand.u32 %v6936, 4294901760
    %v6938 = vsub.f32 %v6936, %v6937
    %v6939 = vand.u32 %v6938, 4294901760
    %6940 = vmatpush1.msra.mxu0 %v6939
    %6941 = vmatprep.subr.mxu0 0.0
    %v6942 = vand.u32 %v3892, 4294901760
    %v6943 = vsub.f32 %v3892, %v6942
    %v6944 = vand.u32 %v6943, 4294901760
    %v6945 = vsub.f32 %v6943, %v6944
    %v6946 = vand.u32 %v6945, 4294901760
    %6947 = vmatpush1.msra.mxu0 %v6946
    %6948 = vmatprep.subr.mxu0 0.0
    %v6949 = vand.u32 %v3893, 4294901760
    %v6950 = vsub.f32 %v3893, %v6949
    %v6951 = vand.u32 %v6950, 4294901760
    %v6952 = vsub.f32 %v6950, %v6951
    %v6953 = vand.u32 %v6952, 4294901760
    %6954 = vmatpush1.msra.mxu0 %v6953
    %6955 = vmatprep.subr.mxu0 0.0
    %v6956 = vand.u32 %v3894, 4294901760
    %v6957 = vsub.f32 %v3894, %v6956
    %v6958 = vand.u32 %v6957, 4294901760
    %v6959 = vsub.f32 %v6957, %v6958
    %v6960 = vand.u32 %v6959, 4294901760
    %6961 = vmatpush1.msra.mxu0 %v6960
    %6962 = vmatprep.subr.mxu0 0.0
    %v6963 = vand.u32 %v3895, 4294901760
    %v6964 = vsub.f32 %v3895, %v6963
    %v6965 = vand.u32 %v6964, 4294901760
    %v6966 = vsub.f32 %v6964, %v6965
    %v6967 = vand.u32 %v6966, 4294901760
    %6968 = vmatpush1.msra.mxu0 %v6967
    %6969 = vmatprep.subr.mxu0 0.0
    %v6970 = vand.u32 %v3896, 4294901760
    %v6971 = vsub.f32 %v3896, %v6970
    %v6972 = vand.u32 %v6971, 4294901760
    %v6973 = vsub.f32 %v6971, %v6972
    %v6974 = vand.u32 %v6973, 4294901760
    %6975 = vmatpush1.msra.mxu0 %v6974
    %6976 = vmatprep.subr.mxu0 0.0
    %v6977 = vand.u32 %v3897, 4294901760
    %v6978 = vsub.f32 %v3897, %v6977
    %v6979 = vand.u32 %v6978, 4294901760
    %v6980 = vsub.f32 %v6978, %v6979
    %v6981 = vand.u32 %v6980, 4294901760
    %6982 = vmatpush1.msra.mxu0 %v6981
    %6983 = vmatprep.subr.mxu0 0.0
    %v6984 = vand.u32 %v3898, 4294901760
    %v6985 = vsub.f32 %v3898, %v6984
    %v6986 = vand.u32 %v6985, 4294901760
    %v6987 = vsub.f32 %v6985, %v6986
    %v6988 = vand.u32 %v6987, 4294901760
    %6989 = vmatpush1.msra.mxu0 %v6988
    %6990 = vmatprep.subr.mxu0 0.0
    %v6991 = vand.u32 %v3899, 4294901760
    %v6992 = vsub.f32 %v3899, %v6991
    %v6993 = vand.u32 %v6992, 4294901760
    %v6994 = vsub.f32 %v6992, %v6993
    %v6995 = vand.u32 %v6994, 4294901760
    %6996 = vmatpush1.msra.mxu0 %v6995
    %6997 = vmatprep.subr.mxu0 0.0
    %v6998 = vand.u32 %v3900, 4294901760
    %v6999 = vsub.f32 %v3900, %v6998
    %v7000 = vand.u32 %v6999, 4294901760
    %v7001 = vsub.f32 %v6999, %v7000
    %v7002 = vand.u32 %v7001, 4294901760
    %7003 = vmatpush1.msra.mxu0 %v7002
    %7004 = vmatprep.subr.mxu0 0.0
    %v7005 = vand.u32 %v3901, 4294901760
    %v7006 = vsub.f32 %v3901, %v7005
    %v7007 = vand.u32 %v7006, 4294901760
    %v7008 = vsub.f32 %v7006, %v7007
    %v7009 = vand.u32 %v7008, 4294901760
    %7010 = vmatpush1.msra.mxu0 %v7009
    %7011 = vmatprep.subr.mxu0 0.0
    %v7012 = vand.u32 %v3902, 4294901760
    %v7013 = vsub.f32 %v3902, %v7012
    %v7014 = vand.u32 %v7013, 4294901760
    %v7015 = vsub.f32 %v7013, %v7014
    %v7016 = vand.u32 %v7015, 4294901760
    %7017 = vmatpush1.msra.mxu0 %v7016
    %7018 = vmatprep.subr.mxu0 0.0
    %v7019 = vand.u32 %v3903, 4294901760
    %v7020 = vsub.f32 %v3903, %v7019
    %v7021 = vand.u32 %v7020, 4294901760
    %v7022 = vsub.f32 %v7020, %v7021
    %v7023 = vand.u32 %v7022, 4294901760
    %7024 = vmatpush1.msra.mxu0 %v7023
    %7025 = vmatprep.subr.mxu0 0.0
    %v7026 = vand.u32 %v3904, 4294901760
    %v7027 = vsub.f32 %v3904, %v7026
    %v7028 = vand.u32 %v7027, 4294901760
    %v7029 = vsub.f32 %v7027, %v7028
    %v7030 = vand.u32 %v7029, 4294901760
    %7031 = vmatpush1.msra.mxu0 %v7030
    %7032 = vmatprep.subr.mxu0 0.0
    %v7033 = vand.u32 %v3905, 4294901760
    %v7034 = vsub.f32 %v3905, %v7033
    %v7035 = vand.u32 %v7034, 4294901760
    %v7036 = vsub.f32 %v7034, %v7035
    %v7037 = vand.u32 %v7036, 4294901760
    %7038 = vmatpush1.msra.mxu0 %v7037
    %7039 = vmatprep.subr.mxu0 0.0
    %v7040 = vand.u32 %v3906, 4294901760
    %v7041 = vsub.f32 %v3906, %v7040
    %v7042 = vand.u32 %v7041, 4294901760
    %v7043 = vsub.f32 %v7041, %v7042
    %v7044 = vand.u32 %v7043, 4294901760
    %7045 = vmatpush1.msra.mxu0 %v7044
    %7046 = vmatprep.subr.mxu0 0.0
    %v7047 = vand.u32 %v3907, 4294901760
    %v7048 = vsub.f32 %v3907, %v7047
    %v7049 = vand.u32 %v7048, 4294901760
    %v7050 = vsub.f32 %v7048, %v7049
    %v7051 = vand.u32 %v7050, 4294901760
    %7052 = vmatpush1.msra.mxu0 %v7051
    %v7053 = vand.u32 %v4080, 4294901760
    %7054 = vmatprep.mubr.f32.mxu0 %v7053
    %v7055 = vand.u32 %v4078, 4294901760
    %7056 = vmatmul.mubr.f32.gmra.mrb[0].mxu0 %v7055
    %v7057 = vpop.f32.mrb[0].mxu0
    %v7058 = vadd.f32 %v6826, %v7057
    %v7059 = vpop.f32.mrb[0].mxu0
    %7060 = vdwg.mxu0
    %7061 = vmatprep.subr.mxu0 0.0
    %v7062 = vand.u32 %v3876, 4294901760
    %v7063 = vsub.f32 %v3876, %v7062
    %7064 = vmatpush1.msra.mxu0 %v7063
    %7065 = vmatprep.subr.mxu0 0.0
    %v7066 = vand.u32 %v3877, 4294901760
    %v7067 = vsub.f32 %v3877, %v7066
    %7068 = vmatpush1.msra.mxu0 %v7067
    %7069 = vmatprep.subr.mxu0 0.0
    %v7070 = vand.u32 %v3878, 4294901760
    %v7071 = vsub.f32 %v3878, %v7070
    %7072 = vmatpush1.msra.mxu0 %v7071
    %7073 = vmatprep.subr.mxu0 0.0
    %v7074 = vand.u32 %v3879, 4294901760
    %v7075 = vsub.f32 %v3879, %v7074
    %7076 = vmatpush1.msra.mxu0 %v7075
    %7077 = vmatprep.subr.mxu0 0.0
    %v7078 = vand.u32 %v3880, 4294901760
    %v7079 = vsub.f32 %v3880, %v7078
    %7080 = vmatpush1.msra.mxu0 %v7079
    %7081 = vmatprep.subr.mxu0 0.0
    %v7082 = vand.u32 %v3881, 4294901760
    %v7083 = vsub.f32 %v3881, %v7082
    %7084 = vmatpush1.msra.mxu0 %v7083
    %7085 = vmatprep.subr.mxu0 0.0
    %v7086 = vand.u32 %v3882, 4294901760
    %v7087 = vsub.f32 %v3882, %v7086
    %7088 = vmatpush1.msra.mxu0 %v7087
    %7089 = vmatprep.subr.mxu0 0.0
    %v7090 = vand.u32 %v3883, 4294901760
    %v7091 = vsub.f32 %v3883, %v7090
    %7092 = vmatpush1.msra.mxu0 %v7091
    %7093 = vmatprep.subr.mxu0 0.0
    %v7094 = vand.u32 %v3884, 4294901760
    %v7095 = vsub.f32 %v3884, %v7094
    %7096 = vmatpush1.msra.mxu0 %v7095
    %7097 = vmatprep.subr.mxu0 0.0
    %v7098 = vand.u32 %v3885, 4294901760
    %v7099 = vsub.f32 %v3885, %v7098
    %7100 = vmatpush1.msra.mxu0 %v7099
    %7101 = vmatprep.subr.mxu0 0.0
    %v7102 = vand.u32 %v3886, 4294901760
    %v7103 = vsub.f32 %v3886, %v7102
    %7104 = vmatpush1.msra.mxu0 %v7103
    %7105 = vmatprep.subr.mxu0 0.0
    %v7106 = vand.u32 %v3887, 4294901760
    %v7107 = vsub.f32 %v3887, %v7106
    %7108 = vmatpush1.msra.mxu0 %v7107
    %7109 = vmatprep.subr.mxu0 0.0
    %v7110 = vand.u32 %v3888, 4294901760
    %v7111 = vsub.f32 %v3888, %v7110
    %7112 = vmatpush1.msra.mxu0 %v7111
    %7113 = vmatprep.subr.mxu0 0.0
    %v7114 = vand.u32 %v3889, 4294901760
    %v7115 = vsub.f32 %v3889, %v7114
    %7116 = vmatpush1.msra.mxu0 %v7115
    %7117 = vmatprep.subr.mxu0 0.0
    %v7118 = vand.u32 %v3890, 4294901760
    %v7119 = vsub.f32 %v3890, %v7118
    %7120 = vmatpush1.msra.mxu0 %v7119
    %7121 = vmatprep.subr.mxu0 0.0
    %v7122 = vand.u32 %v3891, 4294901760
    %v7123 = vsub.f32 %v3891, %v7122
    %7124 = vmatpush1.msra.mxu0 %v7123
    %7125 = vmatprep.subr.mxu0 0.0
    %v7126 = vand.u32 %v3892, 4294901760
    %v7127 = vsub.f32 %v3892, %v7126
    %7128 = vmatpush1.msra.mxu0 %v7127
    %7129 = vmatprep.subr.mxu0 0.0
    %v7130 = vand.u32 %v3893, 4294901760
    %v7131 = vsub.f32 %v3893, %v7130
    %7132 = vmatpush1.msra.mxu0 %v7131
    %7133 = vmatprep.subr.mxu0 0.0
    %v7134 = vand.u32 %v3894, 4294901760
    %v7135 = vsub.f32 %v3894, %v7134
    %7136 = vmatpush1.msra.mxu0 %v7135
    %7137 = vmatprep.subr.mxu0 0.0
    %v7138 = vand.u32 %v3895, 4294901760
    %v7139 = vsub.f32 %v3895, %v7138
    %7140 = vmatpush1.msra.mxu0 %v7139
    %7141 = vmatprep.subr.mxu0 0.0
    %v7142 = vand.u32 %v3896, 4294901760
    %v7143 = vsub.f32 %v3896, %v7142
    %7144 = vmatpush1.msra.mxu0 %v7143
    %7145 = vmatprep.subr.mxu0 0.0
    %v7146 = vand.u32 %v3897, 4294901760
    %v7147 = vsub.f32 %v3897, %v7146
    %7148 = vmatpush1.msra.mxu0 %v7147
    %7149 = vmatprep.subr.mxu0 0.0
    %v7150 = vand.u32 %v3898, 4294901760
    %v7151 = vsub.f32 %v3898, %v7150
    %7152 = vmatpush1.msra.mxu0 %v7151
    %7153 = vmatprep.subr.mxu0 0.0
    %v7154 = vand.u32 %v3899, 4294901760
    %v7155 = vsub.f32 %v3899, %v7154
    %7156 = vmatpush1.msra.mxu0 %v7155
    %7157 = vmatprep.subr.mxu0 0.0
    %v7158 = vand.u32 %v3900, 4294901760
    %v7159 = vsub.f32 %v3900, %v7158
    %7160 = vmatpush1.msra.mxu0 %v7159
    %7161 = vmatprep.subr.mxu0 0.0
    %v7162 = vand.u32 %v3901, 4294901760
    %v7163 = vsub.f32 %v3901, %v7162
    %7164 = vmatpush1.msra.mxu0 %v7163
    %7165 = vmatprep.subr.mxu0 0.0
    %v7166 = vand.u32 %v3902, 4294901760
    %v7167 = vsub.f32 %v3902, %v7166
    %7168 = vmatpush1.msra.mxu0 %v7167
    %7169 = vmatprep.subr.mxu0 0.0
    %v7170 = vand.u32 %v3903, 4294901760
    %v7171 = vsub.f32 %v3903, %v7170
    %7172 = vmatpush1.msra.mxu0 %v7171
    %7173 = vmatprep.subr.mxu0 0.0
    %v7174 = vand.u32 %v3904, 4294901760
    %v7175 = vsub.f32 %v3904, %v7174
    %7176 = vmatpush1.msra.mxu0 %v7175
    %7177 = vmatprep.subr.mxu0 0.0
    %v7178 = vand.u32 %v3905, 4294901760
    %v7179 = vsub.f32 %v3905, %v7178
    %7180 = vmatpush1.msra.mxu0 %v7179
    %7181 = vmatprep.subr.mxu0 0.0
    %v7182 = vand.u32 %v3906, 4294901760
    %v7183 = vsub.f32 %v3906, %v7182
    %7184 = vmatpush1.msra.mxu0 %v7183
    %7185 = vmatprep.subr.mxu0 0.0
    %v7186 = vand.u32 %v3907, 4294901760
    %v7187 = vsub.f32 %v3907, %v7186
    %7188 = vmatpush1.msra.mxu0 %v7187
    %v7189 = vand.u32 %v4080, 4294901760
    %v7190 = vsub.f32 %v4080, %v7189
    %7191 = vmatprep.mubr.f32.mxu0 %v7190
    %v7192 = vand.u32 %v4078, 4294901760
    %v7193 = vsub.f32 %v4078, %v7192
    %7194 = vmatmul.mubr.f32.gmra.mrb[0].mxu0 %v7193
    %v7195 = vpop.f32.mrb[0].mxu0
    %v7196 = vadd.f32 %v7058, %v7195
    %v7197 = vpop.f32.mrb[0].mxu0
    %7198 = vdwg.mxu0
    %7199 = vmatprep.subr.mxu0 0.0
    %v7200 = vand.u32 %v3876, 4294901760
    %7201 = vmatpush1.msra.mxu0 %v7200
    %7202 = vmatprep.subr.mxu0 0.0
    %v7203 = vand.u32 %v3877, 4294901760
    %7204 = vmatpush1.msra.mxu0 %v7203
    %7205 = vmatprep.subr.mxu0 0.0
    %v7206 = vand.u32 %v3878, 4294901760
    %7207 = vmatpush1.msra.mxu0 %v7206
    %7208 = vmatprep.subr.mxu0 0.0
    %v7209 = vand.u32 %v3879, 4294901760
    %7210 = vmatpush1.msra.mxu0 %v7209
    %7211 = vmatprep.subr.mxu0 0.0
    %v7212 = vand.u32 %v3880, 4294901760
    %7213 = vmatpush1.msra.mxu0 %v7212
    %7214 = vmatprep.subr.mxu0 0.0
    %v7215 = vand.u32 %v3881, 4294901760
    %7216 = vmatpush1.msra.mxu0 %v7215
    %7217 = vmatprep.subr.mxu0 0.0
    %v7218 = vand.u32 %v3882, 4294901760
    %7219 = vmatpush1.msra.mxu0 %v7218
    %7220 = vmatprep.subr.mxu0 0.0
    %v7221 = vand.u32 %v3883, 4294901760
    %7222 = vmatpush1.msra.mxu0 %v7221
    %7223 = vmatprep.subr.mxu0 0.0
    %v7224 = vand.u32 %v3884, 4294901760
    %7225 = vmatpush1.msra.mxu0 %v7224
    %7226 = vmatprep.subr.mxu0 0.0
    %v7227 = vand.u32 %v3885, 4294901760
    %7228 = vmatpush1.msra.mxu0 %v7227
    %7229 = vmatprep.subr.mxu0 0.0
    %v7230 = vand.u32 %v3886, 4294901760
    %7231 = vmatpush1.msra.mxu0 %v7230
    %7232 = vmatprep.subr.mxu0 0.0
    %v7233 = vand.u32 %v3887, 4294901760
    %7234 = vmatpush1.msra.mxu0 %v7233
    %7235 = vmatprep.subr.mxu0 0.0
    %v7236 = vand.u32 %v3888, 4294901760
    %7237 = vmatpush1.msra.mxu0 %v7236
    %7238 = vmatprep.subr.mxu0 0.0
    %v7239 = vand.u32 %v3889, 4294901760
    %7240 = vmatpush1.msra.mxu0 %v7239
    %7241 = vmatprep.subr.mxu0 0.0
    %v7242 = vand.u32 %v3890, 4294901760
    %7243 = vmatpush1.msra.mxu0 %v7242
    %7244 = vmatprep.subr.mxu0 0.0
    %v7245 = vand.u32 %v3891, 4294901760
    %7246 = vmatpush1.msra.mxu0 %v7245
    %7247 = vmatprep.subr.mxu0 0.0
    %v7248 = vand.u32 %v3892, 4294901760
    %7249 = vmatpush1.msra.mxu0 %v7248
    %7250 = vmatprep.subr.mxu0 0.0
    %v7251 = vand.u32 %v3893, 4294901760
    %7252 = vmatpush1.msra.mxu0 %v7251
    %7253 = vmatprep.subr.mxu0 0.0
    %v7254 = vand.u32 %v3894, 4294901760
    %7255 = vmatpush1.msra.mxu0 %v7254
    %7256 = vmatprep.subr.mxu0 0.0
    %v7257 = vand.u32 %v3895, 4294901760
    %7258 = vmatpush1.msra.mxu0 %v7257
    %7259 = vmatprep.subr.mxu0 0.0
    %v7260 = vand.u32 %v3896, 4294901760
    %7261 = vmatpush1.msra.mxu0 %v7260
    %7262 = vmatprep.subr.mxu0 0.0
    %v7263 = vand.u32 %v3897, 4294901760
    %7264 = vmatpush1.msra.mxu0 %v7263
    %7265 = vmatprep.subr.mxu0 0.0
    %v7266 = vand.u32 %v3898, 4294901760
    %7267 = vmatpush1.msra.mxu0 %v7266
    %7268 = vmatprep.subr.mxu0 0.0
    %v7269 = vand.u32 %v3899, 4294901760
    %7270 = vmatpush1.msra.mxu0 %v7269
    %7271 = vmatprep.subr.mxu0 0.0
    %v7272 = vand.u32 %v3900, 4294901760
    %7273 = vmatpush1.msra.mxu0 %v7272
    %7274 = vmatprep.subr.mxu0 0.0
    %v7275 = vand.u32 %v3901, 4294901760
    %7276 = vmatpush1.msra.mxu0 %v7275
    %7277 = vmatprep.subr.mxu0 0.0
    %v7278 = vand.u32 %v3902, 4294901760
    %7279 = vmatpush1.msra.mxu0 %v7278
    %7280 = vmatprep.subr.mxu0 0.0
    %v7281 = vand.u32 %v3903, 4294901760
    %7282 = vmatpush1.msra.mxu0 %v7281
    %7283 = vmatprep.subr.mxu0 0.0
    %v7284 = vand.u32 %v3904, 4294901760
    %7285 = vmatpush1.msra.mxu0 %v7284
    %7286 = vmatprep.subr.mxu0 0.0
    %v7287 = vand.u32 %v3905, 4294901760
    %7288 = vmatpush1.msra.mxu0 %v7287
    %7289 = vmatprep.subr.mxu0 0.0
    %v7290 = vand.u32 %v3906, 4294901760
    %7291 = vmatpush1.msra.mxu0 %v7290
    %7292 = vmatprep.subr.mxu0 0.0
    %v7293 = vand.u32 %v3907, 4294901760
    %7294 = vmatpush1.msra.mxu0 %v7293
    %v7295 = vand.u32 %v4080, 4294901760
    %v7296 = vsub.f32 %v4080, %v7295
    %v7297 = vand.u32 %v7296, 4294901760
    %7298 = vmatprep.mubr.f32.mxu0 %v7297
    %v7299 = vand.u32 %v4078, 4294901760
    %v7300 = vsub.f32 %v4078, %v7299
    %v7301 = vand.u32 %v7300, 4294901760
    %7302 = vmatmul.mubr.f32.gmra.mrb[0].mxu0 %v7301
    %v7303 = vpop.f32.mrb[0].mxu0
    %v7304 = vadd.f32 %v7196, %v7303
    %v7305 = vpop.f32.mrb[0].mxu0
    %7306 = vdwg.mxu0
    %7307 = vmatprep.subr.mxu0 0.0
    %v7308 = vand.u32 %v3876, 4294901760
    %v7309 = vsub.f32 %v3876, %v7308
    %v7310 = vand.u32 %v7309, 4294901760
    %7311 = vmatpush1.msra.mxu0 %v7310
    %7312 = vmatprep.subr.mxu0 0.0
    %v7313 = vand.u32 %v3877, 4294901760
    %v7314 = vsub.f32 %v3877, %v7313
    %v7315 = vand.u32 %v7314, 4294901760
    %7316 = vmatpush1.msra.mxu0 %v7315
    %7317 = vmatprep.subr.mxu0 0.0
    %v7318 = vand.u32 %v3878, 4294901760
    %v7319 = vsub.f32 %v3878, %v7318
    %v7320 = vand.u32 %v7319, 4294901760
    %7321 = vmatpush1.msra.mxu0 %v7320
    %7322 = vmatprep.subr.mxu0 0.0
    %v7323 = vand.u32 %v3879, 4294901760
    %v7324 = vsub.f32 %v3879, %v7323
    %v7325 = vand.u32 %v7324, 4294901760
    %7326 = vmatpush1.msra.mxu0 %v7325
    %7327 = vmatprep.subr.mxu0 0.0
    %v7328 = vand.u32 %v3880, 4294901760
    %v7329 = vsub.f32 %v3880, %v7328
    %v7330 = vand.u32 %v7329, 4294901760
    %7331 = vmatpush1.msra.mxu0 %v7330
    %7332 = vmatprep.subr.mxu0 0.0
    %v7333 = vand.u32 %v3881, 4294901760
    %v7334 = vsub.f32 %v3881, %v7333
    %v7335 = vand.u32 %v7334, 4294901760
    %7336 = vmatpush1.msra.mxu0 %v7335
    %7337 = vmatprep.subr.mxu0 0.0
    %v7338 = vand.u32 %v3882, 4294901760
    %v7339 = vsub.f32 %v3882, %v7338
    %v7340 = vand.u32 %v7339, 4294901760
    %7341 = vmatpush1.msra.mxu0 %v7340
    %7342 = vmatprep.subr.mxu0 0.0
    %v7343 = vand.u32 %v3883, 4294901760
    %v7344 = vsub.f32 %v3883, %v7343
    %v7345 = vand.u32 %v7344, 4294901760
    %7346 = vmatpush1.msra.mxu0 %v7345
    %7347 = vmatprep.subr.mxu0 0.0
    %v7348 = vand.u32 %v3884, 4294901760
    %v7349 = vsub.f32 %v3884, %v7348
    %v7350 = vand.u32 %v7349, 4294901760
    %7351 = vmatpush1.msra.mxu0 %v7350
    %7352 = vmatprep.subr.mxu0 0.0
    %v7353 = vand.u32 %v3885, 4294901760
    %v7354 = vsub.f32 %v3885, %v7353
    %v7355 = vand.u32 %v7354, 4294901760
    %7356 = vmatpush1.msra.mxu0 %v7355
    %7357 = vmatprep.subr.mxu0 0.0
    %v7358 = vand.u32 %v3886, 4294901760
    %v7359 = vsub.f32 %v3886, %v7358
    %v7360 = vand.u32 %v7359, 4294901760
    %7361 = vmatpush1.msra.mxu0 %v7360
    %7362 = vmatprep.subr.mxu0 0.0
    %v7363 = vand.u32 %v3887, 4294901760
    %v7364 = vsub.f32 %v3887, %v7363
    %v7365 = vand.u32 %v7364, 4294901760
    %7366 = vmatpush1.msra.mxu0 %v7365
    %7367 = vmatprep.subr.mxu0 0.0
    %v7368 = vand.u32 %v3888, 4294901760
    %v7369 = vsub.f32 %v3888, %v7368
    %v7370 = vand.u32 %v7369, 4294901760
    %7371 = vmatpush1.msra.mxu0 %v7370
    %7372 = vmatprep.subr.mxu0 0.0
    %v7373 = vand.u32 %v3889, 4294901760
    %v7374 = vsub.f32 %v3889, %v7373
    %v7375 = vand.u32 %v7374, 4294901760
    %7376 = vmatpush1.msra.mxu0 %v7375
    %7377 = vmatprep.subr.mxu0 0.0
    %v7378 = vand.u32 %v3890, 4294901760
    %v7379 = vsub.f32 %v3890, %v7378
    %v7380 = vand.u32 %v7379, 4294901760
    %7381 = vmatpush1.msra.mxu0 %v7380
    %7382 = vmatprep.subr.mxu0 0.0
    %v7383 = vand.u32 %v3891, 4294901760
    %v7384 = vsub.f32 %v3891, %v7383
    %v7385 = vand.u32 %v7384, 4294901760
    %7386 = vmatpush1.msra.mxu0 %v7385
    %7387 = vmatprep.subr.mxu0 0.0
    %v7388 = vand.u32 %v3892, 4294901760
    %v7389 = vsub.f32 %v3892, %v7388
    %v7390 = vand.u32 %v7389, 4294901760
    %7391 = vmatpush1.msra.mxu0 %v7390
    %7392 = vmatprep.subr.mxu0 0.0
    %v7393 = vand.u32 %v3893, 4294901760
    %v7394 = vsub.f32 %v3893, %v7393
    %v7395 = vand.u32 %v7394, 4294901760
    %7396 = vmatpush1.msra.mxu0 %v7395
    %7397 = vmatprep.subr.mxu0 0.0
    %v7398 = vand.u32 %v3894, 4294901760
    %v7399 = vsub.f32 %v3894, %v7398
    %v7400 = vand.u32 %v7399, 4294901760
    %7401 = vmatpush1.msra.mxu0 %v7400
    %7402 = vmatprep.subr.mxu0 0.0
    %v7403 = vand.u32 %v3895, 4294901760
    %v7404 = vsub.f32 %v3895, %v7403
    %v7405 = vand.u32 %v7404, 4294901760
    %7406 = vmatpush1.msra.mxu0 %v7405
    %7407 = vmatprep.subr.mxu0 0.0
    %v7408 = vand.u32 %v3896, 4294901760
    %v7409 = vsub.f32 %v3896, %v7408
    %v7410 = vand.u32 %v7409, 4294901760
    %7411 = vmatpush1.msra.mxu0 %v7410
    %7412 = vmatprep.subr.mxu0 0.0
    %v7413 = vand.u32 %v3897, 4294901760
    %v7414 = vsub.f32 %v3897, %v7413
    %v7415 = vand.u32 %v7414, 4294901760
    %7416 = vmatpush1.msra.mxu0 %v7415
    %7417 = vmatprep.subr.mxu0 0.0
    %v7418 = vand.u32 %v3898, 4294901760
    %v7419 = vsub.f32 %v3898, %v7418
    %v7420 = vand.u32 %v7419, 4294901760
    %7421 = vmatpush1.msra.mxu0 %v7420
    %7422 = vmatprep.subr.mxu0 0.0
    %v7423 = vand.u32 %v3899, 4294901760
    %v7424 = vsub.f32 %v3899, %v7423
    %v7425 = vand.u32 %v7424, 4294901760
    %7426 = vmatpush1.msra.mxu0 %v7425
    %7427 = vmatprep.subr.mxu0 0.0
    %v7428 = vand.u32 %v3900, 4294901760
    %v7429 = vsub.f32 %v3900, %v7428
    %v7430 = vand.u32 %v7429, 4294901760
    %7431 = vmatpush1.msra.mxu0 %v7430
    %7432 = vmatprep.subr.mxu0 0.0
    %v7433 = vand.u32 %v3901, 4294901760
    %v7434 = vsub.f32 %v3901, %v7433
    %v7435 = vand.u32 %v7434, 4294901760
    %7436 = vmatpush1.msra.mxu0 %v7435
    %7437 = vmatprep.subr.mxu0 0.0
    %v7438 = vand.u32 %v3902, 4294901760
    %v7439 = vsub.f32 %v3902, %v7438
    %v7440 = vand.u32 %v7439, 4294901760
    %7441 = vmatpush1.msra.mxu0 %v7440
    %7442 = vmatprep.subr.mxu0 0.0
    %v7443 = vand.u32 %v3903, 4294901760
    %v7444 = vsub.f32 %v3903, %v7443
    %v7445 = vand.u32 %v7444, 4294901760
    %7446 = vmatpush1.msra.mxu0 %v7445
    %7447 = vmatprep.subr.mxu0 0.0
    %v7448 = vand.u32 %v3904, 4294901760
    %v7449 = vsub.f32 %v3904, %v7448
    %v7450 = vand.u32 %v7449, 4294901760
    %7451 = vmatpush1.msra.mxu0 %v7450
    %7452 = vmatprep.subr.mxu0 0.0
    %v7453 = vand.u32 %v3905, 4294901760
    %v7454 = vsub.f32 %v3905, %v7453
    %v7455 = vand.u32 %v7454, 4294901760
    %7456 = vmatpush1.msra.mxu0 %v7455
    %7457 = vmatprep.subr.mxu0 0.0
    %v7458 = vand.u32 %v3906, 4294901760
    %v7459 = vsub.f32 %v3906, %v7458
    %v7460 = vand.u32 %v7459, 4294901760
    %7461 = vmatpush1.msra.mxu0 %v7460
    %7462 = vmatprep.subr.mxu0 0.0
    %v7463 = vand.u32 %v3907, 4294901760
    %v7464 = vsub.f32 %v3907, %v7463
    %v7465 = vand.u32 %v7464, 4294901760
    %7466 = vmatpush1.msra.mxu0 %v7465
    %v7467 = vand.u32 %v4080, 4294901760
    %7468 = vmatprep.mubr.f32.mxu0 %v7467
    %v7469 = vand.u32 %v4078, 4294901760
    %7470 = vmatmul.mubr.f32.gmra.mrb[0].mxu0 %v7469
    %v7471 = vpop.f32.mrb[0].mxu0
    %v7472 = vadd.f32 %v7304, %v7471
    %v7473 = vpop.f32.mrb[0].mxu0
    %7474 = vdwg.mxu0
    %7475 = vmatprep.subr.mxu0 0.0
    %v7476 = vand.u32 %v3876, 4294901760
    %7477 = vmatpush1.msra.mxu0 %v7476
    %7478 = vmatprep.subr.mxu0 0.0
    %v7479 = vand.u32 %v3877, 4294901760
    %7480 = vmatpush1.msra.mxu0 %v7479
    %7481 = vmatprep.subr.mxu0 0.0
    %v7482 = vand.u32 %v3878, 4294901760
    %7483 = vmatpush1.msra.mxu0 %v7482
    %7484 = vmatprep.subr.mxu0 0.0
    %v7485 = vand.u32 %v3879, 4294901760
    %7486 = vmatpush1.msra.mxu0 %v7485
    %7487 = vmatprep.subr.mxu0 0.0
    %v7488 = vand.u32 %v3880, 4294901760
    %7489 = vmatpush1.msra.mxu0 %v7488
    %7490 = vmatprep.subr.mxu0 0.0
    %v7491 = vand.u32 %v3881, 4294901760
    %7492 = vmatpush1.msra.mxu0 %v7491
    %7493 = vmatprep.subr.mxu0 0.0
    %v7494 = vand.u32 %v3882, 4294901760
    %7495 = vmatpush1.msra.mxu0 %v7494
    %7496 = vmatprep.subr.mxu0 0.0
    %v7497 = vand.u32 %v3883, 4294901760
    %7498 = vmatpush1.msra.mxu0 %v7497
    %7499 = vmatprep.subr.mxu0 0.0
    %v7500 = vand.u32 %v3884, 4294901760
    %7501 = vmatpush1.msra.mxu0 %v7500
    %7502 = vmatprep.subr.mxu0 0.0
    %v7503 = vand.u32 %v3885, 4294901760
    %7504 = vmatpush1.msra.mxu0 %v7503
    %7505 = vmatprep.subr.mxu0 0.0
    %v7506 = vand.u32 %v3886, 4294901760
    %7507 = vmatpush1.msra.mxu0 %v7506
    %7508 = vmatprep.subr.mxu0 0.0
    %v7509 = vand.u32 %v3887, 4294901760
    %7510 = vmatpush1.msra.mxu0 %v7509
    %7511 = vmatprep.subr.mxu0 0.0
    %v7512 = vand.u32 %v3888, 4294901760
    %7513 = vmatpush1.msra.mxu0 %v7512
    %7514 = vmatprep.subr.mxu0 0.0
    %v7515 = vand.u32 %v3889, 4294901760
    %7516 = vmatpush1.msra.mxu0 %v7515
    %7517 = vmatprep.subr.mxu0 0.0
    %v7518 = vand.u32 %v3890, 4294901760
    %7519 = vmatpush1.msra.mxu0 %v7518
    %7520 = vmatprep.subr.mxu0 0.0
    %v7521 = vand.u32 %v3891, 4294901760
    %7522 = vmatpush1.msra.mxu0 %v7521
    %7523 = vmatprep.subr.mxu0 0.0
    %v7524 = vand.u32 %v3892, 4294901760
    %7525 = vmatpush1.msra.mxu0 %v7524
    %7526 = vmatprep.subr.mxu0 0.0
    %v7527 = vand.u32 %v3893, 4294901760
    %7528 = vmatpush1.msra.mxu0 %v7527
    %7529 = vmatprep.subr.mxu0 0.0
    %v7530 = vand.u32 %v3894, 4294901760
    %7531 = vmatpush1.msra.mxu0 %v7530
    %7532 = vmatprep.subr.mxu0 0.0
    %v7533 = vand.u32 %v3895, 4294901760
    %7534 = vmatpush1.msra.mxu0 %v7533
    %7535 = vmatprep.subr.mxu0 0.0
    %v7536 = vand.u32 %v3896, 4294901760
    %7537 = vmatpush1.msra.mxu0 %v7536
    %7538 = vmatprep.subr.mxu0 0.0
    %v7539 = vand.u32 %v3897, 4294901760
    %7540 = vmatpush1.msra.mxu0 %v7539
    %7541 = vmatprep.subr.mxu0 0.0
    %v7542 = vand.u32 %v3898, 4294901760
    %7543 = vmatpush1.msra.mxu0 %v7542
    %7544 = vmatprep.subr.mxu0 0.0
    %v7545 = vand.u32 %v3899, 4294901760
    %7546 = vmatpush1.msra.mxu0 %v7545
    %7547 = vmatprep.subr.mxu0 0.0
    %v7548 = vand.u32 %v3900, 4294901760
    %7549 = vmatpush1.msra.mxu0 %v7548
    %7550 = vmatprep.subr.mxu0 0.0
    %v7551 = vand.u32 %v3901, 4294901760
    %7552 = vmatpush1.msra.mxu0 %v7551
    %7553 = vmatprep.subr.mxu0 0.0
    %v7554 = vand.u32 %v3902, 4294901760
    %7555 = vmatpush1.msra.mxu0 %v7554
    %7556 = vmatprep.subr.mxu0 0.0
    %v7557 = vand.u32 %v3903, 4294901760
    %7558 = vmatpush1.msra.mxu0 %v7557
    %7559 = vmatprep.subr.mxu0 0.0
    %v7560 = vand.u32 %v3904, 4294901760
    %7561 = vmatpush1.msra.mxu0 %v7560
    %7562 = vmatprep.subr.mxu0 0.0
    %v7563 = vand.u32 %v3905, 4294901760
    %7564 = vmatpush1.msra.mxu0 %v7563
    %7565 = vmatprep.subr.mxu0 0.0
    %v7566 = vand.u32 %v3906, 4294901760
    %7567 = vmatpush1.msra.mxu0 %v7566
    %7568 = vmatprep.subr.mxu0 0.0
    %v7569 = vand.u32 %v3907, 4294901760
    %7570 = vmatpush1.msra.mxu0 %v7569
    %v7571 = vand.u32 %v4080, 4294901760
    %7572 = vmatprep.mubr.f32.mxu0 %v7571
    %v7573 = vand.u32 %v4078, 4294901760
    %7574 = vmatmul.mubr.f32.gmra.mrb[0].mxu0 %v7573
    %v7575 = vpop.f32.mrb[0].mxu0
    %v7576 = vadd.f32 %v7472, %v7575
    %v7577 = vpop.f32.mrb[0].mxu0
    %7578 = vdwg.mxu0
    %7579 = vmatprep.subr.mxu0 0.0
    %v7580 = vand.u32 %v3908, 4294901760
    %7581 = vmatpush1.msra.mxu0 %v7580
    %7582 = vmatprep.subr.mxu0 0.0
    %v7583 = vand.u32 %v3909, 4294901760
    %7584 = vmatpush1.msra.mxu0 %v7583
    %7585 = vmatprep.subr.mxu0 0.0
    %v7586 = vand.u32 %v3910, 4294901760
    %7587 = vmatpush1.msra.mxu0 %v7586
    %7588 = vmatprep.subr.mxu0 0.0
    %v7589 = vand.u32 %v3911, 4294901760
    %7590 = vmatpush1.msra.mxu0 %v7589
    %7591 = vmatprep.subr.mxu0 0.0
    %v7592 = vand.u32 %v3912, 4294901760
    %7593 = vmatpush1.msra.mxu0 %v7592
    %7594 = vmatprep.subr.mxu0 0.0
    %v7595 = vand.u32 %v3913, 4294901760
    %7596 = vmatpush1.msra.mxu0 %v7595
    %7597 = vmatprep.subr.mxu0 0.0
    %v7598 = vand.u32 %v3914, 4294901760
    %7599 = vmatpush1.msra.mxu0 %v7598
    %7600 = vmatprep.subr.mxu0 0.0
    %v7601 = vand.u32 %v3915, 4294901760
    %7602 = vmatpush1.msra.mxu0 %v7601
    %7603 = vmatprep.subr.mxu0 0.0
    %v7604 = vand.u32 %v3916, 4294901760
    %7605 = vmatpush1.msra.mxu0 %v7604
    %7606 = vmatprep.subr.mxu0 0.0
    %v7607 = vand.u32 %v3917, 4294901760
    %7608 = vmatpush1.msra.mxu0 %v7607
    %7609 = vmatprep.subr.mxu0 0.0
    %v7610 = vand.u32 %v3918, 4294901760
    %7611 = vmatpush1.msra.mxu0 %v7610
    %7612 = vmatprep.subr.mxu0 0.0
    %v7613 = vand.u32 %v3919, 4294901760
    %7614 = vmatpush1.msra.mxu0 %v7613
    %7615 = vmatprep.subr.mxu0 0.0
    %v7616 = vand.u32 %v3920, 4294901760
    %7617 = vmatpush1.msra.mxu0 %v7616
    %7618 = vmatprep.subr.mxu0 0.0
    %v7619 = vand.u32 %v3921, 4294901760
    %7620 = vmatpush1.msra.mxu0 %v7619
    %7621 = vmatprep.subr.mxu0 0.0
    %v7622 = vand.u32 %v3922, 4294901760
    %7623 = vmatpush1.msra.mxu0 %v7622
    %7624 = vmatprep.subr.mxu0 0.0
    %v7625 = vand.u32 %v3923, 4294901760
    %7626 = vmatpush1.msra.mxu0 %v7625
    %7627 = vmatprep.subr.mxu0 0.0
    %v7628 = vand.u32 %v3924, 4294901760
    %7629 = vmatpush1.msra.mxu0 %v7628
    %7630 = vmatprep.subr.mxu0 0.0
    %v7631 = vand.u32 %v3925, 4294901760
    %7632 = vmatpush1.msra.mxu0 %v7631
    %7633 = vmatprep.subr.mxu0 0.0
    %v7634 = vand.u32 %v3926, 4294901760
    %7635 = vmatpush1.msra.mxu0 %v7634
    %7636 = vmatprep.subr.mxu0 0.0
    %v7637 = vand.u32 %v3927, 4294901760
    %7638 = vmatpush1.msra.mxu0 %v7637
    %7639 = vmatprep.subr.mxu0 0.0
    %v7640 = vand.u32 %v3928, 4294901760
    %7641 = vmatpush1.msra.mxu0 %v7640
    %7642 = vmatprep.subr.mxu0 0.0
    %v7643 = vand.u32 %v3929, 4294901760
    %7644 = vmatpush1.msra.mxu0 %v7643
    %7645 = vmatprep.subr.mxu0 0.0
    %v7646 = vand.u32 %v3930, 4294901760
    %7647 = vmatpush1.msra.mxu0 %v7646
    %7648 = vmatprep.subr.mxu0 0.0
    %v7649 = vand.u32 %v3931, 4294901760
    %7650 = vmatpush1.msra.mxu0 %v7649
    %7651 = vmatprep.subr.mxu0 0.0
    %v7652 = vand.u32 %v3932, 4294901760
    %7653 = vmatpush1.msra.mxu0 %v7652
    %7654 = vmatprep.subr.mxu0 0.0
    %v7655 = vand.u32 %v3933, 4294901760
    %7656 = vmatpush1.msra.mxu0 %v7655
    %7657 = vmatprep.subr.mxu0 0.0
    %v7658 = vand.u32 %v3934, 4294901760
    %7659 = vmatpush1.msra.mxu0 %v7658
    %7660 = vmatprep.subr.mxu0 0.0
    %v7661 = vand.u32 %v3935, 4294901760
    %7662 = vmatpush1.msra.mxu0 %v7661
    %7663 = vmatprep.subr.mxu0 0.0
    %v7664 = vand.u32 %v3936, 4294901760
    %7665 = vmatpush1.msra.mxu0 %v7664
    %7666 = vmatprep.subr.mxu0 0.0
    %v7667 = vand.u32 %v3937, 4294901760
    %7668 = vmatpush1.msra.mxu0 %v7667
    %7669 = vmatprep.subr.mxu0 0.0
    %v7670 = vand.u32 %v3938, 4294901760
    %7671 = vmatpush1.msra.mxu0 %v7670
    %7672 = vmatprep.subr.mxu0 0.0
    %v7673 = vand.u32 %v3939, 4294901760
    %7674 = vmatpush1.msra.mxu0 %v7673
    %v7675 = vand.u32 %v4096, 4294901760
    %v7676 = vsub.f32 %v4096, %v7675
    %v7677 = vand.u32 %v7676, 4294901760
    %v7678 = vsub.f32 %v7676, %v7677
    %v7679 = vand.u32 %v7678, 4294901760
    %7680 = vmatprep.mubr.f32.mxu0 %v7679
    %v7681 = vand.u32 %v4088, 4294901760
    %v7682 = vsub.f32 %v4088, %v7681
    %v7683 = vand.u32 %v7682, 4294901760
    %v7684 = vsub.f32 %v7682, %v7683
    %v7685 = vand.u32 %v7684, 4294901760
    %7686 = vmatmul.mubr.f32.gmra.mrb[0].mxu0 %v7685
    %v7687 = vpop.f32.mrb[0].mxu0
    %v7688 = vadd.f32 %v7576, %v7687
    %v7689 = vpop.f32.mrb[0].mxu0
    %7690 = vdwg.mxu0
    %7691 = vmatprep.subr.mxu0 0.0
    %v7692 = vand.u32 %v3908, 4294901760
    %v7693 = vsub.f32 %v3908, %v7692
    %v7694 = vand.u32 %v7693, 4294901760
    %v7695 = vsub.f32 %v7693, %v7694
    %v7696 = vand.u32 %v7695, 4294901760
    %7697 = vmatpush1.msra.mxu0 %v7696
    %7698 = vmatprep.subr.mxu0 0.0
    %v7699 = vand.u32 %v3909, 4294901760
    %v7700 = vsub.f32 %v3909, %v7699
    %v7701 = vand.u32 %v7700, 4294901760
    %v7702 = vsub.f32 %v7700, %v7701
    %v7703 = vand.u32 %v7702, 4294901760
    %7704 = vmatpush1.msra.mxu0 %v7703
    %7705 = vmatprep.subr.mxu0 0.0
    %v7706 = vand.u32 %v3910, 4294901760
    %v7707 = vsub.f32 %v3910, %v7706
    %v7708 = vand.u32 %v7707, 4294901760
    %v7709 = vsub.f32 %v7707, %v7708
    %v7710 = vand.u32 %v7709, 4294901760
    %7711 = vmatpush1.msra.mxu0 %v7710
    %7712 = vmatprep.subr.mxu0 0.0
    %v7713 = vand.u32 %v3911, 4294901760
    %v7714 = vsub.f32 %v3911, %v7713
    %v7715 = vand.u32 %v7714, 4294901760
    %v7716 = vsub.f32 %v7714, %v7715
    %v7717 = vand.u32 %v7716, 4294901760
    %7718 = vmatpush1.msra.mxu0 %v7717
    %7719 = vmatprep.subr.mxu0 0.0
    %v7720 = vand.u32 %v3912, 4294901760
    %v7721 = vsub.f32 %v3912, %v7720
    %v7722 = vand.u32 %v7721, 4294901760
    %v7723 = vsub.f32 %v7721, %v7722
    %v7724 = vand.u32 %v7723, 4294901760
    %7725 = vmatpush1.msra.mxu0 %v7724
    %7726 = vmatprep.subr.mxu0 0.0
    %v7727 = vand.u32 %v3913, 4294901760
    %v7728 = vsub.f32 %v3913, %v7727
    %v7729 = vand.u32 %v7728, 4294901760
    %v7730 = vsub.f32 %v7728, %v7729
    %v7731 = vand.u32 %v7730, 4294901760
    %7732 = vmatpush1.msra.mxu0 %v7731
    %7733 = vmatprep.subr.mxu0 0.0
    %v7734 = vand.u32 %v3914, 4294901760
    %v7735 = vsub.f32 %v3914, %v7734
    %v7736 = vand.u32 %v7735, 4294901760
    %v7737 = vsub.f32 %v7735, %v7736
    %v7738 = vand.u32 %v7737, 4294901760
    %7739 = vmatpush1.msra.mxu0 %v7738
    %7740 = vmatprep.subr.mxu0 0.0
    %v7741 = vand.u32 %v3915, 4294901760
    %v7742 = vsub.f32 %v3915, %v7741
    %v7743 = vand.u32 %v7742, 4294901760
    %v7744 = vsub.f32 %v7742, %v7743
    %v7745 = vand.u32 %v7744, 4294901760
    %7746 = vmatpush1.msra.mxu0 %v7745
    %7747 = vmatprep.subr.mxu0 0.0
    %v7748 = vand.u32 %v3916, 4294901760
    %v7749 = vsub.f32 %v3916, %v7748
    %v7750 = vand.u32 %v7749, 4294901760
    %v7751 = vsub.f32 %v7749, %v7750
    %v7752 = vand.u32 %v7751, 4294901760
    %7753 = vmatpush1.msra.mxu0 %v7752
    %7754 = vmatprep.subr.mxu0 0.0
    %v7755 = vand.u32 %v3917, 4294901760
    %v7756 = vsub.f32 %v3917, %v7755
    %v7757 = vand.u32 %v7756, 4294901760
    %v7758 = vsub.f32 %v7756, %v7757
    %v7759 = vand.u32 %v7758, 4294901760
    %7760 = vmatpush1.msra.mxu0 %v7759
    %7761 = vmatprep.subr.mxu0 0.0
    %v7762 = vand.u32 %v3918, 4294901760
    %v7763 = vsub.f32 %v3918, %v7762
    %v7764 = vand.u32 %v7763, 4294901760
    %v7765 = vsub.f32 %v7763, %v7764
    %v7766 = vand.u32 %v7765, 4294901760
    %7767 = vmatpush1.msra.mxu0 %v7766
    %7768 = vmatprep.subr.mxu0 0.0
    %v7769 = vand.u32 %v3919, 4294901760
    %v7770 = vsub.f32 %v3919, %v7769
    %v7771 = vand.u32 %v7770, 4294901760
    %v7772 = vsub.f32 %v7770, %v7771
    %v7773 = vand.u32 %v7772, 4294901760
    %7774 = vmatpush1.msra.mxu0 %v7773
    %7775 = vmatprep.subr.mxu0 0.0
    %v7776 = vand.u32 %v3920, 4294901760
    %v7777 = vsub.f32 %v3920, %v7776
    %v7778 = vand.u32 %v7777, 4294901760
    %v7779 = vsub.f32 %v7777, %v7778
    %v7780 = vand.u32 %v7779, 4294901760
    %7781 = vmatpush1.msra.mxu0 %v7780
    %7782 = vmatprep.subr.mxu0 0.0
    %v7783 = vand.u32 %v3921, 4294901760
    %v7784 = vsub.f32 %v3921, %v7783
    %v7785 = vand.u32 %v7784, 4294901760
    %v7786 = vsub.f32 %v7784, %v7785
    %v7787 = vand.u32 %v7786, 4294901760
    %7788 = vmatpush1.msra.mxu0 %v7787
    %7789 = vmatprep.subr.mxu0 0.0
    %v7790 = vand.u32 %v3922, 4294901760
    %v7791 = vsub.f32 %v3922, %v7790
    %v7792 = vand.u32 %v7791, 4294901760
    %v7793 = vsub.f32 %v7791, %v7792
    %v7794 = vand.u32 %v7793, 4294901760
    %7795 = vmatpush1.msra.mxu0 %v7794
    %7796 = vmatprep.subr.mxu0 0.0
    %v7797 = vand.u32 %v3923, 4294901760
    %v7798 = vsub.f32 %v3923, %v7797
    %v7799 = vand.u32 %v7798, 4294901760
    %v7800 = vsub.f32 %v7798, %v7799
    %v7801 = vand.u32 %v7800, 4294901760
    %7802 = vmatpush1.msra.mxu0 %v7801
    %7803 = vmatprep.subr.mxu0 0.0
    %v7804 = vand.u32 %v3924, 4294901760
    %v7805 = vsub.f32 %v3924, %v7804
    %v7806 = vand.u32 %v7805, 4294901760
    %v7807 = vsub.f32 %v7805, %v7806
    %v7808 = vand.u32 %v7807, 4294901760
    %7809 = vmatpush1.msra.mxu0 %v7808
    %7810 = vmatprep.subr.mxu0 0.0
    %v7811 = vand.u32 %v3925, 4294901760
    %v7812 = vsub.f32 %v3925, %v7811
    %v7813 = vand.u32 %v7812, 4294901760
    %v7814 = vsub.f32 %v7812, %v7813
    %v7815 = vand.u32 %v7814, 4294901760
    %7816 = vmatpush1.msra.mxu0 %v7815
    %7817 = vmatprep.subr.mxu0 0.0
    %v7818 = vand.u32 %v3926, 4294901760
    %v7819 = vsub.f32 %v3926, %v7818
    %v7820 = vand.u32 %v7819, 4294901760
    %v7821 = vsub.f32 %v7819, %v7820
    %v7822 = vand.u32 %v7821, 4294901760
    %7823 = vmatpush1.msra.mxu0 %v7822
    %7824 = vmatprep.subr.mxu0 0.0
    %v7825 = vand.u32 %v3927, 4294901760
    %v7826 = vsub.f32 %v3927, %v7825
    %v7827 = vand.u32 %v7826, 4294901760
    %v7828 = vsub.f32 %v7826, %v7827
    %v7829 = vand.u32 %v7828, 4294901760
    %7830 = vmatpush1.msra.mxu0 %v7829
    %7831 = vmatprep.subr.mxu0 0.0
    %v7832 = vand.u32 %v3928, 4294901760
    %v7833 = vsub.f32 %v3928, %v7832
    %v7834 = vand.u32 %v7833, 4294901760
    %v7835 = vsub.f32 %v7833, %v7834
    %v7836 = vand.u32 %v7835, 4294901760
    %7837 = vmatpush1.msra.mxu0 %v7836
    %7838 = vmatprep.subr.mxu0 0.0
    %v7839 = vand.u32 %v3929, 4294901760
    %v7840 = vsub.f32 %v3929, %v7839
    %v7841 = vand.u32 %v7840, 4294901760
    %v7842 = vsub.f32 %v7840, %v7841
    %v7843 = vand.u32 %v7842, 4294901760
    %7844 = vmatpush1.msra.mxu0 %v7843
    %7845 = vmatprep.subr.mxu0 0.0
    %v7846 = vand.u32 %v3930, 4294901760
    %v7847 = vsub.f32 %v3930, %v7846
    %v7848 = vand.u32 %v7847, 4294901760
    %v7849 = vsub.f32 %v7847, %v7848
    %v7850 = vand.u32 %v7849, 4294901760
    %7851 = vmatpush1.msra.mxu0 %v7850
    %7852 = vmatprep.subr.mxu0 0.0
    %v7853 = vand.u32 %v3931, 4294901760
    %v7854 = vsub.f32 %v3931, %v7853
    %v7855 = vand.u32 %v7854, 4294901760
    %v7856 = vsub.f32 %v7854, %v7855
    %v7857 = vand.u32 %v7856, 4294901760
    %7858 = vmatpush1.msra.mxu0 %v7857
    %7859 = vmatprep.subr.mxu0 0.0
    %v7860 = vand.u32 %v3932, 4294901760
    %v7861 = vsub.f32 %v3932, %v7860
    %v7862 = vand.u32 %v7861, 4294901760
    %v7863 = vsub.f32 %v7861, %v7862
    %v7864 = vand.u32 %v7863, 4294901760
    %7865 = vmatpush1.msra.mxu0 %v7864
    %7866 = vmatprep.subr.mxu0 0.0
    %v7867 = vand.u32 %v3933, 4294901760
    %v7868 = vsub.f32 %v3933, %v7867
    %v7869 = vand.u32 %v7868, 4294901760
    %v7870 = vsub.f32 %v7868, %v7869
    %v7871 = vand.u32 %v7870, 4294901760
    %7872 = vmatpush1.msra.mxu0 %v7871
    %7873 = vmatprep.subr.mxu0 0.0
    %v7874 = vand.u32 %v3934, 4294901760
    %v7875 = vsub.f32 %v3934, %v7874
    %v7876 = vand.u32 %v7875, 4294901760
    %v7877 = vsub.f32 %v7875, %v7876
    %v7878 = vand.u32 %v7877, 4294901760
    %7879 = vmatpush1.msra.mxu0 %v7878
    %7880 = vmatprep.subr.mxu0 0.0
    %v7881 = vand.u32 %v3935, 4294901760
    %v7882 = vsub.f32 %v3935, %v7881
    %v7883 = vand.u32 %v7882, 4294901760
    %v7884 = vsub.f32 %v7882, %v7883
    %v7885 = vand.u32 %v7884, 4294901760
    %7886 = vmatpush1.msra.mxu0 %v7885
    %7887 = vmatprep.subr.mxu0 0.0
    %v7888 = vand.u32 %v3936, 4294901760
    %v7889 = vsub.f32 %v3936, %v7888
    %v7890 = vand.u32 %v7889, 4294901760
    %v7891 = vsub.f32 %v7889, %v7890
    %v7892 = vand.u32 %v7891, 4294901760
    %7893 = vmatpush1.msra.mxu0 %v7892
    %7894 = vmatprep.subr.mxu0 0.0
    %v7895 = vand.u32 %v3937, 4294901760
    %v7896 = vsub.f32 %v3937, %v7895
    %v7897 = vand.u32 %v7896, 4294901760
    %v7898 = vsub.f32 %v7896, %v7897
    %v7899 = vand.u32 %v7898, 4294901760
    %7900 = vmatpush1.msra.mxu0 %v7899
    %7901 = vmatprep.subr.mxu0 0.0
    %v7902 = vand.u32 %v3938, 4294901760
    %v7903 = vsub.f32 %v3938, %v7902
    %v7904 = vand.u32 %v7903, 4294901760
    %v7905 = vsub.f32 %v7903, %v7904
    %v7906 = vand.u32 %v7905, 4294901760
    %7907 = vmatpush1.msra.mxu0 %v7906
    %7908 = vmatprep.subr.mxu0 0.0
    %v7909 = vand.u32 %v3939, 4294901760
    %v7910 = vsub.f32 %v3939, %v7909
    %v7911 = vand.u32 %v7910, 4294901760
    %v7912 = vsub.f32 %v7910, %v7911
    %v7913 = vand.u32 %v7912, 4294901760
    %7914 = vmatpush1.msra.mxu0 %v7913
    %v7915 = vand.u32 %v4096, 4294901760
    %7916 = vmatprep.mubr.f32.mxu0 %v7915
    %v7917 = vand.u32 %v4088, 4294901760
    %7918 = vmatmul.mubr.f32.gmra.mrb[0].mxu0 %v7917
    %v7919 = vpop.f32.mrb[0].mxu0
    %v7920 = vadd.f32 %v7688, %v7919
    %v7921 = vpop.f32.mrb[0].mxu0
    %7922 = vdwg.mxu0
    %7923 = vmatprep.subr.mxu0 0.0
    %v7924 = vand.u32 %v3908, 4294901760
    %v7925 = vsub.f32 %v3908, %v7924
    %7926 = vmatpush1.msra.mxu0 %v7925
    %7927 = vmatprep.subr.mxu0 0.0
    %v7928 = vand.u32 %v3909, 4294901760
    %v7929 = vsub.f32 %v3909, %v7928
    %7930 = vmatpush1.msra.mxu0 %v7929
    %7931 = vmatprep.subr.mxu0 0.0
    %v7932 = vand.u32 %v3910, 4294901760
    %v7933 = vsub.f32 %v3910, %v7932
    %7934 = vmatpush1.msra.mxu0 %v7933
    %7935 = vmatprep.subr.mxu0 0.0
    %v7936 = vand.u32 %v3911, 4294901760
    %v7937 = vsub.f32 %v3911, %v7936
    %7938 = vmatpush1.msra.mxu0 %v7937
    %7939 = vmatprep.subr.mxu0 0.0
    %v7940 = vand.u32 %v3912, 4294901760
    %v7941 = vsub.f32 %v3912, %v7940
    %7942 = vmatpush1.msra.mxu0 %v7941
    %7943 = vmatprep.subr.mxu0 0.0
    %v7944 = vand.u32 %v3913, 4294901760
    %v7945 = vsub.f32 %v3913, %v7944
    %7946 = vmatpush1.msra.mxu0 %v7945
    %7947 = vmatprep.subr.mxu0 0.0
    %v7948 = vand.u32 %v3914, 4294901760
    %v7949 = vsub.f32 %v3914, %v7948
    %7950 = vmatpush1.msra.mxu0 %v7949
    %7951 = vmatprep.subr.mxu0 0.0
    %v7952 = vand.u32 %v3915, 4294901760
    %v7953 = vsub.f32 %v3915, %v7952
    %7954 = vmatpush1.msra.mxu0 %v7953
    %7955 = vmatprep.subr.mxu0 0.0
    %v7956 = vand.u32 %v3916, 4294901760
    %v7957 = vsub.f32 %v3916, %v7956
    %7958 = vmatpush1.msra.mxu0 %v7957
    %7959 = vmatprep.subr.mxu0 0.0
    %v7960 = vand.u32 %v3917, 4294901760
    %v7961 = vsub.f32 %v3917, %v7960
    %7962 = vmatpush1.msra.mxu0 %v7961
    %7963 = vmatprep.subr.mxu0 0.0
    %v7964 = vand.u32 %v3918, 4294901760
    %v7965 = vsub.f32 %v3918, %v7964
    %7966 = vmatpush1.msra.mxu0 %v7965
    %7967 = vmatprep.subr.mxu0 0.0
    %v7968 = vand.u32 %v3919, 4294901760
    %v7969 = vsub.f32 %v3919, %v7968
    %7970 = vmatpush1.msra.mxu0 %v7969
    %7971 = vmatprep.subr.mxu0 0.0
    %v7972 = vand.u32 %v3920, 4294901760
    %v7973 = vsub.f32 %v3920, %v7972
    %7974 = vmatpush1.msra.mxu0 %v7973
    %7975 = vmatprep.subr.mxu0 0.0
    %v7976 = vand.u32 %v3921, 4294901760
    %v7977 = vsub.f32 %v3921, %v7976
    %7978 = vmatpush1.msra.mxu0 %v7977
    %7979 = vmatprep.subr.mxu0 0.0
    %v7980 = vand.u32 %v3922, 4294901760
    %v7981 = vsub.f32 %v3922, %v7980
    %7982 = vmatpush1.msra.mxu0 %v7981
    %7983 = vmatprep.subr.mxu0 0.0
    %v7984 = vand.u32 %v3923, 4294901760
    %v7985 = vsub.f32 %v3923, %v7984
    %7986 = vmatpush1.msra.mxu0 %v7985
    %7987 = vmatprep.subr.mxu0 0.0
    %v7988 = vand.u32 %v3924, 4294901760
    %v7989 = vsub.f32 %v3924, %v7988
    %7990 = vmatpush1.msra.mxu0 %v7989
    %7991 = vmatprep.subr.mxu0 0.0
    %v7992 = vand.u32 %v3925, 4294901760
    %v7993 = vsub.f32 %v3925, %v7992
    %7994 = vmatpush1.msra.mxu0 %v7993
    %7995 = vmatprep.subr.mxu0 0.0
    %v7996 = vand.u32 %v3926, 4294901760
    %v7997 = vsub.f32 %v3926, %v7996
    %7998 = vmatpush1.msra.mxu0 %v7997
    %7999 = vmatprep.subr.mxu0 0.0
    %v8000 = vand.u32 %v3927, 4294901760
    %v8001 = vsub.f32 %v3927, %v8000
    %8002 = vmatpush1.msra.mxu0 %v8001
    %8003 = vmatprep.subr.mxu0 0.0
    %v8004 = vand.u32 %v3928, 4294901760
    %v8005 = vsub.f32 %v3928, %v8004
    %8006 = vmatpush1.msra.mxu0 %v8005
    %8007 = vmatprep.subr.mxu0 0.0
    %v8008 = vand.u32 %v3929, 4294901760
    %v8009 = vsub.f32 %v3929, %v8008
    %8010 = vmatpush1.msra.mxu0 %v8009
    %8011 = vmatprep.subr.mxu0 0.0
    %v8012 = vand.u32 %v3930, 4294901760
    %v8013 = vsub.f32 %v3930, %v8012
    %8014 = vmatpush1.msra.mxu0 %v8013
    %8015 = vmatprep.subr.mxu0 0.0
    %v8016 = vand.u32 %v3931, 4294901760
    %v8017 = vsub.f32 %v3931, %v8016
    %8018 = vmatpush1.msra.mxu0 %v8017
    %8019 = vmatprep.subr.mxu0 0.0
    %v8020 = vand.u32 %v3932, 4294901760
    %v8021 = vsub.f32 %v3932, %v8020
    %8022 = vmatpush1.msra.mxu0 %v8021
    %8023 = vmatprep.subr.mxu0 0.0
    %v8024 = vand.u32 %v3933, 4294901760
    %v8025 = vsub.f32 %v3933, %v8024
    %8026 = vmatpush1.msra.mxu0 %v8025
    %8027 = vmatprep.subr.mxu0 0.0
    %v8028 = vand.u32 %v3934, 4294901760
    %v8029 = vsub.f32 %v3934, %v8028
    %8030 = vmatpush1.msra.mxu0 %v8029
    %8031 = vmatprep.subr.mxu0 0.0
    %v8032 = vand.u32 %v3935, 4294901760
    %v8033 = vsub.f32 %v3935, %v8032
    %8034 = vmatpush1.msra.mxu0 %v8033
    %8035 = vmatprep.subr.mxu0 0.0
    %v8036 = vand.u32 %v3936, 4294901760
    %v8037 = vsub.f32 %v3936, %v8036
    %8038 = vmatpush1.msra.mxu0 %v8037
    %8039 = vmatprep.subr.mxu0 0.0
    %v8040 = vand.u32 %v3937, 4294901760
    %v8041 = vsub.f32 %v3937, %v8040
    %8042 = vmatpush1.msra.mxu0 %v8041
    %8043 = vmatprep.subr.mxu0 0.0
    %v8044 = vand.u32 %v3938, 4294901760
    %v8045 = vsub.f32 %v3938, %v8044
    %8046 = vmatpush1.msra.mxu0 %v8045
    %8047 = vmatprep.subr.mxu0 0.0
    %v8048 = vand.u32 %v3939, 4294901760
    %v8049 = vsub.f32 %v3939, %v8048
    %8050 = vmatpush1.msra.mxu0 %v8049
    %v8051 = vand.u32 %v4096, 4294901760
    %v8052 = vsub.f32 %v4096, %v8051
    %8053 = vmatprep.mubr.f32.mxu0 %v8052
    %v8054 = vand.u32 %v4088, 4294901760
    %v8055 = vsub.f32 %v4088, %v8054
    %8056 = vmatmul.mubr.f32.gmra.mrb[0].mxu0 %v8055
    %v8057 = vpop.f32.mrb[0].mxu0
    %v8058 = vadd.f32 %v7920, %v8057
    %v8059 = vpop.f32.mrb[0].mxu0
    %8060 = vdwg.mxu0
    %8061 = vmatprep.subr.mxu0 0.0
    %v8062 = vand.u32 %v3908, 4294901760
    %8063 = vmatpush1.msra.mxu0 %v8062
    %8064 = vmatprep.subr.mxu0 0.0
    %v8065 = vand.u32 %v3909, 4294901760
    %8066 = vmatpush1.msra.mxu0 %v8065
    %8067 = vmatprep.subr.mxu0 0.0
    %v8068 = vand.u32 %v3910, 4294901760
    %8069 = vmatpush1.msra.mxu0 %v8068
    %8070 = vmatprep.subr.mxu0 0.0
    %v8071 = vand.u32 %v3911, 4294901760
    %8072 = vmatpush1.msra.mxu0 %v8071
    %8073 = vmatprep.subr.mxu0 0.0
    %v8074 = vand.u32 %v3912, 4294901760
    %8075 = vmatpush1.msra.mxu0 %v8074
    %8076 = vmatprep.subr.mxu0 0.0
    %v8077 = vand.u32 %v3913, 4294901760
    %8078 = vmatpush1.msra.mxu0 %v8077
    %8079 = vmatprep.subr.mxu0 0.0
    %v8080 = vand.u32 %v3914, 4294901760
    %8081 = vmatpush1.msra.mxu0 %v8080
    %8082 = vmatprep.subr.mxu0 0.0
    %v8083 = vand.u32 %v3915, 4294901760
    %8084 = vmatpush1.msra.mxu0 %v8083
    %8085 = vmatprep.subr.mxu0 0.0
    %v8086 = vand.u32 %v3916, 4294901760
    %8087 = vmatpush1.msra.mxu0 %v8086
    %8088 = vmatprep.subr.mxu0 0.0
    %v8089 = vand.u32 %v3917, 4294901760
    %8090 = vmatpush1.msra.mxu0 %v8089
    %8091 = vmatprep.subr.mxu0 0.0
    %v8092 = vand.u32 %v3918, 4294901760
    %8093 = vmatpush1.msra.mxu0 %v8092
    %8094 = vmatprep.subr.mxu0 0.0
    %v8095 = vand.u32 %v3919, 4294901760
    %8096 = vmatpush1.msra.mxu0 %v8095
    %8097 = vmatprep.subr.mxu0 0.0
    %v8098 = vand.u32 %v3920, 4294901760
    %8099 = vmatpush1.msra.mxu0 %v8098
    %8100 = vmatprep.subr.mxu0 0.0
    %v8101 = vand.u32 %v3921, 4294901760
    %8102 = vmatpush1.msra.mxu0 %v8101
    %8103 = vmatprep.subr.mxu0 0.0
    %v8104 = vand.u32 %v3922, 4294901760
    %8105 = vmatpush1.msra.mxu0 %v8104
    %8106 = vmatprep.subr.mxu0 0.0
    %v8107 = vand.u32 %v3923, 4294901760
    %8108 = vmatpush1.msra.mxu0 %v8107
    %8109 = vmatprep.subr.mxu0 0.0
    %v8110 = vand.u32 %v3924, 4294901760
    %8111 = vmatpush1.msra.mxu0 %v8110
    %8112 = vmatprep.subr.mxu0 0.0
    %v8113 = vand.u32 %v3925, 4294901760
    %8114 = vmatpush1.msra.mxu0 %v8113
    %8115 = vmatprep.subr.mxu0 0.0
    %v8116 = vand.u32 %v3926, 4294901760
    %8117 = vmatpush1.msra.mxu0 %v8116
    %8118 = vmatprep.subr.mxu0 0.0
    %v8119 = vand.u32 %v3927, 4294901760
    %8120 = vmatpush1.msra.mxu0 %v8119
    %8121 = vmatprep.subr.mxu0 0.0
    %v8122 = vand.u32 %v3928, 4294901760
    %8123 = vmatpush1.msra.mxu0 %v8122
    %8124 = vmatprep.subr.mxu0 0.0
    %v8125 = vand.u32 %v3929, 4294901760
    %8126 = vmatpush1.msra.mxu0 %v8125
    %8127 = vmatprep.subr.mxu0 0.0
    %v8128 = vand.u32 %v3930, 4294901760
    %8129 = vmatpush1.msra.mxu0 %v8128
    %8130 = vmatprep.subr.mxu0 0.0
    %v8131 = vand.u32 %v3931, 4294901760
    %8132 = vmatpush1.msra.mxu0 %v8131
    %8133 = vmatprep.subr.mxu0 0.0
    %v8134 = vand.u32 %v3932, 4294901760
    %8135 = vmatpush1.msra.mxu0 %v8134
    %8136 = vmatprep.subr.mxu0 0.0
    %v8137 = vand.u32 %v3933, 4294901760
    %8138 = vmatpush1.msra.mxu0 %v8137
    %8139 = vmatprep.subr.mxu0 0.0
    %v8140 = vand.u32 %v3934, 4294901760
    %8141 = vmatpush1.msra.mxu0 %v8140
    %8142 = vmatprep.subr.mxu0 0.0
    %v8143 = vand.u32 %v3935, 4294901760
    %8144 = vmatpush1.msra.mxu0 %v8143
    %8145 = vmatprep.subr.mxu0 0.0
    %v8146 = vand.u32 %v3936, 4294901760
    %8147 = vmatpush1.msra.mxu0 %v8146
    %8148 = vmatprep.subr.mxu0 0.0
    %v8149 = vand.u32 %v3937, 4294901760
    %8150 = vmatpush1.msra.mxu0 %v8149
    %8151 = vmatprep.subr.mxu0 0.0
    %v8152 = vand.u32 %v3938, 4294901760
    %8153 = vmatpush1.msra.mxu0 %v8152
    %8154 = vmatprep.subr.mxu0 0.0
    %v8155 = vand.u32 %v3939, 4294901760
    %8156 = vmatpush1.msra.mxu0 %v8155
    %v8157 = vand.u32 %v4096, 4294901760
    %v8158 = vsub.f32 %v4096, %v8157
    %v8159 = vand.u32 %v8158, 4294901760
    %8160 = vmatprep.mubr.f32.mxu0 %v8159
    %v8161 = vand.u32 %v4088, 4294901760
    %v8162 = vsub.f32 %v4088, %v8161
    %v8163 = vand.u32 %v8162, 4294901760
    %8164 = vmatmul.mubr.f32.gmra.mrb[0].mxu0 %v8163
    %v8165 = vpop.f32.mrb[0].mxu0
    %v8166 = vadd.f32 %v8058, %v8165
    %v8167 = vpop.f32.mrb[0].mxu0
    %8168 = vdwg.mxu0
    %8169 = vmatprep.subr.mxu0 0.0
    %v8170 = vand.u32 %v3908, 4294901760
    %v8171 = vsub.f32 %v3908, %v8170
    %v8172 = vand.u32 %v8171, 4294901760
    %8173 = vmatpush1.msra.mxu0 %v8172
    %8174 = vmatprep.subr.mxu0 0.0
    %v8175 = vand.u32 %v3909, 4294901760
    %v8176 = vsub.f32 %v3909, %v8175
    %v8177 = vand.u32 %v8176, 4294901760
    %8178 = vmatpush1.msra.mxu0 %v8177
    %8179 = vmatprep.subr.mxu0 0.0
    %v8180 = vand.u32 %v3910, 4294901760
    %v8181 = vsub.f32 %v3910, %v8180
    %v8182 = vand.u32 %v8181, 4294901760
    %8183 = vmatpush1.msra.mxu0 %v8182
    %8184 = vmatprep.subr.mxu0 0.0
    %v8185 = vand.u32 %v3911, 4294901760
    %v8186 = vsub.f32 %v3911, %v8185
    %v8187 = vand.u32 %v8186, 4294901760
    %8188 = vmatpush1.msra.mxu0 %v8187
    %8189 = vmatprep.subr.mxu0 0.0
    %v8190 = vand.u32 %v3912, 4294901760
    %v8191 = vsub.f32 %v3912, %v8190
    %v8192 = vand.u32 %v8191, 4294901760
    %8193 = vmatpush1.msra.mxu0 %v8192
    %8194 = vmatprep.subr.mxu0 0.0
    %v8195 = vand.u32 %v3913, 4294901760
    %v8196 = vsub.f32 %v3913, %v8195
    %v8197 = vand.u32 %v8196, 4294901760
    %8198 = vmatpush1.msra.mxu0 %v8197
    %8199 = vmatprep.subr.mxu0 0.0
    %v8200 = vand.u32 %v3914, 4294901760
    %v8201 = vsub.f32 %v3914, %v8200
    %v8202 = vand.u32 %v8201, 4294901760
    %8203 = vmatpush1.msra.mxu0 %v8202
    %8204 = vmatprep.subr.mxu0 0.0
    %v8205 = vand.u32 %v3915, 4294901760
    %v8206 = vsub.f32 %v3915, %v8205
    %v8207 = vand.u32 %v8206, 4294901760
    %8208 = vmatpush1.msra.mxu0 %v8207
    %8209 = vmatprep.subr.mxu0 0.0
    %v8210 = vand.u32 %v3916, 4294901760
    %v8211 = vsub.f32 %v3916, %v8210
    %v8212 = vand.u32 %v8211, 4294901760
    %8213 = vmatpush1.msra.mxu0 %v8212
    %8214 = vmatprep.subr.mxu0 0.0
    %v8215 = vand.u32 %v3917, 4294901760
    %v8216 = vsub.f32 %v3917, %v8215
    %v8217 = vand.u32 %v8216, 4294901760
    %8218 = vmatpush1.msra.mxu0 %v8217
    %8219 = vmatprep.subr.mxu0 0.0
    %v8220 = vand.u32 %v3918, 4294901760
    %v8221 = vsub.f32 %v3918, %v8220
    %v8222 = vand.u32 %v8221, 4294901760
    %8223 = vmatpush1.msra.mxu0 %v8222
    %8224 = vmatprep.subr.mxu0 0.0
    %v8225 = vand.u32 %v3919, 4294901760
    %v8226 = vsub.f32 %v3919, %v8225
    %v8227 = vand.u32 %v8226, 4294901760
    %8228 = vmatpush1.msra.mxu0 %v8227
    %8229 = vmatprep.subr.mxu0 0.0
    %v8230 = vand.u32 %v3920, 4294901760
    %v8231 = vsub.f32 %v3920, %v8230
    %v8232 = vand.u32 %v8231, 4294901760
    %8233 = vmatpush1.msra.mxu0 %v8232
    %8234 = vmatprep.subr.mxu0 0.0
    %v8235 = vand.u32 %v3921, 4294901760
    %v8236 = vsub.f32 %v3921, %v8235
    %v8237 = vand.u32 %v8236, 4294901760
    %8238 = vmatpush1.msra.mxu0 %v8237
    %8239 = vmatprep.subr.mxu0 0.0
    %v8240 = vand.u32 %v3922, 4294901760
    %v8241 = vsub.f32 %v3922, %v8240
    %v8242 = vand.u32 %v8241, 4294901760
    %8243 = vmatpush1.msra.mxu0 %v8242
    %8244 = vmatprep.subr.mxu0 0.0
    %v8245 = vand.u32 %v3923, 4294901760
    %v8246 = vsub.f32 %v3923, %v8245
    %v8247 = vand.u32 %v8246, 4294901760
    %8248 = vmatpush1.msra.mxu0 %v8247
    %8249 = vmatprep.subr.mxu0 0.0
    %v8250 = vand.u32 %v3924, 4294901760
    %v8251 = vsub.f32 %v3924, %v8250
    %v8252 = vand.u32 %v8251, 4294901760
    %8253 = vmatpush1.msra.mxu0 %v8252
    %8254 = vmatprep.subr.mxu0 0.0
    %v8255 = vand.u32 %v3925, 4294901760
    %v8256 = vsub.f32 %v3925, %v8255
    %v8257 = vand.u32 %v8256, 4294901760
    %8258 = vmatpush1.msra.mxu0 %v8257
    %8259 = vmatprep.subr.mxu0 0.0
    %v8260 = vand.u32 %v3926, 4294901760
    %v8261 = vsub.f32 %v3926, %v8260
    %v8262 = vand.u32 %v8261, 4294901760
    %8263 = vmatpush1.msra.mxu0 %v8262
    %8264 = vmatprep.subr.mxu0 0.0
    %v8265 = vand.u32 %v3927, 4294901760
    %v8266 = vsub.f32 %v3927, %v8265
    %v8267 = vand.u32 %v8266, 4294901760
    %8268 = vmatpush1.msra.mxu0 %v8267
    %8269 = vmatprep.subr.mxu0 0.0
    %v8270 = vand.u32 %v3928, 4294901760
    %v8271 = vsub.f32 %v3928, %v8270
    %v8272 = vand.u32 %v8271, 4294901760
    %8273 = vmatpush1.msra.mxu0 %v8272
    %8274 = vmatprep.subr.mxu0 0.0
    %v8275 = vand.u32 %v3929, 4294901760
    %v8276 = vsub.f32 %v3929, %v8275
    %v8277 = vand.u32 %v8276, 4294901760
    %8278 = vmatpush1.msra.mxu0 %v8277
    %8279 = vmatprep.subr.mxu0 0.0
    %v8280 = vand.u32 %v3930, 4294901760
    %v8281 = vsub.f32 %v3930, %v8280
    %v8282 = vand.u32 %v8281, 4294901760
    %8283 = vmatpush1.msra.mxu0 %v8282
    %8284 = vmatprep.subr.mxu0 0.0
    %v8285 = vand.u32 %v3931, 4294901760
    %v8286 = vsub.f32 %v3931, %v8285
    %v8287 = vand.u32 %v8286, 4294901760
    %8288 = vmatpush1.msra.mxu0 %v8287
    %8289 = vmatprep.subr.mxu0 0.0
    %v8290 = vand.u32 %v3932, 4294901760
    %v8291 = vsub.f32 %v3932, %v8290
    %v8292 = vand.u32 %v8291, 4294901760
    %8293 = vmatpush1.msra.mxu0 %v8292
    %8294 = vmatprep.subr.mxu0 0.0
    %v8295 = vand.u32 %v3933, 4294901760
    %v8296 = vsub.f32 %v3933, %v8295
    %v8297 = vand.u32 %v8296, 4294901760
    %8298 = vmatpush1.msra.mxu0 %v8297
    %8299 = vmatprep.subr.mxu0 0.0
    %v8300 = vand.u32 %v3934, 4294901760
    %v8301 = vsub.f32 %v3934, %v8300
    %v8302 = vand.u32 %v8301, 4294901760
    %8303 = vmatpush1.msra.mxu0 %v8302
    %8304 = vmatprep.subr.mxu0 0.0
    %v8305 = vand.u32 %v3935, 4294901760
    %v8306 = vsub.f32 %v3935, %v8305
    %v8307 = vand.u32 %v8306, 4294901760
    %8308 = vmatpush1.msra.mxu0 %v8307
    %8309 = vmatprep.subr.mxu0 0.0
    %v8310 = vand.u32 %v3936, 4294901760
    %v8311 = vsub.f32 %v3936, %v8310
    %v8312 = vand.u32 %v8311, 4294901760
    %8313 = vmatpush1.msra.mxu0 %v8312
    %8314 = vmatprep.subr.mxu0 0.0
    %v8315 = vand.u32 %v3937, 4294901760
    %v8316 = vsub.f32 %v3937, %v8315
    %v8317 = vand.u32 %v8316, 4294901760
    %8318 = vmatpush1.msra.mxu0 %v8317
    %8319 = vmatprep.subr.mxu0 0.0
    %v8320 = vand.u32 %v3938, 4294901760
    %v8321 = vsub.f32 %v3938, %v8320
    %v8322 = vand.u32 %v8321, 4294901760
    %8323 = vmatpush1.msra.mxu0 %v8322
    %8324 = vmatprep.subr.mxu0 0.0
    %v8325 = vand.u32 %v3939, 4294901760
    %v8326 = vsub.f32 %v3939, %v8325
    %v8327 = vand.u32 %v8326, 4294901760
    %8328 = vmatpush1.msra.mxu0 %v8327
    %v8329 = vand.u32 %v4096, 4294901760
    %8330 = vmatprep.mubr.f32.mxu0 %v8329
    %v8331 = vand.u32 %v4088, 4294901760
    %8332 = vmatmul.mubr.f32.gmra.mrb[0].mxu0 %v8331
    %v8333 = vpop.f32.mrb[0].mxu0
    %v8334 = vadd.f32 %v8166, %v8333
    %v8335 = vpop.f32.mrb[0].mxu0
    %8336 = vdwg.mxu0
    %8337 = vmatprep.subr.mxu0 0.0
    %v8338 = vand.u32 %v3908, 4294901760
    %8339 = vmatpush1.msra.mxu0 %v8338
    %8340 = vmatprep.subr.mxu0 0.0
    %v8341 = vand.u32 %v3909, 4294901760
    %8342 = vmatpush1.msra.mxu0 %v8341
    %8343 = vmatprep.subr.mxu0 0.0
    %v8344 = vand.u32 %v3910, 4294901760
    %8345 = vmatpush1.msra.mxu0 %v8344
    %8346 = vmatprep.subr.mxu0 0.0
    %v8347 = vand.u32 %v3911, 4294901760
    %8348 = vmatpush1.msra.mxu0 %v8347
    %8349 = vmatprep.subr.mxu0 0.0
    %v8350 = vand.u32 %v3912, 4294901760
    %8351 = vmatpush1.msra.mxu0 %v8350
    %8352 = vmatprep.subr.mxu0 0.0
    %v8353 = vand.u32 %v3913, 4294901760
    %8354 = vmatpush1.msra.mxu0 %v8353
    %8355 = vmatprep.subr.mxu0 0.0
    %v8356 = vand.u32 %v3914, 4294901760
    %8357 = vmatpush1.msra.mxu0 %v8356
    %8358 = vmatprep.subr.mxu0 0.0
    %v8359 = vand.u32 %v3915, 4294901760
    %8360 = vmatpush1.msra.mxu0 %v8359
    %8361 = vmatprep.subr.mxu0 0.0
    %v8362 = vand.u32 %v3916, 4294901760
    %8363 = vmatpush1.msra.mxu0 %v8362
    %8364 = vmatprep.subr.mxu0 0.0
    %v8365 = vand.u32 %v3917, 4294901760
    %8366 = vmatpush1.msra.mxu0 %v8365
    %8367 = vmatprep.subr.mxu0 0.0
    %v8368 = vand.u32 %v3918, 4294901760
    %8369 = vmatpush1.msra.mxu0 %v8368
    %8370 = vmatprep.subr.mxu0 0.0
    %v8371 = vand.u32 %v3919, 4294901760
    %8372 = vmatpush1.msra.mxu0 %v8371
    %8373 = vmatprep.subr.mxu0 0.0
    %v8374 = vand.u32 %v3920, 4294901760
    %8375 = vmatpush1.msra.mxu0 %v8374
    %8376 = vmatprep.subr.mxu0 0.0
    %v8377 = vand.u32 %v3921, 4294901760
    %8378 = vmatpush1.msra.mxu0 %v8377
    %8379 = vmatprep.subr.mxu0 0.0
    %v8380 = vand.u32 %v3922, 4294901760
    %8381 = vmatpush1.msra.mxu0 %v8380
    %8382 = vmatprep.subr.mxu0 0.0
    %v8383 = vand.u32 %v3923, 4294901760
    %8384 = vmatpush1.msra.mxu0 %v8383
    %8385 = vmatprep.subr.mxu0 0.0
    %v8386 = vand.u32 %v3924, 4294901760
    %8387 = vmatpush1.msra.mxu0 %v8386
    %8388 = vmatprep.subr.mxu0 0.0
    %v8389 = vand.u32 %v3925, 4294901760
    %8390 = vmatpush1.msra.mxu0 %v8389
    %8391 = vmatprep.subr.mxu0 0.0
    %v8392 = vand.u32 %v3926, 4294901760
    %8393 = vmatpush1.msra.mxu0 %v8392
    %8394 = vmatprep.subr.mxu0 0.0
    %v8395 = vand.u32 %v3927, 4294901760
    %8396 = vmatpush1.msra.mxu0 %v8395
    %8397 = vmatprep.subr.mxu0 0.0
    %v8398 = vand.u32 %v3928, 4294901760
    %8399 = vmatpush1.msra.mxu0 %v8398
    %8400 = vmatprep.subr.mxu0 0.0
    %v8401 = vand.u32 %v3929, 4294901760
    %8402 = vmatpush1.msra.mxu0 %v8401
    %8403 = vmatprep.subr.mxu0 0.0
    %v8404 = vand.u32 %v3930, 4294901760
    %8405 = vmatpush1.msra.mxu0 %v8404
    %8406 = vmatprep.subr.mxu0 0.0
    %v8407 = vand.u32 %v3931, 4294901760
    %8408 = vmatpush1.msra.mxu0 %v8407
    %8409 = vmatprep.subr.mxu0 0.0
    %v8410 = vand.u32 %v3932, 4294901760
    %8411 = vmatpush1.msra.mxu0 %v8410
    %8412 = vmatprep.subr.mxu0 0.0
    %v8413 = vand.u32 %v3933, 4294901760
    %8414 = vmatpush1.msra.mxu0 %v8413
    %8415 = vmatprep.subr.mxu0 0.0
    %v8416 = vand.u32 %v3934, 4294901760
    %8417 = vmatpush1.msra.mxu0 %v8416
    %8418 = vmatprep.subr.mxu0 0.0
    %v8419 = vand.u32 %v3935, 4294901760
    %8420 = vmatpush1.msra.mxu0 %v8419
    %8421 = vmatprep.subr.mxu0 0.0
    %v8422 = vand.u32 %v3936, 4294901760
    %8423 = vmatpush1.msra.mxu0 %v8422
    %8424 = vmatprep.subr.mxu0 0.0
    %v8425 = vand.u32 %v3937, 4294901760
    %8426 = vmatpush1.msra.mxu0 %v8425
    %8427 = vmatprep.subr.mxu0 0.0
    %v8428 = vand.u32 %v3938, 4294901760
    %8429 = vmatpush1.msra.mxu0 %v8428
    %8430 = vmatprep.subr.mxu0 0.0
    %v8431 = vand.u32 %v3939, 4294901760
    %8432 = vmatpush1.msra.mxu0 %v8431
    %v8433 = vand.u32 %v4096, 4294901760
    %8434 = vmatprep.mubr.f32.mxu0 %v8433
    %v8435 = vand.u32 %v4088, 4294901760
    %8436 = vmatmul.mubr.f32.gmra.mrb[0].mxu0 %v8435
    %v8437 = vpop.f32.mrb[0].mxu0
    %v8438 = vadd.f32 %v8334, %v8437
    %v8439 = vpop.f32.mrb[0].mxu0
    %8440 = vdwg.mxu0
    %8441 = vmatprep.subr.mxu0 0.0
    %v8442 = vand.u32 %v3940, 4294901760
    %8443 = vmatpush1.msra.mxu0 %v8442
    %8444 = vmatprep.subr.mxu0 0.0
    %v8445 = vand.u32 %v3941, 4294901760
    %8446 = vmatpush1.msra.mxu0 %v8445
    %8447 = vmatprep.subr.mxu0 0.0
    %v8448 = vand.u32 %v3942, 4294901760
    %8449 = vmatpush1.msra.mxu0 %v8448
    %8450 = vmatprep.subr.mxu0 0.0
    %v8451 = vand.u32 %v3943, 4294901760
    %8452 = vmatpush1.msra.mxu0 %v8451
    %8453 = vmatprep.subr.mxu0 0.0
    %v8454 = vand.u32 %v3944, 4294901760
    %8455 = vmatpush1.msra.mxu0 %v8454
    %8456 = vmatprep.subr.mxu0 0.0
    %v8457 = vand.u32 %v3945, 4294901760
    %8458 = vmatpush1.msra.mxu0 %v8457
    %8459 = vmatprep.subr.mxu0 0.0
    %v8460 = vand.u32 %v3946, 4294901760
    %8461 = vmatpush1.msra.mxu0 %v8460
    %8462 = vmatprep.subr.mxu0 0.0
    %v8463 = vand.u32 %v3947, 4294901760
    %8464 = vmatpush1.msra.mxu0 %v8463
    %8465 = vmatprep.subr.mxu0 0.0
    %v8466 = vand.u32 %v3948, 4294901760
    %8467 = vmatpush1.msra.mxu0 %v8466
    %8468 = vmatprep.subr.mxu0 0.0
    %v8469 = vand.u32 %v3949, 4294901760
    %8470 = vmatpush1.msra.mxu0 %v8469
    %8471 = vmatprep.subr.mxu0 0.0
    %v8472 = vand.u32 %v3950, 4294901760
    %8473 = vmatpush1.msra.mxu0 %v8472
    %8474 = vmatprep.subr.mxu0 0.0
    %v8475 = vand.u32 %v3951, 4294901760
    %8476 = vmatpush1.msra.mxu0 %v8475
    %8477 = vmatprep.subr.mxu0 0.0
    %v8478 = vand.u32 %v3952, 4294901760
    %8479 = vmatpush1.msra.mxu0 %v8478
    %8480 = vmatprep.subr.mxu0 0.0
    %v8481 = vand.u32 %v3953, 4294901760
    %8482 = vmatpush1.msra.mxu0 %v8481
    %8483 = vmatprep.subr.mxu0 0.0
    %v8484 = vand.u32 %v3954, 4294901760
    %8485 = vmatpush1.msra.mxu0 %v8484
    %8486 = vmatprep.subr.mxu0 0.0
    %v8487 = vand.u32 %v3955, 4294901760
    %8488 = vmatpush1.msra.mxu0 %v8487
    %8489 = vmatprep.subr.mxu0 0.0
    %v8490 = vand.u32 %v3956, 4294901760
    %8491 = vmatpush1.msra.mxu0 %v8490
    %8492 = vmatprep.subr.mxu0 0.0
    %v8493 = vand.u32 %v3957, 4294901760
    %8494 = vmatpush1.msra.mxu0 %v8493
    %8495 = vmatprep.subr.mxu0 0.0
    %v8496 = vand.u32 %v3958, 4294901760
    %8497 = vmatpush1.msra.mxu0 %v8496
    %8498 = vmatprep.subr.mxu0 0.0
    %v8499 = vand.u32 %v3959, 4294901760
    %8500 = vmatpush1.msra.mxu0 %v8499
    %8501 = vmatprep.subr.mxu0 0.0
    %v8502 = vand.u32 %v3960, 4294901760
    %8503 = vmatpush1.msra.mxu0 %v8502
    %8504 = vmatprep.subr.mxu0 0.0
    %v8505 = vand.u32 %v3961, 4294901760
    %8506 = vmatpush1.msra.mxu0 %v8505
    %8507 = vmatprep.subr.mxu0 0.0
    %v8508 = vand.u32 %v3962, 4294901760
    %8509 = vmatpush1.msra.mxu0 %v8508
    %8510 = vmatprep.subr.mxu0 0.0
    %v8511 = vand.u32 %v3963, 4294901760
    %8512 = vmatpush1.msra.mxu0 %v8511
    %8513 = vmatprep.subr.mxu0 0.0
    %v8514 = vand.u32 %v3964, 4294901760
    %8515 = vmatpush1.msra.mxu0 %v8514
    %8516 = vmatprep.subr.mxu0 0.0
    %v8517 = vand.u32 %v3965, 4294901760
    %8518 = vmatpush1.msra.mxu0 %v8517
    %8519 = vmatprep.subr.mxu0 0.0
    %v8520 = vand.u32 %v3966, 4294901760
    %8521 = vmatpush1.msra.mxu0 %v8520
    %8522 = vmatprep.subr.mxu0 0.0
    %v8523 = vand.u32 %v3967, 4294901760
    %8524 = vmatpush1.msra.mxu0 %v8523
    %8525 = vmatprep.subr.mxu0 0.0
    %v8526 = vand.u32 %v3968, 4294901760
    %8527 = vmatpush1.msra.mxu0 %v8526
    %8528 = vmatprep.subr.mxu0 0.0
    %v8529 = vand.u32 %v3969, 4294901760
    %8530 = vmatpush1.msra.mxu0 %v8529
    %8531 = vmatprep.subr.mxu0 0.0
    %v8532 = vand.u32 %v3970, 4294901760
    %8533 = vmatpush1.msra.mxu0 %v8532
    %8534 = vmatprep.subr.mxu0 0.0
    %v8535 = vand.u32 %v3971, 4294901760
    %8536 = vmatpush1.msra.mxu0 %v8535
    %v8537 = vand.u32 %v4097, 4294901760
    %v8538 = vsub.f32 %v4097, %v8537
    %v8539 = vand.u32 %v8538, 4294901760
    %v8540 = vsub.f32 %v8538, %v8539
    %v8541 = vand.u32 %v8540, 4294901760
    %8542 = vmatprep.mubr.f32.mxu0 %v8541
    %v8543 = vand.u32 %v4095, 4294901760
    %v8544 = vsub.f32 %v4095, %v8543
    %v8545 = vand.u32 %v8544, 4294901760
    %v8546 = vsub.f32 %v8544, %v8545
    %v8547 = vand.u32 %v8546, 4294901760
    %8548 = vmatmul.mubr.f32.gmra.mrb[0].mxu0 %v8547
    %v8549 = vpop.f32.mrb[0].mxu0
    %v8550 = vadd.f32 %v8438, %v8549
    %v8551 = vpop.f32.mrb[0].mxu0
    %8552 = vdwg.mxu0
    %8553 = vmatprep.subr.mxu0 0.0
    %v8554 = vand.u32 %v3940, 4294901760
    %v8555 = vsub.f32 %v3940, %v8554
    %v8556 = vand.u32 %v8555, 4294901760
    %v8557 = vsub.f32 %v8555, %v8556
    %v8558 = vand.u32 %v8557, 4294901760
    %8559 = vmatpush1.msra.mxu0 %v8558
    %8560 = vmatprep.subr.mxu0 0.0
    %v8561 = vand.u32 %v3941, 4294901760
    %v8562 = vsub.f32 %v3941, %v8561
    %v8563 = vand.u32 %v8562, 4294901760
    %v8564 = vsub.f32 %v8562, %v8563
    %v8565 = vand.u32 %v8564, 4294901760
    %8566 = vmatpush1.msra.mxu0 %v8565
    %8567 = vmatprep.subr.mxu0 0.0
    %v8568 = vand.u32 %v3942, 4294901760
    %v8569 = vsub.f32 %v3942, %v8568
    %v8570 = vand.u32 %v8569, 4294901760
    %v8571 = vsub.f32 %v8569, %v8570
    %v8572 = vand.u32 %v8571, 4294901760
    %8573 = vmatpush1.msra.mxu0 %v8572
    %8574 = vmatprep.subr.mxu0 0.0
    %v8575 = vand.u32 %v3943, 4294901760
    %v8576 = vsub.f32 %v3943, %v8575
    %v8577 = vand.u32 %v8576, 4294901760
    %v8578 = vsub.f32 %v8576, %v8577
    %v8579 = vand.u32 %v8578, 4294901760
    %8580 = vmatpush1.msra.mxu0 %v8579
    %8581 = vmatprep.subr.mxu0 0.0
    %v8582 = vand.u32 %v3944, 4294901760
    %v8583 = vsub.f32 %v3944, %v8582
    %v8584 = vand.u32 %v8583, 4294901760
    %v8585 = vsub.f32 %v8583, %v8584
    %v8586 = vand.u32 %v8585, 4294901760
    %8587 = vmatpush1.msra.mxu0 %v8586
    %8588 = vmatprep.subr.mxu0 0.0
    %v8589 = vand.u32 %v3945, 4294901760
    %v8590 = vsub.f32 %v3945, %v8589
    %v8591 = vand.u32 %v8590, 4294901760
    %v8592 = vsub.f32 %v8590, %v8591
    %v8593 = vand.u32 %v8592, 4294901760
    %8594 = vmatpush1.msra.mxu0 %v8593
    %8595 = vmatprep.subr.mxu0 0.0
    %v8596 = vand.u32 %v3946, 4294901760
    %v8597 = vsub.f32 %v3946, %v8596
    %v8598 = vand.u32 %v8597, 4294901760
    %v8599 = vsub.f32 %v8597, %v8598
    %v8600 = vand.u32 %v8599, 4294901760
    %8601 = vmatpush1.msra.mxu0 %v8600
    %8602 = vmatprep.subr.mxu0 0.0
    %v8603 = vand.u32 %v3947, 4294901760
    %v8604 = vsub.f32 %v3947, %v8603
    %v8605 = vand.u32 %v8604, 4294901760
    %v8606 = vsub.f32 %v8604, %v8605
    %v8607 = vand.u32 %v8606, 4294901760
    %8608 = vmatpush1.msra.mxu0 %v8607
    %8609 = vmatprep.subr.mxu0 0.0
    %v8610 = vand.u32 %v3948, 4294901760
    %v8611 = vsub.f32 %v3948, %v8610
    %v8612 = vand.u32 %v8611, 4294901760
    %v8613 = vsub.f32 %v8611, %v8612
    %v8614 = vand.u32 %v8613, 4294901760
    %8615 = vmatpush1.msra.mxu0 %v8614
    %8616 = vmatprep.subr.mxu0 0.0
    %v8617 = vand.u32 %v3949, 4294901760
    %v8618 = vsub.f32 %v3949, %v8617
    %v8619 = vand.u32 %v8618, 4294901760
    %v8620 = vsub.f32 %v8618, %v8619
    %v8621 = vand.u32 %v8620, 4294901760
    %8622 = vmatpush1.msra.mxu0 %v8621
    %8623 = vmatprep.subr.mxu0 0.0
    %v8624 = vand.u32 %v3950, 4294901760
    %v8625 = vsub.f32 %v3950, %v8624
    %v8626 = vand.u32 %v8625, 4294901760
    %v8627 = vsub.f32 %v8625, %v8626
    %v8628 = vand.u32 %v8627, 4294901760
    %8629 = vmatpush1.msra.mxu0 %v8628
    %8630 = vmatprep.subr.mxu0 0.0
    %v8631 = vand.u32 %v3951, 4294901760
    %v8632 = vsub.f32 %v3951, %v8631
    %v8633 = vand.u32 %v8632, 4294901760
    %v8634 = vsub.f32 %v8632, %v8633
    %v8635 = vand.u32 %v8634, 4294901760
    %8636 = vmatpush1.msra.mxu0 %v8635
    %8637 = vmatprep.subr.mxu0 0.0
    %v8638 = vand.u32 %v3952, 4294901760
    %v8639 = vsub.f32 %v3952, %v8638
    %v8640 = vand.u32 %v8639, 4294901760
    %v8641 = vsub.f32 %v8639, %v8640
    %v8642 = vand.u32 %v8641, 4294901760
    %8643 = vmatpush1.msra.mxu0 %v8642
    %8644 = vmatprep.subr.mxu0 0.0
    %v8645 = vand.u32 %v3953, 4294901760
    %v8646 = vsub.f32 %v3953, %v8645
    %v8647 = vand.u32 %v8646, 4294901760
    %v8648 = vsub.f32 %v8646, %v8647
    %v8649 = vand.u32 %v8648, 4294901760
    %8650 = vmatpush1.msra.mxu0 %v8649
    %8651 = vmatprep.subr.mxu0 0.0
    %v8652 = vand.u32 %v3954, 4294901760
    %v8653 = vsub.f32 %v3954, %v8652
    %v8654 = vand.u32 %v8653, 4294901760
    %v8655 = vsub.f32 %v8653, %v8654
    %v8656 = vand.u32 %v8655, 4294901760
    %8657 = vmatpush1.msra.mxu0 %v8656
    %8658 = vmatprep.subr.mxu0 0.0
    %v8659 = vand.u32 %v3955, 4294901760
    %v8660 = vsub.f32 %v3955, %v8659
    %v8661 = vand.u32 %v8660, 4294901760
    %v8662 = vsub.f32 %v8660, %v8661
    %v8663 = vand.u32 %v8662, 4294901760
    %8664 = vmatpush1.msra.mxu0 %v8663
    %8665 = vmatprep.subr.mxu0 0.0
    %v8666 = vand.u32 %v3956, 4294901760
    %v8667 = vsub.f32 %v3956, %v8666
    %v8668 = vand.u32 %v8667, 4294901760
    %v8669 = vsub.f32 %v8667, %v8668
    %v8670 = vand.u32 %v8669, 4294901760
    %8671 = vmatpush1.msra.mxu0 %v8670
    %8672 = vmatprep.subr.mxu0 0.0
    %v8673 = vand.u32 %v3957, 4294901760
    %v8674 = vsub.f32 %v3957, %v8673
    %v8675 = vand.u32 %v8674, 4294901760
    %v8676 = vsub.f32 %v8674, %v8675
    %v8677 = vand.u32 %v8676, 4294901760
    %8678 = vmatpush1.msra.mxu0 %v8677
    %8679 = vmatprep.subr.mxu0 0.0
    %v8680 = vand.u32 %v3958, 4294901760
    %v8681 = vsub.f32 %v3958, %v8680
    %v8682 = vand.u32 %v8681, 4294901760
    %v8683 = vsub.f32 %v8681, %v8682
    %v8684 = vand.u32 %v8683, 4294901760
    %8685 = vmatpush1.msra.mxu0 %v8684
    %8686 = vmatprep.subr.mxu0 0.0
    %v8687 = vand.u32 %v3959, 4294901760
    %v8688 = vsub.f32 %v3959, %v8687
    %v8689 = vand.u32 %v8688, 4294901760
    %v8690 = vsub.f32 %v8688, %v8689
    %v8691 = vand.u32 %v8690, 4294901760
    %8692 = vmatpush1.msra.mxu0 %v8691
    %8693 = vmatprep.subr.mxu0 0.0
    %v8694 = vand.u32 %v3960, 4294901760
    %v8695 = vsub.f32 %v3960, %v8694
    %v8696 = vand.u32 %v8695, 4294901760
    %v8697 = vsub.f32 %v8695, %v8696
    %v8698 = vand.u32 %v8697, 4294901760
    %8699 = vmatpush1.msra.mxu0 %v8698
    %8700 = vmatprep.subr.mxu0 0.0
    %v8701 = vand.u32 %v3961, 4294901760
    %v8702 = vsub.f32 %v3961, %v8701
    %v8703 = vand.u32 %v8702, 4294901760
    %v8704 = vsub.f32 %v8702, %v8703
    %v8705 = vand.u32 %v8704, 4294901760
    %8706 = vmatpush1.msra.mxu0 %v8705
    %8707 = vmatprep.subr.mxu0 0.0
    %v8708 = vand.u32 %v3962, 4294901760
    %v8709 = vsub.f32 %v3962, %v8708
    %v8710 = vand.u32 %v8709, 4294901760
    %v8711 = vsub.f32 %v8709, %v8710
    %v8712 = vand.u32 %v8711, 4294901760
    %8713 = vmatpush1.msra.mxu0 %v8712
    %8714 = vmatprep.subr.mxu0 0.0
    %v8715 = vand.u32 %v3963, 4294901760
    %v8716 = vsub.f32 %v3963, %v8715
    %v8717 = vand.u32 %v8716, 4294901760
    %v8718 = vsub.f32 %v8716, %v8717
    %v8719 = vand.u32 %v8718, 4294901760
    %8720 = vmatpush1.msra.mxu0 %v8719
    %8721 = vmatprep.subr.mxu0 0.0
    %v8722 = vand.u32 %v3964, 4294901760
    %v8723 = vsub.f32 %v3964, %v8722
    %v8724 = vand.u32 %v8723, 4294901760
    %v8725 = vsub.f32 %v8723, %v8724
    %v8726 = vand.u32 %v8725, 4294901760
    %8727 = vmatpush1.msra.mxu0 %v8726
    %8728 = vmatprep.subr.mxu0 0.0
    %v8729 = vand.u32 %v3965, 4294901760
    %v8730 = vsub.f32 %v3965, %v8729
    %v8731 = vand.u32 %v8730, 4294901760
    %v8732 = vsub.f32 %v8730, %v8731
    %v8733 = vand.u32 %v8732, 4294901760
    %8734 = vmatpush1.msra.mxu0 %v8733
    %8735 = vmatprep.subr.mxu0 0.0
    %v8736 = vand.u32 %v3966, 4294901760
    %v8737 = vsub.f32 %v3966, %v8736
    %v8738 = vand.u32 %v8737, 4294901760
    %v8739 = vsub.f32 %v8737, %v8738
    %v8740 = vand.u32 %v8739, 4294901760
    %8741 = vmatpush1.msra.mxu0 %v8740
    %8742 = vmatprep.subr.mxu0 0.0
    %v8743 = vand.u32 %v3967, 4294901760
    %v8744 = vsub.f32 %v3967, %v8743
    %v8745 = vand.u32 %v8744, 4294901760
    %v8746 = vsub.f32 %v8744, %v8745
    %v8747 = vand.u32 %v8746, 4294901760
    %8748 = vmatpush1.msra.mxu0 %v8747
    %8749 = vmatprep.subr.mxu0 0.0
    %v8750 = vand.u32 %v3968, 4294901760
    %v8751 = vsub.f32 %v3968, %v8750
    %v8752 = vand.u32 %v8751, 4294901760
    %v8753 = vsub.f32 %v8751, %v8752
    %v8754 = vand.u32 %v8753, 4294901760
    %8755 = vmatpush1.msra.mxu0 %v8754
    %8756 = vmatprep.subr.mxu0 0.0
    %v8757 = vand.u32 %v3969, 4294901760
    %v8758 = vsub.f32 %v3969, %v8757
    %v8759 = vand.u32 %v8758, 4294901760
    %v8760 = vsub.f32 %v8758, %v8759
    %v8761 = vand.u32 %v8760, 4294901760
    %8762 = vmatpush1.msra.mxu0 %v8761
    %8763 = vmatprep.subr.mxu0 0.0
    %v8764 = vand.u32 %v3970, 4294901760
    %v8765 = vsub.f32 %v3970, %v8764
    %v8766 = vand.u32 %v8765, 4294901760
    %v8767 = vsub.f32 %v8765, %v8766
    %v8768 = vand.u32 %v8767, 4294901760
    %8769 = vmatpush1.msra.mxu0 %v8768
    %8770 = vmatprep.subr.mxu0 0.0
    %v8771 = vand.u32 %v3971, 4294901760
    %v8772 = vsub.f32 %v3971, %v8771
    %v8773 = vand.u32 %v8772, 4294901760
    %v8774 = vsub.f32 %v8772, %v8773
    %v8775 = vand.u32 %v8774, 4294901760
    %8776 = vmatpush1.msra.mxu0 %v8775
    %v8777 = vand.u32 %v4097, 4294901760
    %8778 = vmatprep.mubr.f32.mxu0 %v8777
    %v8779 = vand.u32 %v4095, 4294901760
    %8780 = vmatmul.mubr.f32.gmra.mrb[0].mxu0 %v8779
    %v8781 = vpop.f32.mrb[0].mxu0
    %v8782 = vadd.f32 %v8550, %v8781
    %v8783 = vpop.f32.mrb[0].mxu0
    %8784 = vdwg.mxu0
    %8785 = vmatprep.subr.mxu0 0.0
    %v8786 = vand.u32 %v3940, 4294901760
    %v8787 = vsub.f32 %v3940, %v8786
    %8788 = vmatpush1.msra.mxu0 %v8787
    %8789 = vmatprep.subr.mxu0 0.0
    %v8790 = vand.u32 %v3941, 4294901760
    %v8791 = vsub.f32 %v3941, %v8790
    %8792 = vmatpush1.msra.mxu0 %v8791
    %8793 = vmatprep.subr.mxu0 0.0
    %v8794 = vand.u32 %v3942, 4294901760
    %v8795 = vsub.f32 %v3942, %v8794
    %8796 = vmatpush1.msra.mxu0 %v8795
    %8797 = vmatprep.subr.mxu0 0.0
    %v8798 = vand.u32 %v3943, 4294901760
    %v8799 = vsub.f32 %v3943, %v8798
    %8800 = vmatpush1.msra.mxu0 %v8799
    %8801 = vmatprep.subr.mxu0 0.0
    %v8802 = vand.u32 %v3944, 4294901760
    %v8803 = vsub.f32 %v3944, %v8802
    %8804 = vmatpush1.msra.mxu0 %v8803
    %8805 = vmatprep.subr.mxu0 0.0
    %v8806 = vand.u32 %v3945, 4294901760
    %v8807 = vsub.f32 %v3945, %v8806
    %8808 = vmatpush1.msra.mxu0 %v8807
    %8809 = vmatprep.subr.mxu0 0.0
    %v8810 = vand.u32 %v3946, 4294901760
    %v8811 = vsub.f32 %v3946, %v8810
    %8812 = vmatpush1.msra.mxu0 %v8811
    %8813 = vmatprep.subr.mxu0 0.0
    %v8814 = vand.u32 %v3947, 4294901760
    %v8815 = vsub.f32 %v3947, %v8814
    %8816 = vmatpush1.msra.mxu0 %v8815
    %8817 = vmatprep.subr.mxu0 0.0
    %v8818 = vand.u32 %v3948, 4294901760
    %v8819 = vsub.f32 %v3948, %v8818
    %8820 = vmatpush1.msra.mxu0 %v8819
    %8821 = vmatprep.subr.mxu0 0.0
    %v8822 = vand.u32 %v3949, 4294901760
    %v8823 = vsub.f32 %v3949, %v8822
    %8824 = vmatpush1.msra.mxu0 %v8823
    %8825 = vmatprep.subr.mxu0 0.0
    %v8826 = vand.u32 %v3950, 4294901760
    %v8827 = vsub.f32 %v3950, %v8826
    %8828 = vmatpush1.msra.mxu0 %v8827
    %8829 = vmatprep.subr.mxu0 0.0
    %v8830 = vand.u32 %v3951, 4294901760
    %v8831 = vsub.f32 %v3951, %v8830
    %8832 = vmatpush1.msra.mxu0 %v8831
    %8833 = vmatprep.subr.mxu0 0.0
    %v8834 = vand.u32 %v3952, 4294901760
    %v8835 = vsub.f32 %v3952, %v8834
    %8836 = vmatpush1.msra.mxu0 %v8835
    %8837 = vmatprep.subr.mxu0 0.0
    %v8838 = vand.u32 %v3953, 4294901760
    %v8839 = vsub.f32 %v3953, %v8838
    %8840 = vmatpush1.msra.mxu0 %v8839
    %8841 = vmatprep.subr.mxu0 0.0
    %v8842 = vand.u32 %v3954, 4294901760
    %v8843 = vsub.f32 %v3954, %v8842
    %8844 = vmatpush1.msra.mxu0 %v8843
    %8845 = vmatprep.subr.mxu0 0.0
    %v8846 = vand.u32 %v3955, 4294901760
    %v8847 = vsub.f32 %v3955, %v8846
    %8848 = vmatpush1.msra.mxu0 %v8847
    %8849 = vmatprep.subr.mxu0 0.0
    %v8850 = vand.u32 %v3956, 4294901760
    %v8851 = vsub.f32 %v3956, %v8850
    %8852 = vmatpush1.msra.mxu0 %v8851
    %8853 = vmatprep.subr.mxu0 0.0
    %v8854 = vand.u32 %v3957, 4294901760
    %v8855 = vsub.f32 %v3957, %v8854
    %8856 = vmatpush1.msra.mxu0 %v8855
    %8857 = vmatprep.subr.mxu0 0.0
    %v8858 = vand.u32 %v3958, 4294901760
    %v8859 = vsub.f32 %v3958, %v8858
    %8860 = vmatpush1.msra.mxu0 %v8859
    %8861 = vmatprep.subr.mxu0 0.0
    %v8862 = vand.u32 %v3959, 4294901760
    %v8863 = vsub.f32 %v3959, %v8862
    %8864 = vmatpush1.msra.mxu0 %v8863
    %8865 = vmatprep.subr.mxu0 0.0
    %v8866 = vand.u32 %v3960, 4294901760
    %v8867 = vsub.f32 %v3960, %v8866
    %8868 = vmatpush1.msra.mxu0 %v8867
    %8869 = vmatprep.subr.mxu0 0.0
    %v8870 = vand.u32 %v3961, 4294901760
    %v8871 = vsub.f32 %v3961, %v8870
    %8872 = vmatpush1.msra.mxu0 %v8871
    %8873 = vmatprep.subr.mxu0 0.0
    %v8874 = vand.u32 %v3962, 4294901760
    %v8875 = vsub.f32 %v3962, %v8874
    %8876 = vmatpush1.msra.mxu0 %v8875
    %8877 = vmatprep.subr.mxu0 0.0
    %v8878 = vand.u32 %v3963, 4294901760
    %v8879 = vsub.f32 %v3963, %v8878
    %8880 = vmatpush1.msra.mxu0 %v8879
    %8881 = vmatprep.subr.mxu0 0.0
    %v8882 = vand.u32 %v3964, 4294901760
    %v8883 = vsub.f32 %v3964, %v8882
    %8884 = vmatpush1.msra.mxu0 %v8883
    %8885 = vmatprep.subr.mxu0 0.0
    %v8886 = vand.u32 %v3965, 4294901760
    %v8887 = vsub.f32 %v3965, %v8886
    %8888 = vmatpush1.msra.mxu0 %v8887
    %8889 = vmatprep.subr.mxu0 0.0
    %v8890 = vand.u32 %v3966, 4294901760
    %v8891 = vsub.f32 %v3966, %v8890
    %8892 = vmatpush1.msra.mxu0 %v8891
    %8893 = vmatprep.subr.mxu0 0.0
    %v8894 = vand.u32 %v3967, 4294901760
    %v8895 = vsub.f32 %v3967, %v8894
    %8896 = vmatpush1.msra.mxu0 %v8895
    %8897 = vmatprep.subr.mxu0 0.0
    %v8898 = vand.u32 %v3968, 4294901760
    %v8899 = vsub.f32 %v3968, %v8898
    %8900 = vmatpush1.msra.mxu0 %v8899
    %8901 = vmatprep.subr.mxu0 0.0
    %v8902 = vand.u32 %v3969, 4294901760
    %v8903 = vsub.f32 %v3969, %v8902
    %8904 = vmatpush1.msra.mxu0 %v8903
    %8905 = vmatprep.subr.mxu0 0.0
    %v8906 = vand.u32 %v3970, 4294901760
    %v8907 = vsub.f32 %v3970, %v8906
    %8908 = vmatpush1.msra.mxu0 %v8907
    %8909 = vmatprep.subr.mxu0 0.0
    %v8910 = vand.u32 %v3971, 4294901760
    %v8911 = vsub.f32 %v3971, %v8910
    %8912 = vmatpush1.msra.mxu0 %v8911
    %v8913 = vand.u32 %v4097, 4294901760
    %v8914 = vsub.f32 %v4097, %v8913
    %8915 = vmatprep.mubr.f32.mxu0 %v8914
    %v8916 = vand.u32 %v4095, 4294901760
    %v8917 = vsub.f32 %v4095, %v8916
    %8918 = vmatmul.mubr.f32.gmra.mrb[0].mxu0 %v8917
    %v8919 = vpop.f32.mrb[0].mxu0
    %v8920 = vadd.f32 %v8782, %v8919
    %v8921 = vpop.f32.mrb[0].mxu0
    %8922 = vdwg.mxu0
    %8923 = vmatprep.subr.mxu0 0.0
    %v8924 = vand.u32 %v3940, 4294901760
    %8925 = vmatpush1.msra.mxu0 %v8924
    %8926 = vmatprep.subr.mxu0 0.0
    %v8927 = vand.u32 %v3941, 4294901760
    %8928 = vmatpush1.msra.mxu0 %v8927
    %8929 = vmatprep.subr.mxu0 0.0
    %v8930 = vand.u32 %v3942, 4294901760
    %8931 = vmatpush1.msra.mxu0 %v8930
    %8932 = vmatprep.subr.mxu0 0.0
    %v8933 = vand.u32 %v3943, 4294901760
    %8934 = vmatpush1.msra.mxu0 %v8933
    %8935 = vmatprep.subr.mxu0 0.0
    %v8936 = vand.u32 %v3944, 4294901760
    %8937 = vmatpush1.msra.mxu0 %v8936
    %8938 = vmatprep.subr.mxu0 0.0
    %v8939 = vand.u32 %v3945, 4294901760
    %8940 = vmatpush1.msra.mxu0 %v8939
    %8941 = vmatprep.subr.mxu0 0.0
    %v8942 = vand.u32 %v3946, 4294901760
    %8943 = vmatpush1.msra.mxu0 %v8942
    %8944 = vmatprep.subr.mxu0 0.0
    %v8945 = vand.u32 %v3947, 4294901760
    %8946 = vmatpush1.msra.mxu0 %v8945
    %8947 = vmatprep.subr.mxu0 0.0
    %v8948 = vand.u32 %v3948, 4294901760
    %8949 = vmatpush1.msra.mxu0 %v8948
    %8950 = vmatprep.subr.mxu0 0.0
    %v8951 = vand.u32 %v3949, 4294901760
    %8952 = vmatpush1.msra.mxu0 %v8951
    %8953 = vmatprep.subr.mxu0 0.0
    %v8954 = vand.u32 %v3950, 4294901760
    %8955 = vmatpush1.msra.mxu0 %v8954
    %8956 = vmatprep.subr.mxu0 0.0
    %v8957 = vand.u32 %v3951, 4294901760
    %8958 = vmatpush1.msra.mxu0 %v8957
    %8959 = vmatprep.subr.mxu0 0.0
    %v8960 = vand.u32 %v3952, 4294901760
    %8961 = vmatpush1.msra.mxu0 %v8960
    %8962 = vmatprep.subr.mxu0 0.0
    %v8963 = vand.u32 %v3953, 4294901760
    %8964 = vmatpush1.msra.mxu0 %v8963
    %8965 = vmatprep.subr.mxu0 0.0
    %v8966 = vand.u32 %v3954, 4294901760
    %8967 = vmatpush1.msra.mxu0 %v8966
    %8968 = vmatprep.subr.mxu0 0.0
    %v8969 = vand.u32 %v3955, 4294901760
    %8970 = vmatpush1.msra.mxu0 %v8969
    %8971 = vmatprep.subr.mxu0 0.0
    %v8972 = vand.u32 %v3956, 4294901760
    %8973 = vmatpush1.msra.mxu0 %v8972
    %8974 = vmatprep.subr.mxu0 0.0
    %v8975 = vand.u32 %v3957, 4294901760
    %8976 = vmatpush1.msra.mxu0 %v8975
    %8977 = vmatprep.subr.mxu0 0.0
    %v8978 = vand.u32 %v3958, 4294901760
    %8979 = vmatpush1.msra.mxu0 %v8978
    %8980 = vmatprep.subr.mxu0 0.0
    %v8981 = vand.u32 %v3959, 4294901760
    %8982 = vmatpush1.msra.mxu0 %v8981
    %8983 = vmatprep.subr.mxu0 0.0
    %v8984 = vand.u32 %v3960, 4294901760
    %8985 = vmatpush1.msra.mxu0 %v8984
    %8986 = vmatprep.subr.mxu0 0.0
    %v8987 = vand.u32 %v3961, 4294901760
    %8988 = vmatpush1.msra.mxu0 %v8987
    %8989 = vmatprep.subr.mxu0 0.0
    %v8990 = vand.u32 %v3962, 4294901760
    %8991 = vmatpush1.msra.mxu0 %v8990
    %8992 = vmatprep.subr.mxu0 0.0
    %v8993 = vand.u32 %v3963, 4294901760
    %8994 = vmatpush1.msra.mxu0 %v8993
    %8995 = vmatprep.subr.mxu0 0.0
    %v8996 = vand.u32 %v3964, 4294901760
    %8997 = vmatpush1.msra.mxu0 %v8996
    %8998 = vmatprep.subr.mxu0 0.0
    %v8999 = vand.u32 %v3965, 4294901760
    %9000 = vmatpush1.msra.mxu0 %v8999
    %9001 = vmatprep.subr.mxu0 0.0
    %v9002 = vand.u32 %v3966, 4294901760
    %9003 = vmatpush1.msra.mxu0 %v9002
    %9004 = vmatprep.subr.mxu0 0.0
    %v9005 = vand.u32 %v3967, 4294901760
    %9006 = vmatpush1.msra.mxu0 %v9005
    %9007 = vmatprep.subr.mxu0 0.0
    %v9008 = vand.u32 %v3968, 4294901760
    %9009 = vmatpush1.msra.mxu0 %v9008
    %9010 = vmatprep.subr.mxu0 0.0
    %v9011 = vand.u32 %v3969, 4294901760
    %9012 = vmatpush1.msra.mxu0 %v9011
    %9013 = vmatprep.subr.mxu0 0.0
    %v9014 = vand.u32 %v3970, 4294901760
    %9015 = vmatpush1.msra.mxu0 %v9014
    %9016 = vmatprep.subr.mxu0 0.0
    %v9017 = vand.u32 %v3971, 4294901760
    %9018 = vmatpush1.msra.mxu0 %v9017
    %v9019 = vand.u32 %v4097, 4294901760
    %v9020 = vsub.f32 %v4097, %v9019
    %v9021 = vand.u32 %v9020, 4294901760
    %9022 = vmatprep.mubr.f32.mxu0 %v9021
    %v9023 = vand.u32 %v4095, 4294901760
    %v9024 = vsub.f32 %v4095, %v9023
    %v9025 = vand.u32 %v9024, 4294901760
    %9026 = vmatmul.mubr.f32.gmra.mrb[0].mxu0 %v9025
    %v9027 = vpop.f32.mrb[0].mxu0
    %v9028 = vadd.f32 %v8920, %v9027
    %v9029 = vpop.f32.mrb[0].mxu0
    %9030 = vdwg.mxu0
    %9031 = vmatprep.subr.mxu0 0.0
    %v9032 = vand.u32 %v3940, 4294901760
    %v9033 = vsub.f32 %v3940, %v9032
    %v9034 = vand.u32 %v9033, 4294901760
    %9035 = vmatpush1.msra.mxu0 %v9034
    %9036 = vmatprep.subr.mxu0 0.0
    %v9037 = vand.u32 %v3941, 4294901760
    %v9038 = vsub.f32 %v3941, %v9037
    %v9039 = vand.u32 %v9038, 4294901760
    %9040 = vmatpush1.msra.mxu0 %v9039
    %9041 = vmatprep.subr.mxu0 0.0
    %v9042 = vand.u32 %v3942, 4294901760
    %v9043 = vsub.f32 %v3942, %v9042
    %v9044 = vand.u32 %v9043, 4294901760
    %9045 = vmatpush1.msra.mxu0 %v9044
    %9046 = vmatprep.subr.mxu0 0.0
    %v9047 = vand.u32 %v3943, 4294901760
    %v9048 = vsub.f32 %v3943, %v9047
    %v9049 = vand.u32 %v9048, 4294901760
    %9050 = vmatpush1.msra.mxu0 %v9049
    %9051 = vmatprep.subr.mxu0 0.0
    %v9052 = vand.u32 %v3944, 4294901760
    %v9053 = vsub.f32 %v3944, %v9052
    %v9054 = vand.u32 %v9053, 4294901760
    %9055 = vmatpush1.msra.mxu0 %v9054
    %9056 = vmatprep.subr.mxu0 0.0
    %v9057 = vand.u32 %v3945, 4294901760
    %v9058 = vsub.f32 %v3945, %v9057
    %v9059 = vand.u32 %v9058, 4294901760
    %9060 = vmatpush1.msra.mxu0 %v9059
    %9061 = vmatprep.subr.mxu0 0.0
    %v9062 = vand.u32 %v3946, 4294901760
    %v9063 = vsub.f32 %v3946, %v9062
    %v9064 = vand.u32 %v9063, 4294901760
    %9065 = vmatpush1.msra.mxu0 %v9064
    %9066 = vmatprep.subr.mxu0 0.0
    %v9067 = vand.u32 %v3947, 4294901760
    %v9068 = vsub.f32 %v3947, %v9067
    %v9069 = vand.u32 %v9068, 4294901760
    %9070 = vmatpush1.msra.mxu0 %v9069
    %9071 = vmatprep.subr.mxu0 0.0
    %v9072 = vand.u32 %v3948, 4294901760
    %v9073 = vsub.f32 %v3948, %v9072
    %v9074 = vand.u32 %v9073, 4294901760
    %9075 = vmatpush1.msra.mxu0 %v9074
    %9076 = vmatprep.subr.mxu0 0.0
    %v9077 = vand.u32 %v3949, 4294901760
    %v9078 = vsub.f32 %v3949, %v9077
    %v9079 = vand.u32 %v9078, 4294901760
    %9080 = vmatpush1.msra.mxu0 %v9079
    %9081 = vmatprep.subr.mxu0 0.0
    %v9082 = vand.u32 %v3950, 4294901760
    %v9083 = vsub.f32 %v3950, %v9082
    %v9084 = vand.u32 %v9083, 4294901760
    %9085 = vmatpush1.msra.mxu0 %v9084
    %9086 = vmatprep.subr.mxu0 0.0
    %v9087 = vand.u32 %v3951, 4294901760
    %v9088 = vsub.f32 %v3951, %v9087
    %v9089 = vand.u32 %v9088, 4294901760
    %9090 = vmatpush1.msra.mxu0 %v9089
    %9091 = vmatprep.subr.mxu0 0.0
    %v9092 = vand.u32 %v3952, 4294901760
    %v9093 = vsub.f32 %v3952, %v9092
    %v9094 = vand.u32 %v9093, 4294901760
    %9095 = vmatpush1.msra.mxu0 %v9094
    %9096 = vmatprep.subr.mxu0 0.0
    %v9097 = vand.u32 %v3953, 4294901760
    %v9098 = vsub.f32 %v3953, %v9097
    %v9099 = vand.u32 %v9098, 4294901760
    %9100 = vmatpush1.msra.mxu0 %v9099
    %9101 = vmatprep.subr.mxu0 0.0
    %v9102 = vand.u32 %v3954, 4294901760
    %v9103 = vsub.f32 %v3954, %v9102
    %v9104 = vand.u32 %v9103, 4294901760
    %9105 = vmatpush1.msra.mxu0 %v9104
    %9106 = vmatprep.subr.mxu0 0.0
    %v9107 = vand.u32 %v3955, 4294901760
    %v9108 = vsub.f32 %v3955, %v9107
    %v9109 = vand.u32 %v9108, 4294901760
    %9110 = vmatpush1.msra.mxu0 %v9109
    %9111 = vmatprep.subr.mxu0 0.0
    %v9112 = vand.u32 %v3956, 4294901760
    %v9113 = vsub.f32 %v3956, %v9112
    %v9114 = vand.u32 %v9113, 4294901760
    %9115 = vmatpush1.msra.mxu0 %v9114
    %9116 = vmatprep.subr.mxu0 0.0
    %v9117 = vand.u32 %v3957, 4294901760
    %v9118 = vsub.f32 %v3957, %v9117
    %v9119 = vand.u32 %v9118, 4294901760
    %9120 = vmatpush1.msra.mxu0 %v9119
    %9121 = vmatprep.subr.mxu0 0.0
    %v9122 = vand.u32 %v3958, 4294901760
    %v9123 = vsub.f32 %v3958, %v9122
    %v9124 = vand.u32 %v9123, 4294901760
    %9125 = vmatpush1.msra.mxu0 %v9124
    %9126 = vmatprep.subr.mxu0 0.0
    %v9127 = vand.u32 %v3959, 4294901760
    %v9128 = vsub.f32 %v3959, %v9127
    %v9129 = vand.u32 %v9128, 4294901760
    %9130 = vmatpush1.msra.mxu0 %v9129
    %9131 = vmatprep.subr.mxu0 0.0
    %v9132 = vand.u32 %v3960, 4294901760
    %v9133 = vsub.f32 %v3960, %v9132
    %v9134 = vand.u32 %v9133, 4294901760
    %9135 = vmatpush1.msra.mxu0 %v9134
    %9136 = vmatprep.subr.mxu0 0.0
    %v9137 = vand.u32 %v3961, 4294901760
    %v9138 = vsub.f32 %v3961, %v9137
    %v9139 = vand.u32 %v9138, 4294901760
    %9140 = vmatpush1.msra.mxu0 %v9139
    %9141 = vmatprep.subr.mxu0 0.0
    %v9142 = vand.u32 %v3962, 4294901760
    %v9143 = vsub.f32 %v3962, %v9142
    %v9144 = vand.u32 %v9143, 4294901760
    %9145 = vmatpush1.msra.mxu0 %v9144
    %9146 = vmatprep.subr.mxu0 0.0
    %v9147 = vand.u32 %v3963, 4294901760
    %v9148 = vsub.f32 %v3963, %v9147
    %v9149 = vand.u32 %v9148, 4294901760
    %9150 = vmatpush1.msra.mxu0 %v9149
    %9151 = vmatprep.subr.mxu0 0.0
    %v9152 = vand.u32 %v3964, 4294901760
    %v9153 = vsub.f32 %v3964, %v9152
    %v9154 = vand.u32 %v9153, 4294901760
    %9155 = vmatpush1.msra.mxu0 %v9154
    %9156 = vmatprep.subr.mxu0 0.0
    %v9157 = vand.u32 %v3965, 4294901760
    %v9158 = vsub.f32 %v3965, %v9157
    %v9159 = vand.u32 %v9158, 4294901760
    %9160 = vmatpush1.msra.mxu0 %v9159
    %9161 = vmatprep.subr.mxu0 0.0
    %v9162 = vand.u32 %v3966, 4294901760
    %v9163 = vsub.f32 %v3966, %v9162
    %v9164 = vand.u32 %v9163, 4294901760
    %9165 = vmatpush1.msra.mxu0 %v9164
    %9166 = vmatprep.subr.mxu0 0.0
    %v9167 = vand.u32 %v3967, 4294901760
    %v9168 = vsub.f32 %v3967, %v9167
    %v9169 = vand.u32 %v9168, 4294901760
    %9170 = vmatpush1.msra.mxu0 %v9169
    %9171 = vmatprep.subr.mxu0 0.0
    %v9172 = vand.u32 %v3968, 4294901760
    %v9173 = vsub.f32 %v3968, %v9172
    %v9174 = vand.u32 %v9173, 4294901760
    %9175 = vmatpush1.msra.mxu0 %v9174
    %9176 = vmatprep.subr.mxu0 0.0
    %v9177 = vand.u32 %v3969, 4294901760
    %v9178 = vsub.f32 %v3969, %v9177
    %v9179 = vand.u32 %v9178, 4294901760
    %9180 = vmatpush1.msra.mxu0 %v9179
    %9181 = vmatprep.subr.mxu0 0.0
    %v9182 = vand.u32 %v3970, 4294901760
    %v9183 = vsub.f32 %v3970, %v9182
    %v9184 = vand.u32 %v9183, 4294901760
    %9185 = vmatpush1.msra.mxu0 %v9184
    %9186 = vmatprep.subr.mxu0 0.0
    %v9187 = vand.u32 %v3971, 4294901760
    %v9188 = vsub.f32 %v3971, %v9187
    %v9189 = vand.u32 %v9188, 4294901760
    %9190 = vmatpush1.msra.mxu0 %v9189
    %v9191 = vand.u32 %v4097, 4294901760
    %9192 = vmatprep.mubr.f32.mxu0 %v9191
    %v9193 = vand.u32 %v4095, 4294901760
    %9194 = vmatmul.mubr.f32.gmra.mrb[0].mxu0 %v9193
    %v9195 = vpop.f32.mrb[0].mxu0
    %v9196 = vadd.f32 %v9028, %v9195
    %v9197 = vpop.f32.mrb[0].mxu0
    %9198 = vdwg.mxu0
    %9199 = vmatprep.subr.mxu0 0.0
    %v9200 = vand.u32 %v3940, 4294901760
    %9201 = vmatpush1.msra.mxu0 %v9200
    %9202 = vmatprep.subr.mxu0 0.0
    %v9203 = vand.u32 %v3941, 4294901760
    %9204 = vmatpush1.msra.mxu0 %v9203
    %9205 = vmatprep.subr.mxu0 0.0
    %v9206 = vand.u32 %v3942, 4294901760
    %9207 = vmatpush1.msra.mxu0 %v9206
    %9208 = vmatprep.subr.mxu0 0.0
    %v9209 = vand.u32 %v3943, 4294901760
    %9210 = vmatpush1.msra.mxu0 %v9209
    %9211 = vmatprep.subr.mxu0 0.0
    %v9212 = vand.u32 %v3944, 4294901760
    %9213 = vmatpush1.msra.mxu0 %v9212
    %9214 = vmatprep.subr.mxu0 0.0
    %v9215 = vand.u32 %v3945, 4294901760
    %9216 = vmatpush1.msra.mxu0 %v9215
    %9217 = vmatprep.subr.mxu0 0.0
    %v9218 = vand.u32 %v3946, 4294901760
    %9219 = vmatpush1.msra.mxu0 %v9218
    %9220 = vmatprep.subr.mxu0 0.0
    %v9221 = vand.u32 %v3947, 4294901760
    %9222 = vmatpush1.msra.mxu0 %v9221
    %9223 = vmatprep.subr.mxu0 0.0
    %v9224 = vand.u32 %v3948, 4294901760
    %9225 = vmatpush1.msra.mxu0 %v9224
    %9226 = vmatprep.subr.mxu0 0.0
    %v9227 = vand.u32 %v3949, 4294901760
    %9228 = vmatpush1.msra.mxu0 %v9227
    %9229 = vmatprep.subr.mxu0 0.0
    %v9230 = vand.u32 %v3950, 4294901760
    %9231 = vmatpush1.msra.mxu0 %v9230
    %9232 = vmatprep.subr.mxu0 0.0
    %v9233 = vand.u32 %v3951, 4294901760
    %9234 = vmatpush1.msra.mxu0 %v9233
    %9235 = vmatprep.subr.mxu0 0.0
    %v9236 = vand.u32 %v3952, 4294901760
    %9237 = vmatpush1.msra.mxu0 %v9236
    %9238 = vmatprep.subr.mxu0 0.0
    %v9239 = vand.u32 %v3953, 4294901760
    %9240 = vmatpush1.msra.mxu0 %v9239
    %9241 = vmatprep.subr.mxu0 0.0
    %v9242 = vand.u32 %v3954, 4294901760
    %9243 = vmatpush1.msra.mxu0 %v9242
    %9244 = vmatprep.subr.mxu0 0.0
    %v9245 = vand.u32 %v3955, 4294901760
    %9246 = vmatpush1.msra.mxu0 %v9245
    %9247 = vmatprep.subr.mxu0 0.0
    %v9248 = vand.u32 %v3956, 4294901760
    %9249 = vmatpush1.msra.mxu0 %v9248
    %9250 = vmatprep.subr.mxu0 0.0
    %v9251 = vand.u32 %v3957, 4294901760
    %9252 = vmatpush1.msra.mxu0 %v9251
    %9253 = vmatprep.subr.mxu0 0.0
    %v9254 = vand.u32 %v3958, 4294901760
    %9255 = vmatpush1.msra.mxu0 %v9254
    %9256 = vmatprep.subr.mxu0 0.0
    %v9257 = vand.u32 %v3959, 4294901760
    %9258 = vmatpush1.msra.mxu0 %v9257
    %9259 = vmatprep.subr.mxu0 0.0
    %v9260 = vand.u32 %v3960, 4294901760
    %9261 = vmatpush1.msra.mxu0 %v9260
    %9262 = vmatprep.subr.mxu0 0.0
    %v9263 = vand.u32 %v3961, 4294901760
    %9264 = vmatpush1.msra.mxu0 %v9263
    %9265 = vmatprep.subr.mxu0 0.0
    %v9266 = vand.u32 %v3962, 4294901760
    %9267 = vmatpush1.msra.mxu0 %v9266
    %9268 = vmatprep.subr.mxu0 0.0
    %v9269 = vand.u32 %v3963, 4294901760
    %9270 = vmatpush1.msra.mxu0 %v9269
    %9271 = vmatprep.subr.mxu0 0.0
    %v9272 = vand.u32 %v3964, 4294901760
    %9273 = vmatpush1.msra.mxu0 %v9272
    %9274 = vmatprep.subr.mxu0 0.0
    %v9275 = vand.u32 %v3965, 4294901760
    %9276 = vmatpush1.msra.mxu0 %v9275
    %9277 = vmatprep.subr.mxu0 0.0
    %v9278 = vand.u32 %v3966, 4294901760
    %9279 = vmatpush1.msra.mxu0 %v9278
    %9280 = vmatprep.subr.mxu0 0.0
    %v9281 = vand.u32 %v3967, 4294901760
    %9282 = vmatpush1.msra.mxu0 %v9281
    %9283 = vmatprep.subr.mxu0 0.0
    %v9284 = vand.u32 %v3968, 4294901760
    %9285 = vmatpush1.msra.mxu0 %v9284
    %9286 = vmatprep.subr.mxu0 0.0
    %v9287 = vand.u32 %v3969, 4294901760
    %9288 = vmatpush1.msra.mxu0 %v9287
    %9289 = vmatprep.subr.mxu0 0.0
    %v9290 = vand.u32 %v3970, 4294901760
    %9291 = vmatpush1.msra.mxu0 %v9290
    %9292 = vmatprep.subr.mxu0 0.0
    %v9293 = vand.u32 %v3971, 4294901760
    %9294 = vmatpush1.msra.mxu0 %v9293
    %v9295 = vand.u32 %v4097, 4294901760
    %9296 = vmatprep.mubr.f32.mxu0 %v9295
    %v9297 = vand.u32 %v4095, 4294901760
    %9298 = vmatmul.mubr.f32.gmra.mrb[0].mxu0 %v9297
    %v9299 = vpop.f32.mrb[0].mxu0
    %v9300 = vadd.f32 %v9196, %v9299
    %v9301 = vpop.f32.mrb[0].mxu0
    %9302 = vdwg.mxu0
    %9303 = vmatprep.subr.mxu0 0.0
    %v9304 = vand.u32 %v3972, 4294901760
    %9305 = vmatpush1.msra.mxu0 %v9304
    %9306 = vmatprep.subr.mxu0 0.0
    %v9307 = vand.u32 %v3973, 4294901760
    %9308 = vmatpush1.msra.mxu0 %v9307
    %9309 = vmatprep.subr.mxu0 0.0
    %v9310 = vand.u32 %v3974, 4294901760
    %9311 = vmatpush1.msra.mxu0 %v9310
    %9312 = vmatprep.subr.mxu0 0.0
    %v9313 = vand.u32 %v3975, 4294901760
    %9314 = vmatpush1.msra.mxu0 %v9313
    %9315 = vmatprep.subr.mxu0 0.0
    %v9316 = vand.u32 %v3976, 4294901760
    %9317 = vmatpush1.msra.mxu0 %v9316
    %9318 = vmatprep.subr.mxu0 0.0
    %v9319 = vand.u32 %v3977, 4294901760
    %9320 = vmatpush1.msra.mxu0 %v9319
    %9321 = vmatprep.subr.mxu0 0.0
    %v9322 = vand.u32 %v3978, 4294901760
    %9323 = vmatpush1.msra.mxu0 %v9322
    %9324 = vmatprep.subr.mxu0 0.0
    %v9325 = vand.u32 %v3979, 4294901760
    %9326 = vmatpush1.msra.mxu0 %v9325
    %9327 = vmatprep.subr.mxu0 0.0
    %v9328 = vand.u32 %v3980, 4294901760
    %9329 = vmatpush1.msra.mxu0 %v9328
    %9330 = vmatprep.subr.mxu0 0.0
    %v9331 = vand.u32 %v3981, 4294901760
    %9332 = vmatpush1.msra.mxu0 %v9331
    %9333 = vmatprep.subr.mxu0 0.0
    %v9334 = vand.u32 %v3982, 4294901760
    %9335 = vmatpush1.msra.mxu0 %v9334
    %9336 = vmatprep.subr.mxu0 0.0
    %v9337 = vand.u32 %v3983, 4294901760
    %9338 = vmatpush1.msra.mxu0 %v9337
    %9339 = vmatprep.subr.mxu0 0.0
    %v9340 = vand.u32 %v3984, 4294901760
    %9341 = vmatpush1.msra.mxu0 %v9340
    %9342 = vmatprep.subr.mxu0 0.0
    %v9343 = vand.u32 %v3985, 4294901760
    %9344 = vmatpush1.msra.mxu0 %v9343
    %9345 = vmatprep.subr.mxu0 0.0
    %v9346 = vand.u32 %v3986, 4294901760
    %9347 = vmatpush1.msra.mxu0 %v9346
    %9348 = vmatprep.subr.mxu0 0.0
    %v9349 = vand.u32 %v3987, 4294901760
    %9350 = vmatpush1.msra.mxu0 %v9349
    %9351 = vmatprep.subr.mxu0 0.0
    %v9352 = vand.u32 %v3988, 4294901760
    %9353 = vmatpush1.msra.mxu0 %v9352
    %9354 = vmatprep.subr.mxu0 0.0
    %v9355 = vand.u32 %v3989, 4294901760
    %9356 = vmatpush1.msra.mxu0 %v9355
    %9357 = vmatprep.subr.mxu0 0.0
    %v9358 = vand.u32 %v3990, 4294901760
    %9359 = vmatpush1.msra.mxu0 %v9358
    %9360 = vmatprep.subr.mxu0 0.0
    %v9361 = vand.u32 %v3991, 4294901760
    %9362 = vmatpush1.msra.mxu0 %v9361
    %9363 = vmatprep.subr.mxu0 0.0
    %v9364 = vand.u32 %v3992, 4294901760
    %9365 = vmatpush1.msra.mxu0 %v9364
    %9366 = vmatprep.subr.mxu0 0.0
    %v9367 = vand.u32 %v3993, 4294901760
    %9368 = vmatpush1.msra.mxu0 %v9367
    %9369 = vmatprep.subr.mxu0 0.0
    %v9370 = vand.u32 %v3994, 4294901760
    %9371 = vmatpush1.msra.mxu0 %v9370
    %9372 = vmatprep.subr.mxu0 0.0
    %v9373 = vand.u32 %v3995, 4294901760
    %9374 = vmatpush1.msra.mxu0 %v9373
    %9375 = vmatprep.subr.mxu0 0.0
    %v9376 = vand.u32 %v3996, 4294901760
    %9377 = vmatpush1.msra.mxu0 %v9376
    %9378 = vmatprep.subr.mxu0 0.0
    %v9379 = vand.u32 %v3997, 4294901760
    %9380 = vmatpush1.msra.mxu0 %v9379
    %9381 = vmatprep.subr.mxu0 0.0
    %v9382 = vand.u32 %v3998, 4294901760
    %9383 = vmatpush1.msra.mxu0 %v9382
    %9384 = vmatprep.subr.mxu0 0.0
    %v9385 = vand.u32 %v3999, 4294901760
    %9386 = vmatpush1.msra.mxu0 %v9385
    %9387 = vmatprep.subr.mxu0 0.0
    %v9388 = vand.u32 %v4000, 4294901760
    %9389 = vmatpush1.msra.mxu0 %v9388
    %9390 = vmatprep.subr.mxu0 0.0
    %v9391 = vand.u32 %v4001, 4294901760
    %9392 = vmatpush1.msra.mxu0 %v9391
    %9393 = vmatprep.subr.mxu0 0.0
    %v9394 = vand.u32 %v4002, 4294901760
    %9395 = vmatpush1.msra.mxu0 %v9394
    %9396 = vmatprep.subr.mxu0 0.0
    %v9397 = vand.u32 %v4003, 4294901760
    %9398 = vmatpush1.msra.mxu0 %v9397
    %v9399 = vand.u32 %v4113, 4294901760
    %v9400 = vsub.f32 %v4113, %v9399
    %v9401 = vand.u32 %v9400, 4294901760
    %v9402 = vsub.f32 %v9400, %v9401
    %v9403 = vand.u32 %v9402, 4294901760
    %9404 = vmatprep.mubr.f32.mxu0 %v9403
    %v9405 = vand.u32 %v4105, 4294901760
    %v9406 = vsub.f32 %v4105, %v9405
    %v9407 = vand.u32 %v9406, 4294901760
    %v9408 = vsub.f32 %v9406, %v9407
    %v9409 = vand.u32 %v9408, 4294901760
    %9410 = vmatmul.mubr.f32.gmra.mrb[0].mxu0 %v9409
    %v9411 = vpop.f32.mrb[0].mxu0
    %v9412 = vadd.f32 %v9300, %v9411
    %v9413 = vpop.f32.mrb[0].mxu0
    %9414 = vdwg.mxu0
    %9415 = vmatprep.subr.mxu0 0.0
    %v9416 = vand.u32 %v3972, 4294901760
    %v9417 = vsub.f32 %v3972, %v9416
    %v9418 = vand.u32 %v9417, 4294901760
    %v9419 = vsub.f32 %v9417, %v9418
    %v9420 = vand.u32 %v9419, 4294901760
    %9421 = vmatpush1.msra.mxu0 %v9420
    %9422 = vmatprep.subr.mxu0 0.0
    %v9423 = vand.u32 %v3973, 4294901760
    %v9424 = vsub.f32 %v3973, %v9423
    %v9425 = vand.u32 %v9424, 4294901760
    %v9426 = vsub.f32 %v9424, %v9425
    %v9427 = vand.u32 %v9426, 4294901760
    %9428 = vmatpush1.msra.mxu0 %v9427
    %9429 = vmatprep.subr.mxu0 0.0
    %v9430 = vand.u32 %v3974, 4294901760
    %v9431 = vsub.f32 %v3974, %v9430
    %v9432 = vand.u32 %v9431, 4294901760
    %v9433 = vsub.f32 %v9431, %v9432
    %v9434 = vand.u32 %v9433, 4294901760
    %9435 = vmatpush1.msra.mxu0 %v9434
    %9436 = vmatprep.subr.mxu0 0.0
    %v9437 = vand.u32 %v3975, 4294901760
    %v9438 = vsub.f32 %v3975, %v9437
    %v9439 = vand.u32 %v9438, 4294901760
    %v9440 = vsub.f32 %v9438, %v9439
    %v9441 = vand.u32 %v9440, 4294901760
    %9442 = vmatpush1.msra.mxu0 %v9441
    %9443 = vmatprep.subr.mxu0 0.0
    %v9444 = vand.u32 %v3976, 4294901760
    %v9445 = vsub.f32 %v3976, %v9444
    %v9446 = vand.u32 %v9445, 4294901760
    %v9447 = vsub.f32 %v9445, %v9446
    %v9448 = vand.u32 %v9447, 4294901760
    %9449 = vmatpush1.msra.mxu0 %v9448
    %9450 = vmatprep.subr.mxu0 0.0
    %v9451 = vand.u32 %v3977, 4294901760
    %v9452 = vsub.f32 %v3977, %v9451
    %v9453 = vand.u32 %v9452, 4294901760
    %v9454 = vsub.f32 %v9452, %v9453
    %v9455 = vand.u32 %v9454, 4294901760
    %9456 = vmatpush1.msra.mxu0 %v9455
    %9457 = vmatprep.subr.mxu0 0.0
    %v9458 = vand.u32 %v3978, 4294901760
    %v9459 = vsub.f32 %v3978, %v9458
    %v9460 = vand.u32 %v9459, 4294901760
    %v9461 = vsub.f32 %v9459, %v9460
    %v9462 = vand.u32 %v9461, 4294901760
    %9463 = vmatpush1.msra.mxu0 %v9462
    %9464 = vmatprep.subr.mxu0 0.0
    %v9465 = vand.u32 %v3979, 4294901760
    %v9466 = vsub.f32 %v3979, %v9465
    %v9467 = vand.u32 %v9466, 4294901760
    %v9468 = vsub.f32 %v9466, %v9467
    %v9469 = vand.u32 %v9468, 4294901760
    %9470 = vmatpush1.msra.mxu0 %v9469
    %9471 = vmatprep.subr.mxu0 0.0
    %v9472 = vand.u32 %v3980, 4294901760
    %v9473 = vsub.f32 %v3980, %v9472
    %v9474 = vand.u32 %v9473, 4294901760
    %v9475 = vsub.f32 %v9473, %v9474
    %v9476 = vand.u32 %v9475, 4294901760
    %9477 = vmatpush1.msra.mxu0 %v9476
    %9478 = vmatprep.subr.mxu0 0.0
    %v9479 = vand.u32 %v3981, 4294901760
    %v9480 = vsub.f32 %v3981, %v9479
    %v9481 = vand.u32 %v9480, 4294901760
    %v9482 = vsub.f32 %v9480, %v9481
    %v9483 = vand.u32 %v9482, 4294901760
    %9484 = vmatpush1.msra.mxu0 %v9483
    %9485 = vmatprep.subr.mxu0 0.0
    %v9486 = vand.u32 %v3982, 4294901760
    %v9487 = vsub.f32 %v3982, %v9486
    %v9488 = vand.u32 %v9487, 4294901760
    %v9489 = vsub.f32 %v9487, %v9488
    %v9490 = vand.u32 %v9489, 4294901760
    %9491 = vmatpush1.msra.mxu0 %v9490
    %9492 = vmatprep.subr.mxu0 0.0
    %v9493 = vand.u32 %v3983, 4294901760
    %v9494 = vsub.f32 %v3983, %v9493
    %v9495 = vand.u32 %v9494, 4294901760
    %v9496 = vsub.f32 %v9494, %v9495
    %v9497 = vand.u32 %v9496, 4294901760
    %9498 = vmatpush1.msra.mxu0 %v9497
    %9499 = vmatprep.subr.mxu0 0.0
    %v9500 = vand.u32 %v3984, 4294901760
    %v9501 = vsub.f32 %v3984, %v9500
    %v9502 = vand.u32 %v9501, 4294901760
    %v9503 = vsub.f32 %v9501, %v9502
    %v9504 = vand.u32 %v9503, 4294901760
    %9505 = vmatpush1.msra.mxu0 %v9504
    %9506 = vmatprep.subr.mxu0 0.0
    %v9507 = vand.u32 %v3985, 4294901760
    %v9508 = vsub.f32 %v3985, %v9507
    %v9509 = vand.u32 %v9508, 4294901760
    %v9510 = vsub.f32 %v9508, %v9509
    %v9511 = vand.u32 %v9510, 4294901760
    %9512 = vmatpush1.msra.mxu0 %v9511
    %9513 = vmatprep.subr.mxu0 0.0
    %v9514 = vand.u32 %v3986, 4294901760
    %v9515 = vsub.f32 %v3986, %v9514
    %v9516 = vand.u32 %v9515, 4294901760
    %v9517 = vsub.f32 %v9515, %v9516
    %v9518 = vand.u32 %v9517, 4294901760
    %9519 = vmatpush1.msra.mxu0 %v9518
    %9520 = vmatprep.subr.mxu0 0.0
    %v9521 = vand.u32 %v3987, 4294901760
    %v9522 = vsub.f32 %v3987, %v9521
    %v9523 = vand.u32 %v9522, 4294901760
    %v9524 = vsub.f32 %v9522, %v9523
    %v9525 = vand.u32 %v9524, 4294901760
    %9526 = vmatpush1.msra.mxu0 %v9525
    %9527 = vmatprep.subr.mxu0 0.0
    %v9528 = vand.u32 %v3988, 4294901760
    %v9529 = vsub.f32 %v3988, %v9528
    %v9530 = vand.u32 %v9529, 4294901760
    %v9531 = vsub.f32 %v9529, %v9530
    %v9532 = vand.u32 %v9531, 4294901760
    %9533 = vmatpush1.msra.mxu0 %v9532
    %9534 = vmatprep.subr.mxu0 0.0
    %v9535 = vand.u32 %v3989, 4294901760
    %v9536 = vsub.f32 %v3989, %v9535
    %v9537 = vand.u32 %v9536, 4294901760
    %v9538 = vsub.f32 %v9536, %v9537
    %v9539 = vand.u32 %v9538, 4294901760
    %9540 = vmatpush1.msra.mxu0 %v9539
    %9541 = vmatprep.subr.mxu0 0.0
    %v9542 = vand.u32 %v3990, 4294901760
    %v9543 = vsub.f32 %v3990, %v9542
    %v9544 = vand.u32 %v9543, 4294901760
    %v9545 = vsub.f32 %v9543, %v9544
    %v9546 = vand.u32 %v9545, 4294901760
    %9547 = vmatpush1.msra.mxu0 %v9546
    %9548 = vmatprep.subr.mxu0 0.0
    %v9549 = vand.u32 %v3991, 4294901760
    %v9550 = vsub.f32 %v3991, %v9549
    %v9551 = vand.u32 %v9550, 4294901760
    %v9552 = vsub.f32 %v9550, %v9551
    %v9553 = vand.u32 %v9552, 4294901760
    %9554 = vmatpush1.msra.mxu0 %v9553
    %9555 = vmatprep.subr.mxu0 0.0
    %v9556 = vand.u32 %v3992, 4294901760
    %v9557 = vsub.f32 %v3992, %v9556
    %v9558 = vand.u32 %v9557, 4294901760
    %v9559 = vsub.f32 %v9557, %v9558
    %v9560 = vand.u32 %v9559, 4294901760
    %9561 = vmatpush1.msra.mxu0 %v9560
    %9562 = vmatprep.subr.mxu0 0.0
    %v9563 = vand.u32 %v3993, 4294901760
    %v9564 = vsub.f32 %v3993, %v9563
    %v9565 = vand.u32 %v9564, 4294901760
    %v9566 = vsub.f32 %v9564, %v9565
    %v9567 = vand.u32 %v9566, 4294901760
    %9568 = vmatpush1.msra.mxu0 %v9567
    %9569 = vmatprep.subr.mxu0 0.0
    %v9570 = vand.u32 %v3994, 4294901760
    %v9571 = vsub.f32 %v3994, %v9570
    %v9572 = vand.u32 %v9571, 4294901760
    %v9573 = vsub.f32 %v9571, %v9572
    %v9574 = vand.u32 %v9573, 4294901760
    %9575 = vmatpush1.msra.mxu0 %v9574
    %9576 = vmatprep.subr.mxu0 0.0
    %v9577 = vand.u32 %v3995, 4294901760
    %v9578 = vsub.f32 %v3995, %v9577
    %v9579 = vand.u32 %v9578, 4294901760
    %v9580 = vsub.f32 %v9578, %v9579
    %v9581 = vand.u32 %v9580, 4294901760
    %9582 = vmatpush1.msra.mxu0 %v9581
    %9583 = vmatprep.subr.mxu0 0.0
    %v9584 = vand.u32 %v3996, 4294901760
    %v9585 = vsub.f32 %v3996, %v9584
    %v9586 = vand.u32 %v9585, 4294901760
    %v9587 = vsub.f32 %v9585, %v9586
    %v9588 = vand.u32 %v9587, 4294901760
    %9589 = vmatpush1.msra.mxu0 %v9588
    %9590 = vmatprep.subr.mxu0 0.0
    %v9591 = vand.u32 %v3997, 4294901760
    %v9592 = vsub.f32 %v3997, %v9591
    %v9593 = vand.u32 %v9592, 4294901760
    %v9594 = vsub.f32 %v9592, %v9593
    %v9595 = vand.u32 %v9594, 4294901760
    %9596 = vmatpush1.msra.mxu0 %v9595
    %9597 = vmatprep.subr.mxu0 0.0
    %v9598 = vand.u32 %v3998, 4294901760
    %v9599 = vsub.f32 %v3998, %v9598
    %v9600 = vand.u32 %v9599, 4294901760
    %v9601 = vsub.f32 %v9599, %v9600
    %v9602 = vand.u32 %v9601, 4294901760
    %9603 = vmatpush1.msra.mxu0 %v9602
    %9604 = vmatprep.subr.mxu0 0.0
    %v9605 = vand.u32 %v3999, 4294901760
    %v9606 = vsub.f32 %v3999, %v9605
    %v9607 = vand.u32 %v9606, 4294901760
    %v9608 = vsub.f32 %v9606, %v9607
    %v9609 = vand.u32 %v9608, 4294901760
    %9610 = vmatpush1.msra.mxu0 %v9609
    %9611 = vmatprep.subr.mxu0 0.0
    %v9612 = vand.u32 %v4000, 4294901760
    %v9613 = vsub.f32 %v4000, %v9612
    %v9614 = vand.u32 %v9613, 4294901760
    %v9615 = vsub.f32 %v9613, %v9614
    %v9616 = vand.u32 %v9615, 4294901760
    %9617 = vmatpush1.msra.mxu0 %v9616
    %9618 = vmatprep.subr.mxu0 0.0
    %v9619 = vand.u32 %v4001, 4294901760
    %v9620 = vsub.f32 %v4001, %v9619
    %v9621 = vand.u32 %v9620, 4294901760
    %v9622 = vsub.f32 %v9620, %v9621
    %v9623 = vand.u32 %v9622, 4294901760
    %9624 = vmatpush1.msra.mxu0 %v9623
    %9625 = vmatprep.subr.mxu0 0.0
    %v9626 = vand.u32 %v4002, 4294901760
    %v9627 = vsub.f32 %v4002, %v9626
    %v9628 = vand.u32 %v9627, 4294901760
    %v9629 = vsub.f32 %v9627, %v9628
    %v9630 = vand.u32 %v9629, 4294901760
    %9631 = vmatpush1.msra.mxu0 %v9630
    %9632 = vmatprep.subr.mxu0 0.0
    %v9633 = vand.u32 %v4003, 4294901760
    %v9634 = vsub.f32 %v4003, %v9633
    %v9635 = vand.u32 %v9634, 4294901760
    %v9636 = vsub.f32 %v9634, %v9635
    %v9637 = vand.u32 %v9636, 4294901760
    %9638 = vmatpush1.msra.mxu0 %v9637
    %v9639 = vand.u32 %v4113, 4294901760
    %9640 = vmatprep.mubr.f32.mxu0 %v9639
    %v9641 = vand.u32 %v4105, 4294901760
    %9642 = vmatmul.mubr.f32.gmra.mrb[0].mxu0 %v9641
    %v9643 = vpop.f32.mrb[0].mxu0
    %v9644 = vadd.f32 %v9412, %v9643
    %v9645 = vpop.f32.mrb[0].mxu0
    %9646 = vdwg.mxu0
    %9647 = vmatprep.subr.mxu0 0.0
    %v9648 = vand.u32 %v3972, 4294901760
    %v9649 = vsub.f32 %v3972, %v9648
    %9650 = vmatpush1.msra.mxu0 %v9649
    %9651 = vmatprep.subr.mxu0 0.0
    %v9652 = vand.u32 %v3973, 4294901760
    %v9653 = vsub.f32 %v3973, %v9652
    %9654 = vmatpush1.msra.mxu0 %v9653
    %9655 = vmatprep.subr.mxu0 0.0
    %v9656 = vand.u32 %v3974, 4294901760
    %v9657 = vsub.f32 %v3974, %v9656
    %9658 = vmatpush1.msra.mxu0 %v9657
    %9659 = vmatprep.subr.mxu0 0.0
    %v9660 = vand.u32 %v3975, 4294901760
    %v9661 = vsub.f32 %v3975, %v9660
    %9662 = vmatpush1.msra.mxu0 %v9661
    %9663 = vmatprep.subr.mxu0 0.0
    %v9664 = vand.u32 %v3976, 4294901760
    %v9665 = vsub.f32 %v3976, %v9664
    %9666 = vmatpush1.msra.mxu0 %v9665
    %9667 = vmatprep.subr.mxu0 0.0
    %v9668 = vand.u32 %v3977, 4294901760
    %v9669 = vsub.f32 %v3977, %v9668
    %9670 = vmatpush1.msra.mxu0 %v9669
    %9671 = vmatprep.subr.mxu0 0.0
    %v9672 = vand.u32 %v3978, 4294901760
    %v9673 = vsub.f32 %v3978, %v9672
    %9674 = vmatpush1.msra.mxu0 %v9673
    %9675 = vmatprep.subr.mxu0 0.0
    %v9676 = vand.u32 %v3979, 4294901760
    %v9677 = vsub.f32 %v3979, %v9676
    %9678 = vmatpush1.msra.mxu0 %v9677
    %9679 = vmatprep.subr.mxu0 0.0
    %v9680 = vand.u32 %v3980, 4294901760
    %v9681 = vsub.f32 %v3980, %v9680
    %9682 = vmatpush1.msra.mxu0 %v9681
    %9683 = vmatprep.subr.mxu0 0.0
    %v9684 = vand.u32 %v3981, 4294901760
    %v9685 = vsub.f32 %v3981, %v9684
    %9686 = vmatpush1.msra.mxu0 %v9685
    %9687 = vmatprep.subr.mxu0 0.0
    %v9688 = vand.u32 %v3982, 4294901760
    %v9689 = vsub.f32 %v3982, %v9688
    %9690 = vmatpush1.msra.mxu0 %v9689
    %9691 = vmatprep.subr.mxu0 0.0
    %v9692 = vand.u32 %v3983, 4294901760
    %v9693 = vsub.f32 %v3983, %v9692
    %9694 = vmatpush1.msra.mxu0 %v9693
    %9695 = vmatprep.subr.mxu0 0.0
    %v9696 = vand.u32 %v3984, 4294901760
    %v9697 = vsub.f32 %v3984, %v9696
    %9698 = vmatpush1.msra.mxu0 %v9697
    %9699 = vmatprep.subr.mxu0 0.0
    %v9700 = vand.u32 %v3985, 4294901760
    %v9701 = vsub.f32 %v3985, %v9700
    %9702 = vmatpush1.msra.mxu0 %v9701
    %9703 = vmatprep.subr.mxu0 0.0
    %v9704 = vand.u32 %v3986, 4294901760
    %v9705 = vsub.f32 %v3986, %v9704
    %9706 = vmatpush1.msra.mxu0 %v9705
    %9707 = vmatprep.subr.mxu0 0.0
    %v9708 = vand.u32 %v3987, 4294901760
    %v9709 = vsub.f32 %v3987, %v9708
    %9710 = vmatpush1.msra.mxu0 %v9709
    %9711 = vmatprep.subr.mxu0 0.0
    %v9712 = vand.u32 %v3988, 4294901760
    %v9713 = vsub.f32 %v3988, %v9712
    %9714 = vmatpush1.msra.mxu0 %v9713
    %9715 = vmatprep.subr.mxu0 0.0
    %v9716 = vand.u32 %v3989, 4294901760
    %v9717 = vsub.f32 %v3989, %v9716
    %9718 = vmatpush1.msra.mxu0 %v9717
    %9719 = vmatprep.subr.mxu0 0.0
    %v9720 = vand.u32 %v3990, 4294901760
    %v9721 = vsub.f32 %v3990, %v9720
    %9722 = vmatpush1.msra.mxu0 %v9721
    %9723 = vmatprep.subr.mxu0 0.0
    %v9724 = vand.u32 %v3991, 4294901760
    %v9725 = vsub.f32 %v3991, %v9724
    %9726 = vmatpush1.msra.mxu0 %v9725
    %9727 = vmatprep.subr.mxu0 0.0
    %v9728 = vand.u32 %v3992, 4294901760
    %v9729 = vsub.f32 %v3992, %v9728
    %9730 = vmatpush1.msra.mxu0 %v9729
    %9731 = vmatprep.subr.mxu0 0.0
    %v9732 = vand.u32 %v3993, 4294901760
    %v9733 = vsub.f32 %v3993, %v9732
    %9734 = vmatpush1.msra.mxu0 %v9733
    %9735 = vmatprep.subr.mxu0 0.0
    %v9736 = vand.u32 %v3994, 4294901760
    %v9737 = vsub.f32 %v3994, %v9736
    %9738 = vmatpush1.msra.mxu0 %v9737
    %9739 = vmatprep.subr.mxu0 0.0
    %v9740 = vand.u32 %v3995, 4294901760
    %v9741 = vsub.f32 %v3995, %v9740
    %9742 = vmatpush1.msra.mxu0 %v9741
    %9743 = vmatprep.subr.mxu0 0.0
    %v9744 = vand.u32 %v3996, 4294901760
    %v9745 = vsub.f32 %v3996, %v9744
    %9746 = vmatpush1.msra.mxu0 %v9745
    %9747 = vmatprep.subr.mxu0 0.0
    %v9748 = vand.u32 %v3997, 4294901760
    %v9749 = vsub.f32 %v3997, %v9748
    %9750 = vmatpush1.msra.mxu0 %v9749
    %9751 = vmatprep.subr.mxu0 0.0
    %v9752 = vand.u32 %v3998, 4294901760
    %v9753 = vsub.f32 %v3998, %v9752
    %9754 = vmatpush1.msra.mxu0 %v9753
    %9755 = vmatprep.subr.mxu0 0.0
    %v9756 = vand.u32 %v3999, 4294901760
    %v9757 = vsub.f32 %v3999, %v9756
    %9758 = vmatpush1.msra.mxu0 %v9757
    %9759 = vmatprep.subr.mxu0 0.0
    %v9760 = vand.u32 %v4000, 4294901760
    %v9761 = vsub.f32 %v4000, %v9760
    %9762 = vmatpush1.msra.mxu0 %v9761
    %9763 = vmatprep.subr.mxu0 0.0
    %v9764 = vand.u32 %v4001, 4294901760
    %v9765 = vsub.f32 %v4001, %v9764
    %9766 = vmatpush1.msra.mxu0 %v9765
    %9767 = vmatprep.subr.mxu0 0.0
    %v9768 = vand.u32 %v4002, 4294901760
    %v9769 = vsub.f32 %v4002, %v9768
    %9770 = vmatpush1.msra.mxu0 %v9769
    %9771 = vmatprep.subr.mxu0 0.0
    %v9772 = vand.u32 %v4003, 4294901760
    %v9773 = vsub.f32 %v4003, %v9772
    %9774 = vmatpush1.msra.mxu0 %v9773
    %v9775 = vand.u32 %v4113, 4294901760
    %v9776 = vsub.f32 %v4113, %v9775
    %9777 = vmatprep.mubr.f32.mxu0 %v9776
    %v9778 = vand.u32 %v4105, 4294901760
    %v9779 = vsub.f32 %v4105, %v9778
    %9780 = vmatmul.mubr.f32.gmra.mrb[0].mxu0 %v9779
    %v9781 = vpop.f32.mrb[0].mxu0
    %v9782 = vadd.f32 %v9644, %v9781
    %v9783 = vpop.f32.mrb[0].mxu0
    %9784 = vdwg.mxu0
    %9785 = vmatprep.subr.mxu0 0.0
    %v9786 = vand.u32 %v3972, 4294901760
    %9787 = vmatpush1.msra.mxu0 %v9786
    %9788 = vmatprep.subr.mxu0 0.0
    %v9789 = vand.u32 %v3973, 4294901760
    %9790 = vmatpush1.msra.mxu0 %v9789
    %9791 = vmatprep.subr.mxu0 0.0
    %v9792 = vand.u32 %v3974, 4294901760
    %9793 = vmatpush1.msra.mxu0 %v9792
    %9794 = vmatprep.subr.mxu0 0.0
    %v9795 = vand.u32 %v3975, 4294901760
    %9796 = vmatpush1.msra.mxu0 %v9795
    %9797 = vmatprep.subr.mxu0 0.0
    %v9798 = vand.u32 %v3976, 4294901760
    %9799 = vmatpush1.msra.mxu0 %v9798
    %9800 = vmatprep.subr.mxu0 0.0
    %v9801 = vand.u32 %v3977, 4294901760
    %9802 = vmatpush1.msra.mxu0 %v9801
    %9803 = vmatprep.subr.mxu0 0.0
    %v9804 = vand.u32 %v3978, 4294901760
    %9805 = vmatpush1.msra.mxu0 %v9804
    %9806 = vmatprep.subr.mxu0 0.0
    %v9807 = vand.u32 %v3979, 4294901760
    %9808 = vmatpush1.msra.mxu0 %v9807
    %9809 = vmatprep.subr.mxu0 0.0
    %v9810 = vand.u32 %v3980, 4294901760
    %9811 = vmatpush1.msra.mxu0 %v9810
    %9812 = vmatprep.subr.mxu0 0.0
    %v9813 = vand.u32 %v3981, 4294901760
    %9814 = vmatpush1.msra.mxu0 %v9813
    %9815 = vmatprep.subr.mxu0 0.0
    %v9816 = vand.u32 %v3982, 4294901760
    %9817 = vmatpush1.msra.mxu0 %v9816
    %9818 = vmatprep.subr.mxu0 0.0
    %v9819 = vand.u32 %v3983, 4294901760
    %9820 = vmatpush1.msra.mxu0 %v9819
    %9821 = vmatprep.subr.mxu0 0.0
    %v9822 = vand.u32 %v3984, 4294901760
    %9823 = vmatpush1.msra.mxu0 %v9822
    %9824 = vmatprep.subr.mxu0 0.0
    %v9825 = vand.u32 %v3985, 4294901760
    %9826 = vmatpush1.msra.mxu0 %v9825
    %9827 = vmatprep.subr.mxu0 0.0
    %v9828 = vand.u32 %v3986, 4294901760
    %9829 = vmatpush1.msra.mxu0 %v9828
    %9830 = vmatprep.subr.mxu0 0.0
    %v9831 = vand.u32 %v3987, 4294901760
    %9832 = vmatpush1.msra.mxu0 %v9831
    %9833 = vmatprep.subr.mxu0 0.0
    %v9834 = vand.u32 %v3988, 4294901760
    %9835 = vmatpush1.msra.mxu0 %v9834
    %9836 = vmatprep.subr.mxu0 0.0
    %v9837 = vand.u32 %v3989, 4294901760
    %9838 = vmatpush1.msra.mxu0 %v9837
    %9839 = vmatprep.subr.mxu0 0.0
    %v9840 = vand.u32 %v3990, 4294901760
    %9841 = vmatpush1.msra.mxu0 %v9840
    %9842 = vmatprep.subr.mxu0 0.0
    %v9843 = vand.u32 %v3991, 4294901760
    %9844 = vmatpush1.msra.mxu0 %v9843
    %9845 = vmatprep.subr.mxu0 0.0
    %v9846 = vand.u32 %v3992, 4294901760
    %9847 = vmatpush1.msra.mxu0 %v9846
    %9848 = vmatprep.subr.mxu0 0.0
    %v9849 = vand.u32 %v3993, 4294901760
    %9850 = vmatpush1.msra.mxu0 %v9849
    %9851 = vmatprep.subr.mxu0 0.0
    %v9852 = vand.u32 %v3994, 4294901760
    %9853 = vmatpush1.msra.mxu0 %v9852
    %9854 = vmatprep.subr.mxu0 0.0
    %v9855 = vand.u32 %v3995, 4294901760
    %9856 = vmatpush1.msra.mxu0 %v9855
    %9857 = vmatprep.subr.mxu0 0.0
    %v9858 = vand.u32 %v3996, 4294901760
    %9859 = vmatpush1.msra.mxu0 %v9858
    %9860 = vmatprep.subr.mxu0 0.0
    %v9861 = vand.u32 %v3997, 4294901760
    %9862 = vmatpush1.msra.mxu0 %v9861
    %9863 = vmatprep.subr.mxu0 0.0
    %v9864 = vand.u32 %v3998, 4294901760
    %9865 = vmatpush1.msra.mxu0 %v9864
    %9866 = vmatprep.subr.mxu0 0.0
    %v9867 = vand.u32 %v3999, 4294901760
    %9868 = vmatpush1.msra.mxu0 %v9867
    %9869 = vmatprep.subr.mxu0 0.0
    %v9870 = vand.u32 %v4000, 4294901760
    %9871 = vmatpush1.msra.mxu0 %v9870
    %9872 = vmatprep.subr.mxu0 0.0
    %v9873 = vand.u32 %v4001, 4294901760
    %9874 = vmatpush1.msra.mxu0 %v9873
    %9875 = vmatprep.subr.mxu0 0.0
    %v9876 = vand.u32 %v4002, 4294901760
    %9877 = vmatpush1.msra.mxu0 %v9876
    %9878 = vmatprep.subr.mxu0 0.0
    %v9879 = vand.u32 %v4003, 4294901760
    %9880 = vmatpush1.msra.mxu0 %v9879
    %v9881 = vand.u32 %v4113, 4294901760
    %v9882 = vsub.f32 %v4113, %v9881
    %v9883 = vand.u32 %v9882, 4294901760
    %9884 = vmatprep.mubr.f32.mxu0 %v9883
    %v9885 = vand.u32 %v4105, 4294901760
    %v9886 = vsub.f32 %v4105, %v9885
    %v9887 = vand.u32 %v9886, 4294901760
    %9888 = vmatmul.mubr.f32.gmra.mrb[0].mxu0 %v9887
    %v9889 = vpop.f32.mrb[0].mxu0
    %v9890 = vadd.f32 %v9782, %v9889
    %v9891 = vpop.f32.mrb[0].mxu0
    %9892 = vdwg.mxu0
    %9893 = vmatprep.subr.mxu0 0.0
    %v9894 = vand.u32 %v3972, 4294901760
    %v9895 = vsub.f32 %v3972, %v9894
    %v9896 = vand.u32 %v9895, 4294901760
    %9897 = vmatpush1.msra.mxu0 %v9896
    %9898 = vmatprep.subr.mxu0 0.0
    %v9899 = vand.u32 %v3973, 4294901760
    %v9900 = vsub.f32 %v3973, %v9899
    %v9901 = vand.u32 %v9900, 4294901760
    %9902 = vmatpush1.msra.mxu0 %v9901
    %9903 = vmatprep.subr.mxu0 0.0
    %v9904 = vand.u32 %v3974, 4294901760
    %v9905 = vsub.f32 %v3974, %v9904
    %v9906 = vand.u32 %v9905, 4294901760
    %9907 = vmatpush1.msra.mxu0 %v9906
    %9908 = vmatprep.subr.mxu0 0.0
    %v9909 = vand.u32 %v3975, 4294901760
    %v9910 = vsub.f32 %v3975, %v9909
    %v9911 = vand.u32 %v9910, 4294901760
    %9912 = vmatpush1.msra.mxu0 %v9911
    %9913 = vmatprep.subr.mxu0 0.0
    %v9914 = vand.u32 %v3976, 4294901760
    %v9915 = vsub.f32 %v3976, %v9914
    %v9916 = vand.u32 %v9915, 4294901760
    %9917 = vmatpush1.msra.mxu0 %v9916
    %9918 = vmatprep.subr.mxu0 0.0
    %v9919 = vand.u32 %v3977, 4294901760
    %v9920 = vsub.f32 %v3977, %v9919
    %v9921 = vand.u32 %v9920, 4294901760
    %9922 = vmatpush1.msra.mxu0 %v9921
    %9923 = vmatprep.subr.mxu0 0.0
    %v9924 = vand.u32 %v3978, 4294901760
    %v9925 = vsub.f32 %v3978, %v9924
    %v9926 = vand.u32 %v9925, 4294901760
    %9927 = vmatpush1.msra.mxu0 %v9926
    %9928 = vmatprep.subr.mxu0 0.0
    %v9929 = vand.u32 %v3979, 4294901760
    %v9930 = vsub.f32 %v3979, %v9929
    %v9931 = vand.u32 %v9930, 4294901760
    %9932 = vmatpush1.msra.mxu0 %v9931
    %9933 = vmatprep.subr.mxu0 0.0
    %v9934 = vand.u32 %v3980, 4294901760
    %v9935 = vsub.f32 %v3980, %v9934
    %v9936 = vand.u32 %v9935, 4294901760
    %9937 = vmatpush1.msra.mxu0 %v9936
    %9938 = vmatprep.subr.mxu0 0.0
    %v9939 = vand.u32 %v3981, 4294901760
    %v9940 = vsub.f32 %v3981, %v9939
    %v9941 = vand.u32 %v9940, 4294901760
    %9942 = vmatpush1.msra.mxu0 %v9941
    %9943 = vmatprep.subr.mxu0 0.0
    %v9944 = vand.u32 %v3982, 4294901760
    %v9945 = vsub.f32 %v3982, %v9944
    %v9946 = vand.u32 %v9945, 4294901760
    %9947 = vmatpush1.msra.mxu0 %v9946
    %9948 = vmatprep.subr.mxu0 0.0
    %v9949 = vand.u32 %v3983, 4294901760
    %v9950 = vsub.f32 %v3983, %v9949
    %v9951 = vand.u32 %v9950, 4294901760
    %9952 = vmatpush1.msra.mxu0 %v9951
    %9953 = vmatprep.subr.mxu0 0.0
    %v9954 = vand.u32 %v3984, 4294901760
    %v9955 = vsub.f32 %v3984, %v9954
    %v9956 = vand.u32 %v9955, 4294901760
    %9957 = vmatpush1.msra.mxu0 %v9956
    %9958 = vmatprep.subr.mxu0 0.0
    %v9959 = vand.u32 %v3985, 4294901760
    %v9960 = vsub.f32 %v3985, %v9959
    %v9961 = vand.u32 %v9960, 4294901760
    %9962 = vmatpush1.msra.mxu0 %v9961
    %9963 = vmatprep.subr.mxu0 0.0
    %v9964 = vand.u32 %v3986, 4294901760
    %v9965 = vsub.f32 %v3986, %v9964
    %v9966 = vand.u32 %v9965, 4294901760
    %9967 = vmatpush1.msra.mxu0 %v9966
    %9968 = vmatprep.subr.mxu0 0.0
    %v9969 = vand.u32 %v3987, 4294901760
    %v9970 = vsub.f32 %v3987, %v9969
    %v9971 = vand.u32 %v9970, 4294901760
    %9972 = vmatpush1.msra.mxu0 %v9971
    %9973 = vmatprep.subr.mxu0 0.0
    %v9974 = vand.u32 %v3988, 4294901760
    %v9975 = vsub.f32 %v3988, %v9974
    %v9976 = vand.u32 %v9975, 4294901760
    %9977 = vmatpush1.msra.mxu0 %v9976
    %9978 = vmatprep.subr.mxu0 0.0
    %v9979 = vand.u32 %v3989, 4294901760
    %v9980 = vsub.f32 %v3989, %v9979
    %v9981 = vand.u32 %v9980, 4294901760
    %9982 = vmatpush1.msra.mxu0 %v9981
    %9983 = vmatprep.subr.mxu0 0.0
    %v9984 = vand.u32 %v3990, 4294901760
    %v9985 = vsub.f32 %v3990, %v9984
    %v9986 = vand.u32 %v9985, 4294901760
    %9987 = vmatpush1.msra.mxu0 %v9986
    %9988 = vmatprep.subr.mxu0 0.0
    %v9989 = vand.u32 %v3991, 4294901760
    %v9990 = vsub.f32 %v3991, %v9989
    %v9991 = vand.u32 %v9990, 4294901760
    %9992 = vmatpush1.msra.mxu0 %v9991
    %9993 = vmatprep.subr.mxu0 0.0
    %v9994 = vand.u32 %v3992, 4294901760
    %v9995 = vsub.f32 %v3992, %v9994
    %v9996 = vand.u32 %v9995, 4294901760
    %9997 = vmatpush1.msra.mxu0 %v9996
    %9998 = vmatprep.subr.mxu0 0.0
    %v9999 = vand.u32 %v3993, 4294901760
    %v10000 = vsub.f32 %v3993, %v9999
    %v10001 = vand.u32 %v10000, 4294901760
    %10002 = vmatpush1.msra.mxu0 %v10001
    %10003 = vmatprep.subr.mxu0 0.0
    %v10004 = vand.u32 %v3994, 4294901760
    %v10005 = vsub.f32 %v3994, %v10004
    %v10006 = vand.u32 %v10005, 4294901760
    %10007 = vmatpush1.msra.mxu0 %v10006
    %10008 = vmatprep.subr.mxu0 0.0
    %v10009 = vand.u32 %v3995, 4294901760
    %v10010 = vsub.f32 %v3995, %v10009
    %v10011 = vand.u32 %v10010, 4294901760
    %10012 = vmatpush1.msra.mxu0 %v10011
    %10013 = vmatprep.subr.mxu0 0.0
    %v10014 = vand.u32 %v3996, 4294901760
    %v10015 = vsub.f32 %v3996, %v10014
    %v10016 = vand.u32 %v10015, 4294901760
    %10017 = vmatpush1.msra.mxu0 %v10016
    %10018 = vmatprep.subr.mxu0 0.0
    %v10019 = vand.u32 %v3997, 4294901760
    %v10020 = vsub.f32 %v3997, %v10019
    %v10021 = vand.u32 %v10020, 4294901760
    %10022 = vmatpush1.msra.mxu0 %v10021
    %10023 = vmatprep.subr.mxu0 0.0
    %v10024 = vand.u32 %v3998, 4294901760
    %v10025 = vsub.f32 %v3998, %v10024
    %v10026 = vand.u32 %v10025, 4294901760
    %10027 = vmatpush1.msra.mxu0 %v10026
    %10028 = vmatprep.subr.mxu0 0.0
    %v10029 = vand.u32 %v3999, 4294901760
    %v10030 = vsub.f32 %v3999, %v10029
    %v10031 = vand.u32 %v10030, 4294901760
    %10032 = vmatpush1.msra.mxu0 %v10031
    %10033 = vmatprep.subr.mxu0 0.0
    %v10034 = vand.u32 %v4000, 4294901760
    %v10035 = vsub.f32 %v4000, %v10034
    %v10036 = vand.u32 %v10035, 4294901760
    %10037 = vmatpush1.msra.mxu0 %v10036
    %10038 = vmatprep.subr.mxu0 0.0
    %v10039 = vand.u32 %v4001, 4294901760
    %v10040 = vsub.f32 %v4001, %v10039
    %v10041 = vand.u32 %v10040, 4294901760
    %10042 = vmatpush1.msra.mxu0 %v10041
    %10043 = vmatprep.subr.mxu0 0.0
    %v10044 = vand.u32 %v4002, 4294901760
    %v10045 = vsub.f32 %v4002, %v10044
    %v10046 = vand.u32 %v10045, 4294901760
    %10047 = vmatpush1.msra.mxu0 %v10046
    %10048 = vmatprep.subr.mxu0 0.0
    %v10049 = vand.u32 %v4003, 4294901760
    %v10050 = vsub.f32 %v4003, %v10049
    %v10051 = vand.u32 %v10050, 4294901760
    %10052 = vmatpush1.msra.mxu0 %v10051
    %v10053 = vand.u32 %v4113, 4294901760
    %10054 = vmatprep.mubr.f32.mxu0 %v10053
    %v10055 = vand.u32 %v4105, 4294901760
    %10056 = vmatmul.mubr.f32.gmra.mrb[0].mxu0 %v10055
    %v10057 = vpop.f32.mrb[0].mxu0
    %v10058 = vadd.f32 %v9890, %v10057
    %v10059 = vpop.f32.mrb[0].mxu0
    %10060 = vdwg.mxu0
    %10061 = vmatprep.subr.mxu0 0.0
    %v10062 = vand.u32 %v3972, 4294901760
    %10063 = vmatpush1.msra.mxu0 %v10062
    %10064 = vmatprep.subr.mxu0 0.0
    %v10065 = vand.u32 %v3973, 4294901760
    %10066 = vmatpush1.msra.mxu0 %v10065
    %10067 = vmatprep.subr.mxu0 0.0
    %v10068 = vand.u32 %v3974, 4294901760
    %10069 = vmatpush1.msra.mxu0 %v10068
    %10070 = vmatprep.subr.mxu0 0.0
    %v10071 = vand.u32 %v3975, 4294901760
    %10072 = vmatpush1.msra.mxu0 %v10071
    %10073 = vmatprep.subr.mxu0 0.0
    %v10074 = vand.u32 %v3976, 4294901760
    %10075 = vmatpush1.msra.mxu0 %v10074
    %10076 = vmatprep.subr.mxu0 0.0
    %v10077 = vand.u32 %v3977, 4294901760
    %10078 = vmatpush1.msra.mxu0 %v10077
    %10079 = vmatprep.subr.mxu0 0.0
    %v10080 = vand.u32 %v3978, 4294901760
    %10081 = vmatpush1.msra.mxu0 %v10080
    %10082 = vmatprep.subr.mxu0 0.0
    %v10083 = vand.u32 %v3979, 4294901760
    %10084 = vmatpush1.msra.mxu0 %v10083
    %10085 = vmatprep.subr.mxu0 0.0
    %v10086 = vand.u32 %v3980, 4294901760
    %10087 = vmatpush1.msra.mxu0 %v10086
    %10088 = vmatprep.subr.mxu0 0.0
    %v10089 = vand.u32 %v3981, 4294901760
    %10090 = vmatpush1.msra.mxu0 %v10089
    %10091 = vmatprep.subr.mxu0 0.0
    %v10092 = vand.u32 %v3982, 4294901760
    %10093 = vmatpush1.msra.mxu0 %v10092
    %10094 = vmatprep.subr.mxu0 0.0
    %v10095 = vand.u32 %v3983, 4294901760
    %10096 = vmatpush1.msra.mxu0 %v10095
    %10097 = vmatprep.subr.mxu0 0.0
    %v10098 = vand.u32 %v3984, 4294901760
    %10099 = vmatpush1.msra.mxu0 %v10098
    %10100 = vmatprep.subr.mxu0 0.0
    %v10101 = vand.u32 %v3985, 4294901760
    %10102 = vmatpush1.msra.mxu0 %v10101
    %10103 = vmatprep.subr.mxu0 0.0
    %v10104 = vand.u32 %v3986, 4294901760
    %10105 = vmatpush1.msra.mxu0 %v10104
    %10106 = vmatprep.subr.mxu0 0.0
    %v10107 = vand.u32 %v3987, 4294901760
    %10108 = vmatpush1.msra.mxu0 %v10107
    %10109 = vmatprep.subr.mxu0 0.0
    %v10110 = vand.u32 %v3988, 4294901760
    %10111 = vmatpush1.msra.mxu0 %v10110
    %10112 = vmatprep.subr.mxu0 0.0
    %v10113 = vand.u32 %v3989, 4294901760
    %10114 = vmatpush1.msra.mxu0 %v10113
    %10115 = vmatprep.subr.mxu0 0.0
    %v10116 = vand.u32 %v3990, 4294901760
    %10117 = vmatpush1.msra.mxu0 %v10116
    %10118 = vmatprep.subr.mxu0 0.0
    %v10119 = vand.u32 %v3991, 4294901760
    %10120 = vmatpush1.msra.mxu0 %v10119
    %10121 = vmatprep.subr.mxu0 0.0
    %v10122 = vand.u32 %v3992, 4294901760
    %10123 = vmatpush1.msra.mxu0 %v10122
    %10124 = vmatprep.subr.mxu0 0.0
    %v10125 = vand.u32 %v3993, 4294901760
    %10126 = vmatpush1.msra.mxu0 %v10125
    %10127 = vmatprep.subr.mxu0 0.0
    %v10128 = vand.u32 %v3994, 4294901760
    %10129 = vmatpush1.msra.mxu0 %v10128
    %10130 = vmatprep.subr.mxu0 0.0
    %v10131 = vand.u32 %v3995, 4294901760
    %10132 = vmatpush1.msra.mxu0 %v10131
    %10133 = vmatprep.subr.mxu0 0.0
    %v10134 = vand.u32 %v3996, 4294901760
    %10135 = vmatpush1.msra.mxu0 %v10134
    %10136 = vmatprep.subr.mxu0 0.0
    %v10137 = vand.u32 %v3997, 4294901760
    %10138 = vmatpush1.msra.mxu0 %v10137
    %10139 = vmatprep.subr.mxu0 0.0
    %v10140 = vand.u32 %v3998, 4294901760
    %10141 = vmatpush1.msra.mxu0 %v10140
    %10142 = vmatprep.subr.mxu0 0.0
    %v10143 = vand.u32 %v3999, 4294901760
    %10144 = vmatpush1.msra.mxu0 %v10143
    %10145 = vmatprep.subr.mxu0 0.0
    %v10146 = vand.u32 %v4000, 4294901760
    %10147 = vmatpush1.msra.mxu0 %v10146
    %10148 = vmatprep.subr.mxu0 0.0
    %v10149 = vand.u32 %v4001, 4294901760
    %10150 = vmatpush1.msra.mxu0 %v10149
    %10151 = vmatprep.subr.mxu0 0.0
    %v10152 = vand.u32 %v4002, 4294901760
    %10153 = vmatpush1.msra.mxu0 %v10152
    %10154 = vmatprep.subr.mxu0 0.0
    %v10155 = vand.u32 %v4003, 4294901760
    %10156 = vmatpush1.msra.mxu0 %v10155
    %v10157 = vand.u32 %v4113, 4294901760
    %10158 = vmatprep.mubr.f32.mxu0 %v10157
    %v10159 = vand.u32 %v4105, 4294901760
    %10160 = vmatmul.mubr.f32.gmra.mrb[0].mxu0 %v10159
    %v10161 = vpop.f32.mrb[0].mxu0
    %v10162 = vadd.f32 %v10058, %v10161
    %v10163 = vpop.f32.mrb[0].mxu0
    %10164 = vdwg.mxu0
    %10165 = vmatprep.subr.mxu0 0.0
    %v10166 = vand.u32 %v4004, 4294901760
    %10167 = vmatpush1.msra.mxu0 %v10166
    %10168 = vmatprep.subr.mxu0 0.0
    %v10169 = vand.u32 %v4005, 4294901760
    %10170 = vmatpush1.msra.mxu0 %v10169
    %10171 = vmatprep.subr.mxu0 0.0
    %v10172 = vand.u32 %v4006, 4294901760
    %10173 = vmatpush1.msra.mxu0 %v10172
    %10174 = vmatprep.subr.mxu0 0.0
    %v10175 = vand.u32 %v4007, 4294901760
    %10176 = vmatpush1.msra.mxu0 %v10175
    %10177 = vmatprep.subr.mxu0 0.0
    %v10178 = vand.u32 %v4008, 4294901760
    %10179 = vmatpush1.msra.mxu0 %v10178
    %10180 = vmatprep.subr.mxu0 0.0
    %v10181 = vand.u32 %v4009, 4294901760
    %10182 = vmatpush1.msra.mxu0 %v10181
    %10183 = vmatprep.subr.mxu0 0.0
    %v10184 = vand.u32 %v4010, 4294901760
    %10185 = vmatpush1.msra.mxu0 %v10184
    %10186 = vmatprep.subr.mxu0 0.0
    %v10187 = vand.u32 %v4011, 4294901760
    %10188 = vmatpush1.msra.mxu0 %v10187
    %10189 = vmatprep.subr.mxu0 0.0
    %v10190 = vand.u32 %v4012, 4294901760
    %10191 = vmatpush1.msra.mxu0 %v10190
    %10192 = vmatprep.subr.mxu0 0.0
    %v10193 = vand.u32 %v4013, 4294901760
    %10194 = vmatpush1.msra.mxu0 %v10193
    %10195 = vmatprep.subr.mxu0 0.0
    %v10196 = vand.u32 %v4014, 4294901760
    %10197 = vmatpush1.msra.mxu0 %v10196
    %10198 = vmatprep.subr.mxu0 0.0
    %v10199 = vand.u32 %v4015, 4294901760
    %10200 = vmatpush1.msra.mxu0 %v10199
    %10201 = vmatprep.subr.mxu0 0.0
    %v10202 = vand.u32 %v4016, 4294901760
    %10203 = vmatpush1.msra.mxu0 %v10202
    %10204 = vmatprep.subr.mxu0 0.0
    %v10205 = vand.u32 %v4017, 4294901760
    %10206 = vmatpush1.msra.mxu0 %v10205
    %10207 = vmatprep.subr.mxu0 0.0
    %v10208 = vand.u32 %v4018, 4294901760
    %10209 = vmatpush1.msra.mxu0 %v10208
    %10210 = vmatprep.subr.mxu0 0.0
    %v10211 = vand.u32 %v4019, 4294901760
    %10212 = vmatpush1.msra.mxu0 %v10211
    %10213 = vmatprep.subr.mxu0 0.0
    %v10214 = vand.u32 %v4020, 4294901760
    %10215 = vmatpush1.msra.mxu0 %v10214
    %10216 = vmatprep.subr.mxu0 0.0
    %v10217 = vand.u32 %v4021, 4294901760
    %10218 = vmatpush1.msra.mxu0 %v10217
    %10219 = vmatprep.subr.mxu0 0.0
    %v10220 = vand.u32 %v4022, 4294901760
    %10221 = vmatpush1.msra.mxu0 %v10220
    %10222 = vmatprep.subr.mxu0 0.0
    %v10223 = vand.u32 %v4023, 4294901760
    %10224 = vmatpush1.msra.mxu0 %v10223
    %10225 = vmatprep.subr.mxu0 0.0
    %v10226 = vand.u32 %v4024, 4294901760
    %10227 = vmatpush1.msra.mxu0 %v10226
    %10228 = vmatprep.subr.mxu0 0.0
    %v10229 = vand.u32 %v4025, 4294901760
    %10230 = vmatpush1.msra.mxu0 %v10229
    %10231 = vmatprep.subr.mxu0 0.0
    %v10232 = vand.u32 %v4026, 4294901760
    %10233 = vmatpush1.msra.mxu0 %v10232
    %10234 = vmatprep.subr.mxu0 0.0
    %v10235 = vand.u32 %v4027, 4294901760
    %10236 = vmatpush1.msra.mxu0 %v10235
    %10237 = vmatprep.subr.mxu0 0.0
    %v10238 = vand.u32 %v4028, 4294901760
    %10239 = vmatpush1.msra.mxu0 %v10238
    %10240 = vmatprep.subr.mxu0 0.0
    %v10241 = vand.u32 %v4029, 4294901760
    %10242 = vmatpush1.msra.mxu0 %v10241
    %10243 = vmatprep.subr.mxu0 0.0
    %v10244 = vand.u32 %v4030, 4294901760
    %10245 = vmatpush1.msra.mxu0 %v10244
    %10246 = vmatprep.subr.mxu0 0.0
    %v10247 = vand.u32 %v4031, 4294901760
    %10248 = vmatpush1.msra.mxu0 %v10247
    %10249 = vmatprep.subr.mxu0 0.0
    %v10250 = vand.u32 %v4032, 4294901760
    %10251 = vmatpush1.msra.mxu0 %v10250
    %10252 = vmatprep.subr.mxu0 0.0
    %v10253 = vand.u32 %v4033, 4294901760
    %10254 = vmatpush1.msra.mxu0 %v10253
    %10255 = vmatprep.subr.mxu0 0.0
    %v10256 = vand.u32 %v4034, 4294901760
    %10257 = vmatpush1.msra.mxu0 %v10256
    %10258 = vmatprep.subr.mxu0 0.0
    %v10259 = vand.u32 %v4035, 4294901760
    %10260 = vmatpush1.msra.mxu0 %v10259
    %v10261 = vand.u32 %v4114, 4294901760
    %v10262 = vsub.f32 %v4114, %v10261
    %v10263 = vand.u32 %v10262, 4294901760
    %v10264 = vsub.f32 %v10262, %v10263
    %v10265 = vand.u32 %v10264, 4294901760
    %10266 = vmatprep.mubr.f32.mxu0 %v10265
    %v10267 = vand.u32 %v4112, 4294901760
    %v10268 = vsub.f32 %v4112, %v10267
    %v10269 = vand.u32 %v10268, 4294901760
    %v10270 = vsub.f32 %v10268, %v10269
    %v10271 = vand.u32 %v10270, 4294901760
    %10272 = vmatmul.mubr.f32.gmra.mrb[0].mxu0 %v10271
    %v10273 = vpop.f32.mrb[0].mxu0
    %v10274 = vadd.f32 %v10162, %v10273
    %v10275 = vpop.f32.mrb[0].mxu0
    %10276 = vdwg.mxu0
    %10277 = vmatprep.subr.mxu0 0.0
    %v10278 = vand.u32 %v4004, 4294901760
    %v10279 = vsub.f32 %v4004, %v10278
    %v10280 = vand.u32 %v10279, 4294901760
    %v10281 = vsub.f32 %v10279, %v10280
    %v10282 = vand.u32 %v10281, 4294901760
    %10283 = vmatpush1.msra.mxu0 %v10282
    %10284 = vmatprep.subr.mxu0 0.0
    %v10285 = vand.u32 %v4005, 4294901760
    %v10286 = vsub.f32 %v4005, %v10285
    %v10287 = vand.u32 %v10286, 4294901760
    %v10288 = vsub.f32 %v10286, %v10287
    %v10289 = vand.u32 %v10288, 4294901760
    %10290 = vmatpush1.msra.mxu0 %v10289
    %10291 = vmatprep.subr.mxu0 0.0
    %v10292 = vand.u32 %v4006, 4294901760
    %v10293 = vsub.f32 %v4006, %v10292
    %v10294 = vand.u32 %v10293, 4294901760
    %v10295 = vsub.f32 %v10293, %v10294
    %v10296 = vand.u32 %v10295, 4294901760
    %10297 = vmatpush1.msra.mxu0 %v10296
    %10298 = vmatprep.subr.mxu0 0.0
    %v10299 = vand.u32 %v4007, 4294901760
    %v10300 = vsub.f32 %v4007, %v10299
    %v10301 = vand.u32 %v10300, 4294901760
    %v10302 = vsub.f32 %v10300, %v10301
    %v10303 = vand.u32 %v10302, 4294901760
    %10304 = vmatpush1.msra.mxu0 %v10303
    %10305 = vmatprep.subr.mxu0 0.0
    %v10306 = vand.u32 %v4008, 4294901760
    %v10307 = vsub.f32 %v4008, %v10306
    %v10308 = vand.u32 %v10307, 4294901760
    %v10309 = vsub.f32 %v10307, %v10308
    %v10310 = vand.u32 %v10309, 4294901760
    %10311 = vmatpush1.msra.mxu0 %v10310
    %10312 = vmatprep.subr.mxu0 0.0
    %v10313 = vand.u32 %v4009, 4294901760
    %v10314 = vsub.f32 %v4009, %v10313
    %v10315 = vand.u32 %v10314, 4294901760
    %v10316 = vsub.f32 %v10314, %v10315
    %v10317 = vand.u32 %v10316, 4294901760
    %10318 = vmatpush1.msra.mxu0 %v10317
    %10319 = vmatprep.subr.mxu0 0.0
    %v10320 = vand.u32 %v4010, 4294901760
    %v10321 = vsub.f32 %v4010, %v10320
    %v10322 = vand.u32 %v10321, 4294901760
    %v10323 = vsub.f32 %v10321, %v10322
    %v10324 = vand.u32 %v10323, 4294901760
    %10325 = vmatpush1.msra.mxu0 %v10324
    %10326 = vmatprep.subr.mxu0 0.0
    %v10327 = vand.u32 %v4011, 4294901760
    %v10328 = vsub.f32 %v4011, %v10327
    %v10329 = vand.u32 %v10328, 4294901760
    %v10330 = vsub.f32 %v10328, %v10329
    %v10331 = vand.u32 %v10330, 4294901760
    %10332 = vmatpush1.msra.mxu0 %v10331
    %10333 = vmatprep.subr.mxu0 0.0
    %v10334 = vand.u32 %v4012, 4294901760
    %v10335 = vsub.f32 %v4012, %v10334
    %v10336 = vand.u32 %v10335, 4294901760
    %v10337 = vsub.f32 %v10335, %v10336
    %v10338 = vand.u32 %v10337, 4294901760
    %10339 = vmatpush1.msra.mxu0 %v10338
    %10340 = vmatprep.subr.mxu0 0.0
    %v10341 = vand.u32 %v4013, 4294901760
    %v10342 = vsub.f32 %v4013, %v10341
    %v10343 = vand.u32 %v10342, 4294901760
    %v10344 = vsub.f32 %v10342, %v10343
    %v10345 = vand.u32 %v10344, 4294901760
    %10346 = vmatpush1.msra.mxu0 %v10345
    %10347 = vmatprep.subr.mxu0 0.0
    %v10348 = vand.u32 %v4014, 4294901760
    %v10349 = vsub.f32 %v4014, %v10348
    %v10350 = vand.u32 %v10349, 4294901760
    %v10351 = vsub.f32 %v10349, %v10350
    %v10352 = vand.u32 %v10351, 4294901760
    %10353 = vmatpush1.msra.mxu0 %v10352
    %10354 = vmatprep.subr.mxu0 0.0
    %v10355 = vand.u32 %v4015, 4294901760
    %v10356 = vsub.f32 %v4015, %v10355
    %v10357 = vand.u32 %v10356, 4294901760
    %v10358 = vsub.f32 %v10356, %v10357
    %v10359 = vand.u32 %v10358, 4294901760
    %10360 = vmatpush1.msra.mxu0 %v10359
    %10361 = vmatprep.subr.mxu0 0.0
    %v10362 = vand.u32 %v4016, 4294901760
    %v10363 = vsub.f32 %v4016, %v10362
    %v10364 = vand.u32 %v10363, 4294901760
    %v10365 = vsub.f32 %v10363, %v10364
    %v10366 = vand.u32 %v10365, 4294901760
    %10367 = vmatpush1.msra.mxu0 %v10366
    %10368 = vmatprep.subr.mxu0 0.0
    %v10369 = vand.u32 %v4017, 4294901760
    %v10370 = vsub.f32 %v4017, %v10369
    %v10371 = vand.u32 %v10370, 4294901760
    %v10372 = vsub.f32 %v10370, %v10371
    %v10373 = vand.u32 %v10372, 4294901760
    %10374 = vmatpush1.msra.mxu0 %v10373
    %10375 = vmatprep.subr.mxu0 0.0
    %v10376 = vand.u32 %v4018, 4294901760
    %v10377 = vsub.f32 %v4018, %v10376
    %v10378 = vand.u32 %v10377, 4294901760
    %v10379 = vsub.f32 %v10377, %v10378
    %v10380 = vand.u32 %v10379, 4294901760
    %10381 = vmatpush1.msra.mxu0 %v10380
    %10382 = vmatprep.subr.mxu0 0.0
    %v10383 = vand.u32 %v4019, 4294901760
    %v10384 = vsub.f32 %v4019, %v10383
    %v10385 = vand.u32 %v10384, 4294901760
    %v10386 = vsub.f32 %v10384, %v10385
    %v10387 = vand.u32 %v10386, 4294901760
    %10388 = vmatpush1.msra.mxu0 %v10387
    %10389 = vmatprep.subr.mxu0 0.0
    %v10390 = vand.u32 %v4020, 4294901760
    %v10391 = vsub.f32 %v4020, %v10390
    %v10392 = vand.u32 %v10391, 4294901760
    %v10393 = vsub.f32 %v10391, %v10392
    %v10394 = vand.u32 %v10393, 4294901760
    %10395 = vmatpush1.msra.mxu0 %v10394
    %10396 = vmatprep.subr.mxu0 0.0
    %v10397 = vand.u32 %v4021, 4294901760
    %v10398 = vsub.f32 %v4021, %v10397
    %v10399 = vand.u32 %v10398, 4294901760
    %v10400 = vsub.f32 %v10398, %v10399
    %v10401 = vand.u32 %v10400, 4294901760
    %10402 = vmatpush1.msra.mxu0 %v10401
    %10403 = vmatprep.subr.mxu0 0.0
    %v10404 = vand.u32 %v4022, 4294901760
    %v10405 = vsub.f32 %v4022, %v10404
    %v10406 = vand.u32 %v10405, 4294901760
    %v10407 = vsub.f32 %v10405, %v10406
    %v10408 = vand.u32 %v10407, 4294901760
    %10409 = vmatpush1.msra.mxu0 %v10408
    %10410 = vmatprep.subr.mxu0 0.0
    %v10411 = vand.u32 %v4023, 4294901760
    %v10412 = vsub.f32 %v4023, %v10411
    %v10413 = vand.u32 %v10412, 4294901760
    %v10414 = vsub.f32 %v10412, %v10413
    %v10415 = vand.u32 %v10414, 4294901760
    %10416 = vmatpush1.msra.mxu0 %v10415
    %10417 = vmatprep.subr.mxu0 0.0
    %v10418 = vand.u32 %v4024, 4294901760
    %v10419 = vsub.f32 %v4024, %v10418
    %v10420 = vand.u32 %v10419, 4294901760
    %v10421 = vsub.f32 %v10419, %v10420
    %v10422 = vand.u32 %v10421, 4294901760
    %10423 = vmatpush1.msra.mxu0 %v10422
    %10424 = vmatprep.subr.mxu0 0.0
    %v10425 = vand.u32 %v4025, 4294901760
    %v10426 = vsub.f32 %v4025, %v10425
    %v10427 = vand.u32 %v10426, 4294901760
    %v10428 = vsub.f32 %v10426, %v10427
    %v10429 = vand.u32 %v10428, 4294901760
    %10430 = vmatpush1.msra.mxu0 %v10429
    %10431 = vmatprep.subr.mxu0 0.0
    %v10432 = vand.u32 %v4026, 4294901760
    %v10433 = vsub.f32 %v4026, %v10432
    %v10434 = vand.u32 %v10433, 4294901760
    %v10435 = vsub.f32 %v10433, %v10434
    %v10436 = vand.u32 %v10435, 4294901760
    %10437 = vmatpush1.msra.mxu0 %v10436
    %10438 = vmatprep.subr.mxu0 0.0
    %v10439 = vand.u32 %v4027, 4294901760
    %v10440 = vsub.f32 %v4027, %v10439
    %v10441 = vand.u32 %v10440, 4294901760
    %v10442 = vsub.f32 %v10440, %v10441
    %v10443 = vand.u32 %v10442, 4294901760
    %10444 = vmatpush1.msra.mxu0 %v10443
    %10445 = vmatprep.subr.mxu0 0.0
    %v10446 = vand.u32 %v4028, 4294901760
    %v10447 = vsub.f32 %v4028, %v10446
    %v10448 = vand.u32 %v10447, 4294901760
    %v10449 = vsub.f32 %v10447, %v10448
    %v10450 = vand.u32 %v10449, 4294901760
    %10451 = vmatpush1.msra.mxu0 %v10450
    %10452 = vmatprep.subr.mxu0 0.0
    %v10453 = vand.u32 %v4029, 4294901760
    %v10454 = vsub.f32 %v4029, %v10453
    %v10455 = vand.u32 %v10454, 4294901760
    %v10456 = vsub.f32 %v10454, %v10455
    %v10457 = vand.u32 %v10456, 4294901760
    %10458 = vmatpush1.msra.mxu0 %v10457
    %10459 = vmatprep.subr.mxu0 0.0
    %v10460 = vand.u32 %v4030, 4294901760
    %v10461 = vsub.f32 %v4030, %v10460
    %v10462 = vand.u32 %v10461, 4294901760
    %v10463 = vsub.f32 %v10461, %v10462
    %v10464 = vand.u32 %v10463, 4294901760
    %10465 = vmatpush1.msra.mxu0 %v10464
    %10466 = vmatprep.subr.mxu0 0.0
    %v10467 = vand.u32 %v4031, 4294901760
    %v10468 = vsub.f32 %v4031, %v10467
    %v10469 = vand.u32 %v10468, 4294901760
    %v10470 = vsub.f32 %v10468, %v10469
    %v10471 = vand.u32 %v10470, 4294901760
    %10472 = vmatpush1.msra.mxu0 %v10471
    %10473 = vmatprep.subr.mxu0 0.0
    %v10474 = vand.u32 %v4032, 4294901760
    %v10475 = vsub.f32 %v4032, %v10474
    %v10476 = vand.u32 %v10475, 4294901760
    %v10477 = vsub.f32 %v10475, %v10476
    %v10478 = vand.u32 %v10477, 4294901760
    %10479 = vmatpush1.msra.mxu0 %v10478
    %10480 = vmatprep.subr.mxu0 0.0
    %v10481 = vand.u32 %v4033, 4294901760
    %v10482 = vsub.f32 %v4033, %v10481
    %v10483 = vand.u32 %v10482, 4294901760
    %v10484 = vsub.f32 %v10482, %v10483
    %v10485 = vand.u32 %v10484, 4294901760
    %10486 = vmatpush1.msra.mxu0 %v10485
    %10487 = vmatprep.subr.mxu0 0.0
    %v10488 = vand.u32 %v4034, 4294901760
    %v10489 = vsub.f32 %v4034, %v10488
    %v10490 = vand.u32 %v10489, 4294901760
    %v10491 = vsub.f32 %v10489, %v10490
    %v10492 = vand.u32 %v10491, 4294901760
    %10493 = vmatpush1.msra.mxu0 %v10492
    %10494 = vmatprep.subr.mxu0 0.0
    %v10495 = vand.u32 %v4035, 4294901760
    %v10496 = vsub.f32 %v4035, %v10495
    %v10497 = vand.u32 %v10496, 4294901760
    %v10498 = vsub.f32 %v10496, %v10497
    %v10499 = vand.u32 %v10498, 4294901760
    %10500 = vmatpush1.msra.mxu0 %v10499
    %v10501 = vand.u32 %v4114, 4294901760
    %10502 = vmatprep.mubr.f32.mxu0 %v10501
    %v10503 = vand.u32 %v4112, 4294901760
    %10504 = vmatmul.mubr.f32.gmra.mrb[0].mxu0 %v10503
    %v10505 = vpop.f32.mrb[0].mxu0
    %v10506 = vadd.f32 %v10274, %v10505
    %v10507 = vpop.f32.mrb[0].mxu0
    %10508 = vdwg.mxu0
    %10509 = vmatprep.subr.mxu0 0.0
    %v10510 = vand.u32 %v4004, 4294901760
    %v10511 = vsub.f32 %v4004, %v10510
    %10512 = vmatpush1.msra.mxu0 %v10511
    %10513 = vmatprep.subr.mxu0 0.0
    %v10514 = vand.u32 %v4005, 4294901760
    %v10515 = vsub.f32 %v4005, %v10514
    %10516 = vmatpush1.msra.mxu0 %v10515
    %10517 = vmatprep.subr.mxu0 0.0
    %v10518 = vand.u32 %v4006, 4294901760
    %v10519 = vsub.f32 %v4006, %v10518
    %10520 = vmatpush1.msra.mxu0 %v10519
    %10521 = vmatprep.subr.mxu0 0.0
    %v10522 = vand.u32 %v4007, 4294901760
    %v10523 = vsub.f32 %v4007, %v10522
    %10524 = vmatpush1.msra.mxu0 %v10523
    %10525 = vmatprep.subr.mxu0 0.0
    %v10526 = vand.u32 %v4008, 4294901760
    %v10527 = vsub.f32 %v4008, %v10526
    %10528 = vmatpush1.msra.mxu0 %v10527
    %10529 = vmatprep.subr.mxu0 0.0
    %v10530 = vand.u32 %v4009, 4294901760
    %v10531 = vsub.f32 %v4009, %v10530
    %10532 = vmatpush1.msra.mxu0 %v10531
    %10533 = vmatprep.subr.mxu0 0.0
    %v10534 = vand.u32 %v4010, 4294901760
    %v10535 = vsub.f32 %v4010, %v10534
    %10536 = vmatpush1.msra.mxu0 %v10535
    %10537 = vmatprep.subr.mxu0 0.0
    %v10538 = vand.u32 %v4011, 4294901760
    %v10539 = vsub.f32 %v4011, %v10538
    %10540 = vmatpush1.msra.mxu0 %v10539
    %10541 = vmatprep.subr.mxu0 0.0
    %v10542 = vand.u32 %v4012, 4294901760
    %v10543 = vsub.f32 %v4012, %v10542
    %10544 = vmatpush1.msra.mxu0 %v10543
    %10545 = vmatprep.subr.mxu0 0.0
    %v10546 = vand.u32 %v4013, 4294901760
    %v10547 = vsub.f32 %v4013, %v10546
    %10548 = vmatpush1.msra.mxu0 %v10547
    %10549 = vmatprep.subr.mxu0 0.0
    %v10550 = vand.u32 %v4014, 4294901760
    %v10551 = vsub.f32 %v4014, %v10550
    %10552 = vmatpush1.msra.mxu0 %v10551
    %10553 = vmatprep.subr.mxu0 0.0
    %v10554 = vand.u32 %v4015, 4294901760
    %v10555 = vsub.f32 %v4015, %v10554
    %10556 = vmatpush1.msra.mxu0 %v10555
    %10557 = vmatprep.subr.mxu0 0.0
    %v10558 = vand.u32 %v4016, 4294901760
    %v10559 = vsub.f32 %v4016, %v10558
    %10560 = vmatpush1.msra.mxu0 %v10559
    %10561 = vmatprep.subr.mxu0 0.0
    %v10562 = vand.u32 %v4017, 4294901760
    %v10563 = vsub.f32 %v4017, %v10562
    %10564 = vmatpush1.msra.mxu0 %v10563
    %10565 = vmatprep.subr.mxu0 0.0
    %v10566 = vand.u32 %v4018, 4294901760
    %v10567 = vsub.f32 %v4018, %v10566
    %10568 = vmatpush1.msra.mxu0 %v10567
    %10569 = vmatprep.subr.mxu0 0.0
    %v10570 = vand.u32 %v4019, 4294901760
    %v10571 = vsub.f32 %v4019, %v10570
    %10572 = vmatpush1.msra.mxu0 %v10571
    %10573 = vmatprep.subr.mxu0 0.0
    %v10574 = vand.u32 %v4020, 4294901760
    %v10575 = vsub.f32 %v4020, %v10574
    %10576 = vmatpush1.msra.mxu0 %v10575
    %10577 = vmatprep.subr.mxu0 0.0
    %v10578 = vand.u32 %v4021, 4294901760
    %v10579 = vsub.f32 %v4021, %v10578
    %10580 = vmatpush1.msra.mxu0 %v10579
    %10581 = vmatprep.subr.mxu0 0.0
    %v10582 = vand.u32 %v4022, 4294901760
    %v10583 = vsub.f32 %v4022, %v10582
    %10584 = vmatpush1.msra.mxu0 %v10583
    %10585 = vmatprep.subr.mxu0 0.0
    %v10586 = vand.u32 %v4023, 4294901760
    %v10587 = vsub.f32 %v4023, %v10586
    %10588 = vmatpush1.msra.mxu0 %v10587
    %10589 = vmatprep.subr.mxu0 0.0
    %v10590 = vand.u32 %v4024, 4294901760
    %v10591 = vsub.f32 %v4024, %v10590
    %10592 = vmatpush1.msra.mxu0 %v10591
    %10593 = vmatprep.subr.mxu0 0.0
    %v10594 = vand.u32 %v4025, 4294901760
    %v10595 = vsub.f32 %v4025, %v10594
    %10596 = vmatpush1.msra.mxu0 %v10595
    %10597 = vmatprep.subr.mxu0 0.0
    %v10598 = vand.u32 %v4026, 4294901760
    %v10599 = vsub.f32 %v4026, %v10598
    %10600 = vmatpush1.msra.mxu0 %v10599
    %10601 = vmatprep.subr.mxu0 0.0
    %v10602 = vand.u32 %v4027, 4294901760
    %v10603 = vsub.f32 %v4027, %v10602
    %10604 = vmatpush1.msra.mxu0 %v10603
    %10605 = vmatprep.subr.mxu0 0.0
    %v10606 = vand.u32 %v4028, 4294901760
    %v10607 = vsub.f32 %v4028, %v10606
    %10608 = vmatpush1.msra.mxu0 %v10607
    %10609 = vmatprep.subr.mxu0 0.0
    %v10610 = vand.u32 %v4029, 4294901760
    %v10611 = vsub.f32 %v4029, %v10610
    %10612 = vmatpush1.msra.mxu0 %v10611
    %10613 = vmatprep.subr.mxu0 0.0
    %v10614 = vand.u32 %v4030, 4294901760
    %v10615 = vsub.f32 %v4030, %v10614
    %10616 = vmatpush1.msra.mxu0 %v10615
    %10617 = vmatprep.subr.mxu0 0.0
    %v10618 = vand.u32 %v4031, 4294901760
    %v10619 = vsub.f32 %v4031, %v10618
    %10620 = vmatpush1.msra.mxu0 %v10619
    %10621 = vmatprep.subr.mxu0 0.0
    %v10622 = vand.u32 %v4032, 4294901760
    %v10623 = vsub.f32 %v4032, %v10622
    %10624 = vmatpush1.msra.mxu0 %v10623
    %10625 = vmatprep.subr.mxu0 0.0
    %v10626 = vand.u32 %v4033, 4294901760
    %v10627 = vsub.f32 %v4033, %v10626
    %10628 = vmatpush1.msra.mxu0 %v10627
    %10629 = vmatprep.subr.mxu0 0.0
    %v10630 = vand.u32 %v4034, 4294901760
    %v10631 = vsub.f32 %v4034, %v10630
    %10632 = vmatpush1.msra.mxu0 %v10631
    %10633 = vmatprep.subr.mxu0 0.0
    %v10634 = vand.u32 %v4035, 4294901760
    %v10635 = vsub.f32 %v4035, %v10634
    %10636 = vmatpush1.msra.mxu0 %v10635
    %v10637 = vand.u32 %v4114, 4294901760
    %v10638 = vsub.f32 %v4114, %v10637
    %10639 = vmatprep.mubr.f32.mxu0 %v10638
    %v10640 = vand.u32 %v4112, 4294901760
    %v10641 = vsub.f32 %v4112, %v10640
    %10642 = vmatmul.mubr.f32.gmra.mrb[0].mxu0 %v10641
    %v10643 = vpop.f32.mrb[0].mxu0
    %v10644 = vadd.f32 %v10506, %v10643
    %v10645 = vpop.f32.mrb[0].mxu0
    %10646 = vdwg.mxu0
    %10647 = vmatprep.subr.mxu0 0.0
    %v10648 = vand.u32 %v4004, 4294901760
    %10649 = vmatpush1.msra.mxu0 %v10648
    %10650 = vmatprep.subr.mxu0 0.0
    %v10651 = vand.u32 %v4005, 4294901760
    %10652 = vmatpush1.msra.mxu0 %v10651
    %10653 = vmatprep.subr.mxu0 0.0
    %v10654 = vand.u32 %v4006, 4294901760
    %10655 = vmatpush1.msra.mxu0 %v10654
    %10656 = vmatprep.subr.mxu0 0.0
    %v10657 = vand.u32 %v4007, 4294901760
    %10658 = vmatpush1.msra.mxu0 %v10657
    %10659 = vmatprep.subr.mxu0 0.0
    %v10660 = vand.u32 %v4008, 4294901760
    %10661 = vmatpush1.msra.mxu0 %v10660
    %10662 = vmatprep.subr.mxu0 0.0
    %v10663 = vand.u32 %v4009, 4294901760
    %10664 = vmatpush1.msra.mxu0 %v10663
    %10665 = vmatprep.subr.mxu0 0.0
    %v10666 = vand.u32 %v4010, 4294901760
    %10667 = vmatpush1.msra.mxu0 %v10666
    %10668 = vmatprep.subr.mxu0 0.0
    %v10669 = vand.u32 %v4011, 4294901760
    %10670 = vmatpush1.msra.mxu0 %v10669
    %10671 = vmatprep.subr.mxu0 0.0
    %v10672 = vand.u32 %v4012, 4294901760
    %10673 = vmatpush1.msra.mxu0 %v10672
    %10674 = vmatprep.subr.mxu0 0.0
    %v10675 = vand.u32 %v4013, 4294901760
    %10676 = vmatpush1.msra.mxu0 %v10675
    %10677 = vmatprep.subr.mxu0 0.0
    %v10678 = vand.u32 %v4014, 4294901760
    %10679 = vmatpush1.msra.mxu0 %v10678
    %10680 = vmatprep.subr.mxu0 0.0
    %v10681 = vand.u32 %v4015, 4294901760
    %10682 = vmatpush1.msra.mxu0 %v10681
    %10683 = vmatprep.subr.mxu0 0.0
    %v10684 = vand.u32 %v4016, 4294901760
    %10685 = vmatpush1.msra.mxu0 %v10684
    %10686 = vmatprep.subr.mxu0 0.0
    %v10687 = vand.u32 %v4017, 4294901760
    %10688 = vmatpush1.msra.mxu0 %v10687
    %10689 = vmatprep.subr.mxu0 0.0
    %v10690 = vand.u32 %v4018, 4294901760
    %10691 = vmatpush1.msra.mxu0 %v10690
    %10692 = vmatprep.subr.mxu0 0.0
    %v10693 = vand.u32 %v4019, 4294901760
    %10694 = vmatpush1.msra.mxu0 %v10693
    %10695 = vmatprep.subr.mxu0 0.0
    %v10696 = vand.u32 %v4020, 4294901760
    %10697 = vmatpush1.msra.mxu0 %v10696
    %10698 = vmatprep.subr.mxu0 0.0
    %v10699 = vand.u32 %v4021, 4294901760
    %10700 = vmatpush1.msra.mxu0 %v10699
    %10701 = vmatprep.subr.mxu0 0.0
    %v10702 = vand.u32 %v4022, 4294901760
    %10703 = vmatpush1.msra.mxu0 %v10702
    %10704 = vmatprep.subr.mxu0 0.0
    %v10705 = vand.u32 %v4023, 4294901760
    %10706 = vmatpush1.msra.mxu0 %v10705
    %10707 = vmatprep.subr.mxu0 0.0
    %v10708 = vand.u32 %v4024, 4294901760
    %10709 = vmatpush1.msra.mxu0 %v10708
    %10710 = vmatprep.subr.mxu0 0.0
    %v10711 = vand.u32 %v4025, 4294901760
    %10712 = vmatpush1.msra.mxu0 %v10711
    %10713 = vmatprep.subr.mxu0 0.0
    %v10714 = vand.u32 %v4026, 4294901760
    %10715 = vmatpush1.msra.mxu0 %v10714
    %10716 = vmatprep.subr.mxu0 0.0
    %v10717 = vand.u32 %v4027, 4294901760
    %10718 = vmatpush1.msra.mxu0 %v10717
    %10719 = vmatprep.subr.mxu0 0.0
    %v10720 = vand.u32 %v4028, 4294901760
    %10721 = vmatpush1.msra.mxu0 %v10720
    %10722 = vmatprep.subr.mxu0 0.0
    %v10723 = vand.u32 %v4029, 4294901760
    %10724 = vmatpush1.msra.mxu0 %v10723
    %10725 = vmatprep.subr.mxu0 0.0
    %v10726 = vand.u32 %v4030, 4294901760
    %10727 = vmatpush1.msra.mxu0 %v10726
    %10728 = vmatprep.subr.mxu0 0.0
    %v10729 = vand.u32 %v4031, 4294901760
    %10730 = vmatpush1.msra.mxu0 %v10729
    %10731 = vmatprep.subr.mxu0 0.0
    %v10732 = vand.u32 %v4032, 4294901760
    %10733 = vmatpush1.msra.mxu0 %v10732
    %10734 = vmatprep.subr.mxu0 0.0
    %v10735 = vand.u32 %v4033, 4294901760
    %10736 = vmatpush1.msra.mxu0 %v10735
    %10737 = vmatprep.subr.mxu0 0.0
    %v10738 = vand.u32 %v4034, 4294901760
    %10739 = vmatpush1.msra.mxu0 %v10738
    %10740 = vmatprep.subr.mxu0 0.0
    %v10741 = vand.u32 %v4035, 4294901760
    %10742 = vmatpush1.msra.mxu0 %v10741
    %v10743 = vand.u32 %v4114, 4294901760
    %v10744 = vsub.f32 %v4114, %v10743
    %v10745 = vand.u32 %v10744, 4294901760
    %10746 = vmatprep.mubr.f32.mxu0 %v10745
    %v10747 = vand.u32 %v4112, 4294901760
    %v10748 = vsub.f32 %v4112, %v10747
    %v10749 = vand.u32 %v10748, 4294901760
    %10750 = vmatmul.mubr.f32.gmra.mrb[0].mxu0 %v10749
    %v10751 = vpop.f32.mrb[0].mxu0
    %v10752 = vadd.f32 %v10644, %v10751
    %v10753 = vpop.f32.mrb[0].mxu0
    %10754 = vdwg.mxu0
    %10755 = vmatprep.subr.mxu0 0.0
    %v10756 = vand.u32 %v4004, 4294901760
    %v10757 = vsub.f32 %v4004, %v10756
    %v10758 = vand.u32 %v10757, 4294901760
    %10759 = vmatpush1.msra.mxu0 %v10758
    %10760 = vmatprep.subr.mxu0 0.0
    %v10761 = vand.u32 %v4005, 4294901760
    %v10762 = vsub.f32 %v4005, %v10761
    %v10763 = vand.u32 %v10762, 4294901760
    %10764 = vmatpush1.msra.mxu0 %v10763
    %10765 = vmatprep.subr.mxu0 0.0
    %v10766 = vand.u32 %v4006, 4294901760
    %v10767 = vsub.f32 %v4006, %v10766
    %v10768 = vand.u32 %v10767, 4294901760
    %10769 = vmatpush1.msra.mxu0 %v10768
    %10770 = vmatprep.subr.mxu0 0.0
    %v10771 = vand.u32 %v4007, 4294901760
    %v10772 = vsub.f32 %v4007, %v10771
    %v10773 = vand.u32 %v10772, 4294901760
    %10774 = vmatpush1.msra.mxu0 %v10773
    %10775 = vmatprep.subr.mxu0 0.0
    %v10776 = vand.u32 %v4008, 4294901760
    %v10777 = vsub.f32 %v4008, %v10776
    %v10778 = vand.u32 %v10777, 4294901760
    %10779 = vmatpush1.msra.mxu0 %v10778
    %10780 = vmatprep.subr.mxu0 0.0
    %v10781 = vand.u32 %v4009, 4294901760
    %v10782 = vsub.f32 %v4009, %v10781
    %v10783 = vand.u32 %v10782, 4294901760
    %10784 = vmatpush1.msra.mxu0 %v10783
    %10785 = vmatprep.subr.mxu0 0.0
    %v10786 = vand.u32 %v4010, 4294901760
    %v10787 = vsub.f32 %v4010, %v10786
    %v10788 = vand.u32 %v10787, 4294901760
    %10789 = vmatpush1.msra.mxu0 %v10788
    %10790 = vmatprep.subr.mxu0 0.0
    %v10791 = vand.u32 %v4011, 4294901760
    %v10792 = vsub.f32 %v4011, %v10791
    %v10793 = vand.u32 %v10792, 4294901760
    %10794 = vmatpush1.msra.mxu0 %v10793
    %10795 = vmatprep.subr.mxu0 0.0
    %v10796 = vand.u32 %v4012, 4294901760
    %v10797 = vsub.f32 %v4012, %v10796
    %v10798 = vand.u32 %v10797, 4294901760
    %10799 = vmatpush1.msra.mxu0 %v10798
    %10800 = vmatprep.subr.mxu0 0.0
    %v10801 = vand.u32 %v4013, 4294901760
    %v10802 = vsub.f32 %v4013, %v10801
    %v10803 = vand.u32 %v10802, 4294901760
    %10804 = vmatpush1.msra.mxu0 %v10803
    %10805 = vmatprep.subr.mxu0 0.0
    %v10806 = vand.u32 %v4014, 4294901760
    %v10807 = vsub.f32 %v4014, %v10806
    %v10808 = vand.u32 %v10807, 4294901760
    %10809 = vmatpush1.msra.mxu0 %v10808
    %10810 = vmatprep.subr.mxu0 0.0
    %v10811 = vand.u32 %v4015, 4294901760
    %v10812 = vsub.f32 %v4015, %v10811
    %v10813 = vand.u32 %v10812, 4294901760
    %10814 = vmatpush1.msra.mxu0 %v10813
    %10815 = vmatprep.subr.mxu0 0.0
    %v10816 = vand.u32 %v4016, 4294901760
    %v10817 = vsub.f32 %v4016, %v10816
    %v10818 = vand.u32 %v10817, 4294901760
    %10819 = vmatpush1.msra.mxu0 %v10818
    %10820 = vmatprep.subr.mxu0 0.0
    %v10821 = vand.u32 %v4017, 4294901760
    %v10822 = vsub.f32 %v4017, %v10821
    %v10823 = vand.u32 %v10822, 4294901760
    %10824 = vmatpush1.msra.mxu0 %v10823
    %10825 = vmatprep.subr.mxu0 0.0
    %v10826 = vand.u32 %v4018, 4294901760
    %v10827 = vsub.f32 %v4018, %v10826
    %v10828 = vand.u32 %v10827, 4294901760
    %10829 = vmatpush1.msra.mxu0 %v10828
    %10830 = vmatprep.subr.mxu0 0.0
    %v10831 = vand.u32 %v4019, 4294901760
    %v10832 = vsub.f32 %v4019, %v10831
    %v10833 = vand.u32 %v10832, 4294901760
    %10834 = vmatpush1.msra.mxu0 %v10833
    %10835 = vmatprep.subr.mxu0 0.0
    %v10836 = vand.u32 %v4020, 4294901760
    %v10837 = vsub.f32 %v4020, %v10836
    %v10838 = vand.u32 %v10837, 4294901760
    %10839 = vmatpush1.msra.mxu0 %v10838
    %10840 = vmatprep.subr.mxu0 0.0
    %v10841 = vand.u32 %v4021, 4294901760
    %v10842 = vsub.f32 %v4021, %v10841
    %v10843 = vand.u32 %v10842, 4294901760
    %10844 = vmatpush1.msra.mxu0 %v10843
    %10845 = vmatprep.subr.mxu0 0.0
    %v10846 = vand.u32 %v4022, 4294901760
    %v10847 = vsub.f32 %v4022, %v10846
    %v10848 = vand.u32 %v10847, 4294901760
    %10849 = vmatpush1.msra.mxu0 %v10848
    %10850 = vmatprep.subr.mxu0 0.0
    %v10851 = vand.u32 %v4023, 4294901760
    %v10852 = vsub.f32 %v4023, %v10851
    %v10853 = vand.u32 %v10852, 4294901760
    %10854 = vmatpush1.msra.mxu0 %v10853
    %10855 = vmatprep.subr.mxu0 0.0
    %v10856 = vand.u32 %v4024, 4294901760
    %v10857 = vsub.f32 %v4024, %v10856
    %v10858 = vand.u32 %v10857, 4294901760
    %10859 = vmatpush1.msra.mxu0 %v10858
    %10860 = vmatprep.subr.mxu0 0.0
    %v10861 = vand.u32 %v4025, 4294901760
    %v10862 = vsub.f32 %v4025, %v10861
    %v10863 = vand.u32 %v10862, 4294901760
    %10864 = vmatpush1.msra.mxu0 %v10863
    %10865 = vmatprep.subr.mxu0 0.0
    %v10866 = vand.u32 %v4026, 4294901760
    %v10867 = vsub.f32 %v4026, %v10866
    %v10868 = vand.u32 %v10867, 4294901760
    %10869 = vmatpush1.msra.mxu0 %v10868
    %10870 = vmatprep.subr.mxu0 0.0
    %v10871 = vand.u32 %v4027, 4294901760
    %v10872 = vsub.f32 %v4027, %v10871
    %v10873 = vand.u32 %v10872, 4294901760
    %10874 = vmatpush1.msra.mxu0 %v10873
    %10875 = vmatprep.subr.mxu0 0.0
    %v10876 = vand.u32 %v4028, 4294901760
    %v10877 = vsub.f32 %v4028, %v10876
    %v10878 = vand.u32 %v10877, 4294901760
    %10879 = vmatpush1.msra.mxu0 %v10878
    %10880 = vmatprep.subr.mxu0 0.0
    %v10881 = vand.u32 %v4029, 4294901760
    %v10882 = vsub.f32 %v4029, %v10881
    %v10883 = vand.u32 %v10882, 4294901760
    %10884 = vmatpush1.msra.mxu0 %v10883
    %10885 = vmatprep.subr.mxu0 0.0
    %v10886 = vand.u32 %v4030, 4294901760
    %v10887 = vsub.f32 %v4030, %v10886
    %v10888 = vand.u32 %v10887, 4294901760
    %10889 = vmatpush1.msra.mxu0 %v10888
    %10890 = vmatprep.subr.mxu0 0.0
    %v10891 = vand.u32 %v4031, 4294901760
    %v10892 = vsub.f32 %v4031, %v10891
    %v10893 = vand.u32 %v10892, 4294901760
    %10894 = vmatpush1.msra.mxu0 %v10893
    %10895 = vmatprep.subr.mxu0 0.0
    %v10896 = vand.u32 %v4032, 4294901760
    %v10897 = vsub.f32 %v4032, %v10896
    %v10898 = vand.u32 %v10897, 4294901760
    %10899 = vmatpush1.msra.mxu0 %v10898
    %10900 = vmatprep.subr.mxu0 0.0
    %v10901 = vand.u32 %v4033, 4294901760
    %v10902 = vsub.f32 %v4033, %v10901
    %v10903 = vand.u32 %v10902, 4294901760
    %10904 = vmatpush1.msra.mxu0 %v10903
    %10905 = vmatprep.subr.mxu0 0.0
    %v10906 = vand.u32 %v4034, 4294901760
    %v10907 = vsub.f32 %v4034, %v10906
    %v10908 = vand.u32 %v10907, 4294901760
    %10909 = vmatpush1.msra.mxu0 %v10908
    %10910 = vmatprep.subr.mxu0 0.0
    %v10911 = vand.u32 %v4035, 4294901760
    %v10912 = vsub.f32 %v4035, %v10911
    %v10913 = vand.u32 %v10912, 4294901760
    %10914 = vmatpush1.msra.mxu0 %v10913
    %v10915 = vand.u32 %v4114, 4294901760
    %10916 = vmatprep.mubr.f32.mxu0 %v10915
    %v10917 = vand.u32 %v4112, 4294901760
    %10918 = vmatmul.mubr.f32.gmra.mrb[0].mxu0 %v10917
    %v10919 = vpop.f32.mrb[0].mxu0
    %v10920 = vadd.f32 %v10752, %v10919
    %v10921 = vpop.f32.mrb[0].mxu0
    %10922 = vdwg.mxu0
    %10923 = vmatprep.subr.mxu0 0.0
    %v10924 = vand.u32 %v4004, 4294901760
    %10925 = vmatpush1.msra.mxu0 %v10924
    %10926 = vmatprep.subr.mxu0 0.0
    %v10927 = vand.u32 %v4005, 4294901760
    %10928 = vmatpush1.msra.mxu0 %v10927
    %10929 = vmatprep.subr.mxu0 0.0
    %v10930 = vand.u32 %v4006, 4294901760
    %10931 = vmatpush1.msra.mxu0 %v10930
    %10932 = vmatprep.subr.mxu0 0.0
    %v10933 = vand.u32 %v4007, 4294901760
    %10934 = vmatpush1.msra.mxu0 %v10933
    %10935 = vmatprep.subr.mxu0 0.0
    %v10936 = vand.u32 %v4008, 4294901760
    %10937 = vmatpush1.msra.mxu0 %v10936
    %10938 = vmatprep.subr.mxu0 0.0
    %v10939 = vand.u32 %v4009, 4294901760
    %10940 = vmatpush1.msra.mxu0 %v10939
    %10941 = vmatprep.subr.mxu0 0.0
    %v10942 = vand.u32 %v4010, 4294901760
    %10943 = vmatpush1.msra.mxu0 %v10942
    %10944 = vmatprep.subr.mxu0 0.0
    %v10945 = vand.u32 %v4011, 4294901760
    %10946 = vmatpush1.msra.mxu0 %v10945
    %10947 = vmatprep.subr.mxu0 0.0
    %v10948 = vand.u32 %v4012, 4294901760
    %10949 = vmatpush1.msra.mxu0 %v10948
    %10950 = vmatprep.subr.mxu0 0.0
    %v10951 = vand.u32 %v4013, 4294901760
    %10952 = vmatpush1.msra.mxu0 %v10951
    %10953 = vmatprep.subr.mxu0 0.0
    %v10954 = vand.u32 %v4014, 4294901760
    %10955 = vmatpush1.msra.mxu0 %v10954
    %10956 = vmatprep.subr.mxu0 0.0
    %v10957 = vand.u32 %v4015, 4294901760
    %10958 = vmatpush1.msra.mxu0 %v10957
    %10959 = vmatprep.subr.mxu0 0.0
    %v10960 = vand.u32 %v4016, 4294901760
    %10961 = vmatpush1.msra.mxu0 %v10960
    %10962 = vmatprep.subr.mxu0 0.0
    %v10963 = vand.u32 %v4017, 4294901760
    %10964 = vmatpush1.msra.mxu0 %v10963
    %10965 = vmatprep.subr.mxu0 0.0
    %v10966 = vand.u32 %v4018, 4294901760
    %10967 = vmatpush1.msra.mxu0 %v10966
    %10968 = vmatprep.subr.mxu0 0.0
    %v10969 = vand.u32 %v4019, 4294901760
    %10970 = vmatpush1.msra.mxu0 %v10969
    %10971 = vmatprep.subr.mxu0 0.0
    %v10972 = vand.u32 %v4020, 4294901760
    %10973 = vmatpush1.msra.mxu0 %v10972
    %10974 = vmatprep.subr.mxu0 0.0
    %v10975 = vand.u32 %v4021, 4294901760
    %10976 = vmatpush1.msra.mxu0 %v10975
    %10977 = vmatprep.subr.mxu0 0.0
    %v10978 = vand.u32 %v4022, 4294901760
    %10979 = vmatpush1.msra.mxu0 %v10978
    %10980 = vmatprep.subr.mxu0 0.0
    %v10981 = vand.u32 %v4023, 4294901760
    %10982 = vmatpush1.msra.mxu0 %v10981
    %10983 = vmatprep.subr.mxu0 0.0
    %v10984 = vand.u32 %v4024, 4294901760
    %10985 = vmatpush1.msra.mxu0 %v10984
    %10986 = vmatprep.subr.mxu0 0.0
    %v10987 = vand.u32 %v4025, 4294901760
    %10988 = vmatpush1.msra.mxu0 %v10987
    %10989 = vmatprep.subr.mxu0 0.0
    %v10990 = vand.u32 %v4026, 4294901760
    %10991 = vmatpush1.msra.mxu0 %v10990
    %10992 = vmatprep.subr.mxu0 0.0
    %v10993 = vand.u32 %v4027, 4294901760
    %10994 = vmatpush1.msra.mxu0 %v10993
    %10995 = vmatprep.subr.mxu0 0.0
    %v10996 = vand.u32 %v4028, 4294901760
    %10997 = vmatpush1.msra.mxu0 %v10996
    %10998 = vmatprep.subr.mxu0 0.0
    %v10999 = vand.u32 %v4029, 4294901760
    %11000 = vmatpush1.msra.mxu0 %v10999
    %11001 = vmatprep.subr.mxu0 0.0
    %v11002 = vand.u32 %v4030, 4294901760
    %11003 = vmatpush1.msra.mxu0 %v11002
    %11004 = vmatprep.subr.mxu0 0.0
    %v11005 = vand.u32 %v4031, 4294901760
    %11006 = vmatpush1.msra.mxu0 %v11005
    %11007 = vmatprep.subr.mxu0 0.0
    %v11008 = vand.u32 %v4032, 4294901760
    %11009 = vmatpush1.msra.mxu0 %v11008
    %11010 = vmatprep.subr.mxu0 0.0
    %v11011 = vand.u32 %v4033, 4294901760
    %11012 = vmatpush1.msra.mxu0 %v11011
    %11013 = vmatprep.subr.mxu0 0.0
    %v11014 = vand.u32 %v4034, 4294901760
    %11015 = vmatpush1.msra.mxu0 %v11014
    %11016 = vmatprep.subr.mxu0 0.0
    %v11017 = vand.u32 %v4035, 4294901760
    %11018 = vmatpush1.msra.mxu0 %v11017
    %v11019 = vand.u32 %v4114, 4294901760
    %11020 = vmatprep.mubr.f32.mxu0 %v11019
    %v11021 = vand.u32 %v4112, 4294901760
    %11022 = vmatmul.mubr.f32.gmra.mrb[0].mxu0 %v11021
    %v11023 = vpop.f32.mrb[0].mxu0
    %v11024 = vadd.f32 %v10920, %v11023
    %v11025 = vpop.f32.mrb[0].mxu0
    %11026 = vdwg.mxu0
    %vm11027 = vcmask 33792
    %v11028 = vsel %vm11027, %v11024, -inf
    %11029 = vmax.xlane.f32.xlu0 %v11028
    %v11030 = vpop.xlane.xlu0 %11029
    %v11031 = vsub.f32 %v11024, %v11030
    %v11032 = vmul.f32 %v11031, 1.442695
    %v11033 = vpow.pop %v11032
    %v11034 = vsel %vm11027, %v11033, 0.0
    %11035 = vadd.xlane.f32.xlu0 %v11034
    %v11036 = vpop.xlane.xlu0 %11035
    %v11037 = vrcp.pop %v11036
    %v11038 = vmul.f32 %v11033, %v11037
    %11039 = vst.msk [vmem:[#allocation4] sm:$0x3] %vm11027, %v11038
    // Predicated region
    $region62: #{se_forward.1} parent=1 // pred_check
      _
    $region63: #{se_forward.1} parent=1 // pred_check_branch
      %11041 = sbr.rel (0) target = $region65
    $region64: #{se_forward.1} parent=1 // pred_region
      %s11043 = ssub.s32 32, 32
      %11044 = vsyncadd [#allocation5], %s11043
      %s11046 = sshll.u32 [#allocation4], 4
      %s11047 = int_to_ptr.vmem [resolvable:$true] %s11046
      %11049 = dma.vmem_to_hbm [thread:$0]  %s11047, 32, %s15, [#allocation5]
    $region65: #{se_forward.1} parent=1 // pred_fallthru
      _
    // Predicated region
    $region66: #{se_forward.1} parent=1 // pred_check
      _
    $region67: #{se_forward.1} parent=1 // pred_check_branch
      %11051 = sbr.rel (0) target = $region69
    $region68: #{se_forward.1} parent=1 // pred_region
      %11052 = dma.done [#allocation5], 32
    $region69: #{se_forward.1} parent=1 // pred_fallthru
      _
    %11053 = vsyncpa [#allocation5], 1

</llo_original>
